<compile_context>
chip_gen: v6e
topology: v6e:2x2x1
jax: 0.10.0
libtpu: 0.0.40
codegen_flags: <defaults>
</compile_context>

<pallas_src>
import functools

import jax
import jax.numpy as jnp
from jax.experimental import pallas as pl
from jax.experimental.pallas import tpu as pltpu


# ----------------------------------------------------------------------------
# Static tiling helpers
# ----------------------------------------------------------------------------
_LANE = 128
_SUBLANE = 8


def _round_up(x, m):
    return ((x + m - 1) // m) * m


def _choose_k(k_dim, cap=1024):
    """Pad K to a multiple of 128 and pick a K tile <= cap that divides it.

    Idempotent: calling it on an already-padded K returns the same (K_pad, tk),
    so the weight-prep code and the kernel wrapper always agree.
    """
    k_pad = _round_up(k_dim, _LANE)
    if k_pad <= cap:
        return k_pad, k_pad
    nk = -(-k_pad // cap)
    tk = _round_up(-(-k_pad // nk), _LANE)
    return tk * nk, tk


def _choose_n(n_dim, target=256):
    n_pad = _round_up(n_dim, _LANE)
    tn = min(target, n_pad)
    n_pad = _round_up(n_pad, tn)
    return n_pad, tn


def _choose_m(m_dim, target=256):
    m_pad = _round_up(m_dim, _SUBLANE)
    tm = min(target, m_pad)
    m_pad = _round_up(m_pad, tm)
    return m_pad, tm


# ----------------------------------------------------------------------------
# Fused matmul (+bias +ReLU +2x2-maxpool) Pallas kernel
# ----------------------------------------------------------------------------
def _fused_matmul_kernel(a_ref, b_ref, bias_ref, o_ref, acc_ref, *,
                         n_windows, apply_relu):
    # a:    (P, tm, tk) bf16   (P = 1 for fc layers, 4 for fused conv+pool)
    # b:    (tk, tn)   bf16
    # bias: (1, tn)    f32
    # o:    (tm, tn)   f32
    # acc:  (P, tm, tn) f32 scratch, lives across the K grid axis
    k = pl.program_id(2)

    @pl.when(k == 0)
    def _init():
        acc_ref[...] = jnp.zeros_like(acc_ref)

    b = b_ref[...]
    for g in range(n_windows):
        acc_ref[g] += jnp.dot(a_ref[g], b, preferred_element_type=jnp.float32)

    @pl.when(k == pl.num_programs(2) - 1)
    def _finalize():
        r = acc_ref[0]
        for g in range(1, n_windows):
            r = jnp.maximum(r, acc_ref[g])      # fused 2x2 max-pool (VPU only)
        r = r + bias_ref[...]                   # max/bias/relu commute (monotone)
        if apply_relu:
            r = jnp.maximum(r, 0.0)
        o_ref[...] = r.astype(o_ref.dtype)


def fused_matmul(a, w_pad, bias_pad, *, relu, tm_target=256):
    """y = (max over leading window axis of a) @ w_pad + bias, optional ReLU.

    a:        (M, K) or (P, M, K) unpadded activations (any float dtype).
    w_pad:    (K_pad, N_pad) bf16 weights, zero padded (see prepare_params).
    bias_pad: (1, N_pad) f32, zero padded.
    Returns (M_pad, N_pad) f32; the caller slices out the real region.
    For P == 4 the leading axis holds the 2x2-pool window elements, so the
    epilogue max implements MaxPool2d fused into the conv matmul.
    """
    if a.ndim == 2:
        a = a[None]
    p_dim, m_dim, k_dim = a.shape
    k_pad, n_pad = w_pad.shape
    _, tk = _choose_k(k_pad)
    _, tn = _choose_n(n_pad)
    m_pad, tm = _choose_m(m_dim, tm_target)

    a = a.astype(jnp.bfloat16)
    if m_pad != m_dim or k_pad != k_dim:
        a = jnp.pad(a, ((0, 0), (0, m_pad - m_dim), (0, k_pad - k_dim)))

    grid = (m_pad // tm, n_pad // tn, k_pad // tk)
    kernel = functools.partial(_fused_matmul_kernel,
                               n_windows=p_dim, apply_relu=relu)

    flops = 2 * p_dim * m_pad * k_pad * n_pad
    bytes_accessed = (a.size * a.dtype.itemsize + w_pad.size * 2
                      + bias_pad.size * 4 + m_pad * n_pad * 4)

    return pl.pallas_call(
        kernel,
        out_shape=jax.ShapeDtypeStruct((m_pad, n_pad), jnp.float32),
        grid=grid,
        in_specs=[
            pl.BlockSpec((p_dim, tm, tk), lambda i, j, k: (0, i, k)),
            pl.BlockSpec((tk, tn), lambda i, j, k: (k, j)),
            pl.BlockSpec((1, tn), lambda i, j, k: (0, j)),
        ],
        out_specs=pl.BlockSpec((tm, tn), lambda i, j, k: (i, j)),
        scratch_shapes=[pltpu.VMEM((p_dim, tm, tn), jnp.float32)],
        compiler_params=pltpu.CompilerParams(
            dimension_semantics=("parallel", "parallel", "arbitrary"),
            vmem_limit_bytes=32 * 1024 * 1024,
        ),
        cost_estimate=pl.CostEstimate(
            flops=flops, transcendentals=0, bytes_accessed=bytes_accessed),
    )(a, w_pad, bias_pad)


# ----------------------------------------------------------------------------
# Glue: im2col with the 2x2 pooling-window elements on a leading size-4 axis
# ----------------------------------------------------------------------------
def _im2col_pool_order(x_nhwc, ksize, pad):
    """Patches shaped (4, N*Ho*Wo, Cin*ksize*ksize); leading axis = (hp, wp)
    position inside the 2x2 pooling window (max-reduced inside the kernel)."""
    n, h, w, cin = x_nhwc.shape
    ho, wo = h // 2, w // 2
    xp = jnp.pad(x_nhwc, ((0, 0), (pad, pad), (pad, pad), (0, 0)))
    cols = [xp[:, dy:dy + h, dx:dx + w, :]
            for dy in range(ksize) for dx in range(ksize)]
    p = jnp.stack(cols, axis=-1)                          # (N,H,W,Cin,KK)
    p = p.reshape(n, ho, 2, wo, 2, cin, ksize * ksize)    # h=2*ho+hp, w=2*wo+wp
    p = p.transpose(2, 4, 0, 1, 3, 5, 6)                  # (hp,wp,n,ho,wo,cin,kk)
    return p.reshape(4, n * ho * wo, cin * ksize * ksize)


def conv_relu_pool(x_nhwc, w_pad, bias_pad, *, cout, ksize=5, pad=2):
    """Conv2d(k=5,s=1,p=2) + ReLU + MaxPool2d(2,2) in a single Pallas kernel."""
    n, h, w, _ = x_nhwc.shape
    ho, wo = h // 2, w // 2
    # TODO(synk): build im2col patches inside the kernel (VMEM halo tile + 25
    # static shifted slices) instead of materializing them (bf16) in HBM.
    patches = _im2col_pool_order(x_nhwc.astype(jnp.bfloat16), ksize, pad)
    out = fused_matmul(patches, w_pad, bias_pad, relu=True)   # (G_pad, Cout_pad)
    g = n * ho * wo
    return out[:g, :cout].reshape(n, ho, wo, cout)


# ----------------------------------------------------------------------------
# Full ConvNet forward
# ----------------------------------------------------------------------------
def convnet_forward(x_nchw, prepared):
    x = jnp.transpose(x_nchw, (0, 2, 3, 1))                            # (N,28,28,1)
    x = conv_relu_pool(x, prepared["w1"], prepared["b1"], cout=32)     # (N,14,14,32)
    x = conv_relu_pool(x, prepared["w2"], prepared["b2"], cout=64)     # (N,7,7,64)

    n = x.shape[0]
    x = jnp.transpose(x, (0, 3, 1, 2)).reshape(n, -1)                  # NCHW flatten (N,3136)

    # TODO(synk): nn.Dropout() is stochastic in train mode; identity here (eval semantics).
    h = fused_matmul(x, prepared["w_fc1"], prepared["b_fc1"], relu=False)       # (M_pad,1024)
    logits = fused_matmul(h, prepared["w_fc2"], prepared["b_fc2"], relu=False)  # (M_pad,128)
    return logits[:n, :10]


# ----------------------------------------------------------------------------
# One-time (outside jit) weight layout: (K,N), zero-padded, bf16
# ----------------------------------------------------------------------------
def prepare_params(params):
    def pack(w_kn, b):
        k_dim, n_dim = w_kn.shape
        k_pad, _ = _choose_k(k_dim)
        n_pad, _ = _choose_n(n_dim)
        w_p = jnp.zeros((k_pad, n_pad), jnp.bfloat16)
        w_p = w_p.at[:k_dim, :n_dim].set(w_kn.astype(jnp.bfloat16))
        b_p = jnp.zeros((1, n_pad), jnp.float32)
        b_p = b_p.at[0, :n_dim].set(b.astype(jnp.float32))
        return w_p, b_p

    w1, b1 = pack(params["w1"].reshape(32, -1).T, params["b1"])     # (25,32)   -> (128,128)
    w2, b2 = pack(params["w2"].reshape(64, -1).T, params["b2"])     # (800,64)  -> (896,128)
    wf1, bf1 = pack(params["w_fc1"].T, params["b_fc1"])             # (3136,1000)->(3584,1024)
    wf2, bf2 = pack(params["w_fc2"].T, params["b_fc2"])             # (1000,10) -> (1024,128)
    return {"w1": w1, "b1": b1, "w2": w2, "b2": b2,
            "w_fc1": wf1, "b_fc1": bf1, "w_fc2": wf2, "b_fc2": bf2}


def init_params(key):
    ks = jax.random.split(key, 8)

    def w_init(k, shape, scale):
        return (scale * jax.random.normal(k, shape)).astype(jnp.float32)

    return {
        "w1": w_init(ks[0], (32, 1, 5, 5), 0.1),
        "b1": w_init(ks[1], (32,), 0.01),
        "w2": w_init(ks[2], (64, 32, 5, 5), 0.05),
        "b2": w_init(ks[3], (64,), 0.01),
        "w_fc1": w_init(ks[4], (1000, 7 * 7 * 64), 0.02),
        "b_fc1": w_init(ks[5], (1000,), 0.01),
        "w_fc2": w_init(ks[6], (10, 1000), 0.05),
        "b_fc2": w_init(ks[7], (10,), 0.01),
    }


# ----------------------------------------------------------------------------
# Pure-JAX f32 reference (matches the PyTorch module semantics)
# ----------------------------------------------------------------------------
def reference_forward(x_nchw, params):
    x = x_nchw.astype(jnp.float32)

    def conv_block(x, w, b):
        y = jax.lax.conv_general_dilated(
            x, w, window_strides=(1, 1), padding=((2, 2), (2, 2)),
            dimension_numbers=("NCHW", "OIHW", "NCHW"))
        y = jnp.maximum(y + b[None, :, None, None], 0.0)
        return jax.lax.reduce_window(y, -jnp.inf, jax.lax.max,
                                     (1, 1, 2, 2), (1, 1, 2, 2), "VALID")

    x = conv_block(x, params["w1"], params["b1"])
    x = conv_block(x, params["w2"], params["b2"])
    x = x.reshape(x.shape[0], -1)
    x = x @ params["w_fc1"].T + params["b_fc1"]
    x = x @ params["w_fc2"].T + params["b_fc2"]
    return x


if __name__ == "__main__":
    key = jax.random.PRNGKey(0)
    pkey, xkey = jax.random.split(key)
    params = init_params(pkey)
    prepared = prepare_params(params)    # weight layout done once, outside jit

    # MNIST-style input (28x28 is required by fc1 = 7*7*64); small batch = 2.
    x = jax.random.normal(xkey, (2, 1, 28, 28), dtype=jnp.float32)

    fwd = jax.jit(convnet_forward)
    logits = fwd(x, prepared)
    jax.block_until_ready(logits)

    assert logits.shape == (2, 10), logits.shape
    assert logits.dtype == jnp.float32
    assert bool(jnp.all(jnp.isfinite(logits)))

    ref = reference_forward(x, params)
    rel_err = float(jnp.max(jnp.abs(logits - ref)) /
                    (jnp.max(jnp.abs(ref)) + 1e-6))
    assert rel_err < 0.1, f"relative error vs f32 reference too high: {rel_err}"

    print("KERNEL_OK")
</pallas_src>

<mosaic_0001>
module attributes {stable_mosaic.version = 11 : i64} {
  func.func @_fused_matmul_kernel(%arg0: i32, %arg1: i32, %arg2: i32, %arg3: memref<4x256x128xbf16, #tpu.memory_space<vmem>>, %arg4: memref<128x128xbf16, #tpu.memory_space<vmem>>, %arg5: memref<1x128xf32, #tpu.memory_space<vmem>>, %arg6: memref<256x128xf32, #tpu.memory_space<vmem>>, %arg7: memref<4x256x128xf32, #tpu.memory_space<vmem>>) attributes {dimension_semantics = [#tpu.dimension_semantics<parallel>, #tpu.dimension_semantics<parallel>, #tpu.dimension_semantics<arbitrary>], iteration_bounds = array<i64: 2, 1, 1>, scalar_prefetch = 0 : i64, scratch_operands = 1 : i64, tpu.core_type = #tpu.core_type<tc>, window_params = [{transform_indices = @transform_0, window_bounds = array<i64: 4, 256, 128>}, {transform_indices = @transform_1, window_bounds = array<i64: 128, 128>}, {transform_indices = @transform_2, window_bounds = array<i64: 1, 128>}, {transform_indices = @transform_3, window_bounds = array<i64: 256, 128>}]} {
    %c0_i32 = arith.constant 0 : i32
    %0 = arith.cmpi eq, %arg2, %c0_i32 : i32
    %1 = arith.extui %0 : i1 to i32
    %c0_i32_0 = arith.constant 0 : i32
    %2 = arith.cmpi ne, %1, %c0_i32_0 : i32
    scf.if %2 {
      %cst_40 = arith.constant 0.000000e+00 : f32
      %43 = vector.broadcast %cst_40 : f32 to vector<4x256x128xf32>
      %c0_41 = arith.constant 0 : index
      %c0_42 = arith.constant 0 : index
      %c0_43 = arith.constant 0 : index
      %44 = vector.load %arg7[%c0_41, %c0_42, %c0_43] : memref<4x256x128xf32, #tpu.memory_space<vmem>>, vector<4x256x128xf32>
      tpu.vector_store %arg7[%c0_41, %c0_42, %c0_43], %43 {strides = array<i32>} : memref<4x256x128xf32, #tpu.memory_space<vmem>>, vector<4x256x128xf32>,
    } else {
    }
    %c0 = arith.constant 0 : index
    %c0_1 = arith.constant 0 : index
    %3 = vector.load %arg4[%c0, %c0_1] : memref<128x128xbf16, #tpu.memory_space<vmem>>, vector<128x128xbf16>
    %c0_2 = arith.constant 0 : index
    %c0_3 = arith.constant 0 : index
    %c0_4 = arith.constant 0 : index
    %4 = vector.load %arg7[%c0_2, %c0_3, %c0_4] : memref<4x256x128xf32, #tpu.memory_space<vmem>>, vector<1x256x128xf32>
    %5 = vector.shape_cast %4 : vector<1x256x128xf32> to vector<256x128xf32>
    %c0_5 = arith.constant 0 : index
    %c0_6 = arith.constant 0 : index
    %c0_7 = arith.constant 0 : index
    %6 = vector.load %arg3[%c0_5, %c0_6, %c0_7] : memref<4x256x128xbf16, #tpu.memory_space<vmem>>, vector<1x256x128xbf16>
    %7 = vector.shape_cast %6 : vector<1x256x128xbf16> to vector<256x128xbf16>
    %cst = arith.constant dense<0.000000e+00> : vector<256x128xf32>
    %8 = tpu.matmul %7, %3, %cst {dimension_numbers = #tpu.dot_dimension_numbers<[1], [0], [0], [1], [0, 0, 1, 1], [], []>} : vector<256x128xbf16>, vector<128x128xbf16>, vector<256x128xf32> -> vector<256x128xf32>
    %9 = arith.addf %5, %8 : vector<256x128xf32>
    %c0_8 = arith.constant 0 : index
    %c0_9 = arith.constant 0 : index
    %c0_10 = arith.constant 0 : index
    %10 = vector.load %arg7[%c0_8, %c0_9, %c0_10] : memref<4x256x128xf32, #tpu.memory_space<vmem>>, vector<1x256x128xf32>
    %11 = vector.shape_cast %10 : vector<1x256x128xf32> to vector<256x128xf32>
    %12 = vector.shape_cast %9 : vector<256x128xf32> to vector<1x256x128xf32>
    tpu.vector_store %arg7[%c0_8, %c0_9, %c0_10], %12 {strides = array<i32>} : memref<4x256x128xf32, #tpu.memory_space<vmem>>, vector<1x256x128xf32>,
    %c1 = arith.constant 1 : index
    %c0_11 = arith.constant 0 : index
    %c0_12 = arith.constant 0 : index
    %13 = vector.load %arg7[%c1, %c0_11, %c0_12] : memref<4x256x128xf32, #tpu.memory_space<vmem>>, vector<1x256x128xf32>
    %14 = vector.shape_cast %13 : vector<1x256x128xf32> to vector<256x128xf32>
    %c1_13 = arith.constant 1 : index
    %c0_14 = arith.constant 0 : index
    %c0_15 = arith.constant 0 : index
    %15 = vector.load %arg3[%c1_13, %c0_14, %c0_15] : memref<4x256x128xbf16, #tpu.memory_space<vmem>>, vector<1x256x128xbf16>
    %16 = vector.shape_cast %15 : vector<1x256x128xbf16> to vector<256x128xbf16>
    %cst_16 = arith.constant dense<0.000000e+00> : vector<256x128xf32>
    %17 = tpu.matmul %16, %3, %cst_16 {dimension_numbers = #tpu.dot_dimension_numbers<[1], [0], [0], [1], [0, 0, 1, 1], [], []>} : vector<256x128xbf16>, vector<128x128xbf16>, vector<256x128xf32> -> vector<256x128xf32>
    %18 = arith.addf %14, %17 : vector<256x128xf32>
    %c1_17 = arith.constant 1 : index
    %c0_18 = arith.constant 0 : index
    %c0_19 = arith.constant 0 : index
    %19 = vector.load %arg7[%c1_17, %c0_18, %c0_19] : memref<4x256x128xf32, #tpu.memory_space<vmem>>, vector<1x256x128xf32>
    %20 = vector.shape_cast %19 : vector<1x256x128xf32> to vector<256x128xf32>
    %21 = vector.shape_cast %18 : vector<256x128xf32> to vector<1x256x128xf32>
    tpu.vector_store %arg7[%c1_17, %c0_18, %c0_19], %21 {strides = array<i32>} : memref<4x256x128xf32, #tpu.memory_space<vmem>>, vector<1x256x128xf32>,
    %c2 = arith.constant 2 : index
    %c0_20 = arith.constant 0 : index
    %c0_21 = arith.constant 0 : index
    %22 = vector.load %arg7[%c2, %c0_20, %c0_21] : memref<4x256x128xf32, #tpu.memory_space<vmem>>, vector<1x256x128xf32>
    %23 = vector.shape_cast %22 : vector<1x256x128xf32> to vector<256x128xf32>
    %c2_22 = arith.constant 2 : index
    %c0_23 = arith.constant 0 : index
    %c0_24 = arith.constant 0 : index
    %24 = vector.load %arg3[%c2_22, %c0_23, %c0_24] : memref<4x256x128xbf16, #tpu.memory_space<vmem>>, vector<1x256x128xbf16>
    %25 = vector.shape_cast %24 : vector<1x256x128xbf16> to vector<256x128xbf16>
    %cst_25 = arith.constant dense<0.000000e+00> : vector<256x128xf32>
    %26 = tpu.matmul %25, %3, %cst_25 {dimension_numbers = #tpu.dot_dimension_numbers<[1], [0], [0], [1], [0, 0, 1, 1], [], []>} : vector<256x128xbf16>, vector<128x128xbf16>, vector<256x128xf32> -> vector<256x128xf32>
    %27 = arith.addf %23, %26 : vector<256x128xf32>
    %c2_26 = arith.constant 2 : index
    %c0_27 = arith.constant 0 : index
    %c0_28 = arith.constant 0 : index
    %28 = vector.load %arg7[%c2_26, %c0_27, %c0_28] : memref<4x256x128xf32, #tpu.memory_space<vmem>>, vector<1x256x128xf32>
    %29 = vector.shape_cast %28 : vector<1x256x128xf32> to vector<256x128xf32>
    %30 = vector.shape_cast %27 : vector<256x128xf32> to vector<1x256x128xf32>
    tpu.vector_store %arg7[%c2_26, %c0_27, %c0_28], %30 {strides = array<i32>} : memref<4x256x128xf32, #tpu.memory_space<vmem>>, vector<1x256x128xf32>,
    %c3 = arith.constant 3 : index
    %c0_29 = arith.constant 0 : index
    %c0_30 = arith.constant 0 : index
    %31 = vector.load %arg7[%c3, %c0_29, %c0_30] : memref<4x256x128xf32, #tpu.memory_space<vmem>>, vector<1x256x128xf32>
    %32 = vector.shape_cast %31 : vector<1x256x128xf32> to vector<256x128xf32>
    %c3_31 = arith.constant 3 : index
    %c0_32 = arith.constant 0 : index
    %c0_33 = arith.constant 0 : index
    %33 = vector.load %arg3[%c3_31, %c0_32, %c0_33] : memref<4x256x128xbf16, #tpu.memory_space<vmem>>, vector<1x256x128xbf16>
    %34 = vector.shape_cast %33 : vector<1x256x128xbf16> to vector<256x128xbf16>
    %cst_34 = arith.constant dense<0.000000e+00> : vector<256x128xf32>
    %35 = tpu.matmul %34, %3, %cst_34 {dimension_numbers = #tpu.dot_dimension_numbers<[1], [0], [0], [1], [0, 0, 1, 1], [], []>} : vector<256x128xbf16>, vector<128x128xbf16>, vector<256x128xf32> -> vector<256x128xf32>
    %36 = arith.addf %32, %35 : vector<256x128xf32>
    %c3_35 = arith.constant 3 : index
    %c0_36 = arith.constant 0 : index
    %c0_37 = arith.constant 0 : index
    %37 = vector.load %arg7[%c3_35, %c0_36, %c0_37] : memref<4x256x128xf32, #tpu.memory_space<vmem>>, vector<1x256x128xf32>
    %38 = vector.shape_cast %37 : vector<1x256x128xf32> to vector<256x128xf32>
    %39 = vector.shape_cast %36 : vector<256x128xf32> to vector<1x256x128xf32>
    tpu.vector_store %arg7[%c3_35, %c0_36, %c0_37], %39 {strides = array<i32>} : memref<4x256x128xf32, #tpu.memory_space<vmem>>, vector<1x256x128xf32>,
    %c0_i32_38 = arith.constant 0 : i32
    %40 = arith.cmpi eq, %arg2, %c0_i32_38 : i32
    %41 = arith.extui %40 : i1 to i32
    %c0_i32_39 = arith.constant 0 : i32
    %42 = arith.cmpi ne, %41, %c0_i32_39 : i32
    scf.if %42 {
      %c0_40 = arith.constant 0 : index
      %c0_41 = arith.constant 0 : index
      %c0_42 = arith.constant 0 : index
      %43 = vector.load %arg7[%c0_40, %c0_41, %c0_42] : memref<4x256x128xf32, #tpu.memory_space<vmem>>, vector<1x256x128xf32>
      %44 = vector.shape_cast %43 : vector<1x256x128xf32> to vector<256x128xf32>
      %c1_43 = arith.constant 1 : index
      %c0_44 = arith.constant 0 : index
      %c0_45 = arith.constant 0 : index
      %45 = vector.load %arg7[%c1_43, %c0_44, %c0_45] : memref<4x256x128xf32, #tpu.memory_space<vmem>>, vector<1x256x128xf32>
      %46 = vector.shape_cast %45 : vector<1x256x128xf32> to vector<256x128xf32>
      %47 = arith.maximumf %44, %46 : vector<256x128xf32>
      %c2_46 = arith.constant 2 : index
      %c0_47 = arith.constant 0 : index
      %c0_48 = arith.constant 0 : index
      %48 = vector.load %arg7[%c2_46, %c0_47, %c0_48] : memref<4x256x128xf32, #tpu.memory_space<vmem>>, vector<1x256x128xf32>
      %49 = vector.shape_cast %48 : vector<1x256x128xf32> to vector<256x128xf32>
      %50 = arith.maximumf %47, %49 : vector<256x128xf32>
      %c3_49 = arith.constant 3 : index
      %c0_50 = arith.constant 0 : index
      %c0_51 = arith.constant 0 : index
      %51 = vector.load %arg7[%c3_49, %c0_50, %c0_51] : memref<4x256x128xf32, #tpu.memory_space<vmem>>, vector<1x256x128xf32>
      %52 = vector.shape_cast %51 : vector<1x256x128xf32> to vector<256x128xf32>
      %53 = arith.maximumf %50, %52 : vector<256x128xf32>
      %c0_52 = arith.constant 0 : index
      %c0_53 = arith.constant 0 : index
      %54 = vector.load %arg5[%c0_52, %c0_53] : memref<1x128xf32, #tpu.memory_space<vmem>>, vector<1x128xf32>
      %55 = vector.broadcast %54 : vector<1x128xf32> to vector<256x128xf32>
      %56 = arith.addf %53, %55 : vector<256x128xf32>
      %cst_54 = arith.constant 0.000000e+00 : f32
      %57 = vector.broadcast %cst_54 : f32 to vector<256x128xf32>
      %58 = arith.maximumf %56, %57 : vector<256x128xf32>
      %c0_55 = arith.constant 0 : index
      %c0_56 = arith.constant 0 : index
      %59 = vector.load %arg6[%c0_55, %c0_56] : memref<256x128xf32, #tpu.memory_space<vmem>>, vector<256x128xf32>
      tpu.vector_store %arg6[%c0_55, %c0_56], %58 {strides = array<i32>} : memref<256x128xf32, #tpu.memory_space<vmem>>, vector<256x128xf32>,
    } else {
    }
    return
  }
  func.func @transform_0(%arg0: i32, %arg1: i32, %arg2: i32) -> (i32, i32, i32) {
    %c0_i32 = arith.constant 0 : i32
    %c0_i32_0 = arith.constant 0 : i32
    return %c0_i32, %arg0, %arg2 : i32, i32, i32
  }
  func.func @transform_1(%arg0: i32, %arg1: i32, %arg2: i32) -> (i32, i32) {
    %c0_i32 = arith.constant 0 : i32
    return %arg2, %arg1 : i32, i32
  }
  func.func @transform_2(%arg0: i32, %arg1: i32, %arg2: i32) -> (i32, i32) {
    %c0_i32 = arith.constant 0 : i32
    %c0_i32_0 = arith.constant 0 : i32
    return %c0_i32, %arg1 : i32, i32
  }
  func.func @transform_3(%arg0: i32, %arg1: i32, %arg2: i32) -> (i32, i32) {
    %c0_i32 = arith.constant 0 : i32
    return %arg0, %arg1 : i32, i32
  }
}

module attributes {stable_mosaic.version = 11 : i64} {
  func.func @_fused_matmul_kernel(%arg0: i32, %arg1: i32, %arg2: i32, %arg3: memref<4x104x896xbf16, #tpu.memory_space<vmem>>, %arg4: memref<896x128xbf16, #tpu.memory_space<vmem>>, %arg5: memref<1x128xf32, #tpu.memory_space<vmem>>, %arg6: memref<104x128xf32, #tpu.memory_space<vmem>>, %arg7: memref<4x104x128xf32, #tpu.memory_space<vmem>>) attributes {dimension_semantics = [#tpu.dimension_semantics<parallel>, #tpu.dimension_semantics<parallel>, #tpu.dimension_semantics<arbitrary>], iteration_bounds = array<i64: 1, 1, 1>, scalar_prefetch = 0 : i64, scratch_operands = 1 : i64, tpu.core_type = #tpu.core_type<tc>, window_params = [{transform_indices = @transform_0, window_bounds = array<i64: 4, 104, 896>}, {transform_indices = @transform_1, window_bounds = array<i64: 896, 128>}, {transform_indices = @transform_2, window_bounds = array<i64: 1, 128>}, {transform_indices = @transform_3, window_bounds = array<i64: 104, 128>}]} {
    %c0_i32 = arith.constant 0 : i32
    %0 = arith.cmpi eq, %arg2, %c0_i32 : i32
    %1 = arith.extui %0 : i1 to i32
    %c0_i32_0 = arith.constant 0 : i32
    %2 = arith.cmpi ne, %1, %c0_i32_0 : i32
    scf.if %2 {
      %cst_40 = arith.constant 0.000000e+00 : f32
      %43 = vector.broadcast %cst_40 : f32 to vector<4x104x128xf32>
      %c0_41 = arith.constant 0 : index
      %c0_42 = arith.constant 0 : index
      %c0_43 = arith.constant 0 : index
      %44 = vector.load %arg7[%c0_41, %c0_42, %c0_43] : memref<4x104x128xf32, #tpu.memory_space<vmem>>, vector<4x104x128xf32>
      tpu.vector_store %arg7[%c0_41, %c0_42, %c0_43], %43 {strides = array<i32>} : memref<4x104x128xf32, #tpu.memory_space<vmem>>, vector<4x104x128xf32>,
    } else {
    }
    %c0 = arith.constant 0 : index
    %c0_1 = arith.constant 0 : index
    %3 = vector.load %arg4[%c0, %c0_1] : memref<896x128xbf16, #tpu.memory_space<vmem>>, vector<896x128xbf16>
    %c0_2 = arith.constant 0 : index
    %c0_3 = arith.constant 0 : index
    %c0_4 = arith.constant 0 : index
    %4 = vector.load %arg7[%c0_2, %c0_3, %c0_4] : memref<4x104x128xf32, #tpu.memory_space<vmem>>, vector<1x104x128xf32>
    %5 = vector.shape_cast %4 : vector<1x104x128xf32> to vector<104x128xf32>
    %c0_5 = arith.constant 0 : index
    %c0_6 = arith.constant 0 : index
    %c0_7 = arith.constant 0 : index
    %6 = vector.load %arg3[%c0_5, %c0_6, %c0_7] : memref<4x104x896xbf16, #tpu.memory_space<vmem>>, vector<1x104x896xbf16>
    %7 = vector.shape_cast %6 : vector<1x104x896xbf16> to vector<104x896xbf16>
    %cst = arith.constant dense<0.000000e+00> : vector<104x128xf32>
    %8 = tpu.matmul %7, %3, %cst {dimension_numbers = #tpu.dot_dimension_numbers<[1], [0], [0], [1], [0, 0, 1, 1], [], []>} : vector<104x896xbf16>, vector<896x128xbf16>, vector<104x128xf32> -> vector<104x128xf32>
    %9 = arith.addf %5, %8 : vector<104x128xf32>
    %c0_8 = arith.constant 0 : index
    %c0_9 = arith.constant 0 : index
    %c0_10 = arith.constant 0 : index
    %10 = vector.load %arg7[%c0_8, %c0_9, %c0_10] : memref<4x104x128xf32, #tpu.memory_space<vmem>>, vector<1x104x128xf32>
    %11 = vector.shape_cast %10 : vector<1x104x128xf32> to vector<104x128xf32>
    %12 = vector.shape_cast %9 : vector<104x128xf32> to vector<1x104x128xf32>
    tpu.vector_store %arg7[%c0_8, %c0_9, %c0_10], %12 {strides = array<i32>} : memref<4x104x128xf32, #tpu.memory_space<vmem>>, vector<1x104x128xf32>,
    %c1 = arith.constant 1 : index
    %c0_11 = arith.constant 0 : index
    %c0_12 = arith.constant 0 : index
    %13 = vector.load %arg7[%c1, %c0_11, %c0_12] : memref<4x104x128xf32, #tpu.memory_space<vmem>>, vector<1x104x128xf32>
    %14 = vector.shape_cast %13 : vector<1x104x128xf32> to vector<104x128xf32>
    %c1_13 = arith.constant 1 : index
    %c0_14 = arith.constant 0 : index
    %c0_15 = arith.constant 0 : index
    %15 = vector.load %arg3[%c1_13, %c0_14, %c0_15] : memref<4x104x896xbf16, #tpu.memory_space<vmem>>, vector<1x104x896xbf16>
    %16 = vector.shape_cast %15 : vector<1x104x896xbf16> to vector<104x896xbf16>
    %cst_16 = arith.constant dense<0.000000e+00> : vector<104x128xf32>
    %17 = tpu.matmul %16, %3, %cst_16 {dimension_numbers = #tpu.dot_dimension_numbers<[1], [0], [0], [1], [0, 0, 1, 1], [], []>} : vector<104x896xbf16>, vector<896x128xbf16>, vector<104x128xf32> -> vector<104x128xf32>
    %18 = arith.addf %14, %17 : vector<104x128xf32>
    %c1_17 = arith.constant 1 : index
    %c0_18 = arith.constant 0 : index
    %c0_19 = arith.constant 0 : index
    %19 = vector.load %arg7[%c1_17, %c0_18, %c0_19] : memref<4x104x128xf32, #tpu.memory_space<vmem>>, vector<1x104x128xf32>
    %20 = vector.shape_cast %19 : vector<1x104x128xf32> to vector<104x128xf32>
    %21 = vector.shape_cast %18 : vector<104x128xf32> to vector<1x104x128xf32>
    tpu.vector_store %arg7[%c1_17, %c0_18, %c0_19], %21 {strides = array<i32>} : memref<4x104x128xf32, #tpu.memory_space<vmem>>, vector<1x104x128xf32>,
    %c2 = arith.constant 2 : index
    %c0_20 = arith.constant 0 : index
    %c0_21 = arith.constant 0 : index
    %22 = vector.load %arg7[%c2, %c0_20, %c0_21] : memref<4x104x128xf32, #tpu.memory_space<vmem>>, vector<1x104x128xf32>
    %23 = vector.shape_cast %22 : vector<1x104x128xf32> to vector<104x128xf32>
    %c2_22 = arith.constant 2 : index
    %c0_23 = arith.constant 0 : index
    %c0_24 = arith.constant 0 : index
    %24 = vector.load %arg3[%c2_22, %c0_23, %c0_24] : memref<4x104x896xbf16, #tpu.memory_space<vmem>>, vector<1x104x896xbf16>
    %25 = vector.shape_cast %24 : vector<1x104x896xbf16> to vector<104x896xbf16>
    %cst_25 = arith.constant dense<0.000000e+00> : vector<104x128xf32>
    %26 = tpu.matmul %25, %3, %cst_25 {dimension_numbers = #tpu.dot_dimension_numbers<[1], [0], [0], [1], [0, 0, 1, 1], [], []>} : vector<104x896xbf16>, vector<896x128xbf16>, vector<104x128xf32> -> vector<104x128xf32>
    %27 = arith.addf %23, %26 : vector<104x128xf32>
    %c2_26 = arith.constant 2 : index
    %c0_27 = arith.constant 0 : index
    %c0_28 = arith.constant 0 : index
    %28 = vector.load %arg7[%c2_26, %c0_27, %c0_28] : memref<4x104x128xf32, #tpu.memory_space<vmem>>, vector<1x104x128xf32>
    %29 = vector.shape_cast %28 : vector<1x104x128xf32> to vector<104x128xf32>
    %30 = vector.shape_cast %27 : vector<104x128xf32> to vector<1x104x128xf32>
    tpu.vector_store %arg7[%c2_26, %c0_27, %c0_28], %30 {strides = array<i32>} : memref<4x104x128xf32, #tpu.memory_space<vmem>>, vector<1x104x128xf32>,
    %c3 = arith.constant 3 : index
    %c0_29 = arith.constant 0 : index
    %c0_30 = arith.constant 0 : index
    %31 = vector.load %arg7[%c3, %c0_29, %c0_30] : memref<4x104x128xf32, #tpu.memory_space<vmem>>, vector<1x104x128xf32>
    %32 = vector.shape_cast %31 : vector<1x104x128xf32> to vector<104x128xf32>
    %c3_31 = arith.constant 3 : index
    %c0_32 = arith.constant 0 : index
    %c0_33 = arith.constant 0 : index
    %33 = vector.load %arg3[%c3_31, %c0_32, %c0_33] : memref<4x104x896xbf16, #tpu.memory_space<vmem>>, vector<1x104x896xbf16>
    %34 = vector.shape_cast %33 : vector<1x104x896xbf16> to vector<104x896xbf16>
    %cst_34 = arith.constant dense<0.000000e+00> : vector<104x128xf32>
    %35 = tpu.matmul %34, %3, %cst_34 {dimension_numbers = #tpu.dot_dimension_numbers<[1], [0], [0], [1], [0, 0, 1, 1], [], []>} : vector<104x896xbf16>, vector<896x128xbf16>, vector<104x128xf32> -> vector<104x128xf32>
    %36 = arith.addf %32, %35 : vector<104x128xf32>
    %c3_35 = arith.constant 3 : index
    %c0_36 = arith.constant 0 : index
    %c0_37 = arith.constant 0 : index
    %37 = vector.load %arg7[%c3_35, %c0_36, %c0_37] : memref<4x104x128xf32, #tpu.memory_space<vmem>>, vector<1x104x128xf32>
    %38 = vector.shape_cast %37 : vector<1x104x128xf32> to vector<104x128xf32>
    %39 = vector.shape_cast %36 : vector<104x128xf32> to vector<1x104x128xf32>
    tpu.vector_store %arg7[%c3_35, %c0_36, %c0_37], %39 {strides = array<i32>} : memref<4x104x128xf32, #tpu.memory_space<vmem>>, vector<1x104x128xf32>,
    %c0_i32_38 = arith.constant 0 : i32
    %40 = arith.cmpi eq, %arg2, %c0_i32_38 : i32
    %41 = arith.extui %40 : i1 to i32
    %c0_i32_39 = arith.constant 0 : i32
    %42 = arith.cmpi ne, %41, %c0_i32_39 : i32
    scf.if %42 {
      %c0_40 = arith.constant 0 : index
      %c0_41 = arith.constant 0 : index
      %c0_42 = arith.constant 0 : index
      %43 = vector.load %arg7[%c0_40, %c0_41, %c0_42] : memref<4x104x128xf32, #tpu.memory_space<vmem>>, vector<1x104x128xf32>
      %44 = vector.shape_cast %43 : vector<1x104x128xf32> to vector<104x128xf32>
      %c1_43 = arith.constant 1 : index
      %c0_44 = arith.constant 0 : index
      %c0_45 = arith.constant 0 : index
      %45 = vector.load %arg7[%c1_43, %c0_44, %c0_45] : memref<4x104x128xf32, #tpu.memory_space<vmem>>, vector<1x104x128xf32>
      %46 = vector.shape_cast %45 : vector<1x104x128xf32> to vector<104x128xf32>
      %47 = arith.maximumf %44, %46 : vector<104x128xf32>
      %c2_46 = arith.constant 2 : index
      %c0_47 = arith.constant 0 : index
      %c0_48 = arith.constant 0 : index
      %48 = vector.load %arg7[%c2_46, %c0_47, %c0_48] : memref<4x104x128xf32, #tpu.memory_space<vmem>>, vector<1x104x128xf32>
      %49 = vector.shape_cast %48 : vector<1x104x128xf32> to vector<104x128xf32>
      %50 = arith.maximumf %47, %49 : vector<104x128xf32>
      %c3_49 = arith.constant 3 : index
      %c0_50 = arith.constant 0 : index
      %c0_51 = arith.constant 0 : index
      %51 = vector.load %arg7[%c3_49, %c0_50, %c0_51] : memref<4x104x128xf32, #tpu.memory_space<vmem>>, vector<1x104x128xf32>
      %52 = vector.shape_cast %51 : vector<1x104x128xf32> to vector<104x128xf32>
      %53 = arith.maximumf %50, %52 : vector<104x128xf32>
      %c0_52 = arith.constant 0 : index
      %c0_53 = arith.constant 0 : index
      %54 = vector.load %arg5[%c0_52, %c0_53] : memref<1x128xf32, #tpu.memory_space<vmem>>, vector<1x128xf32>
      %55 = vector.broadcast %54 : vector<1x128xf32> to vector<104x128xf32>
      %56 = arith.addf %53, %55 : vector<104x128xf32>
      %cst_54 = arith.constant 0.000000e+00 : f32
      %57 = vector.broadcast %cst_54 : f32 to vector<104x128xf32>
      %58 = arith.maximumf %56, %57 : vector<104x128xf32>
      %c0_55 = arith.constant 0 : index
      %c0_56 = arith.constant 0 : index
      %59 = vector.load %arg6[%c0_55, %c0_56] : memref<104x128xf32, #tpu.memory_space<vmem>>, vector<104x128xf32>
      tpu.vector_store %arg6[%c0_55, %c0_56], %58 {strides = array<i32>} : memref<104x128xf32, #tpu.memory_space<vmem>>, vector<104x128xf32>,
    } else {
    }
    return
  }
  func.func @transform_0(%arg0: i32, %arg1: i32, %arg2: i32) -> (i32, i32, i32) {
    %c0_i32 = arith.constant 0 : i32
    %c0_i32_0 = arith.constant 0 : i32
    return %c0_i32, %arg0, %arg2 : i32, i32, i32
  }
  func.func @transform_1(%arg0: i32, %arg1: i32, %arg2: i32) -> (i32, i32) {
    %c0_i32 = arith.constant 0 : i32
    return %arg2, %arg1 : i32, i32
  }
  func.func @transform_2(%arg0: i32, %arg1: i32, %arg2: i32) -> (i32, i32) {
    %c0_i32 = arith.constant 0 : i32
    %c0_i32_0 = arith.constant 0 : i32
    return %c0_i32, %arg1 : i32, i32
  }
  func.func @transform_3(%arg0: i32, %arg1: i32, %arg2: i32) -> (i32, i32) {
    %c0_i32 = arith.constant 0 : i32
    return %arg0, %arg1 : i32, i32
  }
}

module attributes {stable_mosaic.version = 11 : i64} {
  func.func @_fused_matmul_kernel(%arg0: i32, %arg1: i32, %arg2: i32, %arg3: memref<1x8x896xbf16, #tpu.memory_space<vmem>>, %arg4: memref<896x256xbf16, #tpu.memory_space<vmem>>, %arg5: memref<1x256xf32, #tpu.memory_space<vmem>>, %arg6: memref<8x256xf32, #tpu.memory_space<vmem>>, %arg7: memref<1x8x256xf32, #tpu.memory_space<vmem>>) attributes {dimension_semantics = [#tpu.dimension_semantics<parallel>, #tpu.dimension_semantics<parallel>, #tpu.dimension_semantics<arbitrary>], iteration_bounds = array<i64: 1, 4, 4>, scalar_prefetch = 0 : i64, scratch_operands = 1 : i64, tpu.core_type = #tpu.core_type<tc>, window_params = [{transform_indices = @transform_0, window_bounds = array<i64: 1, 8, 896>}, {transform_indices = @transform_1, window_bounds = array<i64: 896, 256>}, {transform_indices = @transform_2, window_bounds = array<i64: 1, 256>}, {transform_indices = @transform_3, window_bounds = array<i64: 8, 256>}]} {
    %c0_i32 = arith.constant 0 : i32
    %0 = arith.cmpi eq, %arg2, %c0_i32 : i32
    %1 = arith.extui %0 : i1 to i32
    %c0_i32_0 = arith.constant 0 : i32
    %2 = arith.cmpi ne, %1, %c0_i32_0 : i32
    scf.if %2 {
      %cst_12 = arith.constant 0.000000e+00 : f32
      %16 = vector.broadcast %cst_12 : f32 to vector<1x8x256xf32>
      %c0_13 = arith.constant 0 : index
      %c0_14 = arith.constant 0 : index
      %c0_15 = arith.constant 0 : index
      %17 = vector.load %arg7[%c0_13, %c0_14, %c0_15] : memref<1x8x256xf32, #tpu.memory_space<vmem>>, vector<1x8x256xf32>
      tpu.vector_store %arg7[%c0_13, %c0_14, %c0_15], %16 {strides = array<i32>} : memref<1x8x256xf32, #tpu.memory_space<vmem>>, vector<1x8x256xf32>,
    } else {
    }
    %c0 = arith.constant 0 : index
    %c0_1 = arith.constant 0 : index
    %3 = vector.load %arg4[%c0, %c0_1] : memref<896x256xbf16, #tpu.memory_space<vmem>>, vector<896x256xbf16>
    %c0_2 = arith.constant 0 : index
    %c0_3 = arith.constant 0 : index
    %c0_4 = arith.constant 0 : index
    %4 = vector.load %arg7[%c0_2, %c0_3, %c0_4] : memref<1x8x256xf32, #tpu.memory_space<vmem>>, vector<1x8x256xf32>
    %5 = vector.shape_cast %4 : vector<1x8x256xf32> to vector<8x256xf32>
    %c0_5 = arith.constant 0 : index
    %c0_6 = arith.constant 0 : index
    %c0_7 = arith.constant 0 : index
    %6 = vector.load %arg3[%c0_5, %c0_6, %c0_7] : memref<1x8x896xbf16, #tpu.memory_space<vmem>>, vector<1x8x896xbf16>
    %7 = vector.shape_cast %6 : vector<1x8x896xbf16> to vector<8x896xbf16>
    %cst = arith.constant dense<0.000000e+00> : vector<8x256xf32>
    %8 = tpu.matmul %7, %3, %cst {dimension_numbers = #tpu.dot_dimension_numbers<[1], [0], [0], [1], [0, 0, 1, 1], [], []>} : vector<8x896xbf16>, vector<896x256xbf16>, vector<8x256xf32> -> vector<8x256xf32>
    %9 = arith.addf %5, %8 : vector<8x256xf32>
    %c0_8 = arith.constant 0 : index
    %c0_9 = arith.constant 0 : index
    %c0_10 = arith.constant 0 : index
    %10 = vector.load %arg7[%c0_8, %c0_9, %c0_10] : memref<1x8x256xf32, #tpu.memory_space<vmem>>, vector<1x8x256xf32>
    %11 = vector.shape_cast %10 : vector<1x8x256xf32> to vector<8x256xf32>
    %12 = vector.shape_cast %9 : vector<8x256xf32> to vector<1x8x256xf32>
    tpu.vector_store %arg7[%c0_8, %c0_9, %c0_10], %12 {strides = array<i32>} : memref<1x8x256xf32, #tpu.memory_space<vmem>>, vector<1x8x256xf32>,
    %c3_i32 = arith.constant 3 : i32
    %13 = arith.cmpi eq, %arg2, %c3_i32 : i32
    %14 = arith.extui %13 : i1 to i32
    %c0_i32_11 = arith.constant 0 : i32
    %15 = arith.cmpi ne, %14, %c0_i32_11 : i32
    scf.if %15 {
      %c0_12 = arith.constant 0 : index
      %c0_13 = arith.constant 0 : index
      %c0_14 = arith.constant 0 : index
      %16 = vector.load %arg7[%c0_12, %c0_13, %c0_14] : memref<1x8x256xf32, #tpu.memory_space<vmem>>, vector<1x8x256xf32>
      %17 = vector.shape_cast %16 : vector<1x8x256xf32> to vector<8x256xf32>
      %c0_15 = arith.constant 0 : index
      %c0_16 = arith.constant 0 : index
      %18 = vector.load %arg5[%c0_15, %c0_16] : memref<1x256xf32, #tpu.memory_space<vmem>>, vector<1x256xf32>
      %19 = vector.broadcast %18 : vector<1x256xf32> to vector<8x256xf32>
      %20 = arith.addf %17, %19 : vector<8x256xf32>
      %c0_17 = arith.constant 0 : index
      %c0_18 = arith.constant 0 : index
      %21 = vector.load %arg6[%c0_17, %c0_18] : memref<8x256xf32, #tpu.memory_space<vmem>>, vector<8x256xf32>
      tpu.vector_store %arg6[%c0_17, %c0_18], %20 {strides = array<i32>} : memref<8x256xf32, #tpu.memory_space<vmem>>, vector<8x256xf32>,
    } else {
    }
    return
  }
  func.func @transform_0(%arg0: i32, %arg1: i32, %arg2: i32) -> (i32, i32, i32) {
    %c0_i32 = arith.constant 0 : i32
    %c0_i32_0 = arith.constant 0 : i32
    return %c0_i32, %arg0, %arg2 : i32, i32, i32
  }
  func.func @transform_1(%arg0: i32, %arg1: i32, %arg2: i32) -> (i32, i32) {
    %c0_i32 = arith.constant 0 : i32
    return %arg2, %arg1 : i32, i32
  }
  func.func @transform_2(%arg0: i32, %arg1: i32, %arg2: i32) -> (i32, i32) {
    %c0_i32 = arith.constant 0 : i32
    %c0_i32_0 = arith.constant 0 : i32
    return %c0_i32, %arg1 : i32, i32
  }
  func.func @transform_3(%arg0: i32, %arg1: i32, %arg2: i32) -> (i32, i32) {
    %c0_i32 = arith.constant 0 : i32
    return %arg0, %arg1 : i32, i32
  }
}

module attributes {stable_mosaic.version = 11 : i64} {
  func.func @_fused_matmul_kernel(%arg0: i32, %arg1: i32, %arg2: i32, %arg3: memref<1x8x1024xbf16, #tpu.memory_space<vmem>>, %arg4: memref<1024x128xbf16, #tpu.memory_space<vmem>>, %arg5: memref<1x128xf32, #tpu.memory_space<vmem>>, %arg6: memref<8x128xf32, #tpu.memory_space<vmem>>, %arg7: memref<1x8x128xf32, #tpu.memory_space<vmem>>) attributes {dimension_semantics = [#tpu.dimension_semantics<parallel>, #tpu.dimension_semantics<parallel>, #tpu.dimension_semantics<arbitrary>], iteration_bounds = array<i64: 1, 1, 1>, scalar_prefetch = 0 : i64, scratch_operands = 1 : i64, tpu.core_type = #tpu.core_type<tc>, window_params = [{transform_indices = @transform_0, window_bounds = array<i64: 1, 8, 1024>}, {transform_indices = @transform_1, window_bounds = array<i64: 1024, 128>}, {transform_indices = @transform_2, window_bounds = array<i64: 1, 128>}, {transform_indices = @transform_3, window_bounds = array<i64: 8, 128>}]} {
    %c0_i32 = arith.constant 0 : i32
    %0 = arith.cmpi eq, %arg2, %c0_i32 : i32
    %1 = arith.extui %0 : i1 to i32
    %c0_i32_0 = arith.constant 0 : i32
    %2 = arith.cmpi ne, %1, %c0_i32_0 : i32
    scf.if %2 {
      %cst_13 = arith.constant 0.000000e+00 : f32
      %16 = vector.broadcast %cst_13 : f32 to vector<1x8x128xf32>
      %c0_14 = arith.constant 0 : index
      %c0_15 = arith.constant 0 : index
      %c0_16 = arith.constant 0 : index
      %17 = vector.load %arg7[%c0_14, %c0_15, %c0_16] : memref<1x8x128xf32, #tpu.memory_space<vmem>>, vector<1x8x128xf32>
      tpu.vector_store %arg7[%c0_14, %c0_15, %c0_16], %16 {strides = array<i32>} : memref<1x8x128xf32, #tpu.memory_space<vmem>>, vector<1x8x128xf32>,
    } else {
    }
    %c0 = arith.constant 0 : index
    %c0_1 = arith.constant 0 : index
    %3 = vector.load %arg4[%c0, %c0_1] : memref<1024x128xbf16, #tpu.memory_space<vmem>>, vector<1024x128xbf16>
    %c0_2 = arith.constant 0 : index
    %c0_3 = arith.constant 0 : index
    %c0_4 = arith.constant 0 : index
    %4 = vector.load %arg7[%c0_2, %c0_3, %c0_4] : memref<1x8x128xf32, #tpu.memory_space<vmem>>, vector<1x8x128xf32>
    %5 = vector.shape_cast %4 : vector<1x8x128xf32> to vector<8x128xf32>
    %c0_5 = arith.constant 0 : index
    %c0_6 = arith.constant 0 : index
    %c0_7 = arith.constant 0 : index
    %6 = vector.load %arg3[%c0_5, %c0_6, %c0_7] : memref<1x8x1024xbf16, #tpu.memory_space<vmem>>, vector<1x8x1024xbf16>
    %7 = vector.shape_cast %6 : vector<1x8x1024xbf16> to vector<8x1024xbf16>
    %cst = arith.constant dense<0.000000e+00> : vector<8x128xf32>
    %8 = tpu.matmul %7, %3, %cst {dimension_numbers = #tpu.dot_dimension_numbers<[1], [0], [0], [1], [0, 0, 1, 1], [], []>} : vector<8x1024xbf16>, vector<1024x128xbf16>, vector<8x128xf32> -> vector<8x128xf32>
    %9 = arith.addf %5, %8 : vector<8x128xf32>
    %c0_8 = arith.constant 0 : index
    %c0_9 = arith.constant 0 : index
    %c0_10 = arith.constant 0 : index
    %10 = vector.load %arg7[%c0_8, %c0_9, %c0_10] : memref<1x8x128xf32, #tpu.memory_space<vmem>>, vector<1x8x128xf32>
    %11 = vector.shape_cast %10 : vector<1x8x128xf32> to vector<8x128xf32>
    %12 = vector.shape_cast %9 : vector<8x128xf32> to vector<1x8x128xf32>
    tpu.vector_store %arg7[%c0_8, %c0_9, %c0_10], %12 {strides = array<i32>} : memref<1x8x128xf32, #tpu.memory_space<vmem>>, vector<1x8x128xf32>,
    %c0_i32_11 = arith.constant 0 : i32
    %13 = arith.cmpi eq, %arg2, %c0_i32_11 : i32
    %14 = arith.extui %13 : i1 to i32
    %c0_i32_12 = arith.constant 0 : i32
    %15 = arith.cmpi ne, %14, %c0_i32_12 : i32
    scf.if %15 {
      %c0_13 = arith.constant 0 : index
      %c0_14 = arith.constant 0 : index
      %c0_15 = arith.constant 0 : index
      %16 = vector.load %arg7[%c0_13, %c0_14, %c0_15] : memref<1x8x128xf32, #tpu.memory_space<vmem>>, vector<1x8x128xf32>
      %17 = vector.shape_cast %16 : vector<1x8x128xf32> to vector<8x128xf32>
      %c0_16 = arith.constant 0 : index
      %c0_17 = arith.constant 0 : index
      %18 = vector.load %arg5[%c0_16, %c0_17] : memref<1x128xf32, #tpu.memory_space<vmem>>, vector<1x128xf32>
      %19 = vector.broadcast %18 : vector<1x128xf32> to vector<8x128xf32>
      %20 = arith.addf %17, %19 : vector<8x128xf32>
      %c0_18 = arith.constant 0 : index
      %c0_19 = arith.constant 0 : index
      %21 = vector.load %arg6[%c0_18, %c0_19] : memref<8x128xf32, #tpu.memory_space<vmem>>, vector<8x128xf32>
      tpu.vector_store %arg6[%c0_18, %c0_19], %20 {strides = array<i32>} : memref<8x128xf32, #tpu.memory_space<vmem>>, vector<8x128xf32>,
    } else {
    }
    return
  }
  func.func @transform_0(%arg0: i32, %arg1: i32, %arg2: i32) -> (i32, i32, i32) {
    %c0_i32 = arith.constant 0 : i32
    %c0_i32_0 = arith.constant 0 : i32
    return %c0_i32, %arg0, %arg2 : i32, i32, i32
  }
  func.func @transform_1(%arg0: i32, %arg1: i32, %arg2: i32) -> (i32, i32) {
    %c0_i32 = arith.constant 0 : i32
    return %arg2, %arg1 : i32, i32
  }
  func.func @transform_2(%arg0: i32, %arg1: i32, %arg2: i32) -> (i32, i32) {
    %c0_i32 = arith.constant 0 : i32
    %c0_i32_0 = arith.constant 0 : i32
    return %c0_i32, %arg1 : i32, i32
  }
  func.func @transform_3(%arg0: i32, %arg1: i32, %arg2: i32) -> (i32, i32) {
    %c0_i32 = arith.constant 0 : i32
    return %arg0, %arg1 : i32, i32
  }
}

</mosaic_0001>

<llo_original>
// kernel: convnet_forward.4
$region0: #{convnet_forward.4}
  #allocation0 [shape = 'u32[]', space=smem, size = 0x4, offset = 0x4, fixed_abs, tag = 'smem constant byte address 0x4 - core index']
  #allocation1 [shape = 'u32[144,128]{1,0:T(1,128)}', space=vmem, size = 0x12000, scoped, tag = 'internal scratch']
  #allocation2 [shape = 'f32[4,256,128]{2,1,0:T(8,128)}', space=vmem, size = 0x80000, scoped, tag = 'scratch operand']
  %s0 = inlined_call_operand.vmem [shape: bf16[4,512,128], index: 0, kind: input, shape index: {}]
  %s1 = inlined_call_operand.vmem [shape: bf16[128,128], index: 1, kind: input, shape index: {}]
  %s2 = inlined_call_operand.vmem [shape: f32[1,128], index: 2, kind: input, shape index: {}]
  %s3 = inlined_call_operand.vmem [shape: f32[512,128], index: 3, kind: output, shape index: {}]
  %s4 = sld [smem:[#allocation0]]
  $region94: #{convnet_forward.4} parent=0
    _
  %s6 = ssub.s32 1, %s4
  %s7 = scalar_select 0, %s6, %s4
  $region1: #{convnet_forward.4} parent=0
    #allocation3 [shape = 'u8[524288]{0}', space=vmem, size = 0x80000, scoped, tag = 'input window, operand 0']
    loop: start=0, step=1, limit=4
    $region2: #{convnet_forward.4} parent=1 // loop_pre_header
      _
    $region3: #{convnet_forward.4} parent=1 // loop_header
      %s9 = sphi 0, %s13
      %p10 = scmp.ge.s32.totalorder %s9, 4
      %s16 = sphi 0, %s35
      %s17 = sphi 0, %s31
      %s18 = sphi 0, %s27
      %s19 = sphi 0, %s16
      %s20 = sphi 0, %s17
      %s21 = sphi 0, %s18
      %s22 = sphi 0, %s19
      %s23 = sphi 0, %s20
      %s24 = sphi 0, %s21
      %s40 = sphi 0, %s42
      %s43 = sphi 0, %s40
      %s44 = sphi 0, %s43
      %s60 = sphi 0, %s44
      %s68 = sphi 0, %s70
      %s71 = sphi 0, %s68
      %s72 = sphi 0, %s71
      %s88 = sphi 0, %s72
      %s94 = sphi 0, %s96
      %s97 = sphi 0, %s94
      %s98 = sphi 0, %s97
      %s114 = sphi 0, %s98
      %s122 = sphi 0, %s124
      %s125 = sphi 0, %s122
      %s126 = sphi 0, %s125
      %s142 = sphi 0, %s126
    $region4: #{convnet_forward.4} parent=1 // loop_header_branch
      %12 = sbr.rel (%p10) target = $region8
    $region5: #{convnet_forward.4} parent=1 // loop_body
      %s14 = ssub.s32 %s9, 1
      %s15 = ssub.s32 %s9, 2
      %s25 = sadd.s32 1, %s18
      %p26 = scmp.ge.s32.totalorder %s25, 1
      %s27 = scalar_select %p26, 0, %s25
      %s28 = sadd.s32 1, %s17
      %s29 = scalar_select %p26, %s28, %s17
      %p30 = scmp.ge.s32.totalorder %s29, 1
      %s31 = scalar_select %p30, 0, %s29
      %s32 = sadd.s32 1, %s16
      %s33 = scalar_select %p30, %s32, %s16
      %p34 = scmp.ge.s32.totalorder %s33, 2
      %s35 = scalar_select %p34, 0, %s33
      %s36 = ssub.s32 %s16, %s35
      %s37 = ssub.s32 %s18, %s27
      %s38 = sor.u32 %s36, %s37
      %p39 = scmp.eq.s32.totalorder %s38, 0
      %s41 = sadd.s32 %s40, 1
      %s42 = scalar_select %p39, %s40, %s41
      %p45 = pneg %p39
      %p46 = scmp.eq.s32.totalorder %s9, 1
      %p47 = por %p45, %p46
      %p48 = scmp.ne.s32.totalorder %s40, %s43
      %p49 = scmp.eq.s32.totalorder %s9, 0
      %p50 = por %p48, %p49
      %p51 = scmp.ne.s32.totalorder %s40, %s43
      %p52 = scmp.eq.s32.totalorder %s14, 1
      %p53 = por %p51, %p52
      %p54 = scmp.ne.s32.totalorder %s43, %s44
      %p55 = scmp.eq.s32.totalorder %s14, 0
      %p56 = por %p54, %p55
      %p57 = scmp.ne.s32.totalorder %s43, %s44
      %p58 = scmp.eq.s32.totalorder %s15, 1
      %p59 = por %p57, %p58
      %p61 = scmp.ne.s32.totalorder %s44, %s60
      %p62 = scmp.eq.s32.totalorder %s15, 0
      %p63 = por %p61, %p62
      %s64 = ssub.s32 %s18, %s27
      %s65 = ssub.s32 %s17, %s31
      %s66 = sor.u32 %s64, %s65
      %p67 = scmp.eq.s32.totalorder %s66, 0
      %s69 = sadd.s32 %s68, 1
      %s70 = scalar_select %p67, %s68, %s69
      %p73 = pneg %p67
      %p74 = scmp.eq.s32.totalorder %s9, 1
      %p75 = por %p73, %p74
      %p76 = scmp.ne.s32.totalorder %s68, %s71
      %p77 = scmp.eq.s32.totalorder %s9, 0
      %p78 = por %p76, %p77
      %p79 = scmp.ne.s32.totalorder %s68, %s71
      %p80 = scmp.eq.s32.totalorder %s14, 1
      %p81 = por %p79, %p80
      %p82 = scmp.ne.s32.totalorder %s71, %s72
      %p83 = scmp.eq.s32.totalorder %s14, 0
      %p84 = por %p82, %p83
      %p85 = scmp.ne.s32.totalorder %s71, %s72
      %p86 = scmp.eq.s32.totalorder %s15, 1
      %p87 = por %p85, %p86
      %p89 = scmp.ne.s32.totalorder %s72, %s88
      %p90 = scmp.eq.s32.totalorder %s15, 0
      %p91 = por %p89, %p90
      %s92 = ssub.s32 %s17, %s31
      %p93 = scmp.eq.s32.totalorder %s92, 0
      %s95 = sadd.s32 %s94, 1
      %s96 = scalar_select %p93, %s94, %s95
      %p99 = pneg %p93
      %p100 = scmp.eq.s32.totalorder %s9, 1
      %p101 = por %p99, %p100
      %p102 = scmp.ne.s32.totalorder %s94, %s97
      %p103 = scmp.eq.s32.totalorder %s9, 0
      %p104 = por %p102, %p103
      %p105 = scmp.ne.s32.totalorder %s94, %s97
      %p106 = scmp.eq.s32.totalorder %s14, 1
      %p107 = por %p105, %p106
      %p108 = scmp.ne.s32.totalorder %s97, %s98
      %p109 = scmp.eq.s32.totalorder %s14, 0
      %p110 = por %p108, %p109
      %p111 = scmp.ne.s32.totalorder %s97, %s98
      %p112 = scmp.eq.s32.totalorder %s15, 1
      %p113 = por %p111, %p112
      %p115 = scmp.ne.s32.totalorder %s98, %s114
      %p116 = scmp.eq.s32.totalorder %s15, 0
      %p117 = por %p115, %p116
      %s118 = ssub.s32 %s16, %s35
      %s119 = ssub.s32 %s17, %s31
      %s120 = sor.u32 %s118, %s119
      %p121 = scmp.eq.s32.totalorder %s120, 0
      %s123 = sadd.s32 %s122, 1
      %s124 = scalar_select %p121, %s122, %s123
      %p127 = pneg %p121
      %p128 = scmp.eq.s32.totalorder %s9, 1
      %p129 = por %p127, %p128
      %p130 = scmp.ne.s32.totalorder %s122, %s125
      %p131 = scmp.eq.s32.totalorder %s9, 0
      %p132 = por %p130, %p131
      %p133 = scmp.ne.s32.totalorder %s122, %s125
      %p134 = scmp.eq.s32.totalorder %s14, 1
      %p135 = por %p133, %p134
      %p136 = scmp.ne.s32.totalorder %s125, %s126
      %p137 = scmp.eq.s32.totalorder %s14, 0
      %p138 = por %p136, %p137
      %p139 = scmp.ne.s32.totalorder %s125, %s126
      %p140 = scmp.eq.s32.totalorder %s15, 1
      %p141 = por %p139, %p140
      %p143 = scmp.ne.s32.totalorder %s126, %s142
      %p144 = scmp.eq.s32.totalorder %s15, 0
      %p145 = por %p143, %p144
      %p146 = scmp.le.s32.totalorder 1, %s9
      %p147 = scmp.lt.s32.totalorder %s9, 3
      %p148 = pnand %p146, %p147
      %p149 = pneg %p148
      // Predicated region
      $region9: #{convnet_forward.4} parent=5 // pred_check
        _
      $region10: #{convnet_forward.4} parent=5 // pred_check_branch
        %151 = sbr.rel (%p148) target = $region12
      $region11: #{convnet_forward.4} parent=5 // pred_region
        %s152 = ssub.s32 %s9, 1
        // Predicated region
        $region13: #{convnet_forward.4} parent=11 // pred_check
          %p153 = pneg %p84
        $region14: #{convnet_forward.4} parent=11 // pred_check_branch
          %155 = sbr.rel (%p153) target = $region16
        $region15: #{convnet_forward.4} parent=11 // pred_region
          %s156 = smul.u32 16, %s21
          %p157 = scmp.lt.s32.totalorder %s156, 15
          %s158 = scalar_select %p157, %s156, 15
          %p159 = scmp.lt.s32.totalorder %s20, 0
          %s160 = scalar_select %p159, %s20, 0
          %s161 = sadd.s32 %s160, %s158
          %s162 = smul.addr %s161, 4
          %s163 = scalar_lea.vmem %s1, %s162
          %s164 = smul.u32 16, %s21
        $region16: #{convnet_forward.4} parent=11 // pred_fallthru
          _
        // Predicated region
        $region17: #{convnet_forward.4} parent=11 // pred_check
          %p165 = pneg %p110
        $region18: #{convnet_forward.4} parent=11 // pred_check_branch
          %167 = sbr.rel (%p165) target = $region20
        $region19: #{convnet_forward.4} parent=11 // pred_region
          %p168 = scmp.lt.s32.totalorder %s20, 0
          %s169 = scalar_select %p168, %s20, 0
          %s170 = scalar_lea.vmem %s2, %s169
        $region20: #{convnet_forward.4} parent=11 // pred_fallthru
          _
      $region12: #{convnet_forward.4} parent=5 // pred_fallthru
        _
      %p171 = scmp.lt.s32.totalorder %s9, 2
      // Predicated region
      $region21: #{convnet_forward.4} parent=5 // pred_check
        %p172 = pneg %p171
      $region22: #{convnet_forward.4} parent=5 // pred_check_branch
        %174 = sbr.rel (%p172) target = $region24
      $region23: #{convnet_forward.4} parent=5 // pred_region
        // Predicated region
        $region25: #{convnet_forward.4} parent=23 // pred_check
          %p175 = pneg %p50
        $region26: #{convnet_forward.4} parent=23 // pred_check_branch
          %177 = sbr.rel (%p175) target = $region28
        $region27: #{convnet_forward.4} parent=23 // pred_region
          %s178 = sand.u32 %s40, 1
          %s179 = sand.u32 %s40, 1
          %s180 = smul.addr %s179, 512
          %s181 = scalar_lea.vmem [#allocation3], %s180
          %s182 = smul.u32 32, %s16
          %s183 = sadd.s32 %s18, %s182
          %s184 = smul.addr %s183, 4
          %s185 = scalar_lea.vmem %s0, %s184
          // Predicated region
          $region29: #{convnet_forward.4} parent=27 // pred_check
            _
          $region30: #{convnet_forward.4} parent=27 // pred_check_branch
            %187 = sbr.rel (0) target = $region32
          $region31: #{convnet_forward.4} parent=27 // pred_region
            // Predicated region
            $region33: #{convnet_forward.4} parent=31 // pred_check
              _
            $region34: #{convnet_forward.4} parent=31 // pred_check_branch
              %189 = sbr.rel target = $region36
            $region35: #{convnet_forward.4} parent=31 // pred_region
              // Predicated region
              $region48: #{convnet_forward.4} parent=35 // pred_check
                _
              $region49: #{convnet_forward.4} parent=35 // pred_check_branch
                %459 = sbr.rel (0) target = $region51
              $region50: #{convnet_forward.4} parent=35 // pred_region
                loop: start=0, step=1, limit=1
                $region52: #{convnet_forward.4} parent=50 // loop_pre_header
                  _
                $region53: #{convnet_forward.4} parent=50 // loop_header
                  %s461 = sphi 0, %s465
                  %p462 = scmp.ge.s32.totalorder %s461, 1
                  %s466 = sphi %s185, %s185
                  %s467 = sphi %s181, %s181
                $region54: #{convnet_forward.4} parent=50 // loop_header_branch
                  %464 = sbr.rel (%p462) target = $region58
                $region55: #{convnet_forward.4} parent=50 // loop_body
                  _
                $region56: #{convnet_forward.4} parent=50 // loop_footer
                  %s465 = sadd.s32 1, %s461
                $region57: #{convnet_forward.4} parent=50 // loop_footer_branch
                  %460 = sbr.rel target = $region53
                $region58: #{convnet_forward.4} parent=50 // loop_exit
                  _
                %s469 = ssub.s32 16, 1
                loop: start=0, step=1, limit=1
                $region59: #{convnet_forward.4} parent=50 // loop_pre_header
                  _
                $region60: #{convnet_forward.4} parent=50 // loop_header
                  %s471 = sphi 0, %s475
                  %p472 = scmp.ge.s32.totalorder %s471, 1
                  %s476 = sphi %s185, %s185
                  %s477 = sphi %s181, %s181
                $region61: #{convnet_forward.4} parent=50 // loop_header_branch
                  %474 = sbr.rel (%p472) target = $region65
                $region62: #{convnet_forward.4} parent=50 // loop_body
                  %v478 = vld [vmem:[%s476] sm:%s469]
                  %479 = vst [vmem:[%s477] sm:%s469] %v478
                  %v480 = vld [vmem:[%s476 + $0x4] sm:%s469]
                  %481 = vst [vmem:[%s477 + $0x4] sm:%s469] %v480
                  %v482 = vld [vmem:[%s476 + $0x8] sm:%s469]
                  %483 = vst [vmem:[%s477 + $0x8] sm:%s469] %v482
                  %v484 = vld [vmem:[%s476 + $0xc] sm:%s469]
                  %485 = vst [vmem:[%s477 + $0xc] sm:%s469] %v484
                  %v486 = vld [vmem:[%s476 + $0x10] sm:%s469]
                  %487 = vst [vmem:[%s477 + $0x10] sm:%s469] %v486
                  %v488 = vld [vmem:[%s476 + $0x14] sm:%s469]
                  %489 = vst [vmem:[%s477 + $0x14] sm:%s469] %v488
                  %v490 = vld [vmem:[%s476 + $0x18] sm:%s469]
                  %491 = vst [vmem:[%s477 + $0x18] sm:%s469] %v490
                  %v492 = vld [vmem:[%s476 + $0x1c] sm:%s469]
                  %493 = vst [vmem:[%s477 + $0x1c] sm:%s469] %v492
                  %v494 = vld [vmem:[%s476 + $0x20] sm:%s469]
                  %495 = vst [vmem:[%s477 + $0x20] sm:%s469] %v494
                  %v496 = vld [vmem:[%s476 + $0x24] sm:%s469]
                  %497 = vst [vmem:[%s477 + $0x24] sm:%s469] %v496
                  %v498 = vld [vmem:[%s476 + $0x28] sm:%s469]
                  %499 = vst [vmem:[%s477 + $0x28] sm:%s469] %v498
                  %v500 = vld [vmem:[%s476 + $0x2c] sm:%s469]
                  %501 = vst [vmem:[%s477 + $0x2c] sm:%s469] %v500
                  %v502 = vld [vmem:[%s476 + $0x30] sm:%s469]
                  %503 = vst [vmem:[%s477 + $0x30] sm:%s469] %v502
                  %v504 = vld [vmem:[%s476 + $0x34] sm:%s469]
                  %505 = vst [vmem:[%s477 + $0x34] sm:%s469] %v504
                  %v506 = vld [vmem:[%s476 + $0x38] sm:%s469]
                  %507 = vst [vmem:[%s477 + $0x38] sm:%s469] %v506
                  %v508 = vld [vmem:[%s476 + $0x3c] sm:%s469]
                  %509 = vst [vmem:[%s477 + $0x3c] sm:%s469] %v508
                  %v510 = vld [vmem:[%s476 + $0x40] sm:%s469]
                  %511 = vst [vmem:[%s477 + $0x40] sm:%s469] %v510
                  %v512 = vld [vmem:[%s476 + $0x44] sm:%s469]
                  %513 = vst [vmem:[%s477 + $0x44] sm:%s469] %v512
                  %v514 = vld [vmem:[%s476 + $0x48] sm:%s469]
                  %515 = vst [vmem:[%s477 + $0x48] sm:%s469] %v514
                  %v516 = vld [vmem:[%s476 + $0x4c] sm:%s469]
                  %517 = vst [vmem:[%s477 + $0x4c] sm:%s469] %v516
                  %v518 = vld [vmem:[%s476 + $0x50] sm:%s469]
                  %519 = vst [vmem:[%s477 + $0x50] sm:%s469] %v518
                  %v520 = vld [vmem:[%s476 + $0x54] sm:%s469]
                  %521 = vst [vmem:[%s477 + $0x54] sm:%s469] %v520
                  %v522 = vld [vmem:[%s476 + $0x58] sm:%s469]
                  %523 = vst [vmem:[%s477 + $0x58] sm:%s469] %v522
                  %v524 = vld [vmem:[%s476 + $0x5c] sm:%s469]
                  %525 = vst [vmem:[%s477 + $0x5c] sm:%s469] %v524
                  %v526 = vld [vmem:[%s476 + $0x60] sm:%s469]
                  %527 = vst [vmem:[%s477 + $0x60] sm:%s469] %v526
                  %v528 = vld [vmem:[%s476 + $0x64] sm:%s469]
                  %529 = vst [vmem:[%s477 + $0x64] sm:%s469] %v528
                  %v530 = vld [vmem:[%s476 + $0x68] sm:%s469]
                  %531 = vst [vmem:[%s477 + $0x68] sm:%s469] %v530
                  %v532 = vld [vmem:[%s476 + $0x6c] sm:%s469]
                  %533 = vst [vmem:[%s477 + $0x6c] sm:%s469] %v532
                  %v534 = vld [vmem:[%s476 + $0x70] sm:%s469]
                  %535 = vst [vmem:[%s477 + $0x70] sm:%s469] %v534
                  %v536 = vld [vmem:[%s476 + $0x74] sm:%s469]
                  %537 = vst [vmem:[%s477 + $0x74] sm:%s469] %v536
                  %v538 = vld [vmem:[%s476 + $0x78] sm:%s469]
                  %539 = vst [vmem:[%s477 + $0x78] sm:%s469] %v538
                  %v540 = vld [vmem:[%s476 + $0x7c] sm:%s469]
                  %541 = vst [vmem:[%s477 + $0x7c] sm:%s469] %v540
                  %v542 = vld [vmem:[%s476 + $0x100] sm:%s469]
                  %543 = vst [vmem:[%s477 + $0x80] sm:%s469] %v542
                  %v544 = vld [vmem:[%s476 + $0x104] sm:%s469]
                  %545 = vst [vmem:[%s477 + $0x84] sm:%s469] %v544
                  %v546 = vld [vmem:[%s476 + $0x108] sm:%s469]
                  %547 = vst [vmem:[%s477 + $0x88] sm:%s469] %v546
                  %v548 = vld [vmem:[%s476 + $0x10c] sm:%s469]
                  %549 = vst [vmem:[%s477 + $0x8c] sm:%s469] %v548
                  %v550 = vld [vmem:[%s476 + $0x110] sm:%s469]
                  %551 = vst [vmem:[%s477 + $0x90] sm:%s469] %v550
                  %v552 = vld [vmem:[%s476 + $0x114] sm:%s469]
                  %553 = vst [vmem:[%s477 + $0x94] sm:%s469] %v552
                  %v554 = vld [vmem:[%s476 + $0x118] sm:%s469]
                  %555 = vst [vmem:[%s477 + $0x98] sm:%s469] %v554
                  %v556 = vld [vmem:[%s476 + $0x11c] sm:%s469]
                  %557 = vst [vmem:[%s477 + $0x9c] sm:%s469] %v556
                  %v558 = vld [vmem:[%s476 + $0x120] sm:%s469]
                  %559 = vst [vmem:[%s477 + $0xa0] sm:%s469] %v558
                  %v560 = vld [vmem:[%s476 + $0x124] sm:%s469]
                  %561 = vst [vmem:[%s477 + $0xa4] sm:%s469] %v560
                  %v562 = vld [vmem:[%s476 + $0x128] sm:%s469]
                  %563 = vst [vmem:[%s477 + $0xa8] sm:%s469] %v562
                  %v564 = vld [vmem:[%s476 + $0x12c] sm:%s469]
                  %565 = vst [vmem:[%s477 + $0xac] sm:%s469] %v564
                  %v566 = vld [vmem:[%s476 + $0x130] sm:%s469]
                  %567 = vst [vmem:[%s477 + $0xb0] sm:%s469] %v566
                  %v568 = vld [vmem:[%s476 + $0x134] sm:%s469]
                  %569 = vst [vmem:[%s477 + $0xb4] sm:%s469] %v568
                  %v570 = vld [vmem:[%s476 + $0x138] sm:%s469]
                  %571 = vst [vmem:[%s477 + $0xb8] sm:%s469] %v570
                  %v572 = vld [vmem:[%s476 + $0x13c] sm:%s469]
                  %573 = vst [vmem:[%s477 + $0xbc] sm:%s469] %v572
                  %v574 = vld [vmem:[%s476 + $0x140] sm:%s469]
                  %575 = vst [vmem:[%s477 + $0xc0] sm:%s469] %v574
                  %v576 = vld [vmem:[%s476 + $0x144] sm:%s469]
                  %577 = vst [vmem:[%s477 + $0xc4] sm:%s469] %v576
                  %v578 = vld [vmem:[%s476 + $0x148] sm:%s469]
                  %579 = vst [vmem:[%s477 + $0xc8] sm:%s469] %v578
                  %v580 = vld [vmem:[%s476 + $0x14c] sm:%s469]
                  %581 = vst [vmem:[%s477 + $0xcc] sm:%s469] %v580
                  %v582 = vld [vmem:[%s476 + $0x150] sm:%s469]
                  %583 = vst [vmem:[%s477 + $0xd0] sm:%s469] %v582
                  %v584 = vld [vmem:[%s476 + $0x154] sm:%s469]
                  %585 = vst [vmem:[%s477 + $0xd4] sm:%s469] %v584
                  %v586 = vld [vmem:[%s476 + $0x158] sm:%s469]
                  %587 = vst [vmem:[%s477 + $0xd8] sm:%s469] %v586
                  %v588 = vld [vmem:[%s476 + $0x15c] sm:%s469]
                  %589 = vst [vmem:[%s477 + $0xdc] sm:%s469] %v588
                  %v590 = vld [vmem:[%s476 + $0x160] sm:%s469]
                  %591 = vst [vmem:[%s477 + $0xe0] sm:%s469] %v590
                  %v592 = vld [vmem:[%s476 + $0x164] sm:%s469]
                  %593 = vst [vmem:[%s477 + $0xe4] sm:%s469] %v592
                  %v594 = vld [vmem:[%s476 + $0x168] sm:%s469]
                  %595 = vst [vmem:[%s477 + $0xe8] sm:%s469] %v594
                  %v596 = vld [vmem:[%s476 + $0x16c] sm:%s469]
                  %597 = vst [vmem:[%s477 + $0xec] sm:%s469] %v596
                  %v598 = vld [vmem:[%s476 + $0x170] sm:%s469]
                  %599 = vst [vmem:[%s477 + $0xf0] sm:%s469] %v598
                  %v600 = vld [vmem:[%s476 + $0x174] sm:%s469]
                  %601 = vst [vmem:[%s477 + $0xf4] sm:%s469] %v600
                  %v602 = vld [vmem:[%s476 + $0x178] sm:%s469]
                  %603 = vst [vmem:[%s477 + $0xf8] sm:%s469] %v602
                  %v604 = vld [vmem:[%s476 + $0x17c] sm:%s469]
                  %605 = vst [vmem:[%s477 + $0xfc] sm:%s469] %v604
                  %v606 = vld [vmem:[%s476 + $0x200] sm:%s469]
                  %607 = vst [vmem:[%s477 + $0x100] sm:%s469] %v606
                  %v608 = vld [vmem:[%s476 + $0x204] sm:%s469]
                  %609 = vst [vmem:[%s477 + $0x104] sm:%s469] %v608
                  %v610 = vld [vmem:[%s476 + $0x208] sm:%s469]
                  %611 = vst [vmem:[%s477 + $0x108] sm:%s469] %v610
                  %v612 = vld [vmem:[%s476 + $0x20c] sm:%s469]
                  %613 = vst [vmem:[%s477 + $0x10c] sm:%s469] %v612
                  %v614 = vld [vmem:[%s476 + $0x210] sm:%s469]
                  %615 = vst [vmem:[%s477 + $0x110] sm:%s469] %v614
                  %v616 = vld [vmem:[%s476 + $0x214] sm:%s469]
                  %617 = vst [vmem:[%s477 + $0x114] sm:%s469] %v616
                  %v618 = vld [vmem:[%s476 + $0x218] sm:%s469]
                  %619 = vst [vmem:[%s477 + $0x118] sm:%s469] %v618
                  %v620 = vld [vmem:[%s476 + $0x21c] sm:%s469]
                  %621 = vst [vmem:[%s477 + $0x11c] sm:%s469] %v620
                  %v622 = vld [vmem:[%s476 + $0x220] sm:%s469]
                  %623 = vst [vmem:[%s477 + $0x120] sm:%s469] %v622
                  %v624 = vld [vmem:[%s476 + $0x224] sm:%s469]
                  %625 = vst [vmem:[%s477 + $0x124] sm:%s469] %v624
                  %v626 = vld [vmem:[%s476 + $0x228] sm:%s469]
                  %627 = vst [vmem:[%s477 + $0x128] sm:%s469] %v626
                  %v628 = vld [vmem:[%s476 + $0x22c] sm:%s469]
                  %629 = vst [vmem:[%s477 + $0x12c] sm:%s469] %v628
                  %v630 = vld [vmem:[%s476 + $0x230] sm:%s469]
                  %631 = vst [vmem:[%s477 + $0x130] sm:%s469] %v630
                  %v632 = vld [vmem:[%s476 + $0x234] sm:%s469]
                  %633 = vst [vmem:[%s477 + $0x134] sm:%s469] %v632
                  %v634 = vld [vmem:[%s476 + $0x238] sm:%s469]
                  %635 = vst [vmem:[%s477 + $0x138] sm:%s469] %v634
                  %v636 = vld [vmem:[%s476 + $0x23c] sm:%s469]
                  %637 = vst [vmem:[%s477 + $0x13c] sm:%s469] %v636
                  %v638 = vld [vmem:[%s476 + $0x240] sm:%s469]
                  %639 = vst [vmem:[%s477 + $0x140] sm:%s469] %v638
                  %v640 = vld [vmem:[%s476 + $0x244] sm:%s469]
                  %641 = vst [vmem:[%s477 + $0x144] sm:%s469] %v640
                  %v642 = vld [vmem:[%s476 + $0x248] sm:%s469]
                  %643 = vst [vmem:[%s477 + $0x148] sm:%s469] %v642
                  %v644 = vld [vmem:[%s476 + $0x24c] sm:%s469]
                  %645 = vst [vmem:[%s477 + $0x14c] sm:%s469] %v644
                  %v646 = vld [vmem:[%s476 + $0x250] sm:%s469]
                  %647 = vst [vmem:[%s477 + $0x150] sm:%s469] %v646
                  %v648 = vld [vmem:[%s476 + $0x254] sm:%s469]
                  %649 = vst [vmem:[%s477 + $0x154] sm:%s469] %v648
                  %v650 = vld [vmem:[%s476 + $0x258] sm:%s469]
                  %651 = vst [vmem:[%s477 + $0x158] sm:%s469] %v650
                  %v652 = vld [vmem:[%s476 + $0x25c] sm:%s469]
                  %653 = vst [vmem:[%s477 + $0x15c] sm:%s469] %v652
                  %v654 = vld [vmem:[%s476 + $0x260] sm:%s469]
                  %655 = vst [vmem:[%s477 + $0x160] sm:%s469] %v654
                  %v656 = vld [vmem:[%s476 + $0x264] sm:%s469]
                  %657 = vst [vmem:[%s477 + $0x164] sm:%s469] %v656
                  %v658 = vld [vmem:[%s476 + $0x268] sm:%s469]
                  %659 = vst [vmem:[%s477 + $0x168] sm:%s469] %v658
                  %v660 = vld [vmem:[%s476 + $0x26c] sm:%s469]
                  %661 = vst [vmem:[%s477 + $0x16c] sm:%s469] %v660
                  %v662 = vld [vmem:[%s476 + $0x270] sm:%s469]
                  %663 = vst [vmem:[%s477 + $0x170] sm:%s469] %v662
                  %v664 = vld [vmem:[%s476 + $0x274] sm:%s469]
                  %665 = vst [vmem:[%s477 + $0x174] sm:%s469] %v664
                  %v666 = vld [vmem:[%s476 + $0x278] sm:%s469]
                  %667 = vst [vmem:[%s477 + $0x178] sm:%s469] %v666
                  %v668 = vld [vmem:[%s476 + $0x27c] sm:%s469]
                  %669 = vst [vmem:[%s477 + $0x17c] sm:%s469] %v668
                  %v670 = vld [vmem:[%s476 + $0x300] sm:%s469]
                  %671 = vst [vmem:[%s477 + $0x180] sm:%s469] %v670
                  %v672 = vld [vmem:[%s476 + $0x304] sm:%s469]
                  %673 = vst [vmem:[%s477 + $0x184] sm:%s469] %v672
                  %v674 = vld [vmem:[%s476 + $0x308] sm:%s469]
                  %675 = vst [vmem:[%s477 + $0x188] sm:%s469] %v674
                  %v676 = vld [vmem:[%s476 + $0x30c] sm:%s469]
                  %677 = vst [vmem:[%s477 + $0x18c] sm:%s469] %v676
                  %v678 = vld [vmem:[%s476 + $0x310] sm:%s469]
                  %679 = vst [vmem:[%s477 + $0x190] sm:%s469] %v678
                  %v680 = vld [vmem:[%s476 + $0x314] sm:%s469]
                  %681 = vst [vmem:[%s477 + $0x194] sm:%s469] %v680
                  %v682 = vld [vmem:[%s476 + $0x318] sm:%s469]
                  %683 = vst [vmem:[%s477 + $0x198] sm:%s469] %v682
                  %v684 = vld [vmem:[%s476 + $0x31c] sm:%s469]
                  %685 = vst [vmem:[%s477 + $0x19c] sm:%s469] %v684
                  %v686 = vld [vmem:[%s476 + $0x320] sm:%s469]
                  %687 = vst [vmem:[%s477 + $0x1a0] sm:%s469] %v686
                  %v688 = vld [vmem:[%s476 + $0x324] sm:%s469]
                  %689 = vst [vmem:[%s477 + $0x1a4] sm:%s469] %v688
                  %v690 = vld [vmem:[%s476 + $0x328] sm:%s469]
                  %691 = vst [vmem:[%s477 + $0x1a8] sm:%s469] %v690
                  %v692 = vld [vmem:[%s476 + $0x32c] sm:%s469]
                  %693 = vst [vmem:[%s477 + $0x1ac] sm:%s469] %v692
                  %v694 = vld [vmem:[%s476 + $0x330] sm:%s469]
                  %695 = vst [vmem:[%s477 + $0x1b0] sm:%s469] %v694
                  %v696 = vld [vmem:[%s476 + $0x334] sm:%s469]
                  %697 = vst [vmem:[%s477 + $0x1b4] sm:%s469] %v696
                  %v698 = vld [vmem:[%s476 + $0x338] sm:%s469]
                  %699 = vst [vmem:[%s477 + $0x1b8] sm:%s469] %v698
                  %v700 = vld [vmem:[%s476 + $0x33c] sm:%s469]
                  %701 = vst [vmem:[%s477 + $0x1bc] sm:%s469] %v700
                  %v702 = vld [vmem:[%s476 + $0x340] sm:%s469]
                  %703 = vst [vmem:[%s477 + $0x1c0] sm:%s469] %v702
                  %v704 = vld [vmem:[%s476 + $0x344] sm:%s469]
                  %705 = vst [vmem:[%s477 + $0x1c4] sm:%s469] %v704
                  %v706 = vld [vmem:[%s476 + $0x348] sm:%s469]
                  %707 = vst [vmem:[%s477 + $0x1c8] sm:%s469] %v706
                  %v708 = vld [vmem:[%s476 + $0x34c] sm:%s469]
                  %709 = vst [vmem:[%s477 + $0x1cc] sm:%s469] %v708
                  %v710 = vld [vmem:[%s476 + $0x350] sm:%s469]
                  %711 = vst [vmem:[%s477 + $0x1d0] sm:%s469] %v710
                  %v712 = vld [vmem:[%s476 + $0x354] sm:%s469]
                  %713 = vst [vmem:[%s477 + $0x1d4] sm:%s469] %v712
                  %v714 = vld [vmem:[%s476 + $0x358] sm:%s469]
                  %715 = vst [vmem:[%s477 + $0x1d8] sm:%s469] %v714
                  %v716 = vld [vmem:[%s476 + $0x35c] sm:%s469]
                  %717 = vst [vmem:[%s477 + $0x1dc] sm:%s469] %v716
                  %v718 = vld [vmem:[%s476 + $0x360] sm:%s469]
                  %719 = vst [vmem:[%s477 + $0x1e0] sm:%s469] %v718
                  %v720 = vld [vmem:[%s476 + $0x364] sm:%s469]
                  %721 = vst [vmem:[%s477 + $0x1e4] sm:%s469] %v720
                  %v722 = vld [vmem:[%s476 + $0x368] sm:%s469]
                  %723 = vst [vmem:[%s477 + $0x1e8] sm:%s469] %v722
                  %v724 = vld [vmem:[%s476 + $0x36c] sm:%s469]
                  %725 = vst [vmem:[%s477 + $0x1ec] sm:%s469] %v724
                  %v726 = vld [vmem:[%s476 + $0x370] sm:%s469]
                  %727 = vst [vmem:[%s477 + $0x1f0] sm:%s469] %v726
                  %v728 = vld [vmem:[%s476 + $0x374] sm:%s469]
                  %729 = vst [vmem:[%s477 + $0x1f4] sm:%s469] %v728
                  %v730 = vld [vmem:[%s476 + $0x378] sm:%s469]
                  %731 = vst [vmem:[%s477 + $0x1f8] sm:%s469] %v730
                  %v732 = vld [vmem:[%s476 + $0x37c] sm:%s469]
                  %733 = vst [vmem:[%s477 + $0x1fc] sm:%s469] %v732
                $region63: #{convnet_forward.4} parent=50 // loop_footer
                  %s475 = sadd.s32 1, %s471
                $region64: #{convnet_forward.4} parent=50 // loop_footer_branch
                  %470 = sbr.rel target = $region60
                $region65: #{convnet_forward.4} parent=50 // loop_exit
                  _
              $region51: #{convnet_forward.4} parent=35 // pred_fallthru
                _
            $region36: #{convnet_forward.4} parent=31 // pred_fallthru
              _
            // Predicated region
            $region37: #{convnet_forward.4} parent=31 // pred_check
              _
            $region38: #{convnet_forward.4} parent=31 // pred_check_branch
              %191 = sbr.rel (0) target = $region40
            $region39: #{convnet_forward.4} parent=31 // pred_region
              %s193 = ssub.s32 16, 1
              loop: start=0, step=1, limit=1
              $region41: #{convnet_forward.4} parent=39 // loop_pre_header
                _
              $region42: #{convnet_forward.4} parent=39 // loop_header
                %s195 = sphi 0, %s199
                %p196 = scmp.ge.s32.totalorder %s195, 1
                %s200 = sphi %s185, %s185
                %s201 = sphi %s181, %s181
              $region43: #{convnet_forward.4} parent=39 // loop_header_branch
                %198 = sbr.rel (%p196) target = $region47
              $region44: #{convnet_forward.4} parent=39 // loop_body
                %v202 = vld [vmem:[%s200] sm:%s193]
                %203 = vst [vmem:[%s201] sm:%s193] %v202
                %v204 = vld [vmem:[%s200 + $0x4] sm:%s193]
                %205 = vst [vmem:[%s201 + $0x4] sm:%s193] %v204
                %v206 = vld [vmem:[%s200 + $0x8] sm:%s193]
                %207 = vst [vmem:[%s201 + $0x8] sm:%s193] %v206
                %v208 = vld [vmem:[%s200 + $0xc] sm:%s193]
                %209 = vst [vmem:[%s201 + $0xc] sm:%s193] %v208
                %v210 = vld [vmem:[%s200 + $0x10] sm:%s193]
                %211 = vst [vmem:[%s201 + $0x10] sm:%s193] %v210
                %v212 = vld [vmem:[%s200 + $0x14] sm:%s193]
                %213 = vst [vmem:[%s201 + $0x14] sm:%s193] %v212
                %v214 = vld [vmem:[%s200 + $0x18] sm:%s193]
                %215 = vst [vmem:[%s201 + $0x18] sm:%s193] %v214
                %v216 = vld [vmem:[%s200 + $0x1c] sm:%s193]
                %217 = vst [vmem:[%s201 + $0x1c] sm:%s193] %v216
                %v218 = vld [vmem:[%s200 + $0x20] sm:%s193]
                %219 = vst [vmem:[%s201 + $0x20] sm:%s193] %v218
                %v220 = vld [vmem:[%s200 + $0x24] sm:%s193]
                %221 = vst [vmem:[%s201 + $0x24] sm:%s193] %v220
                %v222 = vld [vmem:[%s200 + $0x28] sm:%s193]
                %223 = vst [vmem:[%s201 + $0x28] sm:%s193] %v222
                %v224 = vld [vmem:[%s200 + $0x2c] sm:%s193]
                %225 = vst [vmem:[%s201 + $0x2c] sm:%s193] %v224
                %v226 = vld [vmem:[%s200 + $0x30] sm:%s193]
                %227 = vst [vmem:[%s201 + $0x30] sm:%s193] %v226
                %v228 = vld [vmem:[%s200 + $0x34] sm:%s193]
                %229 = vst [vmem:[%s201 + $0x34] sm:%s193] %v228
                %v230 = vld [vmem:[%s200 + $0x38] sm:%s193]
                %231 = vst [vmem:[%s201 + $0x38] sm:%s193] %v230
                %v232 = vld [vmem:[%s200 + $0x3c] sm:%s193]
                %233 = vst [vmem:[%s201 + $0x3c] sm:%s193] %v232
                %v234 = vld [vmem:[%s200 + $0x40] sm:%s193]
                %235 = vst [vmem:[%s201 + $0x40] sm:%s193] %v234
                %v236 = vld [vmem:[%s200 + $0x44] sm:%s193]
                %237 = vst [vmem:[%s201 + $0x44] sm:%s193] %v236
                %v238 = vld [vmem:[%s200 + $0x48] sm:%s193]
                %239 = vst [vmem:[%s201 + $0x48] sm:%s193] %v238
                %v240 = vld [vmem:[%s200 + $0x4c] sm:%s193]
                %241 = vst [vmem:[%s201 + $0x4c] sm:%s193] %v240
                %v242 = vld [vmem:[%s200 + $0x50] sm:%s193]
                %243 = vst [vmem:[%s201 + $0x50] sm:%s193] %v242
                %v244 = vld [vmem:[%s200 + $0x54] sm:%s193]
                %245 = vst [vmem:[%s201 + $0x54] sm:%s193] %v244
                %v246 = vld [vmem:[%s200 + $0x58] sm:%s193]
                %247 = vst [vmem:[%s201 + $0x58] sm:%s193] %v246
                %v248 = vld [vmem:[%s200 + $0x5c] sm:%s193]
                %249 = vst [vmem:[%s201 + $0x5c] sm:%s193] %v248
                %v250 = vld [vmem:[%s200 + $0x60] sm:%s193]
                %251 = vst [vmem:[%s201 + $0x60] sm:%s193] %v250
                %v252 = vld [vmem:[%s200 + $0x64] sm:%s193]
                %253 = vst [vmem:[%s201 + $0x64] sm:%s193] %v252
                %v254 = vld [vmem:[%s200 + $0x68] sm:%s193]
                %255 = vst [vmem:[%s201 + $0x68] sm:%s193] %v254
                %v256 = vld [vmem:[%s200 + $0x6c] sm:%s193]
                %257 = vst [vmem:[%s201 + $0x6c] sm:%s193] %v256
                %v258 = vld [vmem:[%s200 + $0x70] sm:%s193]
                %259 = vst [vmem:[%s201 + $0x70] sm:%s193] %v258
                %v260 = vld [vmem:[%s200 + $0x74] sm:%s193]
                %261 = vst [vmem:[%s201 + $0x74] sm:%s193] %v260
                %v262 = vld [vmem:[%s200 + $0x78] sm:%s193]
                %263 = vst [vmem:[%s201 + $0x78] sm:%s193] %v262
                %v264 = vld [vmem:[%s200 + $0x7c] sm:%s193]
                %265 = vst [vmem:[%s201 + $0x7c] sm:%s193] %v264
                %v266 = vld [vmem:[%s200 + $0x100] sm:%s193]
                %267 = vst [vmem:[%s201 + $0x80] sm:%s193] %v266
                %v268 = vld [vmem:[%s200 + $0x104] sm:%s193]
                %269 = vst [vmem:[%s201 + $0x84] sm:%s193] %v268
                %v270 = vld [vmem:[%s200 + $0x108] sm:%s193]
                %271 = vst [vmem:[%s201 + $0x88] sm:%s193] %v270
                %v272 = vld [vmem:[%s200 + $0x10c] sm:%s193]
                %273 = vst [vmem:[%s201 + $0x8c] sm:%s193] %v272
                %v274 = vld [vmem:[%s200 + $0x110] sm:%s193]
                %275 = vst [vmem:[%s201 + $0x90] sm:%s193] %v274
                %v276 = vld [vmem:[%s200 + $0x114] sm:%s193]
                %277 = vst [vmem:[%s201 + $0x94] sm:%s193] %v276
                %v278 = vld [vmem:[%s200 + $0x118] sm:%s193]
                %279 = vst [vmem:[%s201 + $0x98] sm:%s193] %v278
                %v280 = vld [vmem:[%s200 + $0x11c] sm:%s193]
                %281 = vst [vmem:[%s201 + $0x9c] sm:%s193] %v280
                %v282 = vld [vmem:[%s200 + $0x120] sm:%s193]
                %283 = vst [vmem:[%s201 + $0xa0] sm:%s193] %v282
                %v284 = vld [vmem:[%s200 + $0x124] sm:%s193]
                %285 = vst [vmem:[%s201 + $0xa4] sm:%s193] %v284
                %v286 = vld [vmem:[%s200 + $0x128] sm:%s193]
                %287 = vst [vmem:[%s201 + $0xa8] sm:%s193] %v286
                %v288 = vld [vmem:[%s200 + $0x12c] sm:%s193]
                %289 = vst [vmem:[%s201 + $0xac] sm:%s193] %v288
                %v290 = vld [vmem:[%s200 + $0x130] sm:%s193]
                %291 = vst [vmem:[%s201 + $0xb0] sm:%s193] %v290
                %v292 = vld [vmem:[%s200 + $0x134] sm:%s193]
                %293 = vst [vmem:[%s201 + $0xb4] sm:%s193] %v292
                %v294 = vld [vmem:[%s200 + $0x138] sm:%s193]
                %295 = vst [vmem:[%s201 + $0xb8] sm:%s193] %v294
                %v296 = vld [vmem:[%s200 + $0x13c] sm:%s193]
                %297 = vst [vmem:[%s201 + $0xbc] sm:%s193] %v296
                %v298 = vld [vmem:[%s200 + $0x140] sm:%s193]
                %299 = vst [vmem:[%s201 + $0xc0] sm:%s193] %v298
                %v300 = vld [vmem:[%s200 + $0x144] sm:%s193]
                %301 = vst [vmem:[%s201 + $0xc4] sm:%s193] %v300
                %v302 = vld [vmem:[%s200 + $0x148] sm:%s193]
                %303 = vst [vmem:[%s201 + $0xc8] sm:%s193] %v302
                %v304 = vld [vmem:[%s200 + $0x14c] sm:%s193]
                %305 = vst [vmem:[%s201 + $0xcc] sm:%s193] %v304
                %v306 = vld [vmem:[%s200 + $0x150] sm:%s193]
                %307 = vst [vmem:[%s201 + $0xd0] sm:%s193] %v306
                %v308 = vld [vmem:[%s200 + $0x154] sm:%s193]
                %309 = vst [vmem:[%s201 + $0xd4] sm:%s193] %v308
                %v310 = vld [vmem:[%s200 + $0x158] sm:%s193]
                %311 = vst [vmem:[%s201 + $0xd8] sm:%s193] %v310
                %v312 = vld [vmem:[%s200 + $0x15c] sm:%s193]
                %313 = vst [vmem:[%s201 + $0xdc] sm:%s193] %v312
                %v314 = vld [vmem:[%s200 + $0x160] sm:%s193]
                %315 = vst [vmem:[%s201 + $0xe0] sm:%s193] %v314
                %v316 = vld [vmem:[%s200 + $0x164] sm:%s193]
                %317 = vst [vmem:[%s201 + $0xe4] sm:%s193] %v316
                %v318 = vld [vmem:[%s200 + $0x168] sm:%s193]
                %319 = vst [vmem:[%s201 + $0xe8] sm:%s193] %v318
                %v320 = vld [vmem:[%s200 + $0x16c] sm:%s193]
                %321 = vst [vmem:[%s201 + $0xec] sm:%s193] %v320
                %v322 = vld [vmem:[%s200 + $0x170] sm:%s193]
                %323 = vst [vmem:[%s201 + $0xf0] sm:%s193] %v322
                %v324 = vld [vmem:[%s200 + $0x174] sm:%s193]
                %325 = vst [vmem:[%s201 + $0xf4] sm:%s193] %v324
                %v326 = vld [vmem:[%s200 + $0x178] sm:%s193]
                %327 = vst [vmem:[%s201 + $0xf8] sm:%s193] %v326
                %v328 = vld [vmem:[%s200 + $0x17c] sm:%s193]
                %329 = vst [vmem:[%s201 + $0xfc] sm:%s193] %v328
                %v330 = vld [vmem:[%s200 + $0x200] sm:%s193]
                %331 = vst [vmem:[%s201 + $0x100] sm:%s193] %v330
                %v332 = vld [vmem:[%s200 + $0x204] sm:%s193]
                %333 = vst [vmem:[%s201 + $0x104] sm:%s193] %v332
                %v334 = vld [vmem:[%s200 + $0x208] sm:%s193]
                %335 = vst [vmem:[%s201 + $0x108] sm:%s193] %v334
                %v336 = vld [vmem:[%s200 + $0x20c] sm:%s193]
                %337 = vst [vmem:[%s201 + $0x10c] sm:%s193] %v336
                %v338 = vld [vmem:[%s200 + $0x210] sm:%s193]
                %339 = vst [vmem:[%s201 + $0x110] sm:%s193] %v338
                %v340 = vld [vmem:[%s200 + $0x214] sm:%s193]
                %341 = vst [vmem:[%s201 + $0x114] sm:%s193] %v340
                %v342 = vld [vmem:[%s200 + $0x218] sm:%s193]
                %343 = vst [vmem:[%s201 + $0x118] sm:%s193] %v342
                %v344 = vld [vmem:[%s200 + $0x21c] sm:%s193]
                %345 = vst [vmem:[%s201 + $0x11c] sm:%s193] %v344
                %v346 = vld [vmem:[%s200 + $0x220] sm:%s193]
                %347 = vst [vmem:[%s201 + $0x120] sm:%s193] %v346
                %v348 = vld [vmem:[%s200 + $0x224] sm:%s193]
                %349 = vst [vmem:[%s201 + $0x124] sm:%s193] %v348
                %v350 = vld [vmem:[%s200 + $0x228] sm:%s193]
                %351 = vst [vmem:[%s201 + $0x128] sm:%s193] %v350
                %v352 = vld [vmem:[%s200 + $0x22c] sm:%s193]
                %353 = vst [vmem:[%s201 + $0x12c] sm:%s193] %v352
                %v354 = vld [vmem:[%s200 + $0x230] sm:%s193]
                %355 = vst [vmem:[%s201 + $0x130] sm:%s193] %v354
                %v356 = vld [vmem:[%s200 + $0x234] sm:%s193]
                %357 = vst [vmem:[%s201 + $0x134] sm:%s193] %v356
                %v358 = vld [vmem:[%s200 + $0x238] sm:%s193]
                %359 = vst [vmem:[%s201 + $0x138] sm:%s193] %v358
                %v360 = vld [vmem:[%s200 + $0x23c] sm:%s193]
                %361 = vst [vmem:[%s201 + $0x13c] sm:%s193] %v360
                %v362 = vld [vmem:[%s200 + $0x240] sm:%s193]
                %363 = vst [vmem:[%s201 + $0x140] sm:%s193] %v362
                %v364 = vld [vmem:[%s200 + $0x244] sm:%s193]
                %365 = vst [vmem:[%s201 + $0x144] sm:%s193] %v364
                %v366 = vld [vmem:[%s200 + $0x248] sm:%s193]
                %367 = vst [vmem:[%s201 + $0x148] sm:%s193] %v366
                %v368 = vld [vmem:[%s200 + $0x24c] sm:%s193]
                %369 = vst [vmem:[%s201 + $0x14c] sm:%s193] %v368
                %v370 = vld [vmem:[%s200 + $0x250] sm:%s193]
                %371 = vst [vmem:[%s201 + $0x150] sm:%s193] %v370
                %v372 = vld [vmem:[%s200 + $0x254] sm:%s193]
                %373 = vst [vmem:[%s201 + $0x154] sm:%s193] %v372
                %v374 = vld [vmem:[%s200 + $0x258] sm:%s193]
                %375 = vst [vmem:[%s201 + $0x158] sm:%s193] %v374
                %v376 = vld [vmem:[%s200 + $0x25c] sm:%s193]
                %377 = vst [vmem:[%s201 + $0x15c] sm:%s193] %v376
                %v378 = vld [vmem:[%s200 + $0x260] sm:%s193]
                %379 = vst [vmem:[%s201 + $0x160] sm:%s193] %v378
                %v380 = vld [vmem:[%s200 + $0x264] sm:%s193]
                %381 = vst [vmem:[%s201 + $0x164] sm:%s193] %v380
                %v382 = vld [vmem:[%s200 + $0x268] sm:%s193]
                %383 = vst [vmem:[%s201 + $0x168] sm:%s193] %v382
                %v384 = vld [vmem:[%s200 + $0x26c] sm:%s193]
                %385 = vst [vmem:[%s201 + $0x16c] sm:%s193] %v384
                %v386 = vld [vmem:[%s200 + $0x270] sm:%s193]
                %387 = vst [vmem:[%s201 + $0x170] sm:%s193] %v386
                %v388 = vld [vmem:[%s200 + $0x274] sm:%s193]
                %389 = vst [vmem:[%s201 + $0x174] sm:%s193] %v388
                %v390 = vld [vmem:[%s200 + $0x278] sm:%s193]
                %391 = vst [vmem:[%s201 + $0x178] sm:%s193] %v390
                %v392 = vld [vmem:[%s200 + $0x27c] sm:%s193]
                %393 = vst [vmem:[%s201 + $0x17c] sm:%s193] %v392
                %v394 = vld [vmem:[%s200 + $0x300] sm:%s193]
                %395 = vst [vmem:[%s201 + $0x180] sm:%s193] %v394
                %v396 = vld [vmem:[%s200 + $0x304] sm:%s193]
                %397 = vst [vmem:[%s201 + $0x184] sm:%s193] %v396
                %v398 = vld [vmem:[%s200 + $0x308] sm:%s193]
                %399 = vst [vmem:[%s201 + $0x188] sm:%s193] %v398
                %v400 = vld [vmem:[%s200 + $0x30c] sm:%s193]
                %401 = vst [vmem:[%s201 + $0x18c] sm:%s193] %v400
                %v402 = vld [vmem:[%s200 + $0x310] sm:%s193]
                %403 = vst [vmem:[%s201 + $0x190] sm:%s193] %v402
                %v404 = vld [vmem:[%s200 + $0x314] sm:%s193]
                %405 = vst [vmem:[%s201 + $0x194] sm:%s193] %v404
                %v406 = vld [vmem:[%s200 + $0x318] sm:%s193]
                %407 = vst [vmem:[%s201 + $0x198] sm:%s193] %v406
                %v408 = vld [vmem:[%s200 + $0x31c] sm:%s193]
                %409 = vst [vmem:[%s201 + $0x19c] sm:%s193] %v408
                %v410 = vld [vmem:[%s200 + $0x320] sm:%s193]
                %411 = vst [vmem:[%s201 + $0x1a0] sm:%s193] %v410
                %v412 = vld [vmem:[%s200 + $0x324] sm:%s193]
                %413 = vst [vmem:[%s201 + $0x1a4] sm:%s193] %v412
                %v414 = vld [vmem:[%s200 + $0x328] sm:%s193]
                %415 = vst [vmem:[%s201 + $0x1a8] sm:%s193] %v414
                %v416 = vld [vmem:[%s200 + $0x32c] sm:%s193]
                %417 = vst [vmem:[%s201 + $0x1ac] sm:%s193] %v416
                %v418 = vld [vmem:[%s200 + $0x330] sm:%s193]
                %419 = vst [vmem:[%s201 + $0x1b0] sm:%s193] %v418
                %v420 = vld [vmem:[%s200 + $0x334] sm:%s193]
                %421 = vst [vmem:[%s201 + $0x1b4] sm:%s193] %v420
                %v422 = vld [vmem:[%s200 + $0x338] sm:%s193]
                %423 = vst [vmem:[%s201 + $0x1b8] sm:%s193] %v422
                %v424 = vld [vmem:[%s200 + $0x33c] sm:%s193]
                %425 = vst [vmem:[%s201 + $0x1bc] sm:%s193] %v424
                %v426 = vld [vmem:[%s200 + $0x340] sm:%s193]
                %427 = vst [vmem:[%s201 + $0x1c0] sm:%s193] %v426
                %v428 = vld [vmem:[%s200 + $0x344] sm:%s193]
                %429 = vst [vmem:[%s201 + $0x1c4] sm:%s193] %v428
                %v430 = vld [vmem:[%s200 + $0x348] sm:%s193]
                %431 = vst [vmem:[%s201 + $0x1c8] sm:%s193] %v430
                %v432 = vld [vmem:[%s200 + $0x34c] sm:%s193]
                %433 = vst [vmem:[%s201 + $0x1cc] sm:%s193] %v432
                %v434 = vld [vmem:[%s200 + $0x350] sm:%s193]
                %435 = vst [vmem:[%s201 + $0x1d0] sm:%s193] %v434
                %v436 = vld [vmem:[%s200 + $0x354] sm:%s193]
                %437 = vst [vmem:[%s201 + $0x1d4] sm:%s193] %v436
                %v438 = vld [vmem:[%s200 + $0x358] sm:%s193]
                %439 = vst [vmem:[%s201 + $0x1d8] sm:%s193] %v438
                %v440 = vld [vmem:[%s200 + $0x35c] sm:%s193]
                %441 = vst [vmem:[%s201 + $0x1dc] sm:%s193] %v440
                %v442 = vld [vmem:[%s200 + $0x360] sm:%s193]
                %443 = vst [vmem:[%s201 + $0x1e0] sm:%s193] %v442
                %v444 = vld [vmem:[%s200 + $0x364] sm:%s193]
                %445 = vst [vmem:[%s201 + $0x1e4] sm:%s193] %v444
                %v446 = vld [vmem:[%s200 + $0x368] sm:%s193]
                %447 = vst [vmem:[%s201 + $0x1e8] sm:%s193] %v446
                %v448 = vld [vmem:[%s200 + $0x36c] sm:%s193]
                %449 = vst [vmem:[%s201 + $0x1ec] sm:%s193] %v448
                %v450 = vld [vmem:[%s200 + $0x370] sm:%s193]
                %451 = vst [vmem:[%s201 + $0x1f0] sm:%s193] %v450
                %v452 = vld [vmem:[%s200 + $0x374] sm:%s193]
                %453 = vst [vmem:[%s201 + $0x1f4] sm:%s193] %v452
                %v454 = vld [vmem:[%s200 + $0x378] sm:%s193]
                %455 = vst [vmem:[%s201 + $0x1f8] sm:%s193] %v454
                %v456 = vld [vmem:[%s200 + $0x37c] sm:%s193]
                %457 = vst [vmem:[%s201 + $0x1fc] sm:%s193] %v456
              $region45: #{convnet_forward.4} parent=39 // loop_footer
                %s199 = sadd.s32 1, %s195
              $region46: #{convnet_forward.4} parent=39 // loop_footer_branch
                %194 = sbr.rel target = $region42
              $region47: #{convnet_forward.4} parent=39 // loop_exit
                _
            $region40: #{convnet_forward.4} parent=31 // pred_fallthru
              _
          $region32: #{convnet_forward.4} parent=27 // pred_fallthru
            _
          %734 = vnop
        $region28: #{convnet_forward.4} parent=23 // pred_fallthru
          _
      $region24: #{convnet_forward.4} parent=5 // pred_fallthru
        _
      %p735 = scmp.le.s32.totalorder 1, %s9
      %p736 = scmp.lt.s32.totalorder %s9, 3
      %p737 = pnand %p735, %p736
      %p738 = pneg %p737
      // Predicated region
      $region66: #{convnet_forward.4} parent=5 // pred_check
        _
      $region67: #{convnet_forward.4} parent=5 // pred_check_branch
        %740 = sbr.rel (%p737) target = $region69
      $region68: #{convnet_forward.4} parent=5 // pred_region
        %s741 = ssub.s32 %s9, 1
        %s742 = sand.u32 %s43, 1
        %s743 = sand.u32 %s43, 1
        %s744 = smul.addr %s743, 512
        %s745 = scalar_lea.vmem [#allocation3], %s744
        // Predicated region
        $region70: #{convnet_forward.4} parent=68 // pred_check
          %p746 = pneg %p56
        $region71: #{convnet_forward.4} parent=68 // pred_check_branch
          %748 = sbr.rel (%p746) target = $region73
        $region72: #{convnet_forward.4} parent=68 // pred_region
          _
        $region73: #{convnet_forward.4} parent=68 // pred_fallthru
          _
        %s749 = sand.u32 %s43, 1
        %s750 = sand.u32 %s43, 1
        %s751 = smul.addr %s750, 512
        %s752 = scalar_lea.vmem [#allocation3], %s751
        %p753 = pneg %p56
        %p754 = pneg %p53
        %s755 = smul.u32 16, %s21
        %p756 = scmp.lt.s32.totalorder %s755, 15
        %s757 = scalar_select %p756, %s755, 15
        %p758 = scmp.lt.s32.totalorder %s20, 0
        %s759 = scalar_select %p758, %s20, 0
        %s760 = sadd.s32 %s759, %s757
        %s761 = smul.addr %s760, 4
        %s762 = scalar_lea.vmem %s1, %s761
        %p763 = pneg %p84
        %p764 = pneg %p81
        %p765 = scmp.lt.s32.totalorder %s20, 0
        %s766 = scalar_select %p765, %s20, 0
        %s767 = scalar_lea.vmem %s2, %s766
        %p768 = pneg %p110
        %p769 = pneg %p107
        %p770 = pneg %p138
        %p771 = pneg %p135
        %s772 = smul.u32 32, %s19
        %p773 = scmp.lt.s32.totalorder %s772, 63
        %s774 = scalar_select %p773, %s772, 63
        %p775 = scmp.lt.s32.totalorder %s20, 0
        %s776 = scalar_select %p775, %s20, 0
        %s777 = sadd.s32 %s776, %s774
        %s778 = smul.addr %s777, 8
        %s779 = scalar_lea.vmem %s3, %s778
        %s780 = smul.u32 32, %s19
        %s781 = smul.u32 16, %s21
        %p782 = scmp.lt.s32.totalorder %s781, 15
        %s783 = scalar_select %p782, %s781, 15
        %p784 = scmp.lt.s32.totalorder %s20, 0
        %s785 = scalar_select %p784, %s20, 0
        %s786 = sadd.s32 %s785, %s783
        %s787 = smul.addr %s786, 4
        %s788 = scalar_lea.vmem %s1, %s787
        %s789 = smul.u32 16, %s21
        %p790 = scmp.lt.s32.totalorder %s20, 0
        %s791 = scalar_select %p790, %s20, 0
        %s792 = scalar_lea.vmem %s2, %s791
        %s793 = smul.u32 32, %s19
        %p794 = scmp.lt.s32.totalorder %s793, 63
        %s795 = scalar_select %p794, %s793, 63
        %p796 = scmp.lt.s32.totalorder %s20, 0
        %s797 = scalar_select %p796, %s20, 0
        %s798 = sadd.s32 %s797, %s795
        %s799 = smul.addr %s798, 8
        %s800 = scalar_lea.vmem %s3, %s799
        %s801 = smul.u32 32, %s19
        %p803 = scmp.eq.s32.totalorder %s21, 0
        // Predicated region
        $region74: #{convnet_forward.4} parent=68 // pred_check
          %p804 = pneg %p803
        $region75: #{convnet_forward.4} parent=68 // pred_check_branch
          %806 = sbr.rel (%p804) target = $region77
        $region76: #{convnet_forward.4} parent=68 // pred_region
          %807 = vst [vmem:[#allocation2] sm:$0xff] 0.0
          %808 = vst [vmem:[#allocation2 + $0x8] sm:$0xff] 0.0
          %809 = vst [vmem:[#allocation2 + $0x10] sm:$0xff] 0.0
          %810 = vst [vmem:[#allocation2 + $0x18] sm:$0xff] 0.0
          %811 = vst [vmem:[#allocation2 + $0x20] sm:$0xff] 0.0
          %812 = vst [vmem:[#allocation2 + $0x28] sm:$0xff] 0.0
          %813 = vst [vmem:[#allocation2 + $0x30] sm:$0xff] 0.0
          %814 = vst [vmem:[#allocation2 + $0x38] sm:$0xff] 0.0
          %815 = vst [vmem:[#allocation2 + $0x40] sm:$0xff] 0.0
          %816 = vst [vmem:[#allocation2 + $0x48] sm:$0xff] 0.0
          %817 = vst [vmem:[#allocation2 + $0x50] sm:$0xff] 0.0
          %818 = vst [vmem:[#allocation2 + $0x58] sm:$0xff] 0.0
          %819 = vst [vmem:[#allocation2 + $0x60] sm:$0xff] 0.0
          %820 = vst [vmem:[#allocation2 + $0x68] sm:$0xff] 0.0
          %821 = vst [vmem:[#allocation2 + $0x70] sm:$0xff] 0.0
          %822 = vst [vmem:[#allocation2 + $0x78] sm:$0xff] 0.0
          %823 = vst [vmem:[#allocation2 + $0x80] sm:$0xff] 0.0
          %824 = vst [vmem:[#allocation2 + $0x88] sm:$0xff] 0.0
          %825 = vst [vmem:[#allocation2 + $0x90] sm:$0xff] 0.0
          %826 = vst [vmem:[#allocation2 + $0x98] sm:$0xff] 0.0
          %827 = vst [vmem:[#allocation2 + $0xa0] sm:$0xff] 0.0
          %828 = vst [vmem:[#allocation2 + $0xa8] sm:$0xff] 0.0
          %829 = vst [vmem:[#allocation2 + $0xb0] sm:$0xff] 0.0
          %830 = vst [vmem:[#allocation2 + $0xb8] sm:$0xff] 0.0
          %831 = vst [vmem:[#allocation2 + $0xc0] sm:$0xff] 0.0
          %832 = vst [vmem:[#allocation2 + $0xc8] sm:$0xff] 0.0
          %833 = vst [vmem:[#allocation2 + $0xd0] sm:$0xff] 0.0
          %834 = vst [vmem:[#allocation2 + $0xd8] sm:$0xff] 0.0
          %835 = vst [vmem:[#allocation2 + $0xe0] sm:$0xff] 0.0
          %836 = vst [vmem:[#allocation2 + $0xe8] sm:$0xff] 0.0
          %837 = vst [vmem:[#allocation2 + $0xf0] sm:$0xff] 0.0
          %838 = vst [vmem:[#allocation2 + $0xf8] sm:$0xff] 0.0
          %839 = vst [vmem:[#allocation2 + $0x100] sm:$0xff] 0.0
          %840 = vst [vmem:[#allocation2 + $0x108] sm:$0xff] 0.0
          %841 = vst [vmem:[#allocation2 + $0x110] sm:$0xff] 0.0
          %842 = vst [vmem:[#allocation2 + $0x118] sm:$0xff] 0.0
          %843 = vst [vmem:[#allocation2 + $0x120] sm:$0xff] 0.0
          %844 = vst [vmem:[#allocation2 + $0x128] sm:$0xff] 0.0
          %845 = vst [vmem:[#allocation2 + $0x130] sm:$0xff] 0.0
          %846 = vst [vmem:[#allocation2 + $0x138] sm:$0xff] 0.0
          %847 = vst [vmem:[#allocation2 + $0x140] sm:$0xff] 0.0
          %848 = vst [vmem:[#allocation2 + $0x148] sm:$0xff] 0.0
          %849 = vst [vmem:[#allocation2 + $0x150] sm:$0xff] 0.0
          %850 = vst [vmem:[#allocation2 + $0x158] sm:$0xff] 0.0
          %851 = vst [vmem:[#allocation2 + $0x160] sm:$0xff] 0.0
          %852 = vst [vmem:[#allocation2 + $0x168] sm:$0xff] 0.0
          %853 = vst [vmem:[#allocation2 + $0x170] sm:$0xff] 0.0
          %854 = vst [vmem:[#allocation2 + $0x178] sm:$0xff] 0.0
          %855 = vst [vmem:[#allocation2 + $0x180] sm:$0xff] 0.0
          %856 = vst [vmem:[#allocation2 + $0x188] sm:$0xff] 0.0
          %857 = vst [vmem:[#allocation2 + $0x190] sm:$0xff] 0.0
          %858 = vst [vmem:[#allocation2 + $0x198] sm:$0xff] 0.0
          %859 = vst [vmem:[#allocation2 + $0x1a0] sm:$0xff] 0.0
          %860 = vst [vmem:[#allocation2 + $0x1a8] sm:$0xff] 0.0
          %861 = vst [vmem:[#allocation2 + $0x1b0] sm:$0xff] 0.0
          %862 = vst [vmem:[#allocation2 + $0x1b8] sm:$0xff] 0.0
          %863 = vst [vmem:[#allocation2 + $0x1c0] sm:$0xff] 0.0
          %864 = vst [vmem:[#allocation2 + $0x1c8] sm:$0xff] 0.0
          %865 = vst [vmem:[#allocation2 + $0x1d0] sm:$0xff] 0.0
          %866 = vst [vmem:[#allocation2 + $0x1d8] sm:$0xff] 0.0
          %867 = vst [vmem:[#allocation2 + $0x1e0] sm:$0xff] 0.0
          %868 = vst [vmem:[#allocation2 + $0x1e8] sm:$0xff] 0.0
          %869 = vst [vmem:[#allocation2 + $0x1f0] sm:$0xff] 0.0
          %870 = vst [vmem:[#allocation2 + $0x1f8] sm:$0xff] 0.0
          %871 = vst [vmem:[#allocation2 + $0x200] sm:$0xff] 0.0
          %872 = vst [vmem:[#allocation2 + $0x208] sm:$0xff] 0.0
          %873 = vst [vmem:[#allocation2 + $0x210] sm:$0xff] 0.0
          %874 = vst [vmem:[#allocation2 + $0x218] sm:$0xff] 0.0
          %875 = vst [vmem:[#allocation2 + $0x220] sm:$0xff] 0.0
          %876 = vst [vmem:[#allocation2 + $0x228] sm:$0xff] 0.0
          %877 = vst [vmem:[#allocation2 + $0x230] sm:$0xff] 0.0
          %878 = vst [vmem:[#allocation2 + $0x238] sm:$0xff] 0.0
          %879 = vst [vmem:[#allocation2 + $0x240] sm:$0xff] 0.0
          %880 = vst [vmem:[#allocation2 + $0x248] sm:$0xff] 0.0
          %881 = vst [vmem:[#allocation2 + $0x250] sm:$0xff] 0.0
          %882 = vst [vmem:[#allocation2 + $0x258] sm:$0xff] 0.0
          %883 = vst [vmem:[#allocation2 + $0x260] sm:$0xff] 0.0
          %884 = vst [vmem:[#allocation2 + $0x268] sm:$0xff] 0.0
          %885 = vst [vmem:[#allocation2 + $0x270] sm:$0xff] 0.0
          %886 = vst [vmem:[#allocation2 + $0x278] sm:$0xff] 0.0
          %887 = vst [vmem:[#allocation2 + $0x280] sm:$0xff] 0.0
          %888 = vst [vmem:[#allocation2 + $0x288] sm:$0xff] 0.0
          %889 = vst [vmem:[#allocation2 + $0x290] sm:$0xff] 0.0
          %890 = vst [vmem:[#allocation2 + $0x298] sm:$0xff] 0.0
          %891 = vst [vmem:[#allocation2 + $0x2a0] sm:$0xff] 0.0
          %892 = vst [vmem:[#allocation2 + $0x2a8] sm:$0xff] 0.0
          %893 = vst [vmem:[#allocation2 + $0x2b0] sm:$0xff] 0.0
          %894 = vst [vmem:[#allocation2 + $0x2b8] sm:$0xff] 0.0
          %895 = vst [vmem:[#allocation2 + $0x2c0] sm:$0xff] 0.0
          %896 = vst [vmem:[#allocation2 + $0x2c8] sm:$0xff] 0.0
          %897 = vst [vmem:[#allocation2 + $0x2d0] sm:$0xff] 0.0
          %898 = vst [vmem:[#allocation2 + $0x2d8] sm:$0xff] 0.0
          %899 = vst [vmem:[#allocation2 + $0x2e0] sm:$0xff] 0.0
          %900 = vst [vmem:[#allocation2 + $0x2e8] sm:$0xff] 0.0
          %901 = vst [vmem:[#allocation2 + $0x2f0] sm:$0xff] 0.0
          %902 = vst [vmem:[#allocation2 + $0x2f8] sm:$0xff] 0.0
          %903 = vst [vmem:[#allocation2 + $0x300] sm:$0xff] 0.0
          %904 = vst [vmem:[#allocation2 + $0x308] sm:$0xff] 0.0
          %905 = vst [vmem:[#allocation2 + $0x310] sm:$0xff] 0.0
          %906 = vst [vmem:[#allocation2 + $0x318] sm:$0xff] 0.0
          %907 = vst [vmem:[#allocation2 + $0x320] sm:$0xff] 0.0
          %908 = vst [vmem:[#allocation2 + $0x328] sm:$0xff] 0.0
          %909 = vst [vmem:[#allocation2 + $0x330] sm:$0xff] 0.0
          %910 = vst [vmem:[#allocation2 + $0x338] sm:$0xff] 0.0
          %911 = vst [vmem:[#allocation2 + $0x340] sm:$0xff] 0.0
          %912 = vst [vmem:[#allocation2 + $0x348] sm:$0xff] 0.0
          %913 = vst [vmem:[#allocation2 + $0x350] sm:$0xff] 0.0
          %914 = vst [vmem:[#allocation2 + $0x358] sm:$0xff] 0.0
          %915 = vst [vmem:[#allocation2 + $0x360] sm:$0xff] 0.0
          %916 = vst [vmem:[#allocation2 + $0x368] sm:$0xff] 0.0
          %917 = vst [vmem:[#allocation2 + $0x370] sm:$0xff] 0.0
          %918 = vst [vmem:[#allocation2 + $0x378] sm:$0xff] 0.0
          %919 = vst [vmem:[#allocation2 + $0x380] sm:$0xff] 0.0
          %920 = vst [vmem:[#allocation2 + $0x388] sm:$0xff] 0.0
          %921 = vst [vmem:[#allocation2 + $0x390] sm:$0xff] 0.0
          %922 = vst [vmem:[#allocation2 + $0x398] sm:$0xff] 0.0
          %923 = vst [vmem:[#allocation2 + $0x3a0] sm:$0xff] 0.0
          %924 = vst [vmem:[#allocation2 + $0x3a8] sm:$0xff] 0.0
          %925 = vst [vmem:[#allocation2 + $0x3b0] sm:$0xff] 0.0
          %926 = vst [vmem:[#allocation2 + $0x3b8] sm:$0xff] 0.0
          %927 = vst [vmem:[#allocation2 + $0x3c0] sm:$0xff] 0.0
          %928 = vst [vmem:[#allocation2 + $0x3c8] sm:$0xff] 0.0
          %929 = vst [vmem:[#allocation2 + $0x3d0] sm:$0xff] 0.0
          %930 = vst [vmem:[#allocation2 + $0x3d8] sm:$0xff] 0.0
          %931 = vst [vmem:[#allocation2 + $0x3e0] sm:$0xff] 0.0
          %932 = vst [vmem:[#allocation2 + $0x3e8] sm:$0xff] 0.0
          %933 = vst [vmem:[#allocation2 + $0x3f0] sm:$0xff] 0.0
          %934 = vst [vmem:[#allocation2 + $0x3f8] sm:$0xff] 0.0
        $region77: #{convnet_forward.4} parent=68 // pred_fallthru
          _
        %v935 = vld [vmem:[%s788] sm:$0xf]
        %v936 = vld [vmem:[%s788 + $0x4] sm:$0xf]
        %v937 = vld [vmem:[%s788 + $0x8] sm:$0xf]
        %v938 = vld [vmem:[%s788 + $0xc] sm:$0xf]
        %v939 = vld [vmem:[%s788 + $0x10] sm:$0xf]
        %v940 = vld [vmem:[%s788 + $0x14] sm:$0xf]
        %v941 = vld [vmem:[%s788 + $0x18] sm:$0xf]
        %v942 = vld [vmem:[%s788 + $0x1c] sm:$0xf]
        %v943 = vld [vmem:[%s788 + $0x20] sm:$0xf]
        %v944 = vld [vmem:[%s788 + $0x24] sm:$0xf]
        %v945 = vld [vmem:[%s788 + $0x28] sm:$0xf]
        %v946 = vld [vmem:[%s788 + $0x2c] sm:$0xf]
        %v947 = vld [vmem:[%s788 + $0x30] sm:$0xf]
        %v948 = vld [vmem:[%s788 + $0x34] sm:$0xf]
        %v949 = vld [vmem:[%s788 + $0x38] sm:$0xf]
        %v950 = vld [vmem:[%s788 + $0x3c] sm:$0xf]
        %v951 = vld [vmem:[#allocation2] sm:$0xff]
        %v952 = vld [vmem:[#allocation2 + $0x8] sm:$0xff]
        %v953 = vld [vmem:[#allocation2 + $0x10] sm:$0xff]
        %v954 = vld [vmem:[#allocation2 + $0x18] sm:$0xff]
        %v955 = vld [vmem:[#allocation2 + $0x20] sm:$0xff]
        %v956 = vld [vmem:[#allocation2 + $0x28] sm:$0xff]
        %v957 = vld [vmem:[#allocation2 + $0x30] sm:$0xff]
        %v958 = vld [vmem:[#allocation2 + $0x38] sm:$0xff]
        %v959 = vld [vmem:[#allocation2 + $0x40] sm:$0xff]
        %v960 = vld [vmem:[#allocation2 + $0x48] sm:$0xff]
        %v961 = vld [vmem:[#allocation2 + $0x50] sm:$0xff]
        %v962 = vld [vmem:[#allocation2 + $0x58] sm:$0xff]
        %v963 = vld [vmem:[#allocation2 + $0x60] sm:$0xff]
        %v964 = vld [vmem:[#allocation2 + $0x68] sm:$0xff]
        %v965 = vld [vmem:[#allocation2 + $0x70] sm:$0xff]
        %v966 = vld [vmem:[#allocation2 + $0x78] sm:$0xff]
        %v967 = vld [vmem:[#allocation2 + $0x80] sm:$0xff]
        %v968 = vld [vmem:[#allocation2 + $0x88] sm:$0xff]
        %v969 = vld [vmem:[#allocation2 + $0x90] sm:$0xff]
        %v970 = vld [vmem:[#allocation2 + $0x98] sm:$0xff]
        %v971 = vld [vmem:[#allocation2 + $0xa0] sm:$0xff]
        %v972 = vld [vmem:[#allocation2 + $0xa8] sm:$0xff]
        %v973 = vld [vmem:[#allocation2 + $0xb0] sm:$0xff]
        %v974 = vld [vmem:[#allocation2 + $0xb8] sm:$0xff]
        %v975 = vld [vmem:[#allocation2 + $0xc0] sm:$0xff]
        %v976 = vld [vmem:[#allocation2 + $0xc8] sm:$0xff]
        %v977 = vld [vmem:[#allocation2 + $0xd0] sm:$0xff]
        %v978 = vld [vmem:[#allocation2 + $0xd8] sm:$0xff]
        %v979 = vld [vmem:[#allocation2 + $0xe0] sm:$0xff]
        %v980 = vld [vmem:[#allocation2 + $0xe8] sm:$0xff]
        %v981 = vld [vmem:[#allocation2 + $0xf0] sm:$0xff]
        %v982 = vld [vmem:[#allocation2 + $0xf8] sm:$0xff]
        %v983 = vld [vmem:[%s745] sm:$0xf]
        %v984 = vld [vmem:[%s745 + $0x4] sm:$0xf]
        %v985 = vld [vmem:[%s745 + $0x8] sm:$0xf]
        %v986 = vld [vmem:[%s745 + $0xc] sm:$0xf]
        %v987 = vld [vmem:[%s745 + $0x10] sm:$0xf]
        %v988 = vld [vmem:[%s745 + $0x14] sm:$0xf]
        %v989 = vld [vmem:[%s745 + $0x18] sm:$0xf]
        %v990 = vld [vmem:[%s745 + $0x1c] sm:$0xf]
        %v991 = vld [vmem:[%s745 + $0x20] sm:$0xf]
        %v992 = vld [vmem:[%s745 + $0x24] sm:$0xf]
        %v993 = vld [vmem:[%s745 + $0x28] sm:$0xf]
        %v994 = vld [vmem:[%s745 + $0x2c] sm:$0xf]
        %v995 = vld [vmem:[%s745 + $0x30] sm:$0xf]
        %v996 = vld [vmem:[%s745 + $0x34] sm:$0xf]
        %v997 = vld [vmem:[%s745 + $0x38] sm:$0xf]
        %v998 = vld [vmem:[%s745 + $0x3c] sm:$0xf]
        %v999 = vld [vmem:[%s745 + $0x40] sm:$0xf]
        %v1000 = vld [vmem:[%s745 + $0x44] sm:$0xf]
        %v1001 = vld [vmem:[%s745 + $0x48] sm:$0xf]
        %v1002 = vld [vmem:[%s745 + $0x4c] sm:$0xf]
        %v1003 = vld [vmem:[%s745 + $0x50] sm:$0xf]
        %v1004 = vld [vmem:[%s745 + $0x54] sm:$0xf]
        %v1005 = vld [vmem:[%s745 + $0x58] sm:$0xf]
        %v1006 = vld [vmem:[%s745 + $0x5c] sm:$0xf]
        %v1007 = vld [vmem:[%s745 + $0x60] sm:$0xf]
        %v1008 = vld [vmem:[%s745 + $0x64] sm:$0xf]
        %v1009 = vld [vmem:[%s745 + $0x68] sm:$0xf]
        %v1010 = vld [vmem:[%s745 + $0x6c] sm:$0xf]
        %v1011 = vld [vmem:[%s745 + $0x70] sm:$0xf]
        %v1012 = vld [vmem:[%s745 + $0x74] sm:$0xf]
        %v1013 = vld [vmem:[%s745 + $0x78] sm:$0xf]
        %v1014 = vld [vmem:[%s745 + $0x7c] sm:$0xf]
        %v1047 = vunpack.c.l.b16 %v983
        %v1048 = vunpack.c.l.b16 %v984
        %v1049 = vunpack.c.l.b16 %v985
        %v1050 = vunpack.c.l.b16 %v986
        %v1051 = vunpack.c.l.b16 %v987
        %v1052 = vunpack.c.l.b16 %v988
        %v1053 = vunpack.c.l.b16 %v989
        %v1054 = vunpack.c.l.b16 %v990
        %v1055 = vunpack.c.l.b16 %v991
        %v1056 = vunpack.c.l.b16 %v992
        %v1057 = vunpack.c.l.b16 %v993
        %v1058 = vunpack.c.l.b16 %v994
        %v1059 = vunpack.c.l.b16 %v995
        %v1060 = vunpack.c.l.b16 %v996
        %v1061 = vunpack.c.l.b16 %v997
        %v1062 = vunpack.c.l.b16 %v998
        %v1063 = vunpack.c.l.b16 %v999
        %v1064 = vunpack.c.l.b16 %v1000
        %v1065 = vunpack.c.l.b16 %v1001
        %v1066 = vunpack.c.l.b16 %v1002
        %v1067 = vunpack.c.l.b16 %v1003
        %v1068 = vunpack.c.l.b16 %v1004
        %v1069 = vunpack.c.l.b16 %v1005
        %v1070 = vunpack.c.l.b16 %v1006
        %v1071 = vunpack.c.l.b16 %v1007
        %v1072 = vunpack.c.l.b16 %v1008
        %v1073 = vunpack.c.l.b16 %v1009
        %v1074 = vunpack.c.l.b16 %v1010
        %v1075 = vunpack.c.l.b16 %v1011
        %v1076 = vunpack.c.l.b16 %v1012
        %v1077 = vunpack.c.l.b16 %v1013
        %v1078 = vunpack.c.l.b16 %v1014
        %v1079 = vpack.c.b16 %v1048, %v1047
        %v1080 = vpack.c.b16 %v1050, %v1049
        %v1081 = vpack.c.b16 %v1052, %v1051
        %v1082 = vpack.c.b16 %v1054, %v1053
        %v1083 = vpack.c.b16 %v1056, %v1055
        %v1084 = vpack.c.b16 %v1058, %v1057
        %v1085 = vpack.c.b16 %v1060, %v1059
        %v1086 = vpack.c.b16 %v1062, %v1061
        %v1087 = vpack.c.b16 %v1064, %v1063
        %v1088 = vpack.c.b16 %v1066, %v1065
        %v1089 = vpack.c.b16 %v1068, %v1067
        %v1090 = vpack.c.b16 %v1070, %v1069
        %v1091 = vpack.c.b16 %v1072, %v1071
        %v1092 = vpack.c.b16 %v1074, %v1073
        %v1093 = vpack.c.b16 %v1076, %v1075
        %v1094 = vpack.c.b16 %v1078, %v1077
        %v1127 = vunpack.c.l.b16 %v935
        %v1128 = vunpack.c.l.b16 %v936
        %v1129 = vunpack.c.l.b16 %v937
        %v1130 = vunpack.c.l.b16 %v938
        %v1131 = vunpack.c.l.b16 %v939
        %v1132 = vunpack.c.l.b16 %v940
        %v1133 = vunpack.c.l.b16 %v941
        %v1134 = vunpack.c.l.b16 %v942
        %v1135 = vunpack.c.l.b16 %v943
        %v1136 = vunpack.c.l.b16 %v944
        %v1137 = vunpack.c.l.b16 %v945
        %v1138 = vunpack.c.l.b16 %v946
        %v1139 = vunpack.c.l.b16 %v947
        %v1140 = vunpack.c.l.b16 %v948
        %v1141 = vunpack.c.l.b16 %v949
        %v1142 = vunpack.c.l.b16 %v950
        %v1143 = vpack.c.b16 %v1128, %v1127
        %v1144 = vpack.c.b16 %v1130, %v1129
        %v1145 = vpack.c.b16 %v1132, %v1131
        %v1146 = vpack.c.b16 %v1134, %v1133
        %v1147 = vpack.c.b16 %v1136, %v1135
        %v1148 = vpack.c.b16 %v1138, %v1137
        %v1149 = vpack.c.b16 %v1140, %v1139
        %v1150 = vpack.c.b16 %v1142, %v1141
        %1159 = vmatprep.subr.bf16.mxu0 0
        %1160 = vmatpush1.bf16.msra.mxu0 %v1150
        %1161 = vmatprep.subr.bf16.mxu0 0
        %1162 = vmatpush1.bf16.msra.mxu0 %v1149
        %1163 = vmatprep.subr.bf16.mxu0 0
        %1164 = vmatpush1.bf16.msra.mxu0 %v1148
        %1165 = vmatprep.subr.bf16.mxu0 0
        %1166 = vmatpush1.bf16.msra.mxu0 %v1147
        %1167 = vmatprep.subr.bf16.mxu0 0
        %1168 = vmatpush1.bf16.msra.mxu0 %v1146
        %1169 = vmatprep.subr.bf16.mxu0 0
        %1170 = vmatpush1.bf16.msra.mxu0 %v1145
        %1171 = vmatprep.subr.bf16.mxu0 0
        %1172 = vmatpush1.bf16.msra.mxu0 %v1144
        %1173 = vmatprep.subr.bf16.mxu0 0
        %1174 = vmatpush1.bf16.msra.mxu0 %v1143
        %1175 = vmatprep.subr.bf16.mxu0 0
        %1176 = vmatpush2.bf16.msra.mxu0 0
        %1177 = vmatprep.subr.bf16.mxu0 0
        %1178 = vmatpush2.bf16.msra.mxu0 0
        %1179 = vmatprep.subr.bf16.mxu0 0
        %1180 = vmatpush2.bf16.msra.mxu0 0
        %1181 = vmatprep.subr.bf16.mxu0 0
        %1182 = vmatpush2.bf16.msra.mxu0 0
        %1183 = vmatprep.subr.bf16.mxu0 0
        %1184 = vmatpush2.bf16.msra.mxu0 0
        %1185 = vmatprep.subr.bf16.mxu0 0
        %1186 = vmatpush2.bf16.msra.mxu0 0
        %1187 = vmatprep.subr.bf16.mxu0 0
        %1188 = vmatpush2.bf16.msra.mxu0 0
        %1189 = vmatprep.subr.bf16.mxu0 0
        %1190 = vmatpush2.bf16.msra.mxu0 0
        %1191 = vmatprep.mubr.bf16.mxu0 0
        %1192 = vmatmul.mubr.bf16.gmra.mxu0 %v1079
        %v1193 = vpop.f32.mrf.mxu0
        %v1194 = vadd.f32 0.0, %v1193
        %v1195 = vpop.f32.mrf.mxu0
        %v1196 = vpop.f32.mrf.mxu0
        %v1197 = vadd.f32 0.0, %v1196
        %v1198 = vpop.f32.mrf.mxu0
        %1199 = vmatprep.mubr.bf16.mxu0 0
        %1200 = vmatmul.mubr.bf16.gmra.mxu0 %v1080
        %v1201 = vpop.f32.mrf.mxu0
        %v1202 = vadd.f32 0.0, %v1201
        %v1203 = vpop.f32.mrf.mxu0
        %v1204 = vpop.f32.mrf.mxu0
        %v1205 = vadd.f32 0.0, %v1204
        %v1206 = vpop.f32.mrf.mxu0
        %1207 = vmatprep.mubr.bf16.mxu0 0
        %1208 = vmatmul.mubr.bf16.gmra.mxu0 %v1081
        %v1209 = vpop.f32.mrf.mxu0
        %v1210 = vadd.f32 0.0, %v1209
        %v1211 = vpop.f32.mrf.mxu0
        %v1212 = vpop.f32.mrf.mxu0
        %v1213 = vadd.f32 0.0, %v1212
        %v1214 = vpop.f32.mrf.mxu0
        %1215 = vmatprep.mubr.bf16.mxu0 0
        %1216 = vmatmul.mubr.bf16.gmra.mxu0 %v1082
        %v1217 = vpop.f32.mrf.mxu0
        %v1218 = vadd.f32 0.0, %v1217
        %v1219 = vpop.f32.mrf.mxu0
        %v1220 = vpop.f32.mrf.mxu0
        %v1221 = vadd.f32 0.0, %v1220
        %v1222 = vpop.f32.mrf.mxu0
        %1223 = vmatprep.mubr.bf16.mxu0 0
        %1224 = vmatmul.mubr.bf16.gmra.mxu0 %v1083
        %v1225 = vpop.f32.mrf.mxu0
        %v1226 = vadd.f32 0.0, %v1225
        %v1227 = vpop.f32.mrf.mxu0
        %v1228 = vpop.f32.mrf.mxu0
        %v1229 = vadd.f32 0.0, %v1228
        %v1230 = vpop.f32.mrf.mxu0
        %1231 = vmatprep.mubr.bf16.mxu0 0
        %1232 = vmatmul.mubr.bf16.gmra.mxu0 %v1084
        %v1233 = vpop.f32.mrf.mxu0
        %v1234 = vadd.f32 0.0, %v1233
        %v1235 = vpop.f32.mrf.mxu0
        %v1236 = vpop.f32.mrf.mxu0
        %v1237 = vadd.f32 0.0, %v1236
        %v1238 = vpop.f32.mrf.mxu0
        %1239 = vmatprep.mubr.bf16.mxu0 0
        %1240 = vmatmul.mubr.bf16.gmra.mxu0 %v1085
        %v1241 = vpop.f32.mrf.mxu0
        %v1242 = vadd.f32 0.0, %v1241
        %v1243 = vpop.f32.mrf.mxu0
        %v1244 = vpop.f32.mrf.mxu0
        %v1245 = vadd.f32 0.0, %v1244
        %v1246 = vpop.f32.mrf.mxu0
        %1247 = vmatprep.mubr.bf16.mxu0 0
        %1248 = vmatmul.mubr.bf16.gmra.mxu0 %v1086
        %v1249 = vpop.f32.mrf.mxu0
        %v1250 = vadd.f32 0.0, %v1249
        %v1251 = vpop.f32.mrf.mxu0
        %v1252 = vpop.f32.mrf.mxu0
        %v1253 = vadd.f32 0.0, %v1252
        %v1254 = vpop.f32.mrf.mxu0
        %1255 = vmatprep.mubr.bf16.mxu0 0
        %1256 = vmatmul.mubr.bf16.gmra.mxu0 %v1087
        %v1257 = vpop.f32.mrf.mxu0
        %v1258 = vadd.f32 0.0, %v1257
        %v1259 = vpop.f32.mrf.mxu0
        %v1260 = vpop.f32.mrf.mxu0
        %v1261 = vadd.f32 0.0, %v1260
        %v1262 = vpop.f32.mrf.mxu0
        %1263 = vmatprep.mubr.bf16.mxu0 0
        %1264 = vmatmul.mubr.bf16.gmra.mxu0 %v1088
        %v1265 = vpop.f32.mrf.mxu0
        %v1266 = vadd.f32 0.0, %v1265
        %v1267 = vpop.f32.mrf.mxu0
        %v1268 = vpop.f32.mrf.mxu0
        %v1269 = vadd.f32 0.0, %v1268
        %v1270 = vpop.f32.mrf.mxu0
        %1271 = vmatprep.mubr.bf16.mxu0 0
        %1272 = vmatmul.mubr.bf16.gmra.mxu0 %v1089
        %v1273 = vpop.f32.mrf.mxu0
        %v1274 = vadd.f32 0.0, %v1273
        %v1275 = vpop.f32.mrf.mxu0
        %v1276 = vpop.f32.mrf.mxu0
        %v1277 = vadd.f32 0.0, %v1276
        %v1278 = vpop.f32.mrf.mxu0
        %1279 = vmatprep.mubr.bf16.mxu0 0
        %1280 = vmatmul.mubr.bf16.gmra.mxu0 %v1090
        %v1281 = vpop.f32.mrf.mxu0
        %v1282 = vadd.f32 0.0, %v1281
        %v1283 = vpop.f32.mrf.mxu0
        %v1284 = vpop.f32.mrf.mxu0
        %v1285 = vadd.f32 0.0, %v1284
        %v1286 = vpop.f32.mrf.mxu0
        %1287 = vmatprep.mubr.bf16.mxu0 0
        %1288 = vmatmul.mubr.bf16.gmra.mxu0 %v1091
        %v1289 = vpop.f32.mrf.mxu0
        %v1290 = vadd.f32 0.0, %v1289
        %v1291 = vpop.f32.mrf.mxu0
        %v1292 = vpop.f32.mrf.mxu0
        %v1293 = vadd.f32 0.0, %v1292
        %v1294 = vpop.f32.mrf.mxu0
        %1295 = vmatprep.mubr.bf16.mxu0 0
        %1296 = vmatmul.mubr.bf16.gmra.mxu0 %v1092
        %v1297 = vpop.f32.mrf.mxu0
        %v1298 = vadd.f32 0.0, %v1297
        %v1299 = vpop.f32.mrf.mxu0
        %v1300 = vpop.f32.mrf.mxu0
        %v1301 = vadd.f32 0.0, %v1300
        %v1302 = vpop.f32.mrf.mxu0
        %1303 = vmatprep.mubr.bf16.mxu0 0
        %1304 = vmatmul.mubr.bf16.gmra.mxu0 %v1093
        %v1305 = vpop.f32.mrf.mxu0
        %v1306 = vadd.f32 0.0, %v1305
        %v1307 = vpop.f32.mrf.mxu0
        %v1308 = vpop.f32.mrf.mxu0
        %v1309 = vadd.f32 0.0, %v1308
        %v1310 = vpop.f32.mrf.mxu0
        %1311 = vmatprep.mubr.bf16.mxu0 0
        %1312 = vmatmul.mubr.bf16.gmra.mxu0 %v1094
        %v1313 = vpop.f32.mrf.mxu0
        %v1314 = vadd.f32 0.0, %v1313
        %v1315 = vpop.f32.mrf.mxu0
        %v1316 = vpop.f32.mrf.mxu0
        %v1317 = vadd.f32 0.0, %v1316
        %v1318 = vpop.f32.mrf.mxu0
        %1319 = vdwg.mxu0
        %v1320 = vadd.f32 %v951, %v1194
        %v1321 = vadd.f32 %v952, %v1197
        %v1322 = vadd.f32 %v953, %v1202
        %v1323 = vadd.f32 %v954, %v1205
        %v1324 = vadd.f32 %v955, %v1210
        %v1325 = vadd.f32 %v956, %v1213
        %v1326 = vadd.f32 %v957, %v1218
        %v1327 = vadd.f32 %v958, %v1221
        %v1328 = vadd.f32 %v959, %v1226
        %v1329 = vadd.f32 %v960, %v1229
        %v1330 = vadd.f32 %v961, %v1234
        %v1331 = vadd.f32 %v962, %v1237
        %v1332 = vadd.f32 %v963, %v1242
        %v1333 = vadd.f32 %v964, %v1245
        %v1334 = vadd.f32 %v965, %v1250
        %v1335 = vadd.f32 %v966, %v1253
        %v1336 = vadd.f32 %v967, %v1258
        %v1337 = vadd.f32 %v968, %v1261
        %v1338 = vadd.f32 %v969, %v1266
        %v1339 = vadd.f32 %v970, %v1269
        %v1340 = vadd.f32 %v971, %v1274
        %v1341 = vadd.f32 %v972, %v1277
        %v1342 = vadd.f32 %v973, %v1282
        %v1343 = vadd.f32 %v974, %v1285
        %v1344 = vadd.f32 %v975, %v1290
        %v1345 = vadd.f32 %v976, %v1293
        %v1346 = vadd.f32 %v977, %v1298
        %v1347 = vadd.f32 %v978, %v1301
        %v1348 = vadd.f32 %v979, %v1306
        %v1349 = vadd.f32 %v980, %v1309
        %v1350 = vadd.f32 %v981, %v1314
        %v1351 = vadd.f32 %v982, %v1317
        %1352 = vst [vmem:[#allocation2] sm:$0xff] %v1320
        %1353 = vst [vmem:[#allocation2 + $0x8] sm:$0xff] %v1321
        %1354 = vst [vmem:[#allocation2 + $0x10] sm:$0xff] %v1322
        %1355 = vst [vmem:[#allocation2 + $0x18] sm:$0xff] %v1323
        %1356 = vst [vmem:[#allocation2 + $0x20] sm:$0xff] %v1324
        %1357 = vst [vmem:[#allocation2 + $0x28] sm:$0xff] %v1325
        %1358 = vst [vmem:[#allocation2 + $0x30] sm:$0xff] %v1326
        %1359 = vst [vmem:[#allocation2 + $0x38] sm:$0xff] %v1327
        %1360 = vst [vmem:[#allocation2 + $0x40] sm:$0xff] %v1328
        %1361 = vst [vmem:[#allocation2 + $0x48] sm:$0xff] %v1329
        %1362 = vst [vmem:[#allocation2 + $0x50] sm:$0xff] %v1330
        %1363 = vst [vmem:[#allocation2 + $0x58] sm:$0xff] %v1331
        %1364 = vst [vmem:[#allocation2 + $0x60] sm:$0xff] %v1332
        %1365 = vst [vmem:[#allocation2 + $0x68] sm:$0xff] %v1333
        %1366 = vst [vmem:[#allocation2 + $0x70] sm:$0xff] %v1334
        %1367 = vst [vmem:[#allocation2 + $0x78] sm:$0xff] %v1335
        %1368 = vst [vmem:[#allocation2 + $0x80] sm:$0xff] %v1336
        %1369 = vst [vmem:[#allocation2 + $0x88] sm:$0xff] %v1337
        %1370 = vst [vmem:[#allocation2 + $0x90] sm:$0xff] %v1338
        %1371 = vst [vmem:[#allocation2 + $0x98] sm:$0xff] %v1339
        %1372 = vst [vmem:[#allocation2 + $0xa0] sm:$0xff] %v1340
        %1373 = vst [vmem:[#allocation2 + $0xa8] sm:$0xff] %v1341
        %1374 = vst [vmem:[#allocation2 + $0xb0] sm:$0xff] %v1342
        %1375 = vst [vmem:[#allocation2 + $0xb8] sm:$0xff] %v1343
        %1376 = vst [vmem:[#allocation2 + $0xc0] sm:$0xff] %v1344
        %1377 = vst [vmem:[#allocation2 + $0xc8] sm:$0xff] %v1345
        %1378 = vst [vmem:[#allocation2 + $0xd0] sm:$0xff] %v1346
        %1379 = vst [vmem:[#allocation2 + $0xd8] sm:$0xff] %v1347
        %1380 = vst [vmem:[#allocation2 + $0xe0] sm:$0xff] %v1348
        %1381 = vst [vmem:[#allocation2 + $0xe8] sm:$0xff] %v1349
        %1382 = vst [vmem:[#allocation2 + $0xf0] sm:$0xff] %v1350
        %1383 = vst [vmem:[#allocation2 + $0xf8] sm:$0xff] %v1351
        %s1384 = scalar_lea.vmem [#allocation2], 256
        %v1385 = vld [vmem:[%s1384] sm:$0xff]
        %v1386 = vld [vmem:[%s1384 + $0x8] sm:$0xff]
        %v1387 = vld [vmem:[%s1384 + $0x10] sm:$0xff]
        %v1388 = vld [vmem:[%s1384 + $0x18] sm:$0xff]
        %v1389 = vld [vmem:[%s1384 + $0x20] sm:$0xff]
        %v1390 = vld [vmem:[%s1384 + $0x28] sm:$0xff]
        %v1391 = vld [vmem:[%s1384 + $0x30] sm:$0xff]
        %v1392 = vld [vmem:[%s1384 + $0x38] sm:$0xff]
        %v1393 = vld [vmem:[%s1384 + $0x40] sm:$0xff]
        %v1394 = vld [vmem:[%s1384 + $0x48] sm:$0xff]
        %v1395 = vld [vmem:[%s1384 + $0x50] sm:$0xff]
        %v1396 = vld [vmem:[%s1384 + $0x58] sm:$0xff]
        %v1397 = vld [vmem:[%s1384 + $0x60] sm:$0xff]
        %v1398 = vld [vmem:[%s1384 + $0x68] sm:$0xff]
        %v1399 = vld [vmem:[%s1384 + $0x70] sm:$0xff]
        %v1400 = vld [vmem:[%s1384 + $0x78] sm:$0xff]
        %v1401 = vld [vmem:[%s1384 + $0x80] sm:$0xff]
        %v1402 = vld [vmem:[%s1384 + $0x88] sm:$0xff]
        %v1403 = vld [vmem:[%s1384 + $0x90] sm:$0xff]
        %v1404 = vld [vmem:[%s1384 + $0x98] sm:$0xff]
        %v1405 = vld [vmem:[%s1384 + $0xa0] sm:$0xff]
        %v1406 = vld [vmem:[%s1384 + $0xa8] sm:$0xff]
        %v1407 = vld [vmem:[%s1384 + $0xb0] sm:$0xff]
        %v1408 = vld [vmem:[%s1384 + $0xb8] sm:$0xff]
        %v1409 = vld [vmem:[%s1384 + $0xc0] sm:$0xff]
        %v1410 = vld [vmem:[%s1384 + $0xc8] sm:$0xff]
        %v1411 = vld [vmem:[%s1384 + $0xd0] sm:$0xff]
        %v1412 = vld [vmem:[%s1384 + $0xd8] sm:$0xff]
        %v1413 = vld [vmem:[%s1384 + $0xe0] sm:$0xff]
        %v1414 = vld [vmem:[%s1384 + $0xe8] sm:$0xff]
        %v1415 = vld [vmem:[%s1384 + $0xf0] sm:$0xff]
        %v1416 = vld [vmem:[%s1384 + $0xf8] sm:$0xff]
        %s1417 = scalar_lea.vmem %s745, 128 [#allocation3]
        %v1418 = vld [vmem:[%s1417] sm:$0xf]
        %v1419 = vld [vmem:[%s1417 + $0x4] sm:$0xf]
        %v1420 = vld [vmem:[%s1417 + $0x8] sm:$0xf]
        %v1421 = vld [vmem:[%s1417 + $0xc] sm:$0xf]
        %v1422 = vld [vmem:[%s1417 + $0x10] sm:$0xf]
        %v1423 = vld [vmem:[%s1417 + $0x14] sm:$0xf]
        %v1424 = vld [vmem:[%s1417 + $0x18] sm:$0xf]
        %v1425 = vld [vmem:[%s1417 + $0x1c] sm:$0xf]
        %v1426 = vld [vmem:[%s1417 + $0x20] sm:$0xf]
        %v1427 = vld [vmem:[%s1417 + $0x24] sm:$0xf]
        %v1428 = vld [vmem:[%s1417 + $0x28] sm:$0xf]
        %v1429 = vld [vmem:[%s1417 + $0x2c] sm:$0xf]
        %v1430 = vld [vmem:[%s1417 + $0x30] sm:$0xf]
        %v1431 = vld [vmem:[%s1417 + $0x34] sm:$0xf]
        %v1432 = vld [vmem:[%s1417 + $0x38] sm:$0xf]
        %v1433 = vld [vmem:[%s1417 + $0x3c] sm:$0xf]
        %v1434 = vld [vmem:[%s1417 + $0x40] sm:$0xf]
        %v1435 = vld [vmem:[%s1417 + $0x44] sm:$0xf]
        %v1436 = vld [vmem:[%s1417 + $0x48] sm:$0xf]
        %v1437 = vld [vmem:[%s1417 + $0x4c] sm:$0xf]
        %v1438 = vld [vmem:[%s1417 + $0x50] sm:$0xf]
        %v1439 = vld [vmem:[%s1417 + $0x54] sm:$0xf]
        %v1440 = vld [vmem:[%s1417 + $0x58] sm:$0xf]
        %v1441 = vld [vmem:[%s1417 + $0x5c] sm:$0xf]
        %v1442 = vld [vmem:[%s1417 + $0x60] sm:$0xf]
        %v1443 = vld [vmem:[%s1417 + $0x64] sm:$0xf]
        %v1444 = vld [vmem:[%s1417 + $0x68] sm:$0xf]
        %v1445 = vld [vmem:[%s1417 + $0x6c] sm:$0xf]
        %v1446 = vld [vmem:[%s1417 + $0x70] sm:$0xf]
        %v1447 = vld [vmem:[%s1417 + $0x74] sm:$0xf]
        %v1448 = vld [vmem:[%s1417 + $0x78] sm:$0xf]
        %v1449 = vld [vmem:[%s1417 + $0x7c] sm:$0xf]
        %v1482 = vunpack.c.l.b16 %v1418
        %v1483 = vunpack.c.l.b16 %v1419
        %v1484 = vunpack.c.l.b16 %v1420
        %v1485 = vunpack.c.l.b16 %v1421
        %v1486 = vunpack.c.l.b16 %v1422
        %v1487 = vunpack.c.l.b16 %v1423
        %v1488 = vunpack.c.l.b16 %v1424
        %v1489 = vunpack.c.l.b16 %v1425
        %v1490 = vunpack.c.l.b16 %v1426
        %v1491 = vunpack.c.l.b16 %v1427
        %v1492 = vunpack.c.l.b16 %v1428
        %v1493 = vunpack.c.l.b16 %v1429
        %v1494 = vunpack.c.l.b16 %v1430
        %v1495 = vunpack.c.l.b16 %v1431
        %v1496 = vunpack.c.l.b16 %v1432
        %v1497 = vunpack.c.l.b16 %v1433
        %v1498 = vunpack.c.l.b16 %v1434
        %v1499 = vunpack.c.l.b16 %v1435
        %v1500 = vunpack.c.l.b16 %v1436
        %v1501 = vunpack.c.l.b16 %v1437
        %v1502 = vunpack.c.l.b16 %v1438
        %v1503 = vunpack.c.l.b16 %v1439
        %v1504 = vunpack.c.l.b16 %v1440
        %v1505 = vunpack.c.l.b16 %v1441
        %v1506 = vunpack.c.l.b16 %v1442
        %v1507 = vunpack.c.l.b16 %v1443
        %v1508 = vunpack.c.l.b16 %v1444
        %v1509 = vunpack.c.l.b16 %v1445
        %v1510 = vunpack.c.l.b16 %v1446
        %v1511 = vunpack.c.l.b16 %v1447
        %v1512 = vunpack.c.l.b16 %v1448
        %v1513 = vunpack.c.l.b16 %v1449
        %v1514 = vpack.c.b16 %v1483, %v1482
        %v1515 = vpack.c.b16 %v1485, %v1484
        %v1516 = vpack.c.b16 %v1487, %v1486
        %v1517 = vpack.c.b16 %v1489, %v1488
        %v1518 = vpack.c.b16 %v1491, %v1490
        %v1519 = vpack.c.b16 %v1493, %v1492
        %v1520 = vpack.c.b16 %v1495, %v1494
        %v1521 = vpack.c.b16 %v1497, %v1496
        %v1522 = vpack.c.b16 %v1499, %v1498
        %v1523 = vpack.c.b16 %v1501, %v1500
        %v1524 = vpack.c.b16 %v1503, %v1502
        %v1525 = vpack.c.b16 %v1505, %v1504
        %v1526 = vpack.c.b16 %v1507, %v1506
        %v1527 = vpack.c.b16 %v1509, %v1508
        %v1528 = vpack.c.b16 %v1511, %v1510
        %v1529 = vpack.c.b16 %v1513, %v1512
        %1546 = vmatprep.subr.bf16.mxu0 0
        %1547 = vmatpush1.bf16.msra.mxu0 %v1150
        %1548 = vmatprep.subr.bf16.mxu0 0
        %1549 = vmatpush1.bf16.msra.mxu0 %v1149
        %1550 = vmatprep.subr.bf16.mxu0 0
        %1551 = vmatpush1.bf16.msra.mxu0 %v1148
        %1552 = vmatprep.subr.bf16.mxu0 0
        %1553 = vmatpush1.bf16.msra.mxu0 %v1147
        %1554 = vmatprep.subr.bf16.mxu0 0
        %1555 = vmatpush1.bf16.msra.mxu0 %v1146
        %1556 = vmatprep.subr.bf16.mxu0 0
        %1557 = vmatpush1.bf16.msra.mxu0 %v1145
        %1558 = vmatprep.subr.bf16.mxu0 0
        %1559 = vmatpush1.bf16.msra.mxu0 %v1144
        %1560 = vmatprep.subr.bf16.mxu0 0
        %1561 = vmatpush1.bf16.msra.mxu0 %v1143
        %1562 = vmatprep.subr.bf16.mxu0 0
        %1563 = vmatpush2.bf16.msra.mxu0 0
        %1564 = vmatprep.subr.bf16.mxu0 0
        %1565 = vmatpush2.bf16.msra.mxu0 0
        %1566 = vmatprep.subr.bf16.mxu0 0
        %1567 = vmatpush2.bf16.msra.mxu0 0
        %1568 = vmatprep.subr.bf16.mxu0 0
        %1569 = vmatpush2.bf16.msra.mxu0 0
        %1570 = vmatprep.subr.bf16.mxu0 0
        %1571 = vmatpush2.bf16.msra.mxu0 0
        %1572 = vmatprep.subr.bf16.mxu0 0
        %1573 = vmatpush2.bf16.msra.mxu0 0
        %1574 = vmatprep.subr.bf16.mxu0 0
        %1575 = vmatpush2.bf16.msra.mxu0 0
        %1576 = vmatprep.subr.bf16.mxu0 0
        %1577 = vmatpush2.bf16.msra.mxu0 0
        %1578 = vmatprep.mubr.bf16.mxu0 0
        %1579 = vmatmul.mubr.bf16.gmra.mxu0 %v1514
        %v1580 = vpop.f32.mrf.mxu0
        %v1581 = vadd.f32 0.0, %v1580
        %v1582 = vpop.f32.mrf.mxu0
        %v1583 = vpop.f32.mrf.mxu0
        %v1584 = vadd.f32 0.0, %v1583
        %v1585 = vpop.f32.mrf.mxu0
        %1586 = vmatprep.mubr.bf16.mxu0 0
        %1587 = vmatmul.mubr.bf16.gmra.mxu0 %v1515
        %v1588 = vpop.f32.mrf.mxu0
        %v1589 = vadd.f32 0.0, %v1588
        %v1590 = vpop.f32.mrf.mxu0
        %v1591 = vpop.f32.mrf.mxu0
        %v1592 = vadd.f32 0.0, %v1591
        %v1593 = vpop.f32.mrf.mxu0
        %1594 = vmatprep.mubr.bf16.mxu0 0
        %1595 = vmatmul.mubr.bf16.gmra.mxu0 %v1516
        %v1596 = vpop.f32.mrf.mxu0
        %v1597 = vadd.f32 0.0, %v1596
        %v1598 = vpop.f32.mrf.mxu0
        %v1599 = vpop.f32.mrf.mxu0
        %v1600 = vadd.f32 0.0, %v1599
        %v1601 = vpop.f32.mrf.mxu0
        %1602 = vmatprep.mubr.bf16.mxu0 0
        %1603 = vmatmul.mubr.bf16.gmra.mxu0 %v1517
        %v1604 = vpop.f32.mrf.mxu0
        %v1605 = vadd.f32 0.0, %v1604
        %v1606 = vpop.f32.mrf.mxu0
        %v1607 = vpop.f32.mrf.mxu0
        %v1608 = vadd.f32 0.0, %v1607
        %v1609 = vpop.f32.mrf.mxu0
        %1610 = vmatprep.mubr.bf16.mxu0 0
        %1611 = vmatmul.mubr.bf16.gmra.mxu0 %v1518
        %v1612 = vpop.f32.mrf.mxu0
        %v1613 = vadd.f32 0.0, %v1612
        %v1614 = vpop.f32.mrf.mxu0
        %v1615 = vpop.f32.mrf.mxu0
        %v1616 = vadd.f32 0.0, %v1615
        %v1617 = vpop.f32.mrf.mxu0
        %1618 = vmatprep.mubr.bf16.mxu0 0
        %1619 = vmatmul.mubr.bf16.gmra.mxu0 %v1519
        %v1620 = vpop.f32.mrf.mxu0
        %v1621 = vadd.f32 0.0, %v1620
        %v1622 = vpop.f32.mrf.mxu0
        %v1623 = vpop.f32.mrf.mxu0
        %v1624 = vadd.f32 0.0, %v1623
        %v1625 = vpop.f32.mrf.mxu0
        %1626 = vmatprep.mubr.bf16.mxu0 0
        %1627 = vmatmul.mubr.bf16.gmra.mxu0 %v1520
        %v1628 = vpop.f32.mrf.mxu0
        %v1629 = vadd.f32 0.0, %v1628
        %v1630 = vpop.f32.mrf.mxu0
        %v1631 = vpop.f32.mrf.mxu0
        %v1632 = vadd.f32 0.0, %v1631
        %v1633 = vpop.f32.mrf.mxu0
        %1634 = vmatprep.mubr.bf16.mxu0 0
        %1635 = vmatmul.mubr.bf16.gmra.mxu0 %v1521
        %v1636 = vpop.f32.mrf.mxu0
        %v1637 = vadd.f32 0.0, %v1636
        %v1638 = vpop.f32.mrf.mxu0
        %v1639 = vpop.f32.mrf.mxu0
        %v1640 = vadd.f32 0.0, %v1639
        %v1641 = vpop.f32.mrf.mxu0
        %1642 = vmatprep.mubr.bf16.mxu0 0
        %1643 = vmatmul.mubr.bf16.gmra.mxu0 %v1522
        %v1644 = vpop.f32.mrf.mxu0
        %v1645 = vadd.f32 0.0, %v1644
        %v1646 = vpop.f32.mrf.mxu0
        %v1647 = vpop.f32.mrf.mxu0
        %v1648 = vadd.f32 0.0, %v1647
        %v1649 = vpop.f32.mrf.mxu0
        %1650 = vmatprep.mubr.bf16.mxu0 0
        %1651 = vmatmul.mubr.bf16.gmra.mxu0 %v1523
        %v1652 = vpop.f32.mrf.mxu0
        %v1653 = vadd.f32 0.0, %v1652
        %v1654 = vpop.f32.mrf.mxu0
        %v1655 = vpop.f32.mrf.mxu0
        %v1656 = vadd.f32 0.0, %v1655
        %v1657 = vpop.f32.mrf.mxu0
        %1658 = vmatprep.mubr.bf16.mxu0 0
        %1659 = vmatmul.mubr.bf16.gmra.mxu0 %v1524
        %v1660 = vpop.f32.mrf.mxu0
        %v1661 = vadd.f32 0.0, %v1660
        %v1662 = vpop.f32.mrf.mxu0
        %v1663 = vpop.f32.mrf.mxu0
        %v1664 = vadd.f32 0.0, %v1663
        %v1665 = vpop.f32.mrf.mxu0
        %1666 = vmatprep.mubr.bf16.mxu0 0
        %1667 = vmatmul.mubr.bf16.gmra.mxu0 %v1525
        %v1668 = vpop.f32.mrf.mxu0
        %v1669 = vadd.f32 0.0, %v1668
        %v1670 = vpop.f32.mrf.mxu0
        %v1671 = vpop.f32.mrf.mxu0
        %v1672 = vadd.f32 0.0, %v1671
        %v1673 = vpop.f32.mrf.mxu0
        %1674 = vmatprep.mubr.bf16.mxu0 0
        %1675 = vmatmul.mubr.bf16.gmra.mxu0 %v1526
        %v1676 = vpop.f32.mrf.mxu0
        %v1677 = vadd.f32 0.0, %v1676
        %v1678 = vpop.f32.mrf.mxu0
        %v1679 = vpop.f32.mrf.mxu0
        %v1680 = vadd.f32 0.0, %v1679
        %v1681 = vpop.f32.mrf.mxu0
        %1682 = vmatprep.mubr.bf16.mxu0 0
        %1683 = vmatmul.mubr.bf16.gmra.mxu0 %v1527
        %v1684 = vpop.f32.mrf.mxu0
        %v1685 = vadd.f32 0.0, %v1684
        %v1686 = vpop.f32.mrf.mxu0
        %v1687 = vpop.f32.mrf.mxu0
        %v1688 = vadd.f32 0.0, %v1687
        %v1689 = vpop.f32.mrf.mxu0
        %1690 = vmatprep.mubr.bf16.mxu0 0
        %1691 = vmatmul.mubr.bf16.gmra.mxu0 %v1528
        %v1692 = vpop.f32.mrf.mxu0
        %v1693 = vadd.f32 0.0, %v1692
        %v1694 = vpop.f32.mrf.mxu0
        %v1695 = vpop.f32.mrf.mxu0
        %v1696 = vadd.f32 0.0, %v1695
        %v1697 = vpop.f32.mrf.mxu0
        %1698 = vmatprep.mubr.bf16.mxu0 0
        %1699 = vmatmul.mubr.bf16.gmra.mxu0 %v1529
        %v1700 = vpop.f32.mrf.mxu0
        %v1701 = vadd.f32 0.0, %v1700
        %v1702 = vpop.f32.mrf.mxu0
        %v1703 = vpop.f32.mrf.mxu0
        %v1704 = vadd.f32 0.0, %v1703
        %v1705 = vpop.f32.mrf.mxu0
        %1706 = vdwg.mxu0
        %v1707 = vadd.f32 %v1385, %v1581
        %v1708 = vadd.f32 %v1386, %v1584
        %v1709 = vadd.f32 %v1387, %v1589
        %v1710 = vadd.f32 %v1388, %v1592
        %v1711 = vadd.f32 %v1389, %v1597
        %v1712 = vadd.f32 %v1390, %v1600
        %v1713 = vadd.f32 %v1391, %v1605
        %v1714 = vadd.f32 %v1392, %v1608
        %v1715 = vadd.f32 %v1393, %v1613
        %v1716 = vadd.f32 %v1394, %v1616
        %v1717 = vadd.f32 %v1395, %v1621
        %v1718 = vadd.f32 %v1396, %v1624
        %v1719 = vadd.f32 %v1397, %v1629
        %v1720 = vadd.f32 %v1398, %v1632
        %v1721 = vadd.f32 %v1399, %v1637
        %v1722 = vadd.f32 %v1400, %v1640
        %v1723 = vadd.f32 %v1401, %v1645
        %v1724 = vadd.f32 %v1402, %v1648
        %v1725 = vadd.f32 %v1403, %v1653
        %v1726 = vadd.f32 %v1404, %v1656
        %v1727 = vadd.f32 %v1405, %v1661
        %v1728 = vadd.f32 %v1406, %v1664
        %v1729 = vadd.f32 %v1407, %v1669
        %v1730 = vadd.f32 %v1408, %v1672
        %v1731 = vadd.f32 %v1409, %v1677
        %v1732 = vadd.f32 %v1410, %v1680
        %v1733 = vadd.f32 %v1411, %v1685
        %v1734 = vadd.f32 %v1412, %v1688
        %v1735 = vadd.f32 %v1413, %v1693
        %v1736 = vadd.f32 %v1414, %v1696
        %v1737 = vadd.f32 %v1415, %v1701
        %v1738 = vadd.f32 %v1416, %v1704
        %1739 = vst [vmem:[%s1384] sm:$0xff] %v1707
        %1740 = vst [vmem:[%s1384 + $0x8] sm:$0xff] %v1708
        %1741 = vst [vmem:[%s1384 + $0x10] sm:$0xff] %v1709
        %1742 = vst [vmem:[%s1384 + $0x18] sm:$0xff] %v1710
        %1743 = vst [vmem:[%s1384 + $0x20] sm:$0xff] %v1711
        %1744 = vst [vmem:[%s1384 + $0x28] sm:$0xff] %v1712
        %1745 = vst [vmem:[%s1384 + $0x30] sm:$0xff] %v1713
        %1746 = vst [vmem:[%s1384 + $0x38] sm:$0xff] %v1714
        %1747 = vst [vmem:[%s1384 + $0x40] sm:$0xff] %v1715
        %1748 = vst [vmem:[%s1384 + $0x48] sm:$0xff] %v1716
        %1749 = vst [vmem:[%s1384 + $0x50] sm:$0xff] %v1717
        %1750 = vst [vmem:[%s1384 + $0x58] sm:$0xff] %v1718
        %1751 = vst [vmem:[%s1384 + $0x60] sm:$0xff] %v1719
        %1752 = vst [vmem:[%s1384 + $0x68] sm:$0xff] %v1720
        %1753 = vst [vmem:[%s1384 + $0x70] sm:$0xff] %v1721
        %1754 = vst [vmem:[%s1384 + $0x78] sm:$0xff] %v1722
        %1755 = vst [vmem:[%s1384 + $0x80] sm:$0xff] %v1723
        %1756 = vst [vmem:[%s1384 + $0x88] sm:$0xff] %v1724
        %1757 = vst [vmem:[%s1384 + $0x90] sm:$0xff] %v1725
        %1758 = vst [vmem:[%s1384 + $0x98] sm:$0xff] %v1726
        %1759 = vst [vmem:[%s1384 + $0xa0] sm:$0xff] %v1727
        %1760 = vst [vmem:[%s1384 + $0xa8] sm:$0xff] %v1728
        %1761 = vst [vmem:[%s1384 + $0xb0] sm:$0xff] %v1729
        %1762 = vst [vmem:[%s1384 + $0xb8] sm:$0xff] %v1730
        %1763 = vst [vmem:[%s1384 + $0xc0] sm:$0xff] %v1731
        %1764 = vst [vmem:[%s1384 + $0xc8] sm:$0xff] %v1732
        %1765 = vst [vmem:[%s1384 + $0xd0] sm:$0xff] %v1733
        %1766 = vst [vmem:[%s1384 + $0xd8] sm:$0xff] %v1734
        %1767 = vst [vmem:[%s1384 + $0xe0] sm:$0xff] %v1735
        %1768 = vst [vmem:[%s1384 + $0xe8] sm:$0xff] %v1736
        %1769 = vst [vmem:[%s1384 + $0xf0] sm:$0xff] %v1737
        %1770 = vst [vmem:[%s1384 + $0xf8] sm:$0xff] %v1738
        %s1771 = scalar_lea.vmem [#allocation2], 512
        %v1772 = vld [vmem:[%s1771] sm:$0xff]
        %v1773 = vld [vmem:[%s1771 + $0x8] sm:$0xff]
        %v1774 = vld [vmem:[%s1771 + $0x10] sm:$0xff]
        %v1775 = vld [vmem:[%s1771 + $0x18] sm:$0xff]
        %v1776 = vld [vmem:[%s1771 + $0x20] sm:$0xff]
        %v1777 = vld [vmem:[%s1771 + $0x28] sm:$0xff]
        %v1778 = vld [vmem:[%s1771 + $0x30] sm:$0xff]
        %v1779 = vld [vmem:[%s1771 + $0x38] sm:$0xff]
        %v1780 = vld [vmem:[%s1771 + $0x40] sm:$0xff]
        %v1781 = vld [vmem:[%s1771 + $0x48] sm:$0xff]
        %v1782 = vld [vmem:[%s1771 + $0x50] sm:$0xff]
        %v1783 = vld [vmem:[%s1771 + $0x58] sm:$0xff]
        %v1784 = vld [vmem:[%s1771 + $0x60] sm:$0xff]
        %v1785 = vld [vmem:[%s1771 + $0x68] sm:$0xff]
        %v1786 = vld [vmem:[%s1771 + $0x70] sm:$0xff]
        %v1787 = vld [vmem:[%s1771 + $0x78] sm:$0xff]
        %v1788 = vld [vmem:[%s1771 + $0x80] sm:$0xff]
        %v1789 = vld [vmem:[%s1771 + $0x88] sm:$0xff]
        %v1790 = vld [vmem:[%s1771 + $0x90] sm:$0xff]
        %v1791 = vld [vmem:[%s1771 + $0x98] sm:$0xff]
        %v1792 = vld [vmem:[%s1771 + $0xa0] sm:$0xff]
        %v1793 = vld [vmem:[%s1771 + $0xa8] sm:$0xff]
        %v1794 = vld [vmem:[%s1771 + $0xb0] sm:$0xff]
        %v1795 = vld [vmem:[%s1771 + $0xb8] sm:$0xff]
        %v1796 = vld [vmem:[%s1771 + $0xc0] sm:$0xff]
        %v1797 = vld [vmem:[%s1771 + $0xc8] sm:$0xff]
        %v1798 = vld [vmem:[%s1771 + $0xd0] sm:$0xff]
        %v1799 = vld [vmem:[%s1771 + $0xd8] sm:$0xff]
        %v1800 = vld [vmem:[%s1771 + $0xe0] sm:$0xff]
        %v1801 = vld [vmem:[%s1771 + $0xe8] sm:$0xff]
        %v1802 = vld [vmem:[%s1771 + $0xf0] sm:$0xff]
        %v1803 = vld [vmem:[%s1771 + $0xf8] sm:$0xff]
        %s1804 = scalar_lea.vmem %s745, 256 [#allocation3]
        %v1805 = vld [vmem:[%s1804] sm:$0xf]
        %v1806 = vld [vmem:[%s1804 + $0x4] sm:$0xf]
        %v1807 = vld [vmem:[%s1804 + $0x8] sm:$0xf]
        %v1808 = vld [vmem:[%s1804 + $0xc] sm:$0xf]
        %v1809 = vld [vmem:[%s1804 + $0x10] sm:$0xf]
        %v1810 = vld [vmem:[%s1804 + $0x14] sm:$0xf]
        %v1811 = vld [vmem:[%s1804 + $0x18] sm:$0xf]
        %v1812 = vld [vmem:[%s1804 + $0x1c] sm:$0xf]
        %v1813 = vld [vmem:[%s1804 + $0x20] sm:$0xf]
        %v1814 = vld [vmem:[%s1804 + $0x24] sm:$0xf]
        %v1815 = vld [vmem:[%s1804 + $0x28] sm:$0xf]
        %v1816 = vld [vmem:[%s1804 + $0x2c] sm:$0xf]
        %v1817 = vld [vmem:[%s1804 + $0x30] sm:$0xf]
        %v1818 = vld [vmem:[%s1804 + $0x34] sm:$0xf]
        %v1819 = vld [vmem:[%s1804 + $0x38] sm:$0xf]
        %v1820 = vld [vmem:[%s1804 + $0x3c] sm:$0xf]
        %v1821 = vld [vmem:[%s1804 + $0x40] sm:$0xf]
        %v1822 = vld [vmem:[%s1804 + $0x44] sm:$0xf]
        %v1823 = vld [vmem:[%s1804 + $0x48] sm:$0xf]
        %v1824 = vld [vmem:[%s1804 + $0x4c] sm:$0xf]
        %v1825 = vld [vmem:[%s1804 + $0x50] sm:$0xf]
        %v1826 = vld [vmem:[%s1804 + $0x54] sm:$0xf]
        %v1827 = vld [vmem:[%s1804 + $0x58] sm:$0xf]
        %v1828 = vld [vmem:[%s1804 + $0x5c] sm:$0xf]
        %v1829 = vld [vmem:[%s1804 + $0x60] sm:$0xf]
        %v1830 = vld [vmem:[%s1804 + $0x64] sm:$0xf]
        %v1831 = vld [vmem:[%s1804 + $0x68] sm:$0xf]
        %v1832 = vld [vmem:[%s1804 + $0x6c] sm:$0xf]
        %v1833 = vld [vmem:[%s1804 + $0x70] sm:$0xf]
        %v1834 = vld [vmem:[%s1804 + $0x74] sm:$0xf]
        %v1835 = vld [vmem:[%s1804 + $0x78] sm:$0xf]
        %v1836 = vld [vmem:[%s1804 + $0x7c] sm:$0xf]
        %v1869 = vunpack.c.l.b16 %v1805
        %v1870 = vunpack.c.l.b16 %v1806
        %v1871 = vunpack.c.l.b16 %v1807
        %v1872 = vunpack.c.l.b16 %v1808
        %v1873 = vunpack.c.l.b16 %v1809
        %v1874 = vunpack.c.l.b16 %v1810
        %v1875 = vunpack.c.l.b16 %v1811
        %v1876 = vunpack.c.l.b16 %v1812
        %v1877 = vunpack.c.l.b16 %v1813
        %v1878 = vunpack.c.l.b16 %v1814
        %v1879 = vunpack.c.l.b16 %v1815
        %v1880 = vunpack.c.l.b16 %v1816
        %v1881 = vunpack.c.l.b16 %v1817
        %v1882 = vunpack.c.l.b16 %v1818
        %v1883 = vunpack.c.l.b16 %v1819
        %v1884 = vunpack.c.l.b16 %v1820
        %v1885 = vunpack.c.l.b16 %v1821
        %v1886 = vunpack.c.l.b16 %v1822
        %v1887 = vunpack.c.l.b16 %v1823
        %v1888 = vunpack.c.l.b16 %v1824
        %v1889 = vunpack.c.l.b16 %v1825
        %v1890 = vunpack.c.l.b16 %v1826
        %v1891 = vunpack.c.l.b16 %v1827
        %v1892 = vunpack.c.l.b16 %v1828
        %v1893 = vunpack.c.l.b16 %v1829
        %v1894 = vunpack.c.l.b16 %v1830
        %v1895 = vunpack.c.l.b16 %v1831
        %v1896 = vunpack.c.l.b16 %v1832
        %v1897 = vunpack.c.l.b16 %v1833
        %v1898 = vunpack.c.l.b16 %v1834
        %v1899 = vunpack.c.l.b16 %v1835
        %v1900 = vunpack.c.l.b16 %v1836
        %v1901 = vpack.c.b16 %v1870, %v1869
        %v1902 = vpack.c.b16 %v1872, %v1871
        %v1903 = vpack.c.b16 %v1874, %v1873
        %v1904 = vpack.c.b16 %v1876, %v1875
        %v1905 = vpack.c.b16 %v1878, %v1877
        %v1906 = vpack.c.b16 %v1880, %v1879
        %v1907 = vpack.c.b16 %v1882, %v1881
        %v1908 = vpack.c.b16 %v1884, %v1883
        %v1909 = vpack.c.b16 %v1886, %v1885
        %v1910 = vpack.c.b16 %v1888, %v1887
        %v1911 = vpack.c.b16 %v1890, %v1889
        %v1912 = vpack.c.b16 %v1892, %v1891
        %v1913 = vpack.c.b16 %v1894, %v1893
        %v1914 = vpack.c.b16 %v1896, %v1895
        %v1915 = vpack.c.b16 %v1898, %v1897
        %v1916 = vpack.c.b16 %v1900, %v1899
        %1933 = vmatprep.subr.bf16.mxu0 0
        %1934 = vmatpush1.bf16.msra.mxu0 %v1150
        %1935 = vmatprep.subr.bf16.mxu0 0
        %1936 = vmatpush1.bf16.msra.mxu0 %v1149
        %1937 = vmatprep.subr.bf16.mxu0 0
        %1938 = vmatpush1.bf16.msra.mxu0 %v1148
        %1939 = vmatprep.subr.bf16.mxu0 0
        %1940 = vmatpush1.bf16.msra.mxu0 %v1147
        %1941 = vmatprep.subr.bf16.mxu0 0
        %1942 = vmatpush1.bf16.msra.mxu0 %v1146
        %1943 = vmatprep.subr.bf16.mxu0 0
        %1944 = vmatpush1.bf16.msra.mxu0 %v1145
        %1945 = vmatprep.subr.bf16.mxu0 0
        %1946 = vmatpush1.bf16.msra.mxu0 %v1144
        %1947 = vmatprep.subr.bf16.mxu0 0
        %1948 = vmatpush1.bf16.msra.mxu0 %v1143
        %1949 = vmatprep.subr.bf16.mxu0 0
        %1950 = vmatpush2.bf16.msra.mxu0 0
        %1951 = vmatprep.subr.bf16.mxu0 0
        %1952 = vmatpush2.bf16.msra.mxu0 0
        %1953 = vmatprep.subr.bf16.mxu0 0
        %1954 = vmatpush2.bf16.msra.mxu0 0
        %1955 = vmatprep.subr.bf16.mxu0 0
        %1956 = vmatpush2.bf16.msra.mxu0 0
        %1957 = vmatprep.subr.bf16.mxu0 0
        %1958 = vmatpush2.bf16.msra.mxu0 0
        %1959 = vmatprep.subr.bf16.mxu0 0
        %1960 = vmatpush2.bf16.msra.mxu0 0
        %1961 = vmatprep.subr.bf16.mxu0 0
        %1962 = vmatpush2.bf16.msra.mxu0 0
        %1963 = vmatprep.subr.bf16.mxu0 0
        %1964 = vmatpush2.bf16.msra.mxu0 0
        %1965 = vmatprep.mubr.bf16.mxu0 0
        %1966 = vmatmul.mubr.bf16.gmra.mxu0 %v1901
        %v1967 = vpop.f32.mrf.mxu0
        %v1968 = vadd.f32 0.0, %v1967
        %v1969 = vpop.f32.mrf.mxu0
        %v1970 = vpop.f32.mrf.mxu0
        %v1971 = vadd.f32 0.0, %v1970
        %v1972 = vpop.f32.mrf.mxu0
        %1973 = vmatprep.mubr.bf16.mxu0 0
        %1974 = vmatmul.mubr.bf16.gmra.mxu0 %v1902
        %v1975 = vpop.f32.mrf.mxu0
        %v1976 = vadd.f32 0.0, %v1975
        %v1977 = vpop.f32.mrf.mxu0
        %v1978 = vpop.f32.mrf.mxu0
        %v1979 = vadd.f32 0.0, %v1978
        %v1980 = vpop.f32.mrf.mxu0
        %1981 = vmatprep.mubr.bf16.mxu0 0
        %1982 = vmatmul.mubr.bf16.gmra.mxu0 %v1903
        %v1983 = vpop.f32.mrf.mxu0
        %v1984 = vadd.f32 0.0, %v1983
        %v1985 = vpop.f32.mrf.mxu0
        %v1986 = vpop.f32.mrf.mxu0
        %v1987 = vadd.f32 0.0, %v1986
        %v1988 = vpop.f32.mrf.mxu0
        %1989 = vmatprep.mubr.bf16.mxu0 0
        %1990 = vmatmul.mubr.bf16.gmra.mxu0 %v1904
        %v1991 = vpop.f32.mrf.mxu0
        %v1992 = vadd.f32 0.0, %v1991
        %v1993 = vpop.f32.mrf.mxu0
        %v1994 = vpop.f32.mrf.mxu0
        %v1995 = vadd.f32 0.0, %v1994
        %v1996 = vpop.f32.mrf.mxu0
        %1997 = vmatprep.mubr.bf16.mxu0 0
        %1998 = vmatmul.mubr.bf16.gmra.mxu0 %v1905
        %v1999 = vpop.f32.mrf.mxu0
        %v2000 = vadd.f32 0.0, %v1999
        %v2001 = vpop.f32.mrf.mxu0
        %v2002 = vpop.f32.mrf.mxu0
        %v2003 = vadd.f32 0.0, %v2002
        %v2004 = vpop.f32.mrf.mxu0
        %2005 = vmatprep.mubr.bf16.mxu0 0
        %2006 = vmatmul.mubr.bf16.gmra.mxu0 %v1906
        %v2007 = vpop.f32.mrf.mxu0
        %v2008 = vadd.f32 0.0, %v2007
        %v2009 = vpop.f32.mrf.mxu0
        %v2010 = vpop.f32.mrf.mxu0
        %v2011 = vadd.f32 0.0, %v2010
        %v2012 = vpop.f32.mrf.mxu0
        %2013 = vmatprep.mubr.bf16.mxu0 0
        %2014 = vmatmul.mubr.bf16.gmra.mxu0 %v1907
        %v2015 = vpop.f32.mrf.mxu0
        %v2016 = vadd.f32 0.0, %v2015
        %v2017 = vpop.f32.mrf.mxu0
        %v2018 = vpop.f32.mrf.mxu0
        %v2019 = vadd.f32 0.0, %v2018
        %v2020 = vpop.f32.mrf.mxu0
        %2021 = vmatprep.mubr.bf16.mxu0 0
        %2022 = vmatmul.mubr.bf16.gmra.mxu0 %v1908
        %v2023 = vpop.f32.mrf.mxu0
        %v2024 = vadd.f32 0.0, %v2023
        %v2025 = vpop.f32.mrf.mxu0
        %v2026 = vpop.f32.mrf.mxu0
        %v2027 = vadd.f32 0.0, %v2026
        %v2028 = vpop.f32.mrf.mxu0
        %2029 = vmatprep.mubr.bf16.mxu0 0
        %2030 = vmatmul.mubr.bf16.gmra.mxu0 %v1909
        %v2031 = vpop.f32.mrf.mxu0
        %v2032 = vadd.f32 0.0, %v2031
        %v2033 = vpop.f32.mrf.mxu0
        %v2034 = vpop.f32.mrf.mxu0
        %v2035 = vadd.f32 0.0, %v2034
        %v2036 = vpop.f32.mrf.mxu0
        %2037 = vmatprep.mubr.bf16.mxu0 0
        %2038 = vmatmul.mubr.bf16.gmra.mxu0 %v1910
        %v2039 = vpop.f32.mrf.mxu0
        %v2040 = vadd.f32 0.0, %v2039
        %v2041 = vpop.f32.mrf.mxu0
        %v2042 = vpop.f32.mrf.mxu0
        %v2043 = vadd.f32 0.0, %v2042
        %v2044 = vpop.f32.mrf.mxu0
        %2045 = vmatprep.mubr.bf16.mxu0 0
        %2046 = vmatmul.mubr.bf16.gmra.mxu0 %v1911
        %v2047 = vpop.f32.mrf.mxu0
        %v2048 = vadd.f32 0.0, %v2047
        %v2049 = vpop.f32.mrf.mxu0
        %v2050 = vpop.f32.mrf.mxu0
        %v2051 = vadd.f32 0.0, %v2050
        %v2052 = vpop.f32.mrf.mxu0
        %2053 = vmatprep.mubr.bf16.mxu0 0
        %2054 = vmatmul.mubr.bf16.gmra.mxu0 %v1912
        %v2055 = vpop.f32.mrf.mxu0
        %v2056 = vadd.f32 0.0, %v2055
        %v2057 = vpop.f32.mrf.mxu0
        %v2058 = vpop.f32.mrf.mxu0
        %v2059 = vadd.f32 0.0, %v2058
        %v2060 = vpop.f32.mrf.mxu0
        %2061 = vmatprep.mubr.bf16.mxu0 0
        %2062 = vmatmul.mubr.bf16.gmra.mxu0 %v1913
        %v2063 = vpop.f32.mrf.mxu0
        %v2064 = vadd.f32 0.0, %v2063
        %v2065 = vpop.f32.mrf.mxu0
        %v2066 = vpop.f32.mrf.mxu0
        %v2067 = vadd.f32 0.0, %v2066
        %v2068 = vpop.f32.mrf.mxu0
        %2069 = vmatprep.mubr.bf16.mxu0 0
        %2070 = vmatmul.mubr.bf16.gmra.mxu0 %v1914
        %v2071 = vpop.f32.mrf.mxu0
        %v2072 = vadd.f32 0.0, %v2071
        %v2073 = vpop.f32.mrf.mxu0
        %v2074 = vpop.f32.mrf.mxu0
        %v2075 = vadd.f32 0.0, %v2074
        %v2076 = vpop.f32.mrf.mxu0
        %2077 = vmatprep.mubr.bf16.mxu0 0
        %2078 = vmatmul.mubr.bf16.gmra.mxu0 %v1915
        %v2079 = vpop.f32.mrf.mxu0
        %v2080 = vadd.f32 0.0, %v2079
        %v2081 = vpop.f32.mrf.mxu0
        %v2082 = vpop.f32.mrf.mxu0
        %v2083 = vadd.f32 0.0, %v2082
        %v2084 = vpop.f32.mrf.mxu0
        %2085 = vmatprep.mubr.bf16.mxu0 0
        %2086 = vmatmul.mubr.bf16.gmra.mxu0 %v1916
        %v2087 = vpop.f32.mrf.mxu0
        %v2088 = vadd.f32 0.0, %v2087
        %v2089 = vpop.f32.mrf.mxu0
        %v2090 = vpop.f32.mrf.mxu0
        %v2091 = vadd.f32 0.0, %v2090
        %v2092 = vpop.f32.mrf.mxu0
        %2093 = vdwg.mxu0
        %v2094 = vadd.f32 %v1772, %v1968
        %v2095 = vadd.f32 %v1773, %v1971
        %v2096 = vadd.f32 %v1774, %v1976
        %v2097 = vadd.f32 %v1775, %v1979
        %v2098 = vadd.f32 %v1776, %v1984
        %v2099 = vadd.f32 %v1777, %v1987
        %v2100 = vadd.f32 %v1778, %v1992
        %v2101 = vadd.f32 %v1779, %v1995
        %v2102 = vadd.f32 %v1780, %v2000
        %v2103 = vadd.f32 %v1781, %v2003
        %v2104 = vadd.f32 %v1782, %v2008
        %v2105 = vadd.f32 %v1783, %v2011
        %v2106 = vadd.f32 %v1784, %v2016
        %v2107 = vadd.f32 %v1785, %v2019
        %v2108 = vadd.f32 %v1786, %v2024
        %v2109 = vadd.f32 %v1787, %v2027
        %v2110 = vadd.f32 %v1788, %v2032
        %v2111 = vadd.f32 %v1789, %v2035
        %v2112 = vadd.f32 %v1790, %v2040
        %v2113 = vadd.f32 %v1791, %v2043
        %v2114 = vadd.f32 %v1792, %v2048
        %v2115 = vadd.f32 %v1793, %v2051
        %v2116 = vadd.f32 %v1794, %v2056
        %v2117 = vadd.f32 %v1795, %v2059
        %v2118 = vadd.f32 %v1796, %v2064
        %v2119 = vadd.f32 %v1797, %v2067
        %v2120 = vadd.f32 %v1798, %v2072
        %v2121 = vadd.f32 %v1799, %v2075
        %v2122 = vadd.f32 %v1800, %v2080
        %v2123 = vadd.f32 %v1801, %v2083
        %v2124 = vadd.f32 %v1802, %v2088
        %v2125 = vadd.f32 %v1803, %v2091
        %2126 = vst [vmem:[%s1771] sm:$0xff] %v2094
        %2127 = vst [vmem:[%s1771 + $0x8] sm:$0xff] %v2095
        %2128 = vst [vmem:[%s1771 + $0x10] sm:$0xff] %v2096
        %2129 = vst [vmem:[%s1771 + $0x18] sm:$0xff] %v2097
        %2130 = vst [vmem:[%s1771 + $0x20] sm:$0xff] %v2098
        %2131 = vst [vmem:[%s1771 + $0x28] sm:$0xff] %v2099
        %2132 = vst [vmem:[%s1771 + $0x30] sm:$0xff] %v2100
        %2133 = vst [vmem:[%s1771 + $0x38] sm:$0xff] %v2101
        %2134 = vst [vmem:[%s1771 + $0x40] sm:$0xff] %v2102
        %2135 = vst [vmem:[%s1771 + $0x48] sm:$0xff] %v2103
        %2136 = vst [vmem:[%s1771 + $0x50] sm:$0xff] %v2104
        %2137 = vst [vmem:[%s1771 + $0x58] sm:$0xff] %v2105
        %2138 = vst [vmem:[%s1771 + $0x60] sm:$0xff] %v2106
        %2139 = vst [vmem:[%s1771 + $0x68] sm:$0xff] %v2107
        %2140 = vst [vmem:[%s1771 + $0x70] sm:$0xff] %v2108
        %2141 = vst [vmem:[%s1771 + $0x78] sm:$0xff] %v2109
        %2142 = vst [vmem:[%s1771 + $0x80] sm:$0xff] %v2110
        %2143 = vst [vmem:[%s1771 + $0x88] sm:$0xff] %v2111
        %2144 = vst [vmem:[%s1771 + $0x90] sm:$0xff] %v2112
        %2145 = vst [vmem:[%s1771 + $0x98] sm:$0xff] %v2113
        %2146 = vst [vmem:[%s1771 + $0xa0] sm:$0xff] %v2114
        %2147 = vst [vmem:[%s1771 + $0xa8] sm:$0xff] %v2115
        %2148 = vst [vmem:[%s1771 + $0xb0] sm:$0xff] %v2116
        %2149 = vst [vmem:[%s1771 + $0xb8] sm:$0xff] %v2117
        %2150 = vst [vmem:[%s1771 + $0xc0] sm:$0xff] %v2118
        %2151 = vst [vmem:[%s1771 + $0xc8] sm:$0xff] %v2119
        %2152 = vst [vmem:[%s1771 + $0xd0] sm:$0xff] %v2120
        %2153 = vst [vmem:[%s1771 + $0xd8] sm:$0xff] %v2121
        %2154 = vst [vmem:[%s1771 + $0xe0] sm:$0xff] %v2122
        %2155 = vst [vmem:[%s1771 + $0xe8] sm:$0xff] %v2123
        %2156 = vst [vmem:[%s1771 + $0xf0] sm:$0xff] %v2124
        %2157 = vst [vmem:[%s1771 + $0xf8] sm:$0xff] %v2125
        %s2158 = scalar_lea.vmem [#allocation2], 768
        %v2159 = vld [vmem:[%s2158] sm:$0xff]
        %v2160 = vld [vmem:[%s2158 + $0x8] sm:$0xff]
        %v2161 = vld [vmem:[%s2158 + $0x10] sm:$0xff]
        %v2162 = vld [vmem:[%s2158 + $0x18] sm:$0xff]
        %v2163 = vld [vmem:[%s2158 + $0x20] sm:$0xff]
        %v2164 = vld [vmem:[%s2158 + $0x28] sm:$0xff]
        %v2165 = vld [vmem:[%s2158 + $0x30] sm:$0xff]
        %v2166 = vld [vmem:[%s2158 + $0x38] sm:$0xff]
        %v2167 = vld [vmem:[%s2158 + $0x40] sm:$0xff]
        %v2168 = vld [vmem:[%s2158 + $0x48] sm:$0xff]
        %v2169 = vld [vmem:[%s2158 + $0x50] sm:$0xff]
        %v2170 = vld [vmem:[%s2158 + $0x58] sm:$0xff]
        %v2171 = vld [vmem:[%s2158 + $0x60] sm:$0xff]
        %v2172 = vld [vmem:[%s2158 + $0x68] sm:$0xff]
        %v2173 = vld [vmem:[%s2158 + $0x70] sm:$0xff]
        %v2174 = vld [vmem:[%s2158 + $0x78] sm:$0xff]
        %v2175 = vld [vmem:[%s2158 + $0x80] sm:$0xff]
        %v2176 = vld [vmem:[%s2158 + $0x88] sm:$0xff]
        %v2177 = vld [vmem:[%s2158 + $0x90] sm:$0xff]
        %v2178 = vld [vmem:[%s2158 + $0x98] sm:$0xff]
        %v2179 = vld [vmem:[%s2158 + $0xa0] sm:$0xff]
        %v2180 = vld [vmem:[%s2158 + $0xa8] sm:$0xff]
        %v2181 = vld [vmem:[%s2158 + $0xb0] sm:$0xff]
        %v2182 = vld [vmem:[%s2158 + $0xb8] sm:$0xff]
        %v2183 = vld [vmem:[%s2158 + $0xc0] sm:$0xff]
        %v2184 = vld [vmem:[%s2158 + $0xc8] sm:$0xff]
        %v2185 = vld [vmem:[%s2158 + $0xd0] sm:$0xff]
        %v2186 = vld [vmem:[%s2158 + $0xd8] sm:$0xff]
        %v2187 = vld [vmem:[%s2158 + $0xe0] sm:$0xff]
        %v2188 = vld [vmem:[%s2158 + $0xe8] sm:$0xff]
        %v2189 = vld [vmem:[%s2158 + $0xf0] sm:$0xff]
        %v2190 = vld [vmem:[%s2158 + $0xf8] sm:$0xff]
        %s2191 = scalar_lea.vmem %s745, 384 [#allocation3]
        %v2192 = vld [vmem:[%s2191] sm:$0xf]
        %v2193 = vld [vmem:[%s2191 + $0x4] sm:$0xf]
        %v2194 = vld [vmem:[%s2191 + $0x8] sm:$0xf]
        %v2195 = vld [vmem:[%s2191 + $0xc] sm:$0xf]
        %v2196 = vld [vmem:[%s2191 + $0x10] sm:$0xf]
        %v2197 = vld [vmem:[%s2191 + $0x14] sm:$0xf]
        %v2198 = vld [vmem:[%s2191 + $0x18] sm:$0xf]
        %v2199 = vld [vmem:[%s2191 + $0x1c] sm:$0xf]
        %v2200 = vld [vmem:[%s2191 + $0x20] sm:$0xf]
        %v2201 = vld [vmem:[%s2191 + $0x24] sm:$0xf]
        %v2202 = vld [vmem:[%s2191 + $0x28] sm:$0xf]
        %v2203 = vld [vmem:[%s2191 + $0x2c] sm:$0xf]
        %v2204 = vld [vmem:[%s2191 + $0x30] sm:$0xf]
        %v2205 = vld [vmem:[%s2191 + $0x34] sm:$0xf]
        %v2206 = vld [vmem:[%s2191 + $0x38] sm:$0xf]
        %v2207 = vld [vmem:[%s2191 + $0x3c] sm:$0xf]
        %v2208 = vld [vmem:[%s2191 + $0x40] sm:$0xf]
        %v2209 = vld [vmem:[%s2191 + $0x44] sm:$0xf]
        %v2210 = vld [vmem:[%s2191 + $0x48] sm:$0xf]
        %v2211 = vld [vmem:[%s2191 + $0x4c] sm:$0xf]
        %v2212 = vld [vmem:[%s2191 + $0x50] sm:$0xf]
        %v2213 = vld [vmem:[%s2191 + $0x54] sm:$0xf]
        %v2214 = vld [vmem:[%s2191 + $0x58] sm:$0xf]
        %v2215 = vld [vmem:[%s2191 + $0x5c] sm:$0xf]
        %v2216 = vld [vmem:[%s2191 + $0x60] sm:$0xf]
        %v2217 = vld [vmem:[%s2191 + $0x64] sm:$0xf]
        %v2218 = vld [vmem:[%s2191 + $0x68] sm:$0xf]
        %v2219 = vld [vmem:[%s2191 + $0x6c] sm:$0xf]
        %v2220 = vld [vmem:[%s2191 + $0x70] sm:$0xf]
        %v2221 = vld [vmem:[%s2191 + $0x74] sm:$0xf]
        %v2222 = vld [vmem:[%s2191 + $0x78] sm:$0xf]
        %v2223 = vld [vmem:[%s2191 + $0x7c] sm:$0xf]
        %v2256 = vunpack.c.l.b16 %v2192
        %v2257 = vunpack.c.l.b16 %v2193
        %v2258 = vunpack.c.l.b16 %v2194
        %v2259 = vunpack.c.l.b16 %v2195
        %v2260 = vunpack.c.l.b16 %v2196
        %v2261 = vunpack.c.l.b16 %v2197
        %v2262 = vunpack.c.l.b16 %v2198
        %v2263 = vunpack.c.l.b16 %v2199
        %v2264 = vunpack.c.l.b16 %v2200
        %v2265 = vunpack.c.l.b16 %v2201
        %v2266 = vunpack.c.l.b16 %v2202
        %v2267 = vunpack.c.l.b16 %v2203
        %v2268 = vunpack.c.l.b16 %v2204
        %v2269 = vunpack.c.l.b16 %v2205
        %v2270 = vunpack.c.l.b16 %v2206
        %v2271 = vunpack.c.l.b16 %v2207
        %v2272 = vunpack.c.l.b16 %v2208
        %v2273 = vunpack.c.l.b16 %v2209
        %v2274 = vunpack.c.l.b16 %v2210
        %v2275 = vunpack.c.l.b16 %v2211
        %v2276 = vunpack.c.l.b16 %v2212
        %v2277 = vunpack.c.l.b16 %v2213
        %v2278 = vunpack.c.l.b16 %v2214
        %v2279 = vunpack.c.l.b16 %v2215
        %v2280 = vunpack.c.l.b16 %v2216
        %v2281 = vunpack.c.l.b16 %v2217
        %v2282 = vunpack.c.l.b16 %v2218
        %v2283 = vunpack.c.l.b16 %v2219
        %v2284 = vunpack.c.l.b16 %v2220
        %v2285 = vunpack.c.l.b16 %v2221
        %v2286 = vunpack.c.l.b16 %v2222
        %v2287 = vunpack.c.l.b16 %v2223
        %v2288 = vpack.c.b16 %v2257, %v2256
        %v2289 = vpack.c.b16 %v2259, %v2258
        %v2290 = vpack.c.b16 %v2261, %v2260
        %v2291 = vpack.c.b16 %v2263, %v2262
        %v2292 = vpack.c.b16 %v2265, %v2264
        %v2293 = vpack.c.b16 %v2267, %v2266
        %v2294 = vpack.c.b16 %v2269, %v2268
        %v2295 = vpack.c.b16 %v2271, %v2270
        %v2296 = vpack.c.b16 %v2273, %v2272
        %v2297 = vpack.c.b16 %v2275, %v2274
        %v2298 = vpack.c.b16 %v2277, %v2276
        %v2299 = vpack.c.b16 %v2279, %v2278
        %v2300 = vpack.c.b16 %v2281, %v2280
        %v2301 = vpack.c.b16 %v2283, %v2282
        %v2302 = vpack.c.b16 %v2285, %v2284
        %v2303 = vpack.c.b16 %v2287, %v2286
        %2320 = vmatprep.subr.bf16.mxu0 0
        %2321 = vmatpush1.bf16.msra.mxu0 %v1150
        %2322 = vmatprep.subr.bf16.mxu0 0
        %2323 = vmatpush1.bf16.msra.mxu0 %v1149
        %2324 = vmatprep.subr.bf16.mxu0 0
        %2325 = vmatpush1.bf16.msra.mxu0 %v1148
        %2326 = vmatprep.subr.bf16.mxu0 0
        %2327 = vmatpush1.bf16.msra.mxu0 %v1147
        %2328 = vmatprep.subr.bf16.mxu0 0
        %2329 = vmatpush1.bf16.msra.mxu0 %v1146
        %2330 = vmatprep.subr.bf16.mxu0 0
        %2331 = vmatpush1.bf16.msra.mxu0 %v1145
        %2332 = vmatprep.subr.bf16.mxu0 0
        %2333 = vmatpush1.bf16.msra.mxu0 %v1144
        %2334 = vmatprep.subr.bf16.mxu0 0
        %2335 = vmatpush1.bf16.msra.mxu0 %v1143
        %2336 = vmatprep.subr.bf16.mxu0 0
        %2337 = vmatpush2.bf16.msra.mxu0 0
        %2338 = vmatprep.subr.bf16.mxu0 0
        %2339 = vmatpush2.bf16.msra.mxu0 0
        %2340 = vmatprep.subr.bf16.mxu0 0
        %2341 = vmatpush2.bf16.msra.mxu0 0
        %2342 = vmatprep.subr.bf16.mxu0 0
        %2343 = vmatpush2.bf16.msra.mxu0 0
        %2344 = vmatprep.subr.bf16.mxu0 0
        %2345 = vmatpush2.bf16.msra.mxu0 0
        %2346 = vmatprep.subr.bf16.mxu0 0
        %2347 = vmatpush2.bf16.msra.mxu0 0
        %2348 = vmatprep.subr.bf16.mxu0 0
        %2349 = vmatpush2.bf16.msra.mxu0 0
        %2350 = vmatprep.subr.bf16.mxu0 0
        %2351 = vmatpush2.bf16.msra.mxu0 0
        %2352 = vmatprep.mubr.bf16.mxu0 0
        %2353 = vmatmul.mubr.bf16.gmra.mxu0 %v2288
        %v2354 = vpop.f32.mrf.mxu0
        %v2355 = vadd.f32 0.0, %v2354
        %v2356 = vpop.f32.mrf.mxu0
        %v2357 = vpop.f32.mrf.mxu0
        %v2358 = vadd.f32 0.0, %v2357
        %v2359 = vpop.f32.mrf.mxu0
        %2360 = vmatprep.mubr.bf16.mxu0 0
        %2361 = vmatmul.mubr.bf16.gmra.mxu0 %v2289
        %v2362 = vpop.f32.mrf.mxu0
        %v2363 = vadd.f32 0.0, %v2362
        %v2364 = vpop.f32.mrf.mxu0
        %v2365 = vpop.f32.mrf.mxu0
        %v2366 = vadd.f32 0.0, %v2365
        %v2367 = vpop.f32.mrf.mxu0
        %2368 = vmatprep.mubr.bf16.mxu0 0
        %2369 = vmatmul.mubr.bf16.gmra.mxu0 %v2290
        %v2370 = vpop.f32.mrf.mxu0
        %v2371 = vadd.f32 0.0, %v2370
        %v2372 = vpop.f32.mrf.mxu0
        %v2373 = vpop.f32.mrf.mxu0
        %v2374 = vadd.f32 0.0, %v2373
        %v2375 = vpop.f32.mrf.mxu0
        %2376 = vmatprep.mubr.bf16.mxu0 0
        %2377 = vmatmul.mubr.bf16.gmra.mxu0 %v2291
        %v2378 = vpop.f32.mrf.mxu0
        %v2379 = vadd.f32 0.0, %v2378
        %v2380 = vpop.f32.mrf.mxu0
        %v2381 = vpop.f32.mrf.mxu0
        %v2382 = vadd.f32 0.0, %v2381
        %v2383 = vpop.f32.mrf.mxu0
        %2384 = vmatprep.mubr.bf16.mxu0 0
        %2385 = vmatmul.mubr.bf16.gmra.mxu0 %v2292
        %v2386 = vpop.f32.mrf.mxu0
        %v2387 = vadd.f32 0.0, %v2386
        %v2388 = vpop.f32.mrf.mxu0
        %v2389 = vpop.f32.mrf.mxu0
        %v2390 = vadd.f32 0.0, %v2389
        %v2391 = vpop.f32.mrf.mxu0
        %2392 = vmatprep.mubr.bf16.mxu0 0
        %2393 = vmatmul.mubr.bf16.gmra.mxu0 %v2293
        %v2394 = vpop.f32.mrf.mxu0
        %v2395 = vadd.f32 0.0, %v2394
        %v2396 = vpop.f32.mrf.mxu0
        %v2397 = vpop.f32.mrf.mxu0
        %v2398 = vadd.f32 0.0, %v2397
        %v2399 = vpop.f32.mrf.mxu0
        %2400 = vmatprep.mubr.bf16.mxu0 0
        %2401 = vmatmul.mubr.bf16.gmra.mxu0 %v2294
        %v2402 = vpop.f32.mrf.mxu0
        %v2403 = vadd.f32 0.0, %v2402
        %v2404 = vpop.f32.mrf.mxu0
        %v2405 = vpop.f32.mrf.mxu0
        %v2406 = vadd.f32 0.0, %v2405
        %v2407 = vpop.f32.mrf.mxu0
        %2408 = vmatprep.mubr.bf16.mxu0 0
        %2409 = vmatmul.mubr.bf16.gmra.mxu0 %v2295
        %v2410 = vpop.f32.mrf.mxu0
        %v2411 = vadd.f32 0.0, %v2410
        %v2412 = vpop.f32.mrf.mxu0
        %v2413 = vpop.f32.mrf.mxu0
        %v2414 = vadd.f32 0.0, %v2413
        %v2415 = vpop.f32.mrf.mxu0
        %2416 = vmatprep.mubr.bf16.mxu0 0
        %2417 = vmatmul.mubr.bf16.gmra.mxu0 %v2296
        %v2418 = vpop.f32.mrf.mxu0
        %v2419 = vadd.f32 0.0, %v2418
        %v2420 = vpop.f32.mrf.mxu0
        %v2421 = vpop.f32.mrf.mxu0
        %v2422 = vadd.f32 0.0, %v2421
        %v2423 = vpop.f32.mrf.mxu0
        %2424 = vmatprep.mubr.bf16.mxu0 0
        %2425 = vmatmul.mubr.bf16.gmra.mxu0 %v2297
        %v2426 = vpop.f32.mrf.mxu0
        %v2427 = vadd.f32 0.0, %v2426
        %v2428 = vpop.f32.mrf.mxu0
        %v2429 = vpop.f32.mrf.mxu0
        %v2430 = vadd.f32 0.0, %v2429
        %v2431 = vpop.f32.mrf.mxu0
        %2432 = vmatprep.mubr.bf16.mxu0 0
        %2433 = vmatmul.mubr.bf16.gmra.mxu0 %v2298
        %v2434 = vpop.f32.mrf.mxu0
        %v2435 = vadd.f32 0.0, %v2434
        %v2436 = vpop.f32.mrf.mxu0
        %v2437 = vpop.f32.mrf.mxu0
        %v2438 = vadd.f32 0.0, %v2437
        %v2439 = vpop.f32.mrf.mxu0
        %2440 = vmatprep.mubr.bf16.mxu0 0
        %2441 = vmatmul.mubr.bf16.gmra.mxu0 %v2299
        %v2442 = vpop.f32.mrf.mxu0
        %v2443 = vadd.f32 0.0, %v2442
        %v2444 = vpop.f32.mrf.mxu0
        %v2445 = vpop.f32.mrf.mxu0
        %v2446 = vadd.f32 0.0, %v2445
        %v2447 = vpop.f32.mrf.mxu0
        %2448 = vmatprep.mubr.bf16.mxu0 0
        %2449 = vmatmul.mubr.bf16.gmra.mxu0 %v2300
        %v2450 = vpop.f32.mrf.mxu0
        %v2451 = vadd.f32 0.0, %v2450
        %v2452 = vpop.f32.mrf.mxu0
        %v2453 = vpop.f32.mrf.mxu0
        %v2454 = vadd.f32 0.0, %v2453
        %v2455 = vpop.f32.mrf.mxu0
        %2456 = vmatprep.mubr.bf16.mxu0 0
        %2457 = vmatmul.mubr.bf16.gmra.mxu0 %v2301
        %v2458 = vpop.f32.mrf.mxu0
        %v2459 = vadd.f32 0.0, %v2458
        %v2460 = vpop.f32.mrf.mxu0
        %v2461 = vpop.f32.mrf.mxu0
        %v2462 = vadd.f32 0.0, %v2461
        %v2463 = vpop.f32.mrf.mxu0
        %2464 = vmatprep.mubr.bf16.mxu0 0
        %2465 = vmatmul.mubr.bf16.gmra.mxu0 %v2302
        %v2466 = vpop.f32.mrf.mxu0
        %v2467 = vadd.f32 0.0, %v2466
        %v2468 = vpop.f32.mrf.mxu0
        %v2469 = vpop.f32.mrf.mxu0
        %v2470 = vadd.f32 0.0, %v2469
        %v2471 = vpop.f32.mrf.mxu0
        %2472 = vmatprep.mubr.bf16.mxu0 0
        %2473 = vmatmul.mubr.bf16.gmra.mxu0 %v2303
        %v2474 = vpop.f32.mrf.mxu0
        %v2475 = vadd.f32 0.0, %v2474
        %v2476 = vpop.f32.mrf.mxu0
        %v2477 = vpop.f32.mrf.mxu0
        %v2478 = vadd.f32 0.0, %v2477
        %v2479 = vpop.f32.mrf.mxu0
        %2480 = vdwg.mxu0
        %v2481 = vadd.f32 %v2159, %v2355
        %v2482 = vadd.f32 %v2160, %v2358
        %v2483 = vadd.f32 %v2161, %v2363
        %v2484 = vadd.f32 %v2162, %v2366
        %v2485 = vadd.f32 %v2163, %v2371
        %v2486 = vadd.f32 %v2164, %v2374
        %v2487 = vadd.f32 %v2165, %v2379
        %v2488 = vadd.f32 %v2166, %v2382
        %v2489 = vadd.f32 %v2167, %v2387
        %v2490 = vadd.f32 %v2168, %v2390
        %v2491 = vadd.f32 %v2169, %v2395
        %v2492 = vadd.f32 %v2170, %v2398
        %v2493 = vadd.f32 %v2171, %v2403
        %v2494 = vadd.f32 %v2172, %v2406
        %v2495 = vadd.f32 %v2173, %v2411
        %v2496 = vadd.f32 %v2174, %v2414
        %v2497 = vadd.f32 %v2175, %v2419
        %v2498 = vadd.f32 %v2176, %v2422
        %v2499 = vadd.f32 %v2177, %v2427
        %v2500 = vadd.f32 %v2178, %v2430
        %v2501 = vadd.f32 %v2179, %v2435
        %v2502 = vadd.f32 %v2180, %v2438
        %v2503 = vadd.f32 %v2181, %v2443
        %v2504 = vadd.f32 %v2182, %v2446
        %v2505 = vadd.f32 %v2183, %v2451
        %v2506 = vadd.f32 %v2184, %v2454
        %v2507 = vadd.f32 %v2185, %v2459
        %v2508 = vadd.f32 %v2186, %v2462
        %v2509 = vadd.f32 %v2187, %v2467
        %v2510 = vadd.f32 %v2188, %v2470
        %v2511 = vadd.f32 %v2189, %v2475
        %v2512 = vadd.f32 %v2190, %v2478
        %2513 = vst [vmem:[%s2158] sm:$0xff] %v2481
        %2514 = vst [vmem:[%s2158 + $0x8] sm:$0xff] %v2482
        %2515 = vst [vmem:[%s2158 + $0x10] sm:$0xff] %v2483
        %2516 = vst [vmem:[%s2158 + $0x18] sm:$0xff] %v2484
        %2517 = vst [vmem:[%s2158 + $0x20] sm:$0xff] %v2485
        %2518 = vst [vmem:[%s2158 + $0x28] sm:$0xff] %v2486
        %2519 = vst [vmem:[%s2158 + $0x30] sm:$0xff] %v2487
        %2520 = vst [vmem:[%s2158 + $0x38] sm:$0xff] %v2488
        %2521 = vst [vmem:[%s2158 + $0x40] sm:$0xff] %v2489
        %2522 = vst [vmem:[%s2158 + $0x48] sm:$0xff] %v2490
        %2523 = vst [vmem:[%s2158 + $0x50] sm:$0xff] %v2491
        %2524 = vst [vmem:[%s2158 + $0x58] sm:$0xff] %v2492
        %2525 = vst [vmem:[%s2158 + $0x60] sm:$0xff] %v2493
        %2526 = vst [vmem:[%s2158 + $0x68] sm:$0xff] %v2494
        %2527 = vst [vmem:[%s2158 + $0x70] sm:$0xff] %v2495
        %2528 = vst [vmem:[%s2158 + $0x78] sm:$0xff] %v2496
        %2529 = vst [vmem:[%s2158 + $0x80] sm:$0xff] %v2497
        %2530 = vst [vmem:[%s2158 + $0x88] sm:$0xff] %v2498
        %2531 = vst [vmem:[%s2158 + $0x90] sm:$0xff] %v2499
        %2532 = vst [vmem:[%s2158 + $0x98] sm:$0xff] %v2500
        %2533 = vst [vmem:[%s2158 + $0xa0] sm:$0xff] %v2501
        %2534 = vst [vmem:[%s2158 + $0xa8] sm:$0xff] %v2502
        %2535 = vst [vmem:[%s2158 + $0xb0] sm:$0xff] %v2503
        %2536 = vst [vmem:[%s2158 + $0xb8] sm:$0xff] %v2504
        %2537 = vst [vmem:[%s2158 + $0xc0] sm:$0xff] %v2505
        %2538 = vst [vmem:[%s2158 + $0xc8] sm:$0xff] %v2506
        %2539 = vst [vmem:[%s2158 + $0xd0] sm:$0xff] %v2507
        %2540 = vst [vmem:[%s2158 + $0xd8] sm:$0xff] %v2508
        %2541 = vst [vmem:[%s2158 + $0xe0] sm:$0xff] %v2509
        %2542 = vst [vmem:[%s2158 + $0xe8] sm:$0xff] %v2510
        %2543 = vst [vmem:[%s2158 + $0xf0] sm:$0xff] %v2511
        %2544 = vst [vmem:[%s2158 + $0xf8] sm:$0xff] %v2512
        // Predicated region
        $region78: #{convnet_forward.4} parent=68 // pred_check
          %p2545 = pneg %p803
        $region79: #{convnet_forward.4} parent=68 // pred_check_branch
          %2547 = sbr.rel (%p2545) target = $region81
        $region80: #{convnet_forward.4} parent=68 // pred_region
          %v2548 = vld [vmem:[#allocation2] sm:$0xff]
          %v2549 = vld [vmem:[#allocation2 + $0x8] sm:$0xff]
          %v2550 = vld [vmem:[#allocation2 + $0x10] sm:$0xff]
          %v2551 = vld [vmem:[#allocation2 + $0x18] sm:$0xff]
          %v2552 = vld [vmem:[#allocation2 + $0x20] sm:$0xff]
          %v2553 = vld [vmem:[#allocation2 + $0x28] sm:$0xff]
          %v2554 = vld [vmem:[#allocation2 + $0x30] sm:$0xff]
          %v2555 = vld [vmem:[#allocation2 + $0x38] sm:$0xff]
          %v2556 = vld [vmem:[#allocation2 + $0x40] sm:$0xff]
          %v2557 = vld [vmem:[#allocation2 + $0x48] sm:$0xff]
          %v2558 = vld [vmem:[#allocation2 + $0x50] sm:$0xff]
          %v2559 = vld [vmem:[#allocation2 + $0x58] sm:$0xff]
          %v2560 = vld [vmem:[#allocation2 + $0x60] sm:$0xff]
          %v2561 = vld [vmem:[#allocation2 + $0x68] sm:$0xff]
          %v2562 = vld [vmem:[#allocation2 + $0x70] sm:$0xff]
          %v2563 = vld [vmem:[#allocation2 + $0x78] sm:$0xff]
          %v2564 = vld [vmem:[#allocation2 + $0x80] sm:$0xff]
          %v2565 = vld [vmem:[#allocation2 + $0x88] sm:$0xff]
          %v2566 = vld [vmem:[#allocation2 + $0x90] sm:$0xff]
          %v2567 = vld [vmem:[#allocation2 + $0x98] sm:$0xff]
          %v2568 = vld [vmem:[#allocation2 + $0xa0] sm:$0xff]
          %v2569 = vld [vmem:[#allocation2 + $0xa8] sm:$0xff]
          %v2570 = vld [vmem:[#allocation2 + $0xb0] sm:$0xff]
          %v2571 = vld [vmem:[#allocation2 + $0xb8] sm:$0xff]
          %v2572 = vld [vmem:[#allocation2 + $0xc0] sm:$0xff]
          %v2573 = vld [vmem:[#allocation2 + $0xc8] sm:$0xff]
          %v2574 = vld [vmem:[#allocation2 + $0xd0] sm:$0xff]
          %v2575 = vld [vmem:[#allocation2 + $0xd8] sm:$0xff]
          %v2576 = vld [vmem:[#allocation2 + $0xe0] sm:$0xff]
          %v2577 = vld [vmem:[#allocation2 + $0xe8] sm:$0xff]
          %v2578 = vld [vmem:[#allocation2 + $0xf0] sm:$0xff]
          %v2579 = vld [vmem:[#allocation2 + $0xf8] sm:$0xff]
          %v2580 = vld [vmem:[%s1384] sm:$0xff]
          %v2581 = vld [vmem:[%s1384 + $0x8] sm:$0xff]
          %v2582 = vld [vmem:[%s1384 + $0x10] sm:$0xff]
          %v2583 = vld [vmem:[%s1384 + $0x18] sm:$0xff]
          %v2584 = vld [vmem:[%s1384 + $0x20] sm:$0xff]
          %v2585 = vld [vmem:[%s1384 + $0x28] sm:$0xff]
          %v2586 = vld [vmem:[%s1384 + $0x30] sm:$0xff]
          %v2587 = vld [vmem:[%s1384 + $0x38] sm:$0xff]
          %v2588 = vld [vmem:[%s1384 + $0x40] sm:$0xff]
          %v2589 = vld [vmem:[%s1384 + $0x48] sm:$0xff]
          %v2590 = vld [vmem:[%s1384 + $0x50] sm:$0xff]
          %v2591 = vld [vmem:[%s1384 + $0x58] sm:$0xff]
          %v2592 = vld [vmem:[%s1384 + $0x60] sm:$0xff]
          %v2593 = vld [vmem:[%s1384 + $0x68] sm:$0xff]
          %v2594 = vld [vmem:[%s1384 + $0x70] sm:$0xff]
          %v2595 = vld [vmem:[%s1384 + $0x78] sm:$0xff]
          %v2596 = vld [vmem:[%s1384 + $0x80] sm:$0xff]
          %v2597 = vld [vmem:[%s1384 + $0x88] sm:$0xff]
          %v2598 = vld [vmem:[%s1384 + $0x90] sm:$0xff]
          %v2599 = vld [vmem:[%s1384 + $0x98] sm:$0xff]
          %v2600 = vld [vmem:[%s1384 + $0xa0] sm:$0xff]
          %v2601 = vld [vmem:[%s1384 + $0xa8] sm:$0xff]
          %v2602 = vld [vmem:[%s1384 + $0xb0] sm:$0xff]
          %v2603 = vld [vmem:[%s1384 + $0xb8] sm:$0xff]
          %v2604 = vld [vmem:[%s1384 + $0xc0] sm:$0xff]
          %v2605 = vld [vmem:[%s1384 + $0xc8] sm:$0xff]
          %v2606 = vld [vmem:[%s1384 + $0xd0] sm:$0xff]
          %v2607 = vld [vmem:[%s1384 + $0xd8] sm:$0xff]
          %v2608 = vld [vmem:[%s1384 + $0xe0] sm:$0xff]
          %v2609 = vld [vmem:[%s1384 + $0xe8] sm:$0xff]
          %v2610 = vld [vmem:[%s1384 + $0xf0] sm:$0xff]
          %v2611 = vld [vmem:[%s1384 + $0xf8] sm:$0xff]
          %v2612 = vmax.f32 %v2548, %v2580
          %v2613 = vmax.f32 %v2549, %v2581
          %v2614 = vmax.f32 %v2550, %v2582
          %v2615 = vmax.f32 %v2551, %v2583
          %v2616 = vmax.f32 %v2552, %v2584
          %v2617 = vmax.f32 %v2553, %v2585
          %v2618 = vmax.f32 %v2554, %v2586
          %v2619 = vmax.f32 %v2555, %v2587
          %v2620 = vmax.f32 %v2556, %v2588
          %v2621 = vmax.f32 %v2557, %v2589
          %v2622 = vmax.f32 %v2558, %v2590
          %v2623 = vmax.f32 %v2559, %v2591
          %v2624 = vmax.f32 %v2560, %v2592
          %v2625 = vmax.f32 %v2561, %v2593
          %v2626 = vmax.f32 %v2562, %v2594
          %v2627 = vmax.f32 %v2563, %v2595
          %v2628 = vmax.f32 %v2564, %v2596
          %v2629 = vmax.f32 %v2565, %v2597
          %v2630 = vmax.f32 %v2566, %v2598
          %v2631 = vmax.f32 %v2567, %v2599
          %v2632 = vmax.f32 %v2568, %v2600
          %v2633 = vmax.f32 %v2569, %v2601
          %v2634 = vmax.f32 %v2570, %v2602
          %v2635 = vmax.f32 %v2571, %v2603
          %v2636 = vmax.f32 %v2572, %v2604
          %v2637 = vmax.f32 %v2573, %v2605
          %v2638 = vmax.f32 %v2574, %v2606
          %v2639 = vmax.f32 %v2575, %v2607
          %v2640 = vmax.f32 %v2576, %v2608
          %v2641 = vmax.f32 %v2577, %v2609
          %v2642 = vmax.f32 %v2578, %v2610
          %v2643 = vmax.f32 %v2579, %v2611
          %v2644 = vld [vmem:[%s1771] sm:$0xff]
          %v2645 = vld [vmem:[%s1771 + $0x8] sm:$0xff]
          %v2646 = vld [vmem:[%s1771 + $0x10] sm:$0xff]
          %v2647 = vld [vmem:[%s1771 + $0x18] sm:$0xff]
          %v2648 = vld [vmem:[%s1771 + $0x20] sm:$0xff]
          %v2649 = vld [vmem:[%s1771 + $0x28] sm:$0xff]
          %v2650 = vld [vmem:[%s1771 + $0x30] sm:$0xff]
          %v2651 = vld [vmem:[%s1771 + $0x38] sm:$0xff]
          %v2652 = vld [vmem:[%s1771 + $0x40] sm:$0xff]
          %v2653 = vld [vmem:[%s1771 + $0x48] sm:$0xff]
          %v2654 = vld [vmem:[%s1771 + $0x50] sm:$0xff]
          %v2655 = vld [vmem:[%s1771 + $0x58] sm:$0xff]
          %v2656 = vld [vmem:[%s1771 + $0x60] sm:$0xff]
          %v2657 = vld [vmem:[%s1771 + $0x68] sm:$0xff]
          %v2658 = vld [vmem:[%s1771 + $0x70] sm:$0xff]
          %v2659 = vld [vmem:[%s1771 + $0x78] sm:$0xff]
          %v2660 = vld [vmem:[%s1771 + $0x80] sm:$0xff]
          %v2661 = vld [vmem:[%s1771 + $0x88] sm:$0xff]
          %v2662 = vld [vmem:[%s1771 + $0x90] sm:$0xff]
          %v2663 = vld [vmem:[%s1771 + $0x98] sm:$0xff]
          %v2664 = vld [vmem:[%s1771 + $0xa0] sm:$0xff]
          %v2665 = vld [vmem:[%s1771 + $0xa8] sm:$0xff]
          %v2666 = vld [vmem:[%s1771 + $0xb0] sm:$0xff]
          %v2667 = vld [vmem:[%s1771 + $0xb8] sm:$0xff]
          %v2668 = vld [vmem:[%s1771 + $0xc0] sm:$0xff]
          %v2669 = vld [vmem:[%s1771 + $0xc8] sm:$0xff]
          %v2670 = vld [vmem:[%s1771 + $0xd0] sm:$0xff]
          %v2671 = vld [vmem:[%s1771 + $0xd8] sm:$0xff]
          %v2672 = vld [vmem:[%s1771 + $0xe0] sm:$0xff]
          %v2673 = vld [vmem:[%s1771 + $0xe8] sm:$0xff]
          %v2674 = vld [vmem:[%s1771 + $0xf0] sm:$0xff]
          %v2675 = vld [vmem:[%s1771 + $0xf8] sm:$0xff]
          %v2676 = vmax.f32 %v2612, %v2644
          %v2677 = vmax.f32 %v2613, %v2645
          %v2678 = vmax.f32 %v2614, %v2646
          %v2679 = vmax.f32 %v2615, %v2647
          %v2680 = vmax.f32 %v2616, %v2648
          %v2681 = vmax.f32 %v2617, %v2649
          %v2682 = vmax.f32 %v2618, %v2650
          %v2683 = vmax.f32 %v2619, %v2651
          %v2684 = vmax.f32 %v2620, %v2652
          %v2685 = vmax.f32 %v2621, %v2653
          %v2686 = vmax.f32 %v2622, %v2654
          %v2687 = vmax.f32 %v2623, %v2655
          %v2688 = vmax.f32 %v2624, %v2656
          %v2689 = vmax.f32 %v2625, %v2657
          %v2690 = vmax.f32 %v2626, %v2658
          %v2691 = vmax.f32 %v2627, %v2659
          %v2692 = vmax.f32 %v2628, %v2660
          %v2693 = vmax.f32 %v2629, %v2661
          %v2694 = vmax.f32 %v2630, %v2662
          %v2695 = vmax.f32 %v2631, %v2663
          %v2696 = vmax.f32 %v2632, %v2664
          %v2697 = vmax.f32 %v2633, %v2665
          %v2698 = vmax.f32 %v2634, %v2666
          %v2699 = vmax.f32 %v2635, %v2667
          %v2700 = vmax.f32 %v2636, %v2668
          %v2701 = vmax.f32 %v2637, %v2669
          %v2702 = vmax.f32 %v2638, %v2670
          %v2703 = vmax.f32 %v2639, %v2671
          %v2704 = vmax.f32 %v2640, %v2672
          %v2705 = vmax.f32 %v2641, %v2673
          %v2706 = vmax.f32 %v2642, %v2674
          %v2707 = vmax.f32 %v2643, %v2675
          %v2708 = vld [vmem:[%s2158] sm:$0xff]
          %v2709 = vld [vmem:[%s2158 + $0x8] sm:$0xff]
          %v2710 = vld [vmem:[%s2158 + $0x10] sm:$0xff]
          %v2711 = vld [vmem:[%s2158 + $0x18] sm:$0xff]
          %v2712 = vld [vmem:[%s2158 + $0x20] sm:$0xff]
          %v2713 = vld [vmem:[%s2158 + $0x28] sm:$0xff]
          %v2714 = vld [vmem:[%s2158 + $0x30] sm:$0xff]
          %v2715 = vld [vmem:[%s2158 + $0x38] sm:$0xff]
          %v2716 = vld [vmem:[%s2158 + $0x40] sm:$0xff]
          %v2717 = vld [vmem:[%s2158 + $0x48] sm:$0xff]
          %v2718 = vld [vmem:[%s2158 + $0x50] sm:$0xff]
          %v2719 = vld [vmem:[%s2158 + $0x58] sm:$0xff]
          %v2720 = vld [vmem:[%s2158 + $0x60] sm:$0xff]
          %v2721 = vld [vmem:[%s2158 + $0x68] sm:$0xff]
          %v2722 = vld [vmem:[%s2158 + $0x70] sm:$0xff]
          %v2723 = vld [vmem:[%s2158 + $0x78] sm:$0xff]
          %v2724 = vld [vmem:[%s2158 + $0x80] sm:$0xff]
          %v2725 = vld [vmem:[%s2158 + $0x88] sm:$0xff]
          %v2726 = vld [vmem:[%s2158 + $0x90] sm:$0xff]
          %v2727 = vld [vmem:[%s2158 + $0x98] sm:$0xff]
          %v2728 = vld [vmem:[%s2158 + $0xa0] sm:$0xff]
          %v2729 = vld [vmem:[%s2158 + $0xa8] sm:$0xff]
          %v2730 = vld [vmem:[%s2158 + $0xb0] sm:$0xff]
          %v2731 = vld [vmem:[%s2158 + $0xb8] sm:$0xff]
          %v2732 = vld [vmem:[%s2158 + $0xc0] sm:$0xff]
          %v2733 = vld [vmem:[%s2158 + $0xc8] sm:$0xff]
          %v2734 = vld [vmem:[%s2158 + $0xd0] sm:$0xff]
          %v2735 = vld [vmem:[%s2158 + $0xd8] sm:$0xff]
          %v2736 = vld [vmem:[%s2158 + $0xe0] sm:$0xff]
          %v2737 = vld [vmem:[%s2158 + $0xe8] sm:$0xff]
          %v2738 = vld [vmem:[%s2158 + $0xf0] sm:$0xff]
          %v2739 = vld [vmem:[%s2158 + $0xf8] sm:$0xff]
          %v2740 = vmax.f32 %v2676, %v2708
          %v2741 = vmax.f32 %v2677, %v2709
          %v2742 = vmax.f32 %v2678, %v2710
          %v2743 = vmax.f32 %v2679, %v2711
          %v2744 = vmax.f32 %v2680, %v2712
          %v2745 = vmax.f32 %v2681, %v2713
          %v2746 = vmax.f32 %v2682, %v2714
          %v2747 = vmax.f32 %v2683, %v2715
          %v2748 = vmax.f32 %v2684, %v2716
          %v2749 = vmax.f32 %v2685, %v2717
          %v2750 = vmax.f32 %v2686, %v2718
          %v2751 = vmax.f32 %v2687, %v2719
          %v2752 = vmax.f32 %v2688, %v2720
          %v2753 = vmax.f32 %v2689, %v2721
          %v2754 = vmax.f32 %v2690, %v2722
          %v2755 = vmax.f32 %v2691, %v2723
          %v2756 = vmax.f32 %v2692, %v2724
          %v2757 = vmax.f32 %v2693, %v2725
          %v2758 = vmax.f32 %v2694, %v2726
          %v2759 = vmax.f32 %v2695, %v2727
          %v2760 = vmax.f32 %v2696, %v2728
          %v2761 = vmax.f32 %v2697, %v2729
          %v2762 = vmax.f32 %v2698, %v2730
          %v2763 = vmax.f32 %v2699, %v2731
          %v2764 = vmax.f32 %v2700, %v2732
          %v2765 = vmax.f32 %v2701, %v2733
          %v2766 = vmax.f32 %v2702, %v2734
          %v2767 = vmax.f32 %v2703, %v2735
          %v2768 = vmax.f32 %v2704, %v2736
          %v2769 = vmax.f32 %v2705, %v2737
          %v2770 = vmax.f32 %v2706, %v2738
          %v2771 = vmax.f32 %v2707, %v2739
          %v2772 = vld [vmem:[%s792] sm:$0x1]
          %v2774 = vlaneseq
          %v2775 = vshrl.u32 %v2774, 7
          %v2776 = vsub.s32 0, %v2775
          %v2777 = vrot.slane %v2772, %v2776
          %v2779 = vadd.f32 %v2740, %v2777
          %v2780 = vadd.f32 %v2741, %v2777
          %v2781 = vadd.f32 %v2742, %v2777
          %v2782 = vadd.f32 %v2743, %v2777
          %v2783 = vadd.f32 %v2744, %v2777
          %v2784 = vadd.f32 %v2745, %v2777
          %v2785 = vadd.f32 %v2746, %v2777
          %v2786 = vadd.f32 %v2747, %v2777
          %v2787 = vadd.f32 %v2748, %v2777
          %v2788 = vadd.f32 %v2749, %v2777
          %v2789 = vadd.f32 %v2750, %v2777
          %v2790 = vadd.f32 %v2751, %v2777
          %v2791 = vadd.f32 %v2752, %v2777
          %v2792 = vadd.f32 %v2753, %v2777
          %v2793 = vadd.f32 %v2754, %v2777
          %v2794 = vadd.f32 %v2755, %v2777
          %v2795 = vadd.f32 %v2756, %v2777
          %v2796 = vadd.f32 %v2757, %v2777
          %v2797 = vadd.f32 %v2758, %v2777
          %v2798 = vadd.f32 %v2759, %v2777
          %v2799 = vadd.f32 %v2760, %v2777
          %v2800 = vadd.f32 %v2761, %v2777
          %v2801 = vadd.f32 %v2762, %v2777
          %v2802 = vadd.f32 %v2763, %v2777
          %v2803 = vadd.f32 %v2764, %v2777
          %v2804 = vadd.f32 %v2765, %v2777
          %v2805 = vadd.f32 %v2766, %v2777
          %v2806 = vadd.f32 %v2767, %v2777
          %v2807 = vadd.f32 %v2768, %v2777
          %v2808 = vadd.f32 %v2769, %v2777
          %v2809 = vadd.f32 %v2770, %v2777
          %v2810 = vadd.f32 %v2771, %v2777
          %v2811 = vmax.f32 %v2779, 0.0
          %v2812 = vmax.f32 %v2780, 0.0
          %v2813 = vmax.f32 %v2781, 0.0
          %v2814 = vmax.f32 %v2782, 0.0
          %v2815 = vmax.f32 %v2783, 0.0
          %v2816 = vmax.f32 %v2784, 0.0
          %v2817 = vmax.f32 %v2785, 0.0
          %v2818 = vmax.f32 %v2786, 0.0
          %v2819 = vmax.f32 %v2787, 0.0
          %v2820 = vmax.f32 %v2788, 0.0
          %v2821 = vmax.f32 %v2789, 0.0
          %v2822 = vmax.f32 %v2790, 0.0
          %v2823 = vmax.f32 %v2791, 0.0
          %v2824 = vmax.f32 %v2792, 0.0
          %v2825 = vmax.f32 %v2793, 0.0
          %v2826 = vmax.f32 %v2794, 0.0
          %v2827 = vmax.f32 %v2795, 0.0
          %v2828 = vmax.f32 %v2796, 0.0
          %v2829 = vmax.f32 %v2797, 0.0
          %v2830 = vmax.f32 %v2798, 0.0
          %v2831 = vmax.f32 %v2799, 0.0
          %v2832 = vmax.f32 %v2800, 0.0
          %v2833 = vmax.f32 %v2801, 0.0
          %v2834 = vmax.f32 %v2802, 0.0
          %v2835 = vmax.f32 %v2803, 0.0
          %v2836 = vmax.f32 %v2804, 0.0
          %v2837 = vmax.f32 %v2805, 0.0
          %v2838 = vmax.f32 %v2806, 0.0
          %v2839 = vmax.f32 %v2807, 0.0
          %v2840 = vmax.f32 %v2808, 0.0
          %v2841 = vmax.f32 %v2809, 0.0
          %v2842 = vmax.f32 %v2810, 0.0
          %2843 = vst [vmem:[%s800] sm:$0xff] %v2811
          %2844 = vst [vmem:[%s800 + $0x8] sm:$0xff] %v2812
          %2845 = vst [vmem:[%s800 + $0x10] sm:$0xff] %v2813
          %2846 = vst [vmem:[%s800 + $0x18] sm:$0xff] %v2814
          %2847 = vst [vmem:[%s800 + $0x20] sm:$0xff] %v2815
          %2848 = vst [vmem:[%s800 + $0x28] sm:$0xff] %v2816
          %2849 = vst [vmem:[%s800 + $0x30] sm:$0xff] %v2817
          %2850 = vst [vmem:[%s800 + $0x38] sm:$0xff] %v2818
          %2851 = vst [vmem:[%s800 + $0x40] sm:$0xff] %v2819
          %2852 = vst [vmem:[%s800 + $0x48] sm:$0xff] %v2820
          %2853 = vst [vmem:[%s800 + $0x50] sm:$0xff] %v2821
          %2854 = vst [vmem:[%s800 + $0x58] sm:$0xff] %v2822
          %2855 = vst [vmem:[%s800 + $0x60] sm:$0xff] %v2823
          %2856 = vst [vmem:[%s800 + $0x68] sm:$0xff] %v2824
          %2857 = vst [vmem:[%s800 + $0x70] sm:$0xff] %v2825
          %2858 = vst [vmem:[%s800 + $0x78] sm:$0xff] %v2826
          %2859 = vst [vmem:[%s800 + $0x80] sm:$0xff] %v2827
          %2860 = vst [vmem:[%s800 + $0x88] sm:$0xff] %v2828
          %2861 = vst [vmem:[%s800 + $0x90] sm:$0xff] %v2829
          %2862 = vst [vmem:[%s800 + $0x98] sm:$0xff] %v2830
          %2863 = vst [vmem:[%s800 + $0xa0] sm:$0xff] %v2831
          %2864 = vst [vmem:[%s800 + $0xa8] sm:$0xff] %v2832
          %2865 = vst [vmem:[%s800 + $0xb0] sm:$0xff] %v2833
          %2866 = vst [vmem:[%s800 + $0xb8] sm:$0xff] %v2834
          %2867 = vst [vmem:[%s800 + $0xc0] sm:$0xff] %v2835
          %2868 = vst [vmem:[%s800 + $0xc8] sm:$0xff] %v2836
          %2869 = vst [vmem:[%s800 + $0xd0] sm:$0xff] %v2837
          %2870 = vst [vmem:[%s800 + $0xd8] sm:$0xff] %v2838
          %2871 = vst [vmem:[%s800 + $0xe0] sm:$0xff] %v2839
          %2872 = vst [vmem:[%s800 + $0xe8] sm:$0xff] %v2840
          %2873 = vst [vmem:[%s800 + $0xf0] sm:$0xff] %v2841
          %2874 = vst [vmem:[%s800 + $0xf8] sm:$0xff] %v2842
        $region81: #{convnet_forward.4} parent=68 // pred_fallthru
          _
        %s2875 = smul.u32 32, %s19
        %p2876 = scmp.lt.s32.totalorder %s2875, 63
        %s2877 = scalar_select %p2876, %s2875, 63
        %p2878 = scmp.lt.s32.totalorder %s20, 0
        %s2879 = scalar_select %p2878, %s20, 0
        %s2880 = sadd.s32 %s2879, %s2877
        %s2881 = smul.addr %s2880, 8
        %s2882 = scalar_lea.vmem %s3, %s2881
        // Predicated region
        $region82: #{convnet_forward.4} parent=68 // pred_check
          %p2883 = pneg %p135
        $region83: #{convnet_forward.4} parent=68 // pred_check_branch
          %2885 = sbr.rel (%p2883) target = $region85
        $region84: #{convnet_forward.4} parent=68 // pred_region
          %s2886 = smul.u32 32, %s19
        $region85: #{convnet_forward.4} parent=68 // pred_fallthru
          _
      $region69: #{convnet_forward.4} parent=5 // pred_fallthru
        _
      %p2887 = scmp.le.s32.totalorder 2, %s9
      // Predicated region
      $region86: #{convnet_forward.4} parent=5 // pred_check
        %p2888 = pneg %p2887
      $region87: #{convnet_forward.4} parent=5 // pred_check_branch
        %2890 = sbr.rel (%p2888) target = $region89
      $region88: #{convnet_forward.4} parent=5 // pred_region
        %s2891 = ssub.s32 %s9, 2
        // Predicated region
        $region90: #{convnet_forward.4} parent=88 // pred_check
          %p2892 = pneg %p141
        $region91: #{convnet_forward.4} parent=88 // pred_check_branch
          %2894 = sbr.rel (%p2892) target = $region93
        $region92: #{convnet_forward.4} parent=88 // pred_region
          %s2895 = smul.u32 32, %s22
          %p2896 = scmp.lt.s32.totalorder %s2895, 63
          %s2897 = scalar_select %p2896, %s2895, 63
          %p2898 = scmp.lt.s32.totalorder %s23, 0
          %s2899 = scalar_select %p2898, %s23, 0
          %s2900 = sadd.s32 %s2899, %s2897
          %s2901 = smul.addr %s2900, 8
          %s2902 = scalar_lea.vmem %s3, %s2901
        $region93: #{convnet_forward.4} parent=88 // pred_fallthru
          _
      $region89: #{convnet_forward.4} parent=5 // pred_fallthru
        _
    $region6: #{convnet_forward.4} parent=1 // loop_footer
      %s13 = sadd.s32 1, %s9
    $region7: #{convnet_forward.4} parent=1 // loop_footer_branch
      %8 = sbr.rel target = $region3
    $region8: #{convnet_forward.4} parent=1 // loop_exit
      _

// kernel: convnet_forward.5
$region0: #{convnet_forward.5}
  #allocation0 [shape = 'u32[]', space=smem, size = 0x4, offset = 0x4, fixed_abs, tag = 'smem constant byte address 0x4 - core index']
  #allocation1 [shape = 'u32[144,128]{1,0:T(1,128)}', space=vmem, size = 0x12000, scoped, tag = 'internal scratch']
  #allocation2 [shape = 'f32[4,104,128]{2,1,0:T(8,128)}', space=vmem, size = 0x34000, scoped, tag = 'scratch operand']
  %s0 = inlined_call_operand.vmem [shape: bf16[4,104,896], index: 0, kind: input, shape index: {}]
  %s1 = inlined_call_operand.vmem [shape: bf16[896,128], index: 1, kind: input, shape index: {}]
  %s2 = inlined_call_operand.vmem [shape: f32[1,128], index: 2, kind: input, shape index: {}]
  %s3 = inlined_call_operand.vmem [shape: f32[104,128], index: 3, kind: output, shape index: {}]
  %s4 = sld [smem:[#allocation0]]
  $region30: #{convnet_forward.5} parent=0
    _
  %s6 = ssub.s32 1, %s4
  %s7 = scalar_select 0, %s6, %s4
  // Predicated region
  $region2: #{convnet_forward.5} parent=0 // pred_check
    _
  $region3: #{convnet_forward.5} parent=0 // pred_check_branch
    %9 = sbr.rel (0) target = $region5
  $region4: #{convnet_forward.5} parent=0 // pred_region
    _
  $region5: #{convnet_forward.5} parent=0 // pred_fallthru
    _
  // Predicated region
  $region6: #{convnet_forward.5} parent=0 // pred_check
    _
  $region7: #{convnet_forward.5} parent=0 // pred_check_branch
    %11 = sbr.rel (0) target = $region9
  $region8: #{convnet_forward.5} parent=0 // pred_region
    _
  $region9: #{convnet_forward.5} parent=0 // pred_fallthru
    _
  // Predicated region
  $region10: #{convnet_forward.5} parent=0 // pred_check
    _
  $region11: #{convnet_forward.5} parent=0 // pred_check_branch
    %13 = sbr.rel (0) target = $region13
  $region12: #{convnet_forward.5} parent=0 // pred_region
    _
  $region13: #{convnet_forward.5} parent=0 // pred_fallthru
    _
  %p15 = scmp.eq.s32.totalorder 0, 0
  // Predicated region
  $region14: #{convnet_forward.5} parent=0 // pred_check
    %p16 = pneg %p15
  $region15: #{convnet_forward.5} parent=0 // pred_check_branch
    %18 = sbr.rel (%p16) target = $region17
  $region16: #{convnet_forward.5} parent=0 // pred_region
    %19 = vst [vmem:[#allocation2] sm:$0xff] 0.0
    %20 = vst [vmem:[#allocation2 + $0x8] sm:$0xff] 0.0
    %21 = vst [vmem:[#allocation2 + $0x10] sm:$0xff] 0.0
    %22 = vst [vmem:[#allocation2 + $0x18] sm:$0xff] 0.0
    %23 = vst [vmem:[#allocation2 + $0x20] sm:$0xff] 0.0
    %24 = vst [vmem:[#allocation2 + $0x28] sm:$0xff] 0.0
    %25 = vst [vmem:[#allocation2 + $0x30] sm:$0xff] 0.0
    %26 = vst [vmem:[#allocation2 + $0x38] sm:$0xff] 0.0
    %27 = vst [vmem:[#allocation2 + $0x40] sm:$0xff] 0.0
    %28 = vst [vmem:[#allocation2 + $0x48] sm:$0xff] 0.0
    %29 = vst [vmem:[#allocation2 + $0x50] sm:$0xff] 0.0
    %30 = vst [vmem:[#allocation2 + $0x58] sm:$0xff] 0.0
    %31 = vst [vmem:[#allocation2 + $0x60] sm:$0xff] 0.0
    %32 = vst [vmem:[#allocation2 + $0x68] sm:$0xff] 0.0
    %33 = vst [vmem:[#allocation2 + $0x70] sm:$0xff] 0.0
    %34 = vst [vmem:[#allocation2 + $0x78] sm:$0xff] 0.0
    %35 = vst [vmem:[#allocation2 + $0x80] sm:$0xff] 0.0
    %36 = vst [vmem:[#allocation2 + $0x88] sm:$0xff] 0.0
    %37 = vst [vmem:[#allocation2 + $0x90] sm:$0xff] 0.0
    %38 = vst [vmem:[#allocation2 + $0x98] sm:$0xff] 0.0
    %39 = vst [vmem:[#allocation2 + $0xa0] sm:$0xff] 0.0
    %40 = vst [vmem:[#allocation2 + $0xa8] sm:$0xff] 0.0
    %41 = vst [vmem:[#allocation2 + $0xb0] sm:$0xff] 0.0
    %42 = vst [vmem:[#allocation2 + $0xb8] sm:$0xff] 0.0
    %43 = vst [vmem:[#allocation2 + $0xc0] sm:$0xff] 0.0
    %44 = vst [vmem:[#allocation2 + $0xc8] sm:$0xff] 0.0
    %45 = vst [vmem:[#allocation2 + $0xd0] sm:$0xff] 0.0
    %46 = vst [vmem:[#allocation2 + $0xd8] sm:$0xff] 0.0
    %47 = vst [vmem:[#allocation2 + $0xe0] sm:$0xff] 0.0
    %48 = vst [vmem:[#allocation2 + $0xe8] sm:$0xff] 0.0
    %49 = vst [vmem:[#allocation2 + $0xf0] sm:$0xff] 0.0
    %50 = vst [vmem:[#allocation2 + $0xf8] sm:$0xff] 0.0
    %51 = vst [vmem:[#allocation2 + $0x100] sm:$0xff] 0.0
    %52 = vst [vmem:[#allocation2 + $0x108] sm:$0xff] 0.0
    %53 = vst [vmem:[#allocation2 + $0x110] sm:$0xff] 0.0
    %54 = vst [vmem:[#allocation2 + $0x118] sm:$0xff] 0.0
    %55 = vst [vmem:[#allocation2 + $0x120] sm:$0xff] 0.0
    %56 = vst [vmem:[#allocation2 + $0x128] sm:$0xff] 0.0
    %57 = vst [vmem:[#allocation2 + $0x130] sm:$0xff] 0.0
    %58 = vst [vmem:[#allocation2 + $0x138] sm:$0xff] 0.0
    %59 = vst [vmem:[#allocation2 + $0x140] sm:$0xff] 0.0
    %60 = vst [vmem:[#allocation2 + $0x148] sm:$0xff] 0.0
    %61 = vst [vmem:[#allocation2 + $0x150] sm:$0xff] 0.0
    %62 = vst [vmem:[#allocation2 + $0x158] sm:$0xff] 0.0
    %63 = vst [vmem:[#allocation2 + $0x160] sm:$0xff] 0.0
    %64 = vst [vmem:[#allocation2 + $0x168] sm:$0xff] 0.0
    %65 = vst [vmem:[#allocation2 + $0x170] sm:$0xff] 0.0
    %66 = vst [vmem:[#allocation2 + $0x178] sm:$0xff] 0.0
    %67 = vst [vmem:[#allocation2 + $0x180] sm:$0xff] 0.0
    %68 = vst [vmem:[#allocation2 + $0x188] sm:$0xff] 0.0
    %69 = vst [vmem:[#allocation2 + $0x190] sm:$0xff] 0.0
    %70 = vst [vmem:[#allocation2 + $0x198] sm:$0xff] 0.0
  $region17: #{convnet_forward.5} parent=0 // pred_fallthru
    _
  %v71 = vld [vmem:[%s1] sm:$0xf]
  %v72 = vld [vmem:[%s1 + $0x4] sm:$0xf]
  %v73 = vld [vmem:[%s1 + $0x8] sm:$0xf]
  %v74 = vld [vmem:[%s1 + $0xc] sm:$0xf]
  %v75 = vld [vmem:[%s1 + $0x10] sm:$0xf]
  %v76 = vld [vmem:[%s1 + $0x14] sm:$0xf]
  %v77 = vld [vmem:[%s1 + $0x18] sm:$0xf]
  %v78 = vld [vmem:[%s1 + $0x1c] sm:$0xf]
  %v79 = vld [vmem:[%s1 + $0x20] sm:$0xf]
  %v80 = vld [vmem:[%s1 + $0x24] sm:$0xf]
  %v81 = vld [vmem:[%s1 + $0x28] sm:$0xf]
  %v82 = vld [vmem:[%s1 + $0x2c] sm:$0xf]
  %v83 = vld [vmem:[%s1 + $0x30] sm:$0xf]
  %v84 = vld [vmem:[%s1 + $0x34] sm:$0xf]
  %v85 = vld [vmem:[%s1 + $0x38] sm:$0xf]
  %v86 = vld [vmem:[%s1 + $0x3c] sm:$0xf]
  %v87 = vld [vmem:[%s1 + $0x40] sm:$0xf]
  %v88 = vld [vmem:[%s1 + $0x44] sm:$0xf]
  %v89 = vld [vmem:[%s1 + $0x48] sm:$0xf]
  %v90 = vld [vmem:[%s1 + $0x4c] sm:$0xf]
  %v91 = vld [vmem:[%s1 + $0x50] sm:$0xf]
  %v92 = vld [vmem:[%s1 + $0x54] sm:$0xf]
  %v93 = vld [vmem:[%s1 + $0x58] sm:$0xf]
  %v94 = vld [vmem:[%s1 + $0x5c] sm:$0xf]
  %v95 = vld [vmem:[%s1 + $0x60] sm:$0xf]
  %v96 = vld [vmem:[%s1 + $0x64] sm:$0xf]
  %v97 = vld [vmem:[%s1 + $0x68] sm:$0xf]
  %v98 = vld [vmem:[%s1 + $0x6c] sm:$0xf]
  %v99 = vld [vmem:[%s1 + $0x70] sm:$0xf]
  %v100 = vld [vmem:[%s1 + $0x74] sm:$0xf]
  %v101 = vld [vmem:[%s1 + $0x78] sm:$0xf]
  %v102 = vld [vmem:[%s1 + $0x7c] sm:$0xf]
  %v103 = vld [vmem:[%s1 + $0x80] sm:$0xf]
  %v104 = vld [vmem:[%s1 + $0x84] sm:$0xf]
  %v105 = vld [vmem:[%s1 + $0x88] sm:$0xf]
  %v106 = vld [vmem:[%s1 + $0x8c] sm:$0xf]
  %v107 = vld [vmem:[%s1 + $0x90] sm:$0xf]
  %v108 = vld [vmem:[%s1 + $0x94] sm:$0xf]
  %v109 = vld [vmem:[%s1 + $0x98] sm:$0xf]
  %v110 = vld [vmem:[%s1 + $0x9c] sm:$0xf]
  %v111 = vld [vmem:[%s1 + $0xa0] sm:$0xf]
  %v112 = vld [vmem:[%s1 + $0xa4] sm:$0xf]
  %v113 = vld [vmem:[%s1 + $0xa8] sm:$0xf]
  %v114 = vld [vmem:[%s1 + $0xac] sm:$0xf]
  %v115 = vld [vmem:[%s1 + $0xb0] sm:$0xf]
  %v116 = vld [vmem:[%s1 + $0xb4] sm:$0xf]
  %v117 = vld [vmem:[%s1 + $0xb8] sm:$0xf]
  %v118 = vld [vmem:[%s1 + $0xbc] sm:$0xf]
  %v119 = vld [vmem:[%s1 + $0xc0] sm:$0xf]
  %v120 = vld [vmem:[%s1 + $0xc4] sm:$0xf]
  %v121 = vld [vmem:[%s1 + $0xc8] sm:$0xf]
  %v122 = vld [vmem:[%s1 + $0xcc] sm:$0xf]
  %v123 = vld [vmem:[%s1 + $0xd0] sm:$0xf]
  %v124 = vld [vmem:[%s1 + $0xd4] sm:$0xf]
  %v125 = vld [vmem:[%s1 + $0xd8] sm:$0xf]
  %v126 = vld [vmem:[%s1 + $0xdc] sm:$0xf]
  %v127 = vld [vmem:[%s1 + $0xe0] sm:$0xf]
  %v128 = vld [vmem:[%s1 + $0xe4] sm:$0xf]
  %v129 = vld [vmem:[%s1 + $0xe8] sm:$0xf]
  %v130 = vld [vmem:[%s1 + $0xec] sm:$0xf]
  %v131 = vld [vmem:[%s1 + $0xf0] sm:$0xf]
  %v132 = vld [vmem:[%s1 + $0xf4] sm:$0xf]
  %v133 = vld [vmem:[%s1 + $0xf8] sm:$0xf]
  %v134 = vld [vmem:[%s1 + $0xfc] sm:$0xf]
  %v135 = vld [vmem:[%s1 + $0x100] sm:$0xf]
  %v136 = vld [vmem:[%s1 + $0x104] sm:$0xf]
  %v137 = vld [vmem:[%s1 + $0x108] sm:$0xf]
  %v138 = vld [vmem:[%s1 + $0x10c] sm:$0xf]
  %v139 = vld [vmem:[%s1 + $0x110] sm:$0xf]
  %v140 = vld [vmem:[%s1 + $0x114] sm:$0xf]
  %v141 = vld [vmem:[%s1 + $0x118] sm:$0xf]
  %v142 = vld [vmem:[%s1 + $0x11c] sm:$0xf]
  %v143 = vld [vmem:[%s1 + $0x120] sm:$0xf]
  %v144 = vld [vmem:[%s1 + $0x124] sm:$0xf]
  %v145 = vld [vmem:[%s1 + $0x128] sm:$0xf]
  %v146 = vld [vmem:[%s1 + $0x12c] sm:$0xf]
  %v147 = vld [vmem:[%s1 + $0x130] sm:$0xf]
  %v148 = vld [vmem:[%s1 + $0x134] sm:$0xf]
  %v149 = vld [vmem:[%s1 + $0x138] sm:$0xf]
  %v150 = vld [vmem:[%s1 + $0x13c] sm:$0xf]
  %v151 = vld [vmem:[%s1 + $0x140] sm:$0xf]
  %v152 = vld [vmem:[%s1 + $0x144] sm:$0xf]
  %v153 = vld [vmem:[%s1 + $0x148] sm:$0xf]
  %v154 = vld [vmem:[%s1 + $0x14c] sm:$0xf]
  %v155 = vld [vmem:[%s1 + $0x150] sm:$0xf]
  %v156 = vld [vmem:[%s1 + $0x154] sm:$0xf]
  %v157 = vld [vmem:[%s1 + $0x158] sm:$0xf]
  %v158 = vld [vmem:[%s1 + $0x15c] sm:$0xf]
  %v159 = vld [vmem:[%s1 + $0x160] sm:$0xf]
  %v160 = vld [vmem:[%s1 + $0x164] sm:$0xf]
  %v161 = vld [vmem:[%s1 + $0x168] sm:$0xf]
  %v162 = vld [vmem:[%s1 + $0x16c] sm:$0xf]
  %v163 = vld [vmem:[%s1 + $0x170] sm:$0xf]
  %v164 = vld [vmem:[%s1 + $0x174] sm:$0xf]
  %v165 = vld [vmem:[%s1 + $0x178] sm:$0xf]
  %v166 = vld [vmem:[%s1 + $0x17c] sm:$0xf]
  %v167 = vld [vmem:[%s1 + $0x180] sm:$0xf]
  %v168 = vld [vmem:[%s1 + $0x184] sm:$0xf]
  %v169 = vld [vmem:[%s1 + $0x188] sm:$0xf]
  %v170 = vld [vmem:[%s1 + $0x18c] sm:$0xf]
  %v171 = vld [vmem:[%s1 + $0x190] sm:$0xf]
  %v172 = vld [vmem:[%s1 + $0x194] sm:$0xf]
  %v173 = vld [vmem:[%s1 + $0x198] sm:$0xf]
  %v174 = vld [vmem:[%s1 + $0x19c] sm:$0xf]
  %v175 = vld [vmem:[%s1 + $0x1a0] sm:$0xf]
  %v176 = vld [vmem:[%s1 + $0x1a4] sm:$0xf]
  %v177 = vld [vmem:[%s1 + $0x1a8] sm:$0xf]
  %v178 = vld [vmem:[%s1 + $0x1ac] sm:$0xf]
  %v179 = vld [vmem:[%s1 + $0x1b0] sm:$0xf]
  %v180 = vld [vmem:[%s1 + $0x1b4] sm:$0xf]
  %v181 = vld [vmem:[%s1 + $0x1b8] sm:$0xf]
  %v182 = vld [vmem:[%s1 + $0x1bc] sm:$0xf]
  %v183 = vld [vmem:[#allocation2] sm:$0xff]
  %v184 = vld [vmem:[#allocation2 + $0x8] sm:$0xff]
  %v185 = vld [vmem:[#allocation2 + $0x10] sm:$0xff]
  %v186 = vld [vmem:[#allocation2 + $0x18] sm:$0xff]
  %v187 = vld [vmem:[#allocation2 + $0x20] sm:$0xff]
  %v188 = vld [vmem:[#allocation2 + $0x28] sm:$0xff]
  %v189 = vld [vmem:[#allocation2 + $0x30] sm:$0xff]
  %v190 = vld [vmem:[#allocation2 + $0x38] sm:$0xff]
  %v191 = vld [vmem:[#allocation2 + $0x40] sm:$0xff]
  %v192 = vld [vmem:[#allocation2 + $0x48] sm:$0xff]
  %v193 = vld [vmem:[#allocation2 + $0x50] sm:$0xff]
  %v194 = vld [vmem:[#allocation2 + $0x58] sm:$0xff]
  %v195 = vld [vmem:[#allocation2 + $0x60] sm:$0xff]
  %v196 = vld [vmem:[%s0] sm:$0xff]
  %v197 = vld [vmem:[%s0 + $0x8] sm:$0xff]
  %v198 = vld [vmem:[%s0 + $0x10] sm:$0xff]
  %v199 = vld [vmem:[%s0 + $0x18] sm:$0xf]
  %v200 = vld [vmem:[%s0 + $0x1c] sm:$0xff]
  %v201 = vld [vmem:[%s0 + $0x24] sm:$0xff]
  %v202 = vld [vmem:[%s0 + $0x2c] sm:$0xff]
  %v203 = vld [vmem:[%s0 + $0x34] sm:$0xf]
  %v204 = vld [vmem:[%s0 + $0x38] sm:$0xff]
  %v205 = vld [vmem:[%s0 + $0x40] sm:$0xff]
  %v206 = vld [vmem:[%s0 + $0x48] sm:$0xff]
  %v207 = vld [vmem:[%s0 + $0x50] sm:$0xf]
  %v208 = vld [vmem:[%s0 + $0x54] sm:$0xff]
  %v209 = vld [vmem:[%s0 + $0x5c] sm:$0xff]
  %v210 = vld [vmem:[%s0 + $0x64] sm:$0xff]
  %v211 = vld [vmem:[%s0 + $0x6c] sm:$0xf]
  %v212 = vld [vmem:[%s0 + $0x70] sm:$0xff]
  %v213 = vld [vmem:[%s0 + $0x78] sm:$0xff]
  %v214 = vld [vmem:[%s0 + $0x80] sm:$0xff]
  %v215 = vld [vmem:[%s0 + $0x88] sm:$0xf]
  %v216 = vld [vmem:[%s0 + $0x8c] sm:$0xff]
  %v217 = vld [vmem:[%s0 + $0x94] sm:$0xff]
  %v218 = vld [vmem:[%s0 + $0x9c] sm:$0xff]
  %v219 = vld [vmem:[%s0 + $0xa4] sm:$0xf]
  %v220 = vld [vmem:[%s0 + $0xa8] sm:$0xff]
  %v221 = vld [vmem:[%s0 + $0xb0] sm:$0xff]
  %v222 = vld [vmem:[%s0 + $0xb8] sm:$0xff]
  %v223 = vld [vmem:[%s0 + $0xc0] sm:$0xf]
  %v224 = vld [vmem:[%s0 + $0xc4] sm:$0xff]
  %v225 = vld [vmem:[%s0 + $0xcc] sm:$0xff]
  %v226 = vld [vmem:[%s0 + $0xd4] sm:$0xff]
  %v227 = vld [vmem:[%s0 + $0xdc] sm:$0xf]
  %v228 = vld [vmem:[%s0 + $0xe0] sm:$0xff]
  %v229 = vld [vmem:[%s0 + $0xe8] sm:$0xff]
  %v230 = vld [vmem:[%s0 + $0xf0] sm:$0xff]
  %v231 = vld [vmem:[%s0 + $0xf8] sm:$0xf]
  %v232 = vld [vmem:[%s0 + $0xfc] sm:$0xff]
  %v233 = vld [vmem:[%s0 + $0x104] sm:$0xff]
  %v234 = vld [vmem:[%s0 + $0x10c] sm:$0xff]
  %v235 = vld [vmem:[%s0 + $0x114] sm:$0xf]
  %v236 = vld [vmem:[%s0 + $0x118] sm:$0xff]
  %v237 = vld [vmem:[%s0 + $0x120] sm:$0xff]
  %v238 = vld [vmem:[%s0 + $0x128] sm:$0xff]
  %v239 = vld [vmem:[%s0 + $0x130] sm:$0xf]
  %v240 = vld [vmem:[%s0 + $0x134] sm:$0xff]
  %v241 = vld [vmem:[%s0 + $0x13c] sm:$0xff]
  %v242 = vld [vmem:[%s0 + $0x144] sm:$0xff]
  %v243 = vld [vmem:[%s0 + $0x14c] sm:$0xf]
  %v244 = vld [vmem:[%s0 + $0x150] sm:$0xff]
  %v245 = vld [vmem:[%s0 + $0x158] sm:$0xff]
  %v246 = vld [vmem:[%s0 + $0x160] sm:$0xff]
  %v247 = vld [vmem:[%s0 + $0x168] sm:$0xf]
  %v300 = vunpack.c.l.b16 %v196
  %v301 = vunpack.c.h.b16 %v196
  %v302 = vunpack.c.l.b16 %v197
  %v303 = vunpack.c.h.b16 %v197
  %v304 = vunpack.c.l.b16 %v198
  %v305 = vunpack.c.h.b16 %v198
  %v306 = vunpack.c.l.b16 %v199
  %v307 = vunpack.c.l.b16 %v200
  %v308 = vunpack.c.h.b16 %v200
  %v309 = vunpack.c.l.b16 %v201
  %v310 = vunpack.c.h.b16 %v201
  %v311 = vunpack.c.l.b16 %v202
  %v312 = vunpack.c.h.b16 %v202
  %v313 = vunpack.c.l.b16 %v203
  %v314 = vunpack.c.l.b16 %v204
  %v315 = vunpack.c.h.b16 %v204
  %v316 = vunpack.c.l.b16 %v205
  %v317 = vunpack.c.h.b16 %v205
  %v318 = vunpack.c.l.b16 %v206
  %v319 = vunpack.c.h.b16 %v206
  %v320 = vunpack.c.l.b16 %v207
  %v321 = vunpack.c.l.b16 %v208
  %v322 = vunpack.c.h.b16 %v208
  %v323 = vunpack.c.l.b16 %v209
  %v324 = vunpack.c.h.b16 %v209
  %v325 = vunpack.c.l.b16 %v210
  %v326 = vunpack.c.h.b16 %v210
  %v327 = vunpack.c.l.b16 %v211
  %v328 = vunpack.c.l.b16 %v212
  %v329 = vunpack.c.h.b16 %v212
  %v330 = vunpack.c.l.b16 %v213
  %v331 = vunpack.c.h.b16 %v213
  %v332 = vunpack.c.l.b16 %v214
  %v333 = vunpack.c.h.b16 %v214
  %v334 = vunpack.c.l.b16 %v215
  %v335 = vunpack.c.l.b16 %v216
  %v336 = vunpack.c.h.b16 %v216
  %v337 = vunpack.c.l.b16 %v217
  %v338 = vunpack.c.h.b16 %v217
  %v339 = vunpack.c.l.b16 %v218
  %v340 = vunpack.c.h.b16 %v218
  %v341 = vunpack.c.l.b16 %v219
  %v342 = vunpack.c.l.b16 %v220
  %v343 = vunpack.c.h.b16 %v220
  %v344 = vunpack.c.l.b16 %v221
  %v345 = vunpack.c.h.b16 %v221
  %v346 = vunpack.c.l.b16 %v222
  %v347 = vunpack.c.h.b16 %v222
  %v348 = vunpack.c.l.b16 %v223
  %v349 = vunpack.c.l.b16 %v224
  %v350 = vunpack.c.h.b16 %v224
  %v351 = vunpack.c.l.b16 %v225
  %v352 = vunpack.c.h.b16 %v225
  %v353 = vunpack.c.l.b16 %v226
  %v354 = vunpack.c.h.b16 %v226
  %v355 = vunpack.c.l.b16 %v227
  %v356 = vunpack.c.l.b16 %v228
  %v357 = vunpack.c.h.b16 %v228
  %v358 = vunpack.c.l.b16 %v229
  %v359 = vunpack.c.h.b16 %v229
  %v360 = vunpack.c.l.b16 %v230
  %v361 = vunpack.c.h.b16 %v230
  %v362 = vunpack.c.l.b16 %v231
  %v363 = vunpack.c.l.b16 %v232
  %v364 = vunpack.c.h.b16 %v232
  %v365 = vunpack.c.l.b16 %v233
  %v366 = vunpack.c.h.b16 %v233
  %v367 = vunpack.c.l.b16 %v234
  %v368 = vunpack.c.h.b16 %v234
  %v369 = vunpack.c.l.b16 %v235
  %v370 = vunpack.c.l.b16 %v236
  %v371 = vunpack.c.h.b16 %v236
  %v372 = vunpack.c.l.b16 %v237
  %v373 = vunpack.c.h.b16 %v237
  %v374 = vunpack.c.l.b16 %v238
  %v375 = vunpack.c.h.b16 %v238
  %v376 = vunpack.c.l.b16 %v239
  %v377 = vunpack.c.l.b16 %v240
  %v378 = vunpack.c.h.b16 %v240
  %v379 = vunpack.c.l.b16 %v241
  %v380 = vunpack.c.h.b16 %v241
  %v381 = vunpack.c.l.b16 %v242
  %v382 = vunpack.c.h.b16 %v242
  %v383 = vunpack.c.l.b16 %v243
  %v384 = vunpack.c.l.b16 %v244
  %v385 = vunpack.c.h.b16 %v244
  %v386 = vunpack.c.l.b16 %v245
  %v387 = vunpack.c.h.b16 %v245
  %v388 = vunpack.c.l.b16 %v246
  %v389 = vunpack.c.h.b16 %v246
  %v390 = vunpack.c.l.b16 %v247
  %v391 = vpack.c.b16 %v307, %v300
  %v392 = vpack.c.b16 %v308, %v301
  %v393 = vpack.c.b16 %v309, %v302
  %v394 = vpack.c.b16 %v310, %v303
  %v395 = vpack.c.b16 %v311, %v304
  %v396 = vpack.c.b16 %v312, %v305
  %v397 = vpack.c.b16 %v313, %v306
  %v398 = vpack.c.b16 %v321, %v314
  %v399 = vpack.c.b16 %v322, %v315
  %v400 = vpack.c.b16 %v323, %v316
  %v401 = vpack.c.b16 %v324, %v317
  %v402 = vpack.c.b16 %v325, %v318
  %v403 = vpack.c.b16 %v326, %v319
  %v404 = vpack.c.b16 %v327, %v320
  %v405 = vpack.c.b16 %v335, %v328
  %v406 = vpack.c.b16 %v336, %v329
  %v407 = vpack.c.b16 %v337, %v330
  %v408 = vpack.c.b16 %v338, %v331
  %v409 = vpack.c.b16 %v339, %v332
  %v410 = vpack.c.b16 %v340, %v333
  %v411 = vpack.c.b16 %v341, %v334
  %v412 = vpack.c.b16 %v349, %v342
  %v413 = vpack.c.b16 %v350, %v343
  %v414 = vpack.c.b16 %v351, %v344
  %v415 = vpack.c.b16 %v352, %v345
  %v416 = vpack.c.b16 %v353, %v346
  %v417 = vpack.c.b16 %v354, %v347
  %v418 = vpack.c.b16 %v355, %v348
  %v419 = vpack.c.b16 %v363, %v356
  %v420 = vpack.c.b16 %v364, %v357
  %v421 = vpack.c.b16 %v365, %v358
  %v422 = vpack.c.b16 %v366, %v359
  %v423 = vpack.c.b16 %v367, %v360
  %v424 = vpack.c.b16 %v368, %v361
  %v425 = vpack.c.b16 %v369, %v362
  %v426 = vpack.c.b16 %v377, %v370
  %v427 = vpack.c.b16 %v378, %v371
  %v428 = vpack.c.b16 %v379, %v372
  %v429 = vpack.c.b16 %v380, %v373
  %v430 = vpack.c.b16 %v381, %v374
  %v431 = vpack.c.b16 %v382, %v375
  %v432 = vpack.c.b16 %v383, %v376
  %v433 = vpack.c.b16 %v384, %v384
  %v434 = vpack.c.b16 %v385, %v385
  %v435 = vpack.c.b16 %v386, %v386
  %v436 = vpack.c.b16 %v387, %v387
  %v437 = vpack.c.b16 %v388, %v388
  %v438 = vpack.c.b16 %v389, %v389
  %v439 = vpack.c.b16 %v390, %v390
  %v601 = vunpack.c.l.b16 %v71
  %v602 = vunpack.c.l.b16 %v72
  %v603 = vunpack.c.l.b16 %v73
  %v604 = vunpack.c.l.b16 %v74
  %v605 = vunpack.c.l.b16 %v75
  %v606 = vunpack.c.l.b16 %v76
  %v607 = vunpack.c.l.b16 %v77
  %v608 = vunpack.c.l.b16 %v78
  %v609 = vunpack.c.l.b16 %v79
  %v610 = vunpack.c.l.b16 %v80
  %v611 = vunpack.c.l.b16 %v81
  %v612 = vunpack.c.l.b16 %v82
  %v613 = vunpack.c.l.b16 %v83
  %v614 = vunpack.c.l.b16 %v84
  %v615 = vunpack.c.l.b16 %v85
  %v616 = vunpack.c.l.b16 %v86
  %v617 = vunpack.c.l.b16 %v87
  %v618 = vunpack.c.l.b16 %v88
  %v619 = vunpack.c.l.b16 %v89
  %v620 = vunpack.c.l.b16 %v90
  %v621 = vunpack.c.l.b16 %v91
  %v622 = vunpack.c.l.b16 %v92
  %v623 = vunpack.c.l.b16 %v93
  %v624 = vunpack.c.l.b16 %v94
  %v625 = vunpack.c.l.b16 %v95
  %v626 = vunpack.c.l.b16 %v96
  %v627 = vunpack.c.l.b16 %v97
  %v628 = vunpack.c.l.b16 %v98
  %v629 = vunpack.c.l.b16 %v99
  %v630 = vunpack.c.l.b16 %v100
  %v631 = vunpack.c.l.b16 %v101
  %v632 = vunpack.c.l.b16 %v102
  %v633 = vunpack.c.l.b16 %v103
  %v634 = vunpack.c.l.b16 %v104
  %v635 = vunpack.c.l.b16 %v105
  %v636 = vunpack.c.l.b16 %v106
  %v637 = vunpack.c.l.b16 %v107
  %v638 = vunpack.c.l.b16 %v108
  %v639 = vunpack.c.l.b16 %v109
  %v640 = vunpack.c.l.b16 %v110
  %v641 = vunpack.c.l.b16 %v111
  %v642 = vunpack.c.l.b16 %v112
  %v643 = vunpack.c.l.b16 %v113
  %v644 = vunpack.c.l.b16 %v114
  %v645 = vunpack.c.l.b16 %v115
  %v646 = vunpack.c.l.b16 %v116
  %v647 = vunpack.c.l.b16 %v117
  %v648 = vunpack.c.l.b16 %v118
  %v649 = vunpack.c.l.b16 %v119
  %v650 = vunpack.c.l.b16 %v120
  %v651 = vunpack.c.l.b16 %v121
  %v652 = vunpack.c.l.b16 %v122
  %v653 = vunpack.c.l.b16 %v123
  %v654 = vunpack.c.l.b16 %v124
  %v655 = vunpack.c.l.b16 %v125
  %v656 = vunpack.c.l.b16 %v126
  %v657 = vunpack.c.l.b16 %v127
  %v658 = vunpack.c.l.b16 %v128
  %v659 = vunpack.c.l.b16 %v129
  %v660 = vunpack.c.l.b16 %v130
  %v661 = vunpack.c.l.b16 %v131
  %v662 = vunpack.c.l.b16 %v132
  %v663 = vunpack.c.l.b16 %v133
  %v664 = vunpack.c.l.b16 %v134
  %v665 = vunpack.c.l.b16 %v135
  %v666 = vunpack.c.l.b16 %v136
  %v667 = vunpack.c.l.b16 %v137
  %v668 = vunpack.c.l.b16 %v138
  %v669 = vunpack.c.l.b16 %v139
  %v670 = vunpack.c.l.b16 %v140
  %v671 = vunpack.c.l.b16 %v141
  %v672 = vunpack.c.l.b16 %v142
  %v673 = vunpack.c.l.b16 %v143
  %v674 = vunpack.c.l.b16 %v144
  %v675 = vunpack.c.l.b16 %v145
  %v676 = vunpack.c.l.b16 %v146
  %v677 = vunpack.c.l.b16 %v147
  %v678 = vunpack.c.l.b16 %v148
  %v679 = vunpack.c.l.b16 %v149
  %v680 = vunpack.c.l.b16 %v150
  %v681 = vunpack.c.l.b16 %v151
  %v682 = vunpack.c.l.b16 %v152
  %v683 = vunpack.c.l.b16 %v153
  %v684 = vunpack.c.l.b16 %v154
  %v685 = vunpack.c.l.b16 %v155
  %v686 = vunpack.c.l.b16 %v156
  %v687 = vunpack.c.l.b16 %v157
  %v688 = vunpack.c.l.b16 %v158
  %v689 = vunpack.c.l.b16 %v159
  %v690 = vunpack.c.l.b16 %v160
  %v691 = vunpack.c.l.b16 %v161
  %v692 = vunpack.c.l.b16 %v162
  %v693 = vunpack.c.l.b16 %v163
  %v694 = vunpack.c.l.b16 %v164
  %v695 = vunpack.c.l.b16 %v165
  %v696 = vunpack.c.l.b16 %v166
  %v697 = vunpack.c.l.b16 %v167
  %v698 = vunpack.c.l.b16 %v168
  %v699 = vunpack.c.l.b16 %v169
  %v700 = vunpack.c.l.b16 %v170
  %v701 = vunpack.c.l.b16 %v171
  %v702 = vunpack.c.l.b16 %v172
  %v703 = vunpack.c.l.b16 %v173
  %v704 = vunpack.c.l.b16 %v174
  %v705 = vunpack.c.l.b16 %v175
  %v706 = vunpack.c.l.b16 %v176
  %v707 = vunpack.c.l.b16 %v177
  %v708 = vunpack.c.l.b16 %v178
  %v709 = vunpack.c.l.b16 %v179
  %v710 = vunpack.c.l.b16 %v180
  %v711 = vunpack.c.l.b16 %v181
  %v712 = vunpack.c.l.b16 %v182
  %v713 = vpack.c.b16 %v602, %v601
  %v714 = vpack.c.b16 %v604, %v603
  %v715 = vpack.c.b16 %v606, %v605
  %v716 = vpack.c.b16 %v608, %v607
  %v717 = vpack.c.b16 %v610, %v609
  %v718 = vpack.c.b16 %v612, %v611
  %v719 = vpack.c.b16 %v614, %v613
  %v720 = vpack.c.b16 %v616, %v615
  %v721 = vpack.c.b16 %v618, %v617
  %v722 = vpack.c.b16 %v620, %v619
  %v723 = vpack.c.b16 %v622, %v621
  %v724 = vpack.c.b16 %v624, %v623
  %v725 = vpack.c.b16 %v626, %v625
  %v726 = vpack.c.b16 %v628, %v627
  %v727 = vpack.c.b16 %v630, %v629
  %v728 = vpack.c.b16 %v632, %v631
  %v729 = vpack.c.b16 %v634, %v633
  %v730 = vpack.c.b16 %v636, %v635
  %v731 = vpack.c.b16 %v638, %v637
  %v732 = vpack.c.b16 %v640, %v639
  %v733 = vpack.c.b16 %v642, %v641
  %v734 = vpack.c.b16 %v644, %v643
  %v735 = vpack.c.b16 %v646, %v645
  %v736 = vpack.c.b16 %v648, %v647
  %v737 = vpack.c.b16 %v650, %v649
  %v738 = vpack.c.b16 %v652, %v651
  %v739 = vpack.c.b16 %v654, %v653
  %v740 = vpack.c.b16 %v656, %v655
  %v741 = vpack.c.b16 %v658, %v657
  %v742 = vpack.c.b16 %v660, %v659
  %v743 = vpack.c.b16 %v662, %v661
  %v744 = vpack.c.b16 %v664, %v663
  %v745 = vpack.c.b16 %v666, %v665
  %v746 = vpack.c.b16 %v668, %v667
  %v747 = vpack.c.b16 %v670, %v669
  %v748 = vpack.c.b16 %v672, %v671
  %v749 = vpack.c.b16 %v674, %v673
  %v750 = vpack.c.b16 %v676, %v675
  %v751 = vpack.c.b16 %v678, %v677
  %v752 = vpack.c.b16 %v680, %v679
  %v753 = vpack.c.b16 %v682, %v681
  %v754 = vpack.c.b16 %v684, %v683
  %v755 = vpack.c.b16 %v686, %v685
  %v756 = vpack.c.b16 %v688, %v687
  %v757 = vpack.c.b16 %v690, %v689
  %v758 = vpack.c.b16 %v692, %v691
  %v759 = vpack.c.b16 %v694, %v693
  %v760 = vpack.c.b16 %v696, %v695
  %v761 = vpack.c.b16 %v698, %v697
  %v762 = vpack.c.b16 %v700, %v699
  %v763 = vpack.c.b16 %v702, %v701
  %v764 = vpack.c.b16 %v704, %v703
  %v765 = vpack.c.b16 %v706, %v705
  %v766 = vpack.c.b16 %v708, %v707
  %v767 = vpack.c.b16 %v710, %v709
  %v768 = vpack.c.b16 %v712, %v711
  %825 = vmatprep.subr.bf16.mxu0 0
  %826 = vmatpush1.bf16.msra.mxu0 %v720
  %827 = vmatprep.subr.bf16.mxu0 0
  %828 = vmatpush1.bf16.msra.mxu0 %v719
  %829 = vmatprep.subr.bf16.mxu0 0
  %830 = vmatpush1.bf16.msra.mxu0 %v718
  %831 = vmatprep.subr.bf16.mxu0 0
  %832 = vmatpush1.bf16.msra.mxu0 %v717
  %833 = vmatprep.subr.bf16.mxu0 0
  %834 = vmatpush1.bf16.msra.mxu0 %v716
  %835 = vmatprep.subr.bf16.mxu0 0
  %836 = vmatpush1.bf16.msra.mxu0 %v715
  %837 = vmatprep.subr.bf16.mxu0 0
  %838 = vmatpush1.bf16.msra.mxu0 %v714
  %839 = vmatprep.subr.bf16.mxu0 0
  %840 = vmatpush1.bf16.msra.mxu0 %v713
  %841 = vmatprep.subr.bf16.mxu0 0
  %842 = vmatpush2.bf16.msra.mxu0 %v728
  %843 = vmatprep.subr.bf16.mxu0 0
  %844 = vmatpush2.bf16.msra.mxu0 %v727
  %845 = vmatprep.subr.bf16.mxu0 0
  %846 = vmatpush2.bf16.msra.mxu0 %v726
  %847 = vmatprep.subr.bf16.mxu0 0
  %848 = vmatpush2.bf16.msra.mxu0 %v725
  %849 = vmatprep.subr.bf16.mxu0 0
  %850 = vmatpush2.bf16.msra.mxu0 %v724
  %851 = vmatprep.subr.bf16.mxu0 0
  %852 = vmatpush2.bf16.msra.mxu0 %v723
  %853 = vmatprep.subr.bf16.mxu0 0
  %854 = vmatpush2.bf16.msra.mxu0 %v722
  %855 = vmatprep.subr.bf16.mxu0 0
  %856 = vmatpush2.bf16.msra.mxu0 %v721
  %857 = vmatprep.mubr.bf16.mxu0 %v392
  %858 = vmatmul.mubr.bf16.gmra.mxu0 %v391
  %v859 = vpop.f32.mrf.mxu0
  %v860 = vadd.f32 0.0, %v859
  %v861 = vpop.f32.mrf.mxu0
  %v862 = vpop.f32.mrf.mxu0
  %v863 = vadd.f32 0.0, %v862
  %v864 = vpop.f32.mrf.mxu0
  %865 = vmatprep.mubr.bf16.mxu0 %v399
  %866 = vmatmul.mubr.bf16.gmra.mxu0 %v398
  %v867 = vpop.f32.mrf.mxu0
  %v868 = vadd.f32 0.0, %v867
  %v869 = vpop.f32.mrf.mxu0
  %v870 = vpop.f32.mrf.mxu0
  %v871 = vadd.f32 0.0, %v870
  %v872 = vpop.f32.mrf.mxu0
  %873 = vmatprep.mubr.bf16.mxu0 %v406
  %874 = vmatmul.mubr.bf16.gmra.mxu0 %v405
  %v875 = vpop.f32.mrf.mxu0
  %v876 = vadd.f32 0.0, %v875
  %v877 = vpop.f32.mrf.mxu0
  %v878 = vpop.f32.mrf.mxu0
  %v879 = vadd.f32 0.0, %v878
  %v880 = vpop.f32.mrf.mxu0
  %881 = vmatprep.mubr.bf16.mxu0 %v413
  %882 = vmatmul.mubr.bf16.gmra.mxu0 %v412
  %v883 = vpop.f32.mrf.mxu0
  %v884 = vadd.f32 0.0, %v883
  %v885 = vpop.f32.mrf.mxu0
  %v886 = vpop.f32.mrf.mxu0
  %v887 = vadd.f32 0.0, %v886
  %v888 = vpop.f32.mrf.mxu0
  %889 = vmatprep.mubr.bf16.mxu0 %v420
  %890 = vmatmul.mubr.bf16.gmra.mxu0 %v419
  %v891 = vpop.f32.mrf.mxu0
  %v892 = vadd.f32 0.0, %v891
  %v893 = vpop.f32.mrf.mxu0
  %v894 = vpop.f32.mrf.mxu0
  %v895 = vadd.f32 0.0, %v894
  %v896 = vpop.f32.mrf.mxu0
  %897 = vmatprep.mubr.bf16.mxu0 %v427
  %898 = vmatmul.mubr.bf16.gmra.mxu0 %v426
  %v899 = vpop.f32.mrf.mxu0
  %v900 = vadd.f32 0.0, %v899
  %v901 = vpop.f32.mrf.mxu0
  %v902 = vpop.f32.mrf.mxu0
  %v903 = vadd.f32 0.0, %v902
  %v904 = vpop.f32.mrf.mxu0
  %905 = vmatprep.mubr.bf16.mxu0 %v434
  %906 = vmatmul.mubr.bf16.gmra.mxu0 %v433
  %v907 = vpop.f32.mrf.mxu0
  %v908 = vadd.f32 0.0, %v907
  %v909 = vpop.f32.mrf.mxu0
  %v910 = vpop.f32.mrf.mxu0
  %v911 = vpop.f32.mrf.mxu0
  %912 = vdwg.mxu0
  %913 = vmatprep.subr.bf16.mxu0 0
  %914 = vmatpush1.bf16.msra.mxu0 %v736
  %915 = vmatprep.subr.bf16.mxu0 0
  %916 = vmatpush1.bf16.msra.mxu0 %v735
  %917 = vmatprep.subr.bf16.mxu0 0
  %918 = vmatpush1.bf16.msra.mxu0 %v734
  %919 = vmatprep.subr.bf16.mxu0 0
  %920 = vmatpush1.bf16.msra.mxu0 %v733
  %921 = vmatprep.subr.bf16.mxu0 0
  %922 = vmatpush1.bf16.msra.mxu0 %v732
  %923 = vmatprep.subr.bf16.mxu0 0
  %924 = vmatpush1.bf16.msra.mxu0 %v731
  %925 = vmatprep.subr.bf16.mxu0 0
  %926 = vmatpush1.bf16.msra.mxu0 %v730
  %927 = vmatprep.subr.bf16.mxu0 0
  %928 = vmatpush1.bf16.msra.mxu0 %v729
  %929 = vmatprep.subr.bf16.mxu0 0
  %930 = vmatpush2.bf16.msra.mxu0 %v744
  %931 = vmatprep.subr.bf16.mxu0 0
  %932 = vmatpush2.bf16.msra.mxu0 %v743
  %933 = vmatprep.subr.bf16.mxu0 0
  %934 = vmatpush2.bf16.msra.mxu0 %v742
  %935 = vmatprep.subr.bf16.mxu0 0
  %936 = vmatpush2.bf16.msra.mxu0 %v741
  %937 = vmatprep.subr.bf16.mxu0 0
  %938 = vmatpush2.bf16.msra.mxu0 %v740
  %939 = vmatprep.subr.bf16.mxu0 0
  %940 = vmatpush2.bf16.msra.mxu0 %v739
  %941 = vmatprep.subr.bf16.mxu0 0
  %942 = vmatpush2.bf16.msra.mxu0 %v738
  %943 = vmatprep.subr.bf16.mxu0 0
  %944 = vmatpush2.bf16.msra.mxu0 %v737
  %945 = vmatprep.mubr.bf16.mxu0 %v394
  %946 = vmatmul.mubr.bf16.gmra.mxu0 %v393
  %v947 = vpop.f32.mrf.mxu0
  %v948 = vadd.f32 %v860, %v947
  %v949 = vpop.f32.mrf.mxu0
  %v950 = vpop.f32.mrf.mxu0
  %v951 = vadd.f32 %v863, %v950
  %v952 = vpop.f32.mrf.mxu0
  %953 = vmatprep.mubr.bf16.mxu0 %v401
  %954 = vmatmul.mubr.bf16.gmra.mxu0 %v400
  %v955 = vpop.f32.mrf.mxu0
  %v956 = vadd.f32 %v868, %v955
  %v957 = vpop.f32.mrf.mxu0
  %v958 = vpop.f32.mrf.mxu0
  %v959 = vadd.f32 %v871, %v958
  %v960 = vpop.f32.mrf.mxu0
  %961 = vmatprep.mubr.bf16.mxu0 %v408
  %962 = vmatmul.mubr.bf16.gmra.mxu0 %v407
  %v963 = vpop.f32.mrf.mxu0
  %v964 = vadd.f32 %v876, %v963
  %v965 = vpop.f32.mrf.mxu0
  %v966 = vpop.f32.mrf.mxu0
  %v967 = vadd.f32 %v879, %v966
  %v968 = vpop.f32.mrf.mxu0
  %969 = vmatprep.mubr.bf16.mxu0 %v415
  %970 = vmatmul.mubr.bf16.gmra.mxu0 %v414
  %v971 = vpop.f32.mrf.mxu0
  %v972 = vadd.f32 %v884, %v971
  %v973 = vpop.f32.mrf.mxu0
  %v974 = vpop.f32.mrf.mxu0
  %v975 = vadd.f32 %v887, %v974
  %v976 = vpop.f32.mrf.mxu0
  %977 = vmatprep.mubr.bf16.mxu0 %v422
  %978 = vmatmul.mubr.bf16.gmra.mxu0 %v421
  %v979 = vpop.f32.mrf.mxu0
  %v980 = vadd.f32 %v892, %v979
  %v981 = vpop.f32.mrf.mxu0
  %v982 = vpop.f32.mrf.mxu0
  %v983 = vadd.f32 %v895, %v982
  %v984 = vpop.f32.mrf.mxu0
  %985 = vmatprep.mubr.bf16.mxu0 %v429
  %986 = vmatmul.mubr.bf16.gmra.mxu0 %v428
  %v987 = vpop.f32.mrf.mxu0
  %v988 = vadd.f32 %v900, %v987
  %v989 = vpop.f32.mrf.mxu0
  %v990 = vpop.f32.mrf.mxu0
  %v991 = vadd.f32 %v903, %v990
  %v992 = vpop.f32.mrf.mxu0
  %993 = vmatprep.mubr.bf16.mxu0 %v436
  %994 = vmatmul.mubr.bf16.gmra.mxu0 %v435
  %v995 = vpop.f32.mrf.mxu0
  %v996 = vadd.f32 %v908, %v995
  %v997 = vpop.f32.mrf.mxu0
  %v998 = vpop.f32.mrf.mxu0
  %v999 = vpop.f32.mrf.mxu0
  %1000 = vdwg.mxu0
  %1001 = vmatprep.subr.bf16.mxu0 0
  %1002 = vmatpush1.bf16.msra.mxu0 %v752
  %1003 = vmatprep.subr.bf16.mxu0 0
  %1004 = vmatpush1.bf16.msra.mxu0 %v751
  %1005 = vmatprep.subr.bf16.mxu0 0
  %1006 = vmatpush1.bf16.msra.mxu0 %v750
  %1007 = vmatprep.subr.bf16.mxu0 0
  %1008 = vmatpush1.bf16.msra.mxu0 %v749
  %1009 = vmatprep.subr.bf16.mxu0 0
  %1010 = vmatpush1.bf16.msra.mxu0 %v748
  %1011 = vmatprep.subr.bf16.mxu0 0
  %1012 = vmatpush1.bf16.msra.mxu0 %v747
  %1013 = vmatprep.subr.bf16.mxu0 0
  %1014 = vmatpush1.bf16.msra.mxu0 %v746
  %1015 = vmatprep.subr.bf16.mxu0 0
  %1016 = vmatpush1.bf16.msra.mxu0 %v745
  %1017 = vmatprep.subr.bf16.mxu0 0
  %1018 = vmatpush2.bf16.msra.mxu0 %v760
  %1019 = vmatprep.subr.bf16.mxu0 0
  %1020 = vmatpush2.bf16.msra.mxu0 %v759
  %1021 = vmatprep.subr.bf16.mxu0 0
  %1022 = vmatpush2.bf16.msra.mxu0 %v758
  %1023 = vmatprep.subr.bf16.mxu0 0
  %1024 = vmatpush2.bf16.msra.mxu0 %v757
  %1025 = vmatprep.subr.bf16.mxu0 0
  %1026 = vmatpush2.bf16.msra.mxu0 %v756
  %1027 = vmatprep.subr.bf16.mxu0 0
  %1028 = vmatpush2.bf16.msra.mxu0 %v755
  %1029 = vmatprep.subr.bf16.mxu0 0
  %1030 = vmatpush2.bf16.msra.mxu0 %v754
  %1031 = vmatprep.subr.bf16.mxu0 0
  %1032 = vmatpush2.bf16.msra.mxu0 %v753
  %1033 = vmatprep.mubr.bf16.mxu0 %v396
  %1034 = vmatmul.mubr.bf16.gmra.mxu0 %v395
  %v1035 = vpop.f32.mrf.mxu0
  %v1036 = vadd.f32 %v948, %v1035
  %v1037 = vpop.f32.mrf.mxu0
  %v1038 = vpop.f32.mrf.mxu0
  %v1039 = vadd.f32 %v951, %v1038
  %v1040 = vpop.f32.mrf.mxu0
  %1041 = vmatprep.mubr.bf16.mxu0 %v403
  %1042 = vmatmul.mubr.bf16.gmra.mxu0 %v402
  %v1043 = vpop.f32.mrf.mxu0
  %v1044 = vadd.f32 %v956, %v1043
  %v1045 = vpop.f32.mrf.mxu0
  %v1046 = vpop.f32.mrf.mxu0
  %v1047 = vadd.f32 %v959, %v1046
  %v1048 = vpop.f32.mrf.mxu0
  %1049 = vmatprep.mubr.bf16.mxu0 %v410
  %1050 = vmatmul.mubr.bf16.gmra.mxu0 %v409
  %v1051 = vpop.f32.mrf.mxu0
  %v1052 = vadd.f32 %v964, %v1051
  %v1053 = vpop.f32.mrf.mxu0
  %v1054 = vpop.f32.mrf.mxu0
  %v1055 = vadd.f32 %v967, %v1054
  %v1056 = vpop.f32.mrf.mxu0
  %1057 = vmatprep.mubr.bf16.mxu0 %v417
  %1058 = vmatmul.mubr.bf16.gmra.mxu0 %v416
  %v1059 = vpop.f32.mrf.mxu0
  %v1060 = vadd.f32 %v972, %v1059
  %v1061 = vpop.f32.mrf.mxu0
  %v1062 = vpop.f32.mrf.mxu0
  %v1063 = vadd.f32 %v975, %v1062
  %v1064 = vpop.f32.mrf.mxu0
  %1065 = vmatprep.mubr.bf16.mxu0 %v424
  %1066 = vmatmul.mubr.bf16.gmra.mxu0 %v423
  %v1067 = vpop.f32.mrf.mxu0
  %v1068 = vadd.f32 %v980, %v1067
  %v1069 = vpop.f32.mrf.mxu0
  %v1070 = vpop.f32.mrf.mxu0
  %v1071 = vadd.f32 %v983, %v1070
  %v1072 = vpop.f32.mrf.mxu0
  %1073 = vmatprep.mubr.bf16.mxu0 %v431
  %1074 = vmatmul.mubr.bf16.gmra.mxu0 %v430
  %v1075 = vpop.f32.mrf.mxu0
  %v1076 = vadd.f32 %v988, %v1075
  %v1077 = vpop.f32.mrf.mxu0
  %v1078 = vpop.f32.mrf.mxu0
  %v1079 = vadd.f32 %v991, %v1078
  %v1080 = vpop.f32.mrf.mxu0
  %1081 = vmatprep.mubr.bf16.mxu0 %v438
  %1082 = vmatmul.mubr.bf16.gmra.mxu0 %v437
  %v1083 = vpop.f32.mrf.mxu0
  %v1084 = vadd.f32 %v996, %v1083
  %v1085 = vpop.f32.mrf.mxu0
  %v1086 = vpop.f32.mrf.mxu0
  %v1087 = vpop.f32.mrf.mxu0
  %1088 = vdwg.mxu0
  %1089 = vmatprep.subr.bf16.mxu0 0
  %1090 = vmatpush1.bf16.msra.mxu0 %v768
  %1091 = vmatprep.subr.bf16.mxu0 0
  %1092 = vmatpush1.bf16.msra.mxu0 %v767
  %1093 = vmatprep.subr.bf16.mxu0 0
  %1094 = vmatpush1.bf16.msra.mxu0 %v766
  %1095 = vmatprep.subr.bf16.mxu0 0
  %1096 = vmatpush1.bf16.msra.mxu0 %v765
  %1097 = vmatprep.subr.bf16.mxu0 0
  %1098 = vmatpush1.bf16.msra.mxu0 %v764
  %1099 = vmatprep.subr.bf16.mxu0 0
  %1100 = vmatpush1.bf16.msra.mxu0 %v763
  %1101 = vmatprep.subr.bf16.mxu0 0
  %1102 = vmatpush1.bf16.msra.mxu0 %v762
  %1103 = vmatprep.subr.bf16.mxu0 0
  %1104 = vmatpush1.bf16.msra.mxu0 %v761
  %1105 = vmatprep.subr.bf16.mxu0 0
  %1106 = vmatpush2.bf16.msra.mxu0 0
  %1107 = vmatprep.subr.bf16.mxu0 0
  %1108 = vmatpush2.bf16.msra.mxu0 0
  %1109 = vmatprep.subr.bf16.mxu0 0
  %1110 = vmatpush2.bf16.msra.mxu0 0
  %1111 = vmatprep.subr.bf16.mxu0 0
  %1112 = vmatpush2.bf16.msra.mxu0 0
  %1113 = vmatprep.subr.bf16.mxu0 0
  %1114 = vmatpush2.bf16.msra.mxu0 0
  %1115 = vmatprep.subr.bf16.mxu0 0
  %1116 = vmatpush2.bf16.msra.mxu0 0
  %1117 = vmatprep.subr.bf16.mxu0 0
  %1118 = vmatpush2.bf16.msra.mxu0 0
  %1119 = vmatprep.subr.bf16.mxu0 0
  %1120 = vmatpush2.bf16.msra.mxu0 0
  %1121 = vmatprep.mubr.bf16.mxu0 0
  %1122 = vmatmul.mubr.bf16.gmra.mxu0 %v397
  %v1123 = vpop.f32.mrf.mxu0
  %v1124 = vadd.f32 %v1036, %v1123
  %v1125 = vpop.f32.mrf.mxu0
  %v1126 = vpop.f32.mrf.mxu0
  %v1127 = vadd.f32 %v1039, %v1126
  %v1128 = vpop.f32.mrf.mxu0
  %1129 = vmatprep.mubr.bf16.mxu0 0
  %1130 = vmatmul.mubr.bf16.gmra.mxu0 %v404
  %v1131 = vpop.f32.mrf.mxu0
  %v1132 = vadd.f32 %v1044, %v1131
  %v1133 = vpop.f32.mrf.mxu0
  %v1134 = vpop.f32.mrf.mxu0
  %v1135 = vadd.f32 %v1047, %v1134
  %v1136 = vpop.f32.mrf.mxu0
  %1137 = vmatprep.mubr.bf16.mxu0 0
  %1138 = vmatmul.mubr.bf16.gmra.mxu0 %v411
  %v1139 = vpop.f32.mrf.mxu0
  %v1140 = vadd.f32 %v1052, %v1139
  %v1141 = vpop.f32.mrf.mxu0
  %v1142 = vpop.f32.mrf.mxu0
  %v1143 = vadd.f32 %v1055, %v1142
  %v1144 = vpop.f32.mrf.mxu0
  %1145 = vmatprep.mubr.bf16.mxu0 0
  %1146 = vmatmul.mubr.bf16.gmra.mxu0 %v418
  %v1147 = vpop.f32.mrf.mxu0
  %v1148 = vadd.f32 %v1060, %v1147
  %v1149 = vpop.f32.mrf.mxu0
  %v1150 = vpop.f32.mrf.mxu0
  %v1151 = vadd.f32 %v1063, %v1150
  %v1152 = vpop.f32.mrf.mxu0
  %1153 = vmatprep.mubr.bf16.mxu0 0
  %1154 = vmatmul.mubr.bf16.gmra.mxu0 %v425
  %v1155 = vpop.f32.mrf.mxu0
  %v1156 = vadd.f32 %v1068, %v1155
  %v1157 = vpop.f32.mrf.mxu0
  %v1158 = vpop.f32.mrf.mxu0
  %v1159 = vadd.f32 %v1071, %v1158
  %v1160 = vpop.f32.mrf.mxu0
  %1161 = vmatprep.mubr.bf16.mxu0 0
  %1162 = vmatmul.mubr.bf16.gmra.mxu0 %v432
  %v1163 = vpop.f32.mrf.mxu0
  %v1164 = vadd.f32 %v1076, %v1163
  %v1165 = vpop.f32.mrf.mxu0
  %v1166 = vpop.f32.mrf.mxu0
  %v1167 = vadd.f32 %v1079, %v1166
  %v1168 = vpop.f32.mrf.mxu0
  %1169 = vmatprep.mubr.bf16.mxu0 0
  %1170 = vmatmul.mubr.bf16.gmra.mxu0 %v439
  %v1171 = vpop.f32.mrf.mxu0
  %v1172 = vadd.f32 %v1084, %v1171
  %v1173 = vpop.f32.mrf.mxu0
  %v1174 = vpop.f32.mrf.mxu0
  %v1175 = vpop.f32.mrf.mxu0
  %1176 = vdwg.mxu0
  %v1177 = vadd.f32 %v183, %v1124
  %v1178 = vadd.f32 %v184, %v1127
  %v1179 = vadd.f32 %v185, %v1132
  %v1180 = vadd.f32 %v186, %v1135
  %v1181 = vadd.f32 %v187, %v1140
  %v1182 = vadd.f32 %v188, %v1143
  %v1183 = vadd.f32 %v189, %v1148
  %v1184 = vadd.f32 %v190, %v1151
  %v1185 = vadd.f32 %v191, %v1156
  %v1186 = vadd.f32 %v192, %v1159
  %v1187 = vadd.f32 %v193, %v1164
  %v1188 = vadd.f32 %v194, %v1167
  %v1189 = vadd.f32 %v195, %v1172
  %1190 = vst [vmem:[#allocation2] sm:$0xff] %v1177
  %1191 = vst [vmem:[#allocation2 + $0x8] sm:$0xff] %v1178
  %1192 = vst [vmem:[#allocation2 + $0x10] sm:$0xff] %v1179
  %1193 = vst [vmem:[#allocation2 + $0x18] sm:$0xff] %v1180
  %1194 = vst [vmem:[#allocation2 + $0x20] sm:$0xff] %v1181
  %1195 = vst [vmem:[#allocation2 + $0x28] sm:$0xff] %v1182
  %1196 = vst [vmem:[#allocation2 + $0x30] sm:$0xff] %v1183
  %1197 = vst [vmem:[#allocation2 + $0x38] sm:$0xff] %v1184
  %1198 = vst [vmem:[#allocation2 + $0x40] sm:$0xff] %v1185
  %1199 = vst [vmem:[#allocation2 + $0x48] sm:$0xff] %v1186
  %1200 = vst [vmem:[#allocation2 + $0x50] sm:$0xff] %v1187
  %1201 = vst [vmem:[#allocation2 + $0x58] sm:$0xff] %v1188
  %1202 = vst [vmem:[#allocation2 + $0x60] sm:$0xff] %v1189
  %s1203 = scalar_lea.vmem [#allocation2], 104
  %v1204 = vld [vmem:[%s1203] sm:$0xff]
  %v1205 = vld [vmem:[%s1203 + $0x8] sm:$0xff]
  %v1206 = vld [vmem:[%s1203 + $0x10] sm:$0xff]
  %v1207 = vld [vmem:[%s1203 + $0x18] sm:$0xff]
  %v1208 = vld [vmem:[%s1203 + $0x20] sm:$0xff]
  %v1209 = vld [vmem:[%s1203 + $0x28] sm:$0xff]
  %v1210 = vld [vmem:[%s1203 + $0x30] sm:$0xff]
  %v1211 = vld [vmem:[%s1203 + $0x38] sm:$0xff]
  %v1212 = vld [vmem:[%s1203 + $0x40] sm:$0xff]
  %v1213 = vld [vmem:[%s1203 + $0x48] sm:$0xff]
  %v1214 = vld [vmem:[%s1203 + $0x50] sm:$0xff]
  %v1215 = vld [vmem:[%s1203 + $0x58] sm:$0xff]
  %v1216 = vld [vmem:[%s1203 + $0x60] sm:$0xff]
  %s1217 = scalar_lea.vmem %s0, 364
  %v1218 = vld [vmem:[%s1217] sm:$0xff]
  %v1219 = vld [vmem:[%s1217 + $0x8] sm:$0xff]
  %v1220 = vld [vmem:[%s1217 + $0x10] sm:$0xff]
  %v1221 = vld [vmem:[%s1217 + $0x18] sm:$0xf]
  %v1222 = vld [vmem:[%s1217 + $0x1c] sm:$0xff]
  %v1223 = vld [vmem:[%s1217 + $0x24] sm:$0xff]
  %v1224 = vld [vmem:[%s1217 + $0x2c] sm:$0xff]
  %v1225 = vld [vmem:[%s1217 + $0x34] sm:$0xf]
  %v1226 = vld [vmem:[%s1217 + $0x38] sm:$0xff]
  %v1227 = vld [vmem:[%s1217 + $0x40] sm:$0xff]
  %v1228 = vld [vmem:[%s1217 + $0x48] sm:$0xff]
  %v1229 = vld [vmem:[%s1217 + $0x50] sm:$0xf]
  %v1230 = vld [vmem:[%s1217 + $0x54] sm:$0xff]
  %v1231 = vld [vmem:[%s1217 + $0x5c] sm:$0xff]
  %v1232 = vld [vmem:[%s1217 + $0x64] sm:$0xff]
  %v1233 = vld [vmem:[%s1217 + $0x6c] sm:$0xf]
  %v1234 = vld [vmem:[%s1217 + $0x70] sm:$0xff]
  %v1235 = vld [vmem:[%s1217 + $0x78] sm:$0xff]
  %v1236 = vld [vmem:[%s1217 + $0x80] sm:$0xff]
  %v1237 = vld [vmem:[%s1217 + $0x88] sm:$0xf]
  %v1238 = vld [vmem:[%s1217 + $0x8c] sm:$0xff]
  %v1239 = vld [vmem:[%s1217 + $0x94] sm:$0xff]
  %v1240 = vld [vmem:[%s1217 + $0x9c] sm:$0xff]
  %v1241 = vld [vmem:[%s1217 + $0xa4] sm:$0xf]
  %v1242 = vld [vmem:[%s1217 + $0xa8] sm:$0xff]
  %v1243 = vld [vmem:[%s1217 + $0xb0] sm:$0xff]
  %v1244 = vld [vmem:[%s1217 + $0xb8] sm:$0xff]
  %v1245 = vld [vmem:[%s1217 + $0xc0] sm:$0xf]
  %v1246 = vld [vmem:[%s1217 + $0xc4] sm:$0xff]
  %v1247 = vld [vmem:[%s1217 + $0xcc] sm:$0xff]
  %v1248 = vld [vmem:[%s1217 + $0xd4] sm:$0xff]
  %v1249 = vld [vmem:[%s1217 + $0xdc] sm:$0xf]
  %v1250 = vld [vmem:[%s1217 + $0xe0] sm:$0xff]
  %v1251 = vld [vmem:[%s1217 + $0xe8] sm:$0xff]
  %v1252 = vld [vmem:[%s1217 + $0xf0] sm:$0xff]
  %v1253 = vld [vmem:[%s1217 + $0xf8] sm:$0xf]
  %v1254 = vld [vmem:[%s1217 + $0xfc] sm:$0xff]
  %v1255 = vld [vmem:[%s1217 + $0x104] sm:$0xff]
  %v1256 = vld [vmem:[%s1217 + $0x10c] sm:$0xff]
  %v1257 = vld [vmem:[%s1217 + $0x114] sm:$0xf]
  %v1258 = vld [vmem:[%s1217 + $0x118] sm:$0xff]
  %v1259 = vld [vmem:[%s1217 + $0x120] sm:$0xff]
  %v1260 = vld [vmem:[%s1217 + $0x128] sm:$0xff]
  %v1261 = vld [vmem:[%s1217 + $0x130] sm:$0xf]
  %v1262 = vld [vmem:[%s1217 + $0x134] sm:$0xff]
  %v1263 = vld [vmem:[%s1217 + $0x13c] sm:$0xff]
  %v1264 = vld [vmem:[%s1217 + $0x144] sm:$0xff]
  %v1265 = vld [vmem:[%s1217 + $0x14c] sm:$0xf]
  %v1266 = vld [vmem:[%s1217 + $0x150] sm:$0xff]
  %v1267 = vld [vmem:[%s1217 + $0x158] sm:$0xff]
  %v1268 = vld [vmem:[%s1217 + $0x160] sm:$0xff]
  %v1269 = vld [vmem:[%s1217 + $0x168] sm:$0xf]
  %v1322 = vunpack.c.l.b16 %v1218
  %v1323 = vunpack.c.h.b16 %v1218
  %v1324 = vunpack.c.l.b16 %v1219
  %v1325 = vunpack.c.h.b16 %v1219
  %v1326 = vunpack.c.l.b16 %v1220
  %v1327 = vunpack.c.h.b16 %v1220
  %v1328 = vunpack.c.l.b16 %v1221
  %v1329 = vunpack.c.l.b16 %v1222
  %v1330 = vunpack.c.h.b16 %v1222
  %v1331 = vunpack.c.l.b16 %v1223
  %v1332 = vunpack.c.h.b16 %v1223
  %v1333 = vunpack.c.l.b16 %v1224
  %v1334 = vunpack.c.h.b16 %v1224
  %v1335 = vunpack.c.l.b16 %v1225
  %v1336 = vunpack.c.l.b16 %v1226
  %v1337 = vunpack.c.h.b16 %v1226
  %v1338 = vunpack.c.l.b16 %v1227
  %v1339 = vunpack.c.h.b16 %v1227
  %v1340 = vunpack.c.l.b16 %v1228
  %v1341 = vunpack.c.h.b16 %v1228
  %v1342 = vunpack.c.l.b16 %v1229
  %v1343 = vunpack.c.l.b16 %v1230
  %v1344 = vunpack.c.h.b16 %v1230
  %v1345 = vunpack.c.l.b16 %v1231
  %v1346 = vunpack.c.h.b16 %v1231
  %v1347 = vunpack.c.l.b16 %v1232
  %v1348 = vunpack.c.h.b16 %v1232
  %v1349 = vunpack.c.l.b16 %v1233
  %v1350 = vunpack.c.l.b16 %v1234
  %v1351 = vunpack.c.h.b16 %v1234
  %v1352 = vunpack.c.l.b16 %v1235
  %v1353 = vunpack.c.h.b16 %v1235
  %v1354 = vunpack.c.l.b16 %v1236
  %v1355 = vunpack.c.h.b16 %v1236
  %v1356 = vunpack.c.l.b16 %v1237
  %v1357 = vunpack.c.l.b16 %v1238
  %v1358 = vunpack.c.h.b16 %v1238
  %v1359 = vunpack.c.l.b16 %v1239
  %v1360 = vunpack.c.h.b16 %v1239
  %v1361 = vunpack.c.l.b16 %v1240
  %v1362 = vunpack.c.h.b16 %v1240
  %v1363 = vunpack.c.l.b16 %v1241
  %v1364 = vunpack.c.l.b16 %v1242
  %v1365 = vunpack.c.h.b16 %v1242
  %v1366 = vunpack.c.l.b16 %v1243
  %v1367 = vunpack.c.h.b16 %v1243
  %v1368 = vunpack.c.l.b16 %v1244
  %v1369 = vunpack.c.h.b16 %v1244
  %v1370 = vunpack.c.l.b16 %v1245
  %v1371 = vunpack.c.l.b16 %v1246
  %v1372 = vunpack.c.h.b16 %v1246
  %v1373 = vunpack.c.l.b16 %v1247
  %v1374 = vunpack.c.h.b16 %v1247
  %v1375 = vunpack.c.l.b16 %v1248
  %v1376 = vunpack.c.h.b16 %v1248
  %v1377 = vunpack.c.l.b16 %v1249
  %v1378 = vunpack.c.l.b16 %v1250
  %v1379 = vunpack.c.h.b16 %v1250
  %v1380 = vunpack.c.l.b16 %v1251
  %v1381 = vunpack.c.h.b16 %v1251
  %v1382 = vunpack.c.l.b16 %v1252
  %v1383 = vunpack.c.h.b16 %v1252
  %v1384 = vunpack.c.l.b16 %v1253
  %v1385 = vunpack.c.l.b16 %v1254
  %v1386 = vunpack.c.h.b16 %v1254
  %v1387 = vunpack.c.l.b16 %v1255
  %v1388 = vunpack.c.h.b16 %v1255
  %v1389 = vunpack.c.l.b16 %v1256
  %v1390 = vunpack.c.h.b16 %v1256
  %v1391 = vunpack.c.l.b16 %v1257
  %v1392 = vunpack.c.l.b16 %v1258
  %v1393 = vunpack.c.h.b16 %v1258
  %v1394 = vunpack.c.l.b16 %v1259
  %v1395 = vunpack.c.h.b16 %v1259
  %v1396 = vunpack.c.l.b16 %v1260
  %v1397 = vunpack.c.h.b16 %v1260
  %v1398 = vunpack.c.l.b16 %v1261
  %v1399 = vunpack.c.l.b16 %v1262
  %v1400 = vunpack.c.h.b16 %v1262
  %v1401 = vunpack.c.l.b16 %v1263
  %v1402 = vunpack.c.h.b16 %v1263
  %v1403 = vunpack.c.l.b16 %v1264
  %v1404 = vunpack.c.h.b16 %v1264
  %v1405 = vunpack.c.l.b16 %v1265
  %v1406 = vunpack.c.l.b16 %v1266
  %v1407 = vunpack.c.h.b16 %v1266
  %v1408 = vunpack.c.l.b16 %v1267
  %v1409 = vunpack.c.h.b16 %v1267
  %v1410 = vunpack.c.l.b16 %v1268
  %v1411 = vunpack.c.h.b16 %v1268
  %v1412 = vunpack.c.l.b16 %v1269
  %v1413 = vpack.c.b16 %v1329, %v1322
  %v1414 = vpack.c.b16 %v1330, %v1323
  %v1415 = vpack.c.b16 %v1331, %v1324
  %v1416 = vpack.c.b16 %v1332, %v1325
  %v1417 = vpack.c.b16 %v1333, %v1326
  %v1418 = vpack.c.b16 %v1334, %v1327
  %v1419 = vpack.c.b16 %v1335, %v1328
  %v1420 = vpack.c.b16 %v1343, %v1336
  %v1421 = vpack.c.b16 %v1344, %v1337
  %v1422 = vpack.c.b16 %v1345, %v1338
  %v1423 = vpack.c.b16 %v1346, %v1339
  %v1424 = vpack.c.b16 %v1347, %v1340
  %v1425 = vpack.c.b16 %v1348, %v1341
  %v1426 = vpack.c.b16 %v1349, %v1342
  %v1427 = vpack.c.b16 %v1357, %v1350
  %v1428 = vpack.c.b16 %v1358, %v1351
  %v1429 = vpack.c.b16 %v1359, %v1352
  %v1430 = vpack.c.b16 %v1360, %v1353
  %v1431 = vpack.c.b16 %v1361, %v1354
  %v1432 = vpack.c.b16 %v1362, %v1355
  %v1433 = vpack.c.b16 %v1363, %v1356
  %v1434 = vpack.c.b16 %v1371, %v1364
  %v1435 = vpack.c.b16 %v1372, %v1365
  %v1436 = vpack.c.b16 %v1373, %v1366
  %v1437 = vpack.c.b16 %v1374, %v1367
  %v1438 = vpack.c.b16 %v1375, %v1368
  %v1439 = vpack.c.b16 %v1376, %v1369
  %v1440 = vpack.c.b16 %v1377, %v1370
  %v1441 = vpack.c.b16 %v1385, %v1378
  %v1442 = vpack.c.b16 %v1386, %v1379
  %v1443 = vpack.c.b16 %v1387, %v1380
  %v1444 = vpack.c.b16 %v1388, %v1381
  %v1445 = vpack.c.b16 %v1389, %v1382
  %v1446 = vpack.c.b16 %v1390, %v1383
  %v1447 = vpack.c.b16 %v1391, %v1384
  %v1448 = vpack.c.b16 %v1399, %v1392
  %v1449 = vpack.c.b16 %v1400, %v1393
  %v1450 = vpack.c.b16 %v1401, %v1394
  %v1451 = vpack.c.b16 %v1402, %v1395
  %v1452 = vpack.c.b16 %v1403, %v1396
  %v1453 = vpack.c.b16 %v1404, %v1397
  %v1454 = vpack.c.b16 %v1405, %v1398
  %v1455 = vpack.c.b16 %v1406, %v1406
  %v1456 = vpack.c.b16 %v1407, %v1407
  %v1457 = vpack.c.b16 %v1408, %v1408
  %v1458 = vpack.c.b16 %v1409, %v1409
  %v1459 = vpack.c.b16 %v1410, %v1410
  %v1460 = vpack.c.b16 %v1411, %v1411
  %v1461 = vpack.c.b16 %v1412, %v1412
  %1511 = vmatprep.subr.bf16.mxu0 0
  %1512 = vmatpush1.bf16.msra.mxu0 %v720
  %1513 = vmatprep.subr.bf16.mxu0 0
  %1514 = vmatpush1.bf16.msra.mxu0 %v719
  %1515 = vmatprep.subr.bf16.mxu0 0
  %1516 = vmatpush1.bf16.msra.mxu0 %v718
  %1517 = vmatprep.subr.bf16.mxu0 0
  %1518 = vmatpush1.bf16.msra.mxu0 %v717
  %1519 = vmatprep.subr.bf16.mxu0 0
  %1520 = vmatpush1.bf16.msra.mxu0 %v716
  %1521 = vmatprep.subr.bf16.mxu0 0
  %1522 = vmatpush1.bf16.msra.mxu0 %v715
  %1523 = vmatprep.subr.bf16.mxu0 0
  %1524 = vmatpush1.bf16.msra.mxu0 %v714
  %1525 = vmatprep.subr.bf16.mxu0 0
  %1526 = vmatpush1.bf16.msra.mxu0 %v713
  %1527 = vmatprep.subr.bf16.mxu0 0
  %1528 = vmatpush2.bf16.msra.mxu0 %v728
  %1529 = vmatprep.subr.bf16.mxu0 0
  %1530 = vmatpush2.bf16.msra.mxu0 %v727
  %1531 = vmatprep.subr.bf16.mxu0 0
  %1532 = vmatpush2.bf16.msra.mxu0 %v726
  %1533 = vmatprep.subr.bf16.mxu0 0
  %1534 = vmatpush2.bf16.msra.mxu0 %v725
  %1535 = vmatprep.subr.bf16.mxu0 0
  %1536 = vmatpush2.bf16.msra.mxu0 %v724
  %1537 = vmatprep.subr.bf16.mxu0 0
  %1538 = vmatpush2.bf16.msra.mxu0 %v723
  %1539 = vmatprep.subr.bf16.mxu0 0
  %1540 = vmatpush2.bf16.msra.mxu0 %v722
  %1541 = vmatprep.subr.bf16.mxu0 0
  %1542 = vmatpush2.bf16.msra.mxu0 %v721
  %1543 = vmatprep.mubr.bf16.mxu0 %v1414
  %1544 = vmatmul.mubr.bf16.gmra.mxu0 %v1413
  %v1545 = vpop.f32.mrf.mxu0
  %v1546 = vadd.f32 0.0, %v1545
  %v1547 = vpop.f32.mrf.mxu0
  %v1548 = vpop.f32.mrf.mxu0
  %v1549 = vadd.f32 0.0, %v1548
  %v1550 = vpop.f32.mrf.mxu0
  %1551 = vmatprep.mubr.bf16.mxu0 %v1421
  %1552 = vmatmul.mubr.bf16.gmra.mxu0 %v1420
  %v1553 = vpop.f32.mrf.mxu0
  %v1554 = vadd.f32 0.0, %v1553
  %v1555 = vpop.f32.mrf.mxu0
  %v1556 = vpop.f32.mrf.mxu0
  %v1557 = vadd.f32 0.0, %v1556
  %v1558 = vpop.f32.mrf.mxu0
  %1559 = vmatprep.mubr.bf16.mxu0 %v1428
  %1560 = vmatmul.mubr.bf16.gmra.mxu0 %v1427
  %v1561 = vpop.f32.mrf.mxu0
  %v1562 = vadd.f32 0.0, %v1561
  %v1563 = vpop.f32.mrf.mxu0
  %v1564 = vpop.f32.mrf.mxu0
  %v1565 = vadd.f32 0.0, %v1564
  %v1566 = vpop.f32.mrf.mxu0
  %1567 = vmatprep.mubr.bf16.mxu0 %v1435
  %1568 = vmatmul.mubr.bf16.gmra.mxu0 %v1434
  %v1569 = vpop.f32.mrf.mxu0
  %v1570 = vadd.f32 0.0, %v1569
  %v1571 = vpop.f32.mrf.mxu0
  %v1572 = vpop.f32.mrf.mxu0
  %v1573 = vadd.f32 0.0, %v1572
  %v1574 = vpop.f32.mrf.mxu0
  %1575 = vmatprep.mubr.bf16.mxu0 %v1442
  %1576 = vmatmul.mubr.bf16.gmra.mxu0 %v1441
  %v1577 = vpop.f32.mrf.mxu0
  %v1578 = vadd.f32 0.0, %v1577
  %v1579 = vpop.f32.mrf.mxu0
  %v1580 = vpop.f32.mrf.mxu0
  %v1581 = vadd.f32 0.0, %v1580
  %v1582 = vpop.f32.mrf.mxu0
  %1583 = vmatprep.mubr.bf16.mxu0 %v1449
  %1584 = vmatmul.mubr.bf16.gmra.mxu0 %v1448
  %v1585 = vpop.f32.mrf.mxu0
  %v1586 = vadd.f32 0.0, %v1585
  %v1587 = vpop.f32.mrf.mxu0
  %v1588 = vpop.f32.mrf.mxu0
  %v1589 = vadd.f32 0.0, %v1588
  %v1590 = vpop.f32.mrf.mxu0
  %1591 = vmatprep.mubr.bf16.mxu0 %v1456
  %1592 = vmatmul.mubr.bf16.gmra.mxu0 %v1455
  %v1593 = vpop.f32.mrf.mxu0
  %v1594 = vadd.f32 0.0, %v1593
  %v1595 = vpop.f32.mrf.mxu0
  %v1596 = vpop.f32.mrf.mxu0
  %v1597 = vpop.f32.mrf.mxu0
  %1598 = vdwg.mxu0
  %1599 = vmatprep.subr.bf16.mxu0 0
  %1600 = vmatpush1.bf16.msra.mxu0 %v736
  %1601 = vmatprep.subr.bf16.mxu0 0
  %1602 = vmatpush1.bf16.msra.mxu0 %v735
  %1603 = vmatprep.subr.bf16.mxu0 0
  %1604 = vmatpush1.bf16.msra.mxu0 %v734
  %1605 = vmatprep.subr.bf16.mxu0 0
  %1606 = vmatpush1.bf16.msra.mxu0 %v733
  %1607 = vmatprep.subr.bf16.mxu0 0
  %1608 = vmatpush1.bf16.msra.mxu0 %v732
  %1609 = vmatprep.subr.bf16.mxu0 0
  %1610 = vmatpush1.bf16.msra.mxu0 %v731
  %1611 = vmatprep.subr.bf16.mxu0 0
  %1612 = vmatpush1.bf16.msra.mxu0 %v730
  %1613 = vmatprep.subr.bf16.mxu0 0
  %1614 = vmatpush1.bf16.msra.mxu0 %v729
  %1615 = vmatprep.subr.bf16.mxu0 0
  %1616 = vmatpush2.bf16.msra.mxu0 %v744
  %1617 = vmatprep.subr.bf16.mxu0 0
  %1618 = vmatpush2.bf16.msra.mxu0 %v743
  %1619 = vmatprep.subr.bf16.mxu0 0
  %1620 = vmatpush2.bf16.msra.mxu0 %v742
  %1621 = vmatprep.subr.bf16.mxu0 0
  %1622 = vmatpush2.bf16.msra.mxu0 %v741
  %1623 = vmatprep.subr.bf16.mxu0 0
  %1624 = vmatpush2.bf16.msra.mxu0 %v740
  %1625 = vmatprep.subr.bf16.mxu0 0
  %1626 = vmatpush2.bf16.msra.mxu0 %v739
  %1627 = vmatprep.subr.bf16.mxu0 0
  %1628 = vmatpush2.bf16.msra.mxu0 %v738
  %1629 = vmatprep.subr.bf16.mxu0 0
  %1630 = vmatpush2.bf16.msra.mxu0 %v737
  %1631 = vmatprep.mubr.bf16.mxu0 %v1416
  %1632 = vmatmul.mubr.bf16.gmra.mxu0 %v1415
  %v1633 = vpop.f32.mrf.mxu0
  %v1634 = vadd.f32 %v1546, %v1633
  %v1635 = vpop.f32.mrf.mxu0
  %v1636 = vpop.f32.mrf.mxu0
  %v1637 = vadd.f32 %v1549, %v1636
  %v1638 = vpop.f32.mrf.mxu0
  %1639 = vmatprep.mubr.bf16.mxu0 %v1423
  %1640 = vmatmul.mubr.bf16.gmra.mxu0 %v1422
  %v1641 = vpop.f32.mrf.mxu0
  %v1642 = vadd.f32 %v1554, %v1641
  %v1643 = vpop.f32.mrf.mxu0
  %v1644 = vpop.f32.mrf.mxu0
  %v1645 = vadd.f32 %v1557, %v1644
  %v1646 = vpop.f32.mrf.mxu0
  %1647 = vmatprep.mubr.bf16.mxu0 %v1430
  %1648 = vmatmul.mubr.bf16.gmra.mxu0 %v1429
  %v1649 = vpop.f32.mrf.mxu0
  %v1650 = vadd.f32 %v1562, %v1649
  %v1651 = vpop.f32.mrf.mxu0
  %v1652 = vpop.f32.mrf.mxu0
  %v1653 = vadd.f32 %v1565, %v1652
  %v1654 = vpop.f32.mrf.mxu0
  %1655 = vmatprep.mubr.bf16.mxu0 %v1437
  %1656 = vmatmul.mubr.bf16.gmra.mxu0 %v1436
  %v1657 = vpop.f32.mrf.mxu0
  %v1658 = vadd.f32 %v1570, %v1657
  %v1659 = vpop.f32.mrf.mxu0
  %v1660 = vpop.f32.mrf.mxu0
  %v1661 = vadd.f32 %v1573, %v1660
  %v1662 = vpop.f32.mrf.mxu0
  %1663 = vmatprep.mubr.bf16.mxu0 %v1444
  %1664 = vmatmul.mubr.bf16.gmra.mxu0 %v1443
  %v1665 = vpop.f32.mrf.mxu0
  %v1666 = vadd.f32 %v1578, %v1665
  %v1667 = vpop.f32.mrf.mxu0
  %v1668 = vpop.f32.mrf.mxu0
  %v1669 = vadd.f32 %v1581, %v1668
  %v1670 = vpop.f32.mrf.mxu0
  %1671 = vmatprep.mubr.bf16.mxu0 %v1451
  %1672 = vmatmul.mubr.bf16.gmra.mxu0 %v1450
  %v1673 = vpop.f32.mrf.mxu0
  %v1674 = vadd.f32 %v1586, %v1673
  %v1675 = vpop.f32.mrf.mxu0
  %v1676 = vpop.f32.mrf.mxu0
  %v1677 = vadd.f32 %v1589, %v1676
  %v1678 = vpop.f32.mrf.mxu0
  %1679 = vmatprep.mubr.bf16.mxu0 %v1458
  %1680 = vmatmul.mubr.bf16.gmra.mxu0 %v1457
  %v1681 = vpop.f32.mrf.mxu0
  %v1682 = vadd.f32 %v1594, %v1681
  %v1683 = vpop.f32.mrf.mxu0
  %v1684 = vpop.f32.mrf.mxu0
  %v1685 = vpop.f32.mrf.mxu0
  %1686 = vdwg.mxu0
  %1687 = vmatprep.subr.bf16.mxu0 0
  %1688 = vmatpush1.bf16.msra.mxu0 %v752
  %1689 = vmatprep.subr.bf16.mxu0 0
  %1690 = vmatpush1.bf16.msra.mxu0 %v751
  %1691 = vmatprep.subr.bf16.mxu0 0
  %1692 = vmatpush1.bf16.msra.mxu0 %v750
  %1693 = vmatprep.subr.bf16.mxu0 0
  %1694 = vmatpush1.bf16.msra.mxu0 %v749
  %1695 = vmatprep.subr.bf16.mxu0 0
  %1696 = vmatpush1.bf16.msra.mxu0 %v748
  %1697 = vmatprep.subr.bf16.mxu0 0
  %1698 = vmatpush1.bf16.msra.mxu0 %v747
  %1699 = vmatprep.subr.bf16.mxu0 0
  %1700 = vmatpush1.bf16.msra.mxu0 %v746
  %1701 = vmatprep.subr.bf16.mxu0 0
  %1702 = vmatpush1.bf16.msra.mxu0 %v745
  %1703 = vmatprep.subr.bf16.mxu0 0
  %1704 = vmatpush2.bf16.msra.mxu0 %v760
  %1705 = vmatprep.subr.bf16.mxu0 0
  %1706 = vmatpush2.bf16.msra.mxu0 %v759
  %1707 = vmatprep.subr.bf16.mxu0 0
  %1708 = vmatpush2.bf16.msra.mxu0 %v758
  %1709 = vmatprep.subr.bf16.mxu0 0
  %1710 = vmatpush2.bf16.msra.mxu0 %v757
  %1711 = vmatprep.subr.bf16.mxu0 0
  %1712 = vmatpush2.bf16.msra.mxu0 %v756
  %1713 = vmatprep.subr.bf16.mxu0 0
  %1714 = vmatpush2.bf16.msra.mxu0 %v755
  %1715 = vmatprep.subr.bf16.mxu0 0
  %1716 = vmatpush2.bf16.msra.mxu0 %v754
  %1717 = vmatprep.subr.bf16.mxu0 0
  %1718 = vmatpush2.bf16.msra.mxu0 %v753
  %1719 = vmatprep.mubr.bf16.mxu0 %v1418
  %1720 = vmatmul.mubr.bf16.gmra.mxu0 %v1417
  %v1721 = vpop.f32.mrf.mxu0
  %v1722 = vadd.f32 %v1634, %v1721
  %v1723 = vpop.f32.mrf.mxu0
  %v1724 = vpop.f32.mrf.mxu0
  %v1725 = vadd.f32 %v1637, %v1724
  %v1726 = vpop.f32.mrf.mxu0
  %1727 = vmatprep.mubr.bf16.mxu0 %v1425
  %1728 = vmatmul.mubr.bf16.gmra.mxu0 %v1424
  %v1729 = vpop.f32.mrf.mxu0
  %v1730 = vadd.f32 %v1642, %v1729
  %v1731 = vpop.f32.mrf.mxu0
  %v1732 = vpop.f32.mrf.mxu0
  %v1733 = vadd.f32 %v1645, %v1732
  %v1734 = vpop.f32.mrf.mxu0
  %1735 = vmatprep.mubr.bf16.mxu0 %v1432
  %1736 = vmatmul.mubr.bf16.gmra.mxu0 %v1431
  %v1737 = vpop.f32.mrf.mxu0
  %v1738 = vadd.f32 %v1650, %v1737
  %v1739 = vpop.f32.mrf.mxu0
  %v1740 = vpop.f32.mrf.mxu0
  %v1741 = vadd.f32 %v1653, %v1740
  %v1742 = vpop.f32.mrf.mxu0
  %1743 = vmatprep.mubr.bf16.mxu0 %v1439
  %1744 = vmatmul.mubr.bf16.gmra.mxu0 %v1438
  %v1745 = vpop.f32.mrf.mxu0
  %v1746 = vadd.f32 %v1658, %v1745
  %v1747 = vpop.f32.mrf.mxu0
  %v1748 = vpop.f32.mrf.mxu0
  %v1749 = vadd.f32 %v1661, %v1748
  %v1750 = vpop.f32.mrf.mxu0
  %1751 = vmatprep.mubr.bf16.mxu0 %v1446
  %1752 = vmatmul.mubr.bf16.gmra.mxu0 %v1445
  %v1753 = vpop.f32.mrf.mxu0
  %v1754 = vadd.f32 %v1666, %v1753
  %v1755 = vpop.f32.mrf.mxu0
  %v1756 = vpop.f32.mrf.mxu0
  %v1757 = vadd.f32 %v1669, %v1756
  %v1758 = vpop.f32.mrf.mxu0
  %1759 = vmatprep.mubr.bf16.mxu0 %v1453
  %1760 = vmatmul.mubr.bf16.gmra.mxu0 %v1452
  %v1761 = vpop.f32.mrf.mxu0
  %v1762 = vadd.f32 %v1674, %v1761
  %v1763 = vpop.f32.mrf.mxu0
  %v1764 = vpop.f32.mrf.mxu0
  %v1765 = vadd.f32 %v1677, %v1764
  %v1766 = vpop.f32.mrf.mxu0
  %1767 = vmatprep.mubr.bf16.mxu0 %v1460
  %1768 = vmatmul.mubr.bf16.gmra.mxu0 %v1459
  %v1769 = vpop.f32.mrf.mxu0
  %v1770 = vadd.f32 %v1682, %v1769
  %v1771 = vpop.f32.mrf.mxu0
  %v1772 = vpop.f32.mrf.mxu0
  %v1773 = vpop.f32.mrf.mxu0
  %1774 = vdwg.mxu0
  %1775 = vmatprep.subr.bf16.mxu0 0
  %1776 = vmatpush1.bf16.msra.mxu0 %v768
  %1777 = vmatprep.subr.bf16.mxu0 0
  %1778 = vmatpush1.bf16.msra.mxu0 %v767
  %1779 = vmatprep.subr.bf16.mxu0 0
  %1780 = vmatpush1.bf16.msra.mxu0 %v766
  %1781 = vmatprep.subr.bf16.mxu0 0
  %1782 = vmatpush1.bf16.msra.mxu0 %v765
  %1783 = vmatprep.subr.bf16.mxu0 0
  %1784 = vmatpush1.bf16.msra.mxu0 %v764
  %1785 = vmatprep.subr.bf16.mxu0 0
  %1786 = vmatpush1.bf16.msra.mxu0 %v763
  %1787 = vmatprep.subr.bf16.mxu0 0
  %1788 = vmatpush1.bf16.msra.mxu0 %v762
  %1789 = vmatprep.subr.bf16.mxu0 0
  %1790 = vmatpush1.bf16.msra.mxu0 %v761
  %1791 = vmatprep.subr.bf16.mxu0 0
  %1792 = vmatpush2.bf16.msra.mxu0 0
  %1793 = vmatprep.subr.bf16.mxu0 0
  %1794 = vmatpush2.bf16.msra.mxu0 0
  %1795 = vmatprep.subr.bf16.mxu0 0
  %1796 = vmatpush2.bf16.msra.mxu0 0
  %1797 = vmatprep.subr.bf16.mxu0 0
  %1798 = vmatpush2.bf16.msra.mxu0 0
  %1799 = vmatprep.subr.bf16.mxu0 0
  %1800 = vmatpush2.bf16.msra.mxu0 0
  %1801 = vmatprep.subr.bf16.mxu0 0
  %1802 = vmatpush2.bf16.msra.mxu0 0
  %1803 = vmatprep.subr.bf16.mxu0 0
  %1804 = vmatpush2.bf16.msra.mxu0 0
  %1805 = vmatprep.subr.bf16.mxu0 0
  %1806 = vmatpush2.bf16.msra.mxu0 0
  %1807 = vmatprep.mubr.bf16.mxu0 0
  %1808 = vmatmul.mubr.bf16.gmra.mxu0 %v1419
  %v1809 = vpop.f32.mrf.mxu0
  %v1810 = vadd.f32 %v1722, %v1809
  %v1811 = vpop.f32.mrf.mxu0
  %v1812 = vpop.f32.mrf.mxu0
  %v1813 = vadd.f32 %v1725, %v1812
  %v1814 = vpop.f32.mrf.mxu0
  %1815 = vmatprep.mubr.bf16.mxu0 0
  %1816 = vmatmul.mubr.bf16.gmra.mxu0 %v1426
  %v1817 = vpop.f32.mrf.mxu0
  %v1818 = vadd.f32 %v1730, %v1817
  %v1819 = vpop.f32.mrf.mxu0
  %v1820 = vpop.f32.mrf.mxu0
  %v1821 = vadd.f32 %v1733, %v1820
  %v1822 = vpop.f32.mrf.mxu0
  %1823 = vmatprep.mubr.bf16.mxu0 0
  %1824 = vmatmul.mubr.bf16.gmra.mxu0 %v1433
  %v1825 = vpop.f32.mrf.mxu0
  %v1826 = vadd.f32 %v1738, %v1825
  %v1827 = vpop.f32.mrf.mxu0
  %v1828 = vpop.f32.mrf.mxu0
  %v1829 = vadd.f32 %v1741, %v1828
  %v1830 = vpop.f32.mrf.mxu0
  %1831 = vmatprep.mubr.bf16.mxu0 0
  %1832 = vmatmul.mubr.bf16.gmra.mxu0 %v1440
  %v1833 = vpop.f32.mrf.mxu0
  %v1834 = vadd.f32 %v1746, %v1833
  %v1835 = vpop.f32.mrf.mxu0
  %v1836 = vpop.f32.mrf.mxu0
  %v1837 = vadd.f32 %v1749, %v1836
  %v1838 = vpop.f32.mrf.mxu0
  %1839 = vmatprep.mubr.bf16.mxu0 0
  %1840 = vmatmul.mubr.bf16.gmra.mxu0 %v1447
  %v1841 = vpop.f32.mrf.mxu0
  %v1842 = vadd.f32 %v1754, %v1841
  %v1843 = vpop.f32.mrf.mxu0
  %v1844 = vpop.f32.mrf.mxu0
  %v1845 = vadd.f32 %v1757, %v1844
  %v1846 = vpop.f32.mrf.mxu0
  %1847 = vmatprep.mubr.bf16.mxu0 0
  %1848 = vmatmul.mubr.bf16.gmra.mxu0 %v1454
  %v1849 = vpop.f32.mrf.mxu0
  %v1850 = vadd.f32 %v1762, %v1849
  %v1851 = vpop.f32.mrf.mxu0
  %v1852 = vpop.f32.mrf.mxu0
  %v1853 = vadd.f32 %v1765, %v1852
  %v1854 = vpop.f32.mrf.mxu0
  %1855 = vmatprep.mubr.bf16.mxu0 0
  %1856 = vmatmul.mubr.bf16.gmra.mxu0 %v1461
  %v1857 = vpop.f32.mrf.mxu0
  %v1858 = vadd.f32 %v1770, %v1857
  %v1859 = vpop.f32.mrf.mxu0
  %v1860 = vpop.f32.mrf.mxu0
  %v1861 = vpop.f32.mrf.mxu0
  %1862 = vdwg.mxu0
  %v1863 = vadd.f32 %v1204, %v1810
  %v1864 = vadd.f32 %v1205, %v1813
  %v1865 = vadd.f32 %v1206, %v1818
  %v1866 = vadd.f32 %v1207, %v1821
  %v1867 = vadd.f32 %v1208, %v1826
  %v1868 = vadd.f32 %v1209, %v1829
  %v1869 = vadd.f32 %v1210, %v1834
  %v1870 = vadd.f32 %v1211, %v1837
  %v1871 = vadd.f32 %v1212, %v1842
  %v1872 = vadd.f32 %v1213, %v1845
  %v1873 = vadd.f32 %v1214, %v1850
  %v1874 = vadd.f32 %v1215, %v1853
  %v1875 = vadd.f32 %v1216, %v1858
  %1876 = vst [vmem:[%s1203] sm:$0xff] %v1863
  %1877 = vst [vmem:[%s1203 + $0x8] sm:$0xff] %v1864
  %1878 = vst [vmem:[%s1203 + $0x10] sm:$0xff] %v1865
  %1879 = vst [vmem:[%s1203 + $0x18] sm:$0xff] %v1866
  %1880 = vst [vmem:[%s1203 + $0x20] sm:$0xff] %v1867
  %1881 = vst [vmem:[%s1203 + $0x28] sm:$0xff] %v1868
  %1882 = vst [vmem:[%s1203 + $0x30] sm:$0xff] %v1869
  %1883 = vst [vmem:[%s1203 + $0x38] sm:$0xff] %v1870
  %1884 = vst [vmem:[%s1203 + $0x40] sm:$0xff] %v1871
  %1885 = vst [vmem:[%s1203 + $0x48] sm:$0xff] %v1872
  %1886 = vst [vmem:[%s1203 + $0x50] sm:$0xff] %v1873
  %1887 = vst [vmem:[%s1203 + $0x58] sm:$0xff] %v1874
  %1888 = vst [vmem:[%s1203 + $0x60] sm:$0xff] %v1875
  %s1889 = scalar_lea.vmem [#allocation2], 208
  %v1890 = vld [vmem:[%s1889] sm:$0xff]
  %v1891 = vld [vmem:[%s1889 + $0x8] sm:$0xff]
  %v1892 = vld [vmem:[%s1889 + $0x10] sm:$0xff]
  %v1893 = vld [vmem:[%s1889 + $0x18] sm:$0xff]
  %v1894 = vld [vmem:[%s1889 + $0x20] sm:$0xff]
  %v1895 = vld [vmem:[%s1889 + $0x28] sm:$0xff]
  %v1896 = vld [vmem:[%s1889 + $0x30] sm:$0xff]
  %v1897 = vld [vmem:[%s1889 + $0x38] sm:$0xff]
  %v1898 = vld [vmem:[%s1889 + $0x40] sm:$0xff]
  %v1899 = vld [vmem:[%s1889 + $0x48] sm:$0xff]
  %v1900 = vld [vmem:[%s1889 + $0x50] sm:$0xff]
  %v1901 = vld [vmem:[%s1889 + $0x58] sm:$0xff]
  %v1902 = vld [vmem:[%s1889 + $0x60] sm:$0xff]
  %s1903 = scalar_lea.vmem %s0, 728
  %v1904 = vld [vmem:[%s1903] sm:$0xff]
  %v1905 = vld [vmem:[%s1903 + $0x8] sm:$0xff]
  %v1906 = vld [vmem:[%s1903 + $0x10] sm:$0xff]
  %v1907 = vld [vmem:[%s1903 + $0x18] sm:$0xf]
  %v1908 = vld [vmem:[%s1903 + $0x1c] sm:$0xff]
  %v1909 = vld [vmem:[%s1903 + $0x24] sm:$0xff]
  %v1910 = vld [vmem:[%s1903 + $0x2c] sm:$0xff]
  %v1911 = vld [vmem:[%s1903 + $0x34] sm:$0xf]
  %v1912 = vld [vmem:[%s1903 + $0x38] sm:$0xff]
  %v1913 = vld [vmem:[%s1903 + $0x40] sm:$0xff]
  %v1914 = vld [vmem:[%s1903 + $0x48] sm:$0xff]
  %v1915 = vld [vmem:[%s1903 + $0x50] sm:$0xf]
  %v1916 = vld [vmem:[%s1903 + $0x54] sm:$0xff]
  %v1917 = vld [vmem:[%s1903 + $0x5c] sm:$0xff]
  %v1918 = vld [vmem:[%s1903 + $0x64] sm:$0xff]
  %v1919 = vld [vmem:[%s1903 + $0x6c] sm:$0xf]
  %v1920 = vld [vmem:[%s1903 + $0x70] sm:$0xff]
  %v1921 = vld [vmem:[%s1903 + $0x78] sm:$0xff]
  %v1922 = vld [vmem:[%s1903 + $0x80] sm:$0xff]
  %v1923 = vld [vmem:[%s1903 + $0x88] sm:$0xf]
  %v1924 = vld [vmem:[%s1903 + $0x8c] sm:$0xff]
  %v1925 = vld [vmem:[%s1903 + $0x94] sm:$0xff]
  %v1926 = vld [vmem:[%s1903 + $0x9c] sm:$0xff]
  %v1927 = vld [vmem:[%s1903 + $0xa4] sm:$0xf]
  %v1928 = vld [vmem:[%s1903 + $0xa8] sm:$0xff]
  %v1929 = vld [vmem:[%s1903 + $0xb0] sm:$0xff]
  %v1930 = vld [vmem:[%s1903 + $0xb8] sm:$0xff]
  %v1931 = vld [vmem:[%s1903 + $0xc0] sm:$0xf]
  %v1932 = vld [vmem:[%s1903 + $0xc4] sm:$0xff]
  %v1933 = vld [vmem:[%s1903 + $0xcc] sm:$0xff]
  %v1934 = vld [vmem:[%s1903 + $0xd4] sm:$0xff]
  %v1935 = vld [vmem:[%s1903 + $0xdc] sm:$0xf]
  %v1936 = vld [vmem:[%s1903 + $0xe0] sm:$0xff]
  %v1937 = vld [vmem:[%s1903 + $0xe8] sm:$0xff]
  %v1938 = vld [vmem:[%s1903 + $0xf0] sm:$0xff]
  %v1939 = vld [vmem:[%s1903 + $0xf8] sm:$0xf]
  %v1940 = vld [vmem:[%s1903 + $0xfc] sm:$0xff]
  %v1941 = vld [vmem:[%s1903 + $0x104] sm:$0xff]
  %v1942 = vld [vmem:[%s1903 + $0x10c] sm:$0xff]
  %v1943 = vld [vmem:[%s1903 + $0x114] sm:$0xf]
  %v1944 = vld [vmem:[%s1903 + $0x118] sm:$0xff]
  %v1945 = vld [vmem:[%s1903 + $0x120] sm:$0xff]
  %v1946 = vld [vmem:[%s1903 + $0x128] sm:$0xff]
  %v1947 = vld [vmem:[%s1903 + $0x130] sm:$0xf]
  %v1948 = vld [vmem:[%s1903 + $0x134] sm:$0xff]
  %v1949 = vld [vmem:[%s1903 + $0x13c] sm:$0xff]
  %v1950 = vld [vmem:[%s1903 + $0x144] sm:$0xff]
  %v1951 = vld [vmem:[%s1903 + $0x14c] sm:$0xf]
  %v1952 = vld [vmem:[%s1903 + $0x150] sm:$0xff]
  %v1953 = vld [vmem:[%s1903 + $0x158] sm:$0xff]
  %v1954 = vld [vmem:[%s1903 + $0x160] sm:$0xff]
  %v1955 = vld [vmem:[%s1903 + $0x168] sm:$0xf]
  %v2008 = vunpack.c.l.b16 %v1904
  %v2009 = vunpack.c.h.b16 %v1904
  %v2010 = vunpack.c.l.b16 %v1905
  %v2011 = vunpack.c.h.b16 %v1905
  %v2012 = vunpack.c.l.b16 %v1906
  %v2013 = vunpack.c.h.b16 %v1906
  %v2014 = vunpack.c.l.b16 %v1907
  %v2015 = vunpack.c.l.b16 %v1908
  %v2016 = vunpack.c.h.b16 %v1908
  %v2017 = vunpack.c.l.b16 %v1909
  %v2018 = vunpack.c.h.b16 %v1909
  %v2019 = vunpack.c.l.b16 %v1910
  %v2020 = vunpack.c.h.b16 %v1910
  %v2021 = vunpack.c.l.b16 %v1911
  %v2022 = vunpack.c.l.b16 %v1912
  %v2023 = vunpack.c.h.b16 %v1912
  %v2024 = vunpack.c.l.b16 %v1913
  %v2025 = vunpack.c.h.b16 %v1913
  %v2026 = vunpack.c.l.b16 %v1914
  %v2027 = vunpack.c.h.b16 %v1914
  %v2028 = vunpack.c.l.b16 %v1915
  %v2029 = vunpack.c.l.b16 %v1916
  %v2030 = vunpack.c.h.b16 %v1916
  %v2031 = vunpack.c.l.b16 %v1917
  %v2032 = vunpack.c.h.b16 %v1917
  %v2033 = vunpack.c.l.b16 %v1918
  %v2034 = vunpack.c.h.b16 %v1918
  %v2035 = vunpack.c.l.b16 %v1919
  %v2036 = vunpack.c.l.b16 %v1920
  %v2037 = vunpack.c.h.b16 %v1920
  %v2038 = vunpack.c.l.b16 %v1921
  %v2039 = vunpack.c.h.b16 %v1921
  %v2040 = vunpack.c.l.b16 %v1922
  %v2041 = vunpack.c.h.b16 %v1922
  %v2042 = vunpack.c.l.b16 %v1923
  %v2043 = vunpack.c.l.b16 %v1924
  %v2044 = vunpack.c.h.b16 %v1924
  %v2045 = vunpack.c.l.b16 %v1925
  %v2046 = vunpack.c.h.b16 %v1925
  %v2047 = vunpack.c.l.b16 %v1926
  %v2048 = vunpack.c.h.b16 %v1926
  %v2049 = vunpack.c.l.b16 %v1927
  %v2050 = vunpack.c.l.b16 %v1928
  %v2051 = vunpack.c.h.b16 %v1928
  %v2052 = vunpack.c.l.b16 %v1929
  %v2053 = vunpack.c.h.b16 %v1929
  %v2054 = vunpack.c.l.b16 %v1930
  %v2055 = vunpack.c.h.b16 %v1930
  %v2056 = vunpack.c.l.b16 %v1931
  %v2057 = vunpack.c.l.b16 %v1932
  %v2058 = vunpack.c.h.b16 %v1932
  %v2059 = vunpack.c.l.b16 %v1933
  %v2060 = vunpack.c.h.b16 %v1933
  %v2061 = vunpack.c.l.b16 %v1934
  %v2062 = vunpack.c.h.b16 %v1934
  %v2063 = vunpack.c.l.b16 %v1935
  %v2064 = vunpack.c.l.b16 %v1936
  %v2065 = vunpack.c.h.b16 %v1936
  %v2066 = vunpack.c.l.b16 %v1937
  %v2067 = vunpack.c.h.b16 %v1937
  %v2068 = vunpack.c.l.b16 %v1938
  %v2069 = vunpack.c.h.b16 %v1938
  %v2070 = vunpack.c.l.b16 %v1939
  %v2071 = vunpack.c.l.b16 %v1940
  %v2072 = vunpack.c.h.b16 %v1940
  %v2073 = vunpack.c.l.b16 %v1941
  %v2074 = vunpack.c.h.b16 %v1941
  %v2075 = vunpack.c.l.b16 %v1942
  %v2076 = vunpack.c.h.b16 %v1942
  %v2077 = vunpack.c.l.b16 %v1943
  %v2078 = vunpack.c.l.b16 %v1944
  %v2079 = vunpack.c.h.b16 %v1944
  %v2080 = vunpack.c.l.b16 %v1945
  %v2081 = vunpack.c.h.b16 %v1945
  %v2082 = vunpack.c.l.b16 %v1946
  %v2083 = vunpack.c.h.b16 %v1946
  %v2084 = vunpack.c.l.b16 %v1947
  %v2085 = vunpack.c.l.b16 %v1948
  %v2086 = vunpack.c.h.b16 %v1948
  %v2087 = vunpack.c.l.b16 %v1949
  %v2088 = vunpack.c.h.b16 %v1949
  %v2089 = vunpack.c.l.b16 %v1950
  %v2090 = vunpack.c.h.b16 %v1950
  %v2091 = vunpack.c.l.b16 %v1951
  %v2092 = vunpack.c.l.b16 %v1952
  %v2093 = vunpack.c.h.b16 %v1952
  %v2094 = vunpack.c.l.b16 %v1953
  %v2095 = vunpack.c.h.b16 %v1953
  %v2096 = vunpack.c.l.b16 %v1954
  %v2097 = vunpack.c.h.b16 %v1954
  %v2098 = vunpack.c.l.b16 %v1955
  %v2099 = vpack.c.b16 %v2015, %v2008
  %v2100 = vpack.c.b16 %v2016, %v2009
  %v2101 = vpack.c.b16 %v2017, %v2010
  %v2102 = vpack.c.b16 %v2018, %v2011
  %v2103 = vpack.c.b16 %v2019, %v2012
  %v2104 = vpack.c.b16 %v2020, %v2013
  %v2105 = vpack.c.b16 %v2021, %v2014
  %v2106 = vpack.c.b16 %v2029, %v2022
  %v2107 = vpack.c.b16 %v2030, %v2023
  %v2108 = vpack.c.b16 %v2031, %v2024
  %v2109 = vpack.c.b16 %v2032, %v2025
  %v2110 = vpack.c.b16 %v2033, %v2026
  %v2111 = vpack.c.b16 %v2034, %v2027
  %v2112 = vpack.c.b16 %v2035, %v2028
  %v2113 = vpack.c.b16 %v2043, %v2036
  %v2114 = vpack.c.b16 %v2044, %v2037
  %v2115 = vpack.c.b16 %v2045, %v2038
  %v2116 = vpack.c.b16 %v2046, %v2039
  %v2117 = vpack.c.b16 %v2047, %v2040
  %v2118 = vpack.c.b16 %v2048, %v2041
  %v2119 = vpack.c.b16 %v2049, %v2042
  %v2120 = vpack.c.b16 %v2057, %v2050
  %v2121 = vpack.c.b16 %v2058, %v2051
  %v2122 = vpack.c.b16 %v2059, %v2052
  %v2123 = vpack.c.b16 %v2060, %v2053
  %v2124 = vpack.c.b16 %v2061, %v2054
  %v2125 = vpack.c.b16 %v2062, %v2055
  %v2126 = vpack.c.b16 %v2063, %v2056
  %v2127 = vpack.c.b16 %v2071, %v2064
  %v2128 = vpack.c.b16 %v2072, %v2065
  %v2129 = vpack.c.b16 %v2073, %v2066
  %v2130 = vpack.c.b16 %v2074, %v2067
  %v2131 = vpack.c.b16 %v2075, %v2068
  %v2132 = vpack.c.b16 %v2076, %v2069
  %v2133 = vpack.c.b16 %v2077, %v2070
  %v2134 = vpack.c.b16 %v2085, %v2078
  %v2135 = vpack.c.b16 %v2086, %v2079
  %v2136 = vpack.c.b16 %v2087, %v2080
  %v2137 = vpack.c.b16 %v2088, %v2081
  %v2138 = vpack.c.b16 %v2089, %v2082
  %v2139 = vpack.c.b16 %v2090, %v2083
  %v2140 = vpack.c.b16 %v2091, %v2084
  %v2141 = vpack.c.b16 %v2092, %v2092
  %v2142 = vpack.c.b16 %v2093, %v2093
  %v2143 = vpack.c.b16 %v2094, %v2094
  %v2144 = vpack.c.b16 %v2095, %v2095
  %v2145 = vpack.c.b16 %v2096, %v2096
  %v2146 = vpack.c.b16 %v2097, %v2097
  %v2147 = vpack.c.b16 %v2098, %v2098
  %2197 = vmatprep.subr.bf16.mxu0 0
  %2198 = vmatpush1.bf16.msra.mxu0 %v720
  %2199 = vmatprep.subr.bf16.mxu0 0
  %2200 = vmatpush1.bf16.msra.mxu0 %v719
  %2201 = vmatprep.subr.bf16.mxu0 0
  %2202 = vmatpush1.bf16.msra.mxu0 %v718
  %2203 = vmatprep.subr.bf16.mxu0 0
  %2204 = vmatpush1.bf16.msra.mxu0 %v717
  %2205 = vmatprep.subr.bf16.mxu0 0
  %2206 = vmatpush1.bf16.msra.mxu0 %v716
  %2207 = vmatprep.subr.bf16.mxu0 0
  %2208 = vmatpush1.bf16.msra.mxu0 %v715
  %2209 = vmatprep.subr.bf16.mxu0 0
  %2210 = vmatpush1.bf16.msra.mxu0 %v714
  %2211 = vmatprep.subr.bf16.mxu0 0
  %2212 = vmatpush1.bf16.msra.mxu0 %v713
  %2213 = vmatprep.subr.bf16.mxu0 0
  %2214 = vmatpush2.bf16.msra.mxu0 %v728
  %2215 = vmatprep.subr.bf16.mxu0 0
  %2216 = vmatpush2.bf16.msra.mxu0 %v727
  %2217 = vmatprep.subr.bf16.mxu0 0
  %2218 = vmatpush2.bf16.msra.mxu0 %v726
  %2219 = vmatprep.subr.bf16.mxu0 0
  %2220 = vmatpush2.bf16.msra.mxu0 %v725
  %2221 = vmatprep.subr.bf16.mxu0 0
  %2222 = vmatpush2.bf16.msra.mxu0 %v724
  %2223 = vmatprep.subr.bf16.mxu0 0
  %2224 = vmatpush2.bf16.msra.mxu0 %v723
  %2225 = vmatprep.subr.bf16.mxu0 0
  %2226 = vmatpush2.bf16.msra.mxu0 %v722
  %2227 = vmatprep.subr.bf16.mxu0 0
  %2228 = vmatpush2.bf16.msra.mxu0 %v721
  %2229 = vmatprep.mubr.bf16.mxu0 %v2100
  %2230 = vmatmul.mubr.bf16.gmra.mxu0 %v2099
  %v2231 = vpop.f32.mrf.mxu0
  %v2232 = vadd.f32 0.0, %v2231
  %v2233 = vpop.f32.mrf.mxu0
  %v2234 = vpop.f32.mrf.mxu0
  %v2235 = vadd.f32 0.0, %v2234
  %v2236 = vpop.f32.mrf.mxu0
  %2237 = vmatprep.mubr.bf16.mxu0 %v2107
  %2238 = vmatmul.mubr.bf16.gmra.mxu0 %v2106
  %v2239 = vpop.f32.mrf.mxu0
  %v2240 = vadd.f32 0.0, %v2239
  %v2241 = vpop.f32.mrf.mxu0
  %v2242 = vpop.f32.mrf.mxu0
  %v2243 = vadd.f32 0.0, %v2242
  %v2244 = vpop.f32.mrf.mxu0
  %2245 = vmatprep.mubr.bf16.mxu0 %v2114
  %2246 = vmatmul.mubr.bf16.gmra.mxu0 %v2113
  %v2247 = vpop.f32.mrf.mxu0
  %v2248 = vadd.f32 0.0, %v2247
  %v2249 = vpop.f32.mrf.mxu0
  %v2250 = vpop.f32.mrf.mxu0
  %v2251 = vadd.f32 0.0, %v2250
  %v2252 = vpop.f32.mrf.mxu0
  %2253 = vmatprep.mubr.bf16.mxu0 %v2121
  %2254 = vmatmul.mubr.bf16.gmra.mxu0 %v2120
  %v2255 = vpop.f32.mrf.mxu0
  %v2256 = vadd.f32 0.0, %v2255
  %v2257 = vpop.f32.mrf.mxu0
  %v2258 = vpop.f32.mrf.mxu0
  %v2259 = vadd.f32 0.0, %v2258
  %v2260 = vpop.f32.mrf.mxu0
  %2261 = vmatprep.mubr.bf16.mxu0 %v2128
  %2262 = vmatmul.mubr.bf16.gmra.mxu0 %v2127
  %v2263 = vpop.f32.mrf.mxu0
  %v2264 = vadd.f32 0.0, %v2263
  %v2265 = vpop.f32.mrf.mxu0
  %v2266 = vpop.f32.mrf.mxu0
  %v2267 = vadd.f32 0.0, %v2266
  %v2268 = vpop.f32.mrf.mxu0
  %2269 = vmatprep.mubr.bf16.mxu0 %v2135
  %2270 = vmatmul.mubr.bf16.gmra.mxu0 %v2134
  %v2271 = vpop.f32.mrf.mxu0
  %v2272 = vadd.f32 0.0, %v2271
  %v2273 = vpop.f32.mrf.mxu0
  %v2274 = vpop.f32.mrf.mxu0
  %v2275 = vadd.f32 0.0, %v2274
  %v2276 = vpop.f32.mrf.mxu0
  %2277 = vmatprep.mubr.bf16.mxu0 %v2142
  %2278 = vmatmul.mubr.bf16.gmra.mxu0 %v2141
  %v2279 = vpop.f32.mrf.mxu0
  %v2280 = vadd.f32 0.0, %v2279
  %v2281 = vpop.f32.mrf.mxu0
  %v2282 = vpop.f32.mrf.mxu0
  %v2283 = vpop.f32.mrf.mxu0
  %2284 = vdwg.mxu0
  %2285 = vmatprep.subr.bf16.mxu0 0
  %2286 = vmatpush1.bf16.msra.mxu0 %v736
  %2287 = vmatprep.subr.bf16.mxu0 0
  %2288 = vmatpush1.bf16.msra.mxu0 %v735
  %2289 = vmatprep.subr.bf16.mxu0 0
  %2290 = vmatpush1.bf16.msra.mxu0 %v734
  %2291 = vmatprep.subr.bf16.mxu0 0
  %2292 = vmatpush1.bf16.msra.mxu0 %v733
  %2293 = vmatprep.subr.bf16.mxu0 0
  %2294 = vmatpush1.bf16.msra.mxu0 %v732
  %2295 = vmatprep.subr.bf16.mxu0 0
  %2296 = vmatpush1.bf16.msra.mxu0 %v731
  %2297 = vmatprep.subr.bf16.mxu0 0
  %2298 = vmatpush1.bf16.msra.mxu0 %v730
  %2299 = vmatprep.subr.bf16.mxu0 0
  %2300 = vmatpush1.bf16.msra.mxu0 %v729
  %2301 = vmatprep.subr.bf16.mxu0 0
  %2302 = vmatpush2.bf16.msra.mxu0 %v744
  %2303 = vmatprep.subr.bf16.mxu0 0
  %2304 = vmatpush2.bf16.msra.mxu0 %v743
  %2305 = vmatprep.subr.bf16.mxu0 0
  %2306 = vmatpush2.bf16.msra.mxu0 %v742
  %2307 = vmatprep.subr.bf16.mxu0 0
  %2308 = vmatpush2.bf16.msra.mxu0 %v741
  %2309 = vmatprep.subr.bf16.mxu0 0
  %2310 = vmatpush2.bf16.msra.mxu0 %v740
  %2311 = vmatprep.subr.bf16.mxu0 0
  %2312 = vmatpush2.bf16.msra.mxu0 %v739
  %2313 = vmatprep.subr.bf16.mxu0 0
  %2314 = vmatpush2.bf16.msra.mxu0 %v738
  %2315 = vmatprep.subr.bf16.mxu0 0
  %2316 = vmatpush2.bf16.msra.mxu0 %v737
  %2317 = vmatprep.mubr.bf16.mxu0 %v2102
  %2318 = vmatmul.mubr.bf16.gmra.mxu0 %v2101
  %v2319 = vpop.f32.mrf.mxu0
  %v2320 = vadd.f32 %v2232, %v2319
  %v2321 = vpop.f32.mrf.mxu0
  %v2322 = vpop.f32.mrf.mxu0
  %v2323 = vadd.f32 %v2235, %v2322
  %v2324 = vpop.f32.mrf.mxu0
  %2325 = vmatprep.mubr.bf16.mxu0 %v2109
  %2326 = vmatmul.mubr.bf16.gmra.mxu0 %v2108
  %v2327 = vpop.f32.mrf.mxu0
  %v2328 = vadd.f32 %v2240, %v2327
  %v2329 = vpop.f32.mrf.mxu0
  %v2330 = vpop.f32.mrf.mxu0
  %v2331 = vadd.f32 %v2243, %v2330
  %v2332 = vpop.f32.mrf.mxu0
  %2333 = vmatprep.mubr.bf16.mxu0 %v2116
  %2334 = vmatmul.mubr.bf16.gmra.mxu0 %v2115
  %v2335 = vpop.f32.mrf.mxu0
  %v2336 = vadd.f32 %v2248, %v2335
  %v2337 = vpop.f32.mrf.mxu0
  %v2338 = vpop.f32.mrf.mxu0
  %v2339 = vadd.f32 %v2251, %v2338
  %v2340 = vpop.f32.mrf.mxu0
  %2341 = vmatprep.mubr.bf16.mxu0 %v2123
  %2342 = vmatmul.mubr.bf16.gmra.mxu0 %v2122
  %v2343 = vpop.f32.mrf.mxu0
  %v2344 = vadd.f32 %v2256, %v2343
  %v2345 = vpop.f32.mrf.mxu0
  %v2346 = vpop.f32.mrf.mxu0
  %v2347 = vadd.f32 %v2259, %v2346
  %v2348 = vpop.f32.mrf.mxu0
  %2349 = vmatprep.mubr.bf16.mxu0 %v2130
  %2350 = vmatmul.mubr.bf16.gmra.mxu0 %v2129
  %v2351 = vpop.f32.mrf.mxu0
  %v2352 = vadd.f32 %v2264, %v2351
  %v2353 = vpop.f32.mrf.mxu0
  %v2354 = vpop.f32.mrf.mxu0
  %v2355 = vadd.f32 %v2267, %v2354
  %v2356 = vpop.f32.mrf.mxu0
  %2357 = vmatprep.mubr.bf16.mxu0 %v2137
  %2358 = vmatmul.mubr.bf16.gmra.mxu0 %v2136
  %v2359 = vpop.f32.mrf.mxu0
  %v2360 = vadd.f32 %v2272, %v2359
  %v2361 = vpop.f32.mrf.mxu0
  %v2362 = vpop.f32.mrf.mxu0
  %v2363 = vadd.f32 %v2275, %v2362
  %v2364 = vpop.f32.mrf.mxu0
  %2365 = vmatprep.mubr.bf16.mxu0 %v2144
  %2366 = vmatmul.mubr.bf16.gmra.mxu0 %v2143
  %v2367 = vpop.f32.mrf.mxu0
  %v2368 = vadd.f32 %v2280, %v2367
  %v2369 = vpop.f32.mrf.mxu0
  %v2370 = vpop.f32.mrf.mxu0
  %v2371 = vpop.f32.mrf.mxu0
  %2372 = vdwg.mxu0
  %2373 = vmatprep.subr.bf16.mxu0 0
  %2374 = vmatpush1.bf16.msra.mxu0 %v752
  %2375 = vmatprep.subr.bf16.mxu0 0
  %2376 = vmatpush1.bf16.msra.mxu0 %v751
  %2377 = vmatprep.subr.bf16.mxu0 0
  %2378 = vmatpush1.bf16.msra.mxu0 %v750
  %2379 = vmatprep.subr.bf16.mxu0 0
  %2380 = vmatpush1.bf16.msra.mxu0 %v749
  %2381 = vmatprep.subr.bf16.mxu0 0
  %2382 = vmatpush1.bf16.msra.mxu0 %v748
  %2383 = vmatprep.subr.bf16.mxu0 0
  %2384 = vmatpush1.bf16.msra.mxu0 %v747
  %2385 = vmatprep.subr.bf16.mxu0 0
  %2386 = vmatpush1.bf16.msra.mxu0 %v746
  %2387 = vmatprep.subr.bf16.mxu0 0
  %2388 = vmatpush1.bf16.msra.mxu0 %v745
  %2389 = vmatprep.subr.bf16.mxu0 0
  %2390 = vmatpush2.bf16.msra.mxu0 %v760
  %2391 = vmatprep.subr.bf16.mxu0 0
  %2392 = vmatpush2.bf16.msra.mxu0 %v759
  %2393 = vmatprep.subr.bf16.mxu0 0
  %2394 = vmatpush2.bf16.msra.mxu0 %v758
  %2395 = vmatprep.subr.bf16.mxu0 0
  %2396 = vmatpush2.bf16.msra.mxu0 %v757
  %2397 = vmatprep.subr.bf16.mxu0 0
  %2398 = vmatpush2.bf16.msra.mxu0 %v756
  %2399 = vmatprep.subr.bf16.mxu0 0
  %2400 = vmatpush2.bf16.msra.mxu0 %v755
  %2401 = vmatprep.subr.bf16.mxu0 0
  %2402 = vmatpush2.bf16.msra.mxu0 %v754
  %2403 = vmatprep.subr.bf16.mxu0 0
  %2404 = vmatpush2.bf16.msra.mxu0 %v753
  %2405 = vmatprep.mubr.bf16.mxu0 %v2104
  %2406 = vmatmul.mubr.bf16.gmra.mxu0 %v2103
  %v2407 = vpop.f32.mrf.mxu0
  %v2408 = vadd.f32 %v2320, %v2407
  %v2409 = vpop.f32.mrf.mxu0
  %v2410 = vpop.f32.mrf.mxu0
  %v2411 = vadd.f32 %v2323, %v2410
  %v2412 = vpop.f32.mrf.mxu0
  %2413 = vmatprep.mubr.bf16.mxu0 %v2111
  %2414 = vmatmul.mubr.bf16.gmra.mxu0 %v2110
  %v2415 = vpop.f32.mrf.mxu0
  %v2416 = vadd.f32 %v2328, %v2415
  %v2417 = vpop.f32.mrf.mxu0
  %v2418 = vpop.f32.mrf.mxu0
  %v2419 = vadd.f32 %v2331, %v2418
  %v2420 = vpop.f32.mrf.mxu0
  %2421 = vmatprep.mubr.bf16.mxu0 %v2118
  %2422 = vmatmul.mubr.bf16.gmra.mxu0 %v2117
  %v2423 = vpop.f32.mrf.mxu0
  %v2424 = vadd.f32 %v2336, %v2423
  %v2425 = vpop.f32.mrf.mxu0
  %v2426 = vpop.f32.mrf.mxu0
  %v2427 = vadd.f32 %v2339, %v2426
  %v2428 = vpop.f32.mrf.mxu0
  %2429 = vmatprep.mubr.bf16.mxu0 %v2125
  %2430 = vmatmul.mubr.bf16.gmra.mxu0 %v2124
  %v2431 = vpop.f32.mrf.mxu0
  %v2432 = vadd.f32 %v2344, %v2431
  %v2433 = vpop.f32.mrf.mxu0
  %v2434 = vpop.f32.mrf.mxu0
  %v2435 = vadd.f32 %v2347, %v2434
  %v2436 = vpop.f32.mrf.mxu0
  %2437 = vmatprep.mubr.bf16.mxu0 %v2132
  %2438 = vmatmul.mubr.bf16.gmra.mxu0 %v2131
  %v2439 = vpop.f32.mrf.mxu0
  %v2440 = vadd.f32 %v2352, %v2439
  %v2441 = vpop.f32.mrf.mxu0
  %v2442 = vpop.f32.mrf.mxu0
  %v2443 = vadd.f32 %v2355, %v2442
  %v2444 = vpop.f32.mrf.mxu0
  %2445 = vmatprep.mubr.bf16.mxu0 %v2139
  %2446 = vmatmul.mubr.bf16.gmra.mxu0 %v2138
  %v2447 = vpop.f32.mrf.mxu0
  %v2448 = vadd.f32 %v2360, %v2447
  %v2449 = vpop.f32.mrf.mxu0
  %v2450 = vpop.f32.mrf.mxu0
  %v2451 = vadd.f32 %v2363, %v2450
  %v2452 = vpop.f32.mrf.mxu0
  %2453 = vmatprep.mubr.bf16.mxu0 %v2146
  %2454 = vmatmul.mubr.bf16.gmra.mxu0 %v2145
  %v2455 = vpop.f32.mrf.mxu0
  %v2456 = vadd.f32 %v2368, %v2455
  %v2457 = vpop.f32.mrf.mxu0
  %v2458 = vpop.f32.mrf.mxu0
  %v2459 = vpop.f32.mrf.mxu0
  %2460 = vdwg.mxu0
  %2461 = vmatprep.subr.bf16.mxu0 0
  %2462 = vmatpush1.bf16.msra.mxu0 %v768
  %2463 = vmatprep.subr.bf16.mxu0 0
  %2464 = vmatpush1.bf16.msra.mxu0 %v767
  %2465 = vmatprep.subr.bf16.mxu0 0
  %2466 = vmatpush1.bf16.msra.mxu0 %v766
  %2467 = vmatprep.subr.bf16.mxu0 0
  %2468 = vmatpush1.bf16.msra.mxu0 %v765
  %2469 = vmatprep.subr.bf16.mxu0 0
  %2470 = vmatpush1.bf16.msra.mxu0 %v764
  %2471 = vmatprep.subr.bf16.mxu0 0
  %2472 = vmatpush1.bf16.msra.mxu0 %v763
  %2473 = vmatprep.subr.bf16.mxu0 0
  %2474 = vmatpush1.bf16.msra.mxu0 %v762
  %2475 = vmatprep.subr.bf16.mxu0 0
  %2476 = vmatpush1.bf16.msra.mxu0 %v761
  %2477 = vmatprep.subr.bf16.mxu0 0
  %2478 = vmatpush2.bf16.msra.mxu0 0
  %2479 = vmatprep.subr.bf16.mxu0 0
  %2480 = vmatpush2.bf16.msra.mxu0 0
  %2481 = vmatprep.subr.bf16.mxu0 0
  %2482 = vmatpush2.bf16.msra.mxu0 0
  %2483 = vmatprep.subr.bf16.mxu0 0
  %2484 = vmatpush2.bf16.msra.mxu0 0
  %2485 = vmatprep.subr.bf16.mxu0 0
  %2486 = vmatpush2.bf16.msra.mxu0 0
  %2487 = vmatprep.subr.bf16.mxu0 0
  %2488 = vmatpush2.bf16.msra.mxu0 0
  %2489 = vmatprep.subr.bf16.mxu0 0
  %2490 = vmatpush2.bf16.msra.mxu0 0
  %2491 = vmatprep.subr.bf16.mxu0 0
  %2492 = vmatpush2.bf16.msra.mxu0 0
  %2493 = vmatprep.mubr.bf16.mxu0 0
  %2494 = vmatmul.mubr.bf16.gmra.mxu0 %v2105
  %v2495 = vpop.f32.mrf.mxu0
  %v2496 = vadd.f32 %v2408, %v2495
  %v2497 = vpop.f32.mrf.mxu0
  %v2498 = vpop.f32.mrf.mxu0
  %v2499 = vadd.f32 %v2411, %v2498
  %v2500 = vpop.f32.mrf.mxu0
  %2501 = vmatprep.mubr.bf16.mxu0 0
  %2502 = vmatmul.mubr.bf16.gmra.mxu0 %v2112
  %v2503 = vpop.f32.mrf.mxu0
  %v2504 = vadd.f32 %v2416, %v2503
  %v2505 = vpop.f32.mrf.mxu0
  %v2506 = vpop.f32.mrf.mxu0
  %v2507 = vadd.f32 %v2419, %v2506
  %v2508 = vpop.f32.mrf.mxu0
  %2509 = vmatprep.mubr.bf16.mxu0 0
  %2510 = vmatmul.mubr.bf16.gmra.mxu0 %v2119
  %v2511 = vpop.f32.mrf.mxu0
  %v2512 = vadd.f32 %v2424, %v2511
  %v2513 = vpop.f32.mrf.mxu0
  %v2514 = vpop.f32.mrf.mxu0
  %v2515 = vadd.f32 %v2427, %v2514
  %v2516 = vpop.f32.mrf.mxu0
  %2517 = vmatprep.mubr.bf16.mxu0 0
  %2518 = vmatmul.mubr.bf16.gmra.mxu0 %v2126
  %v2519 = vpop.f32.mrf.mxu0
  %v2520 = vadd.f32 %v2432, %v2519
  %v2521 = vpop.f32.mrf.mxu0
  %v2522 = vpop.f32.mrf.mxu0
  %v2523 = vadd.f32 %v2435, %v2522
  %v2524 = vpop.f32.mrf.mxu0
  %2525 = vmatprep.mubr.bf16.mxu0 0
  %2526 = vmatmul.mubr.bf16.gmra.mxu0 %v2133
  %v2527 = vpop.f32.mrf.mxu0
  %v2528 = vadd.f32 %v2440, %v2527
  %v2529 = vpop.f32.mrf.mxu0
  %v2530 = vpop.f32.mrf.mxu0
  %v2531 = vadd.f32 %v2443, %v2530
  %v2532 = vpop.f32.mrf.mxu0
  %2533 = vmatprep.mubr.bf16.mxu0 0
  %2534 = vmatmul.mubr.bf16.gmra.mxu0 %v2140
  %v2535 = vpop.f32.mrf.mxu0
  %v2536 = vadd.f32 %v2448, %v2535
  %v2537 = vpop.f32.mrf.mxu0
  %v2538 = vpop.f32.mrf.mxu0
  %v2539 = vadd.f32 %v2451, %v2538
  %v2540 = vpop.f32.mrf.mxu0
  %2541 = vmatprep.mubr.bf16.mxu0 0
  %2542 = vmatmul.mubr.bf16.gmra.mxu0 %v2147
  %v2543 = vpop.f32.mrf.mxu0
  %v2544 = vadd.f32 %v2456, %v2543
  %v2545 = vpop.f32.mrf.mxu0
  %v2546 = vpop.f32.mrf.mxu0
  %v2547 = vpop.f32.mrf.mxu0
  %2548 = vdwg.mxu0
  %v2549 = vadd.f32 %v1890, %v2496
  %v2550 = vadd.f32 %v1891, %v2499
  %v2551 = vadd.f32 %v1892, %v2504
  %v2552 = vadd.f32 %v1893, %v2507
  %v2553 = vadd.f32 %v1894, %v2512
  %v2554 = vadd.f32 %v1895, %v2515
  %v2555 = vadd.f32 %v1896, %v2520
  %v2556 = vadd.f32 %v1897, %v2523
  %v2557 = vadd.f32 %v1898, %v2528
  %v2558 = vadd.f32 %v1899, %v2531
  %v2559 = vadd.f32 %v1900, %v2536
  %v2560 = vadd.f32 %v1901, %v2539
  %v2561 = vadd.f32 %v1902, %v2544
  %2562 = vst [vmem:[%s1889] sm:$0xff] %v2549
  %2563 = vst [vmem:[%s1889 + $0x8] sm:$0xff] %v2550
  %2564 = vst [vmem:[%s1889 + $0x10] sm:$0xff] %v2551
  %2565 = vst [vmem:[%s1889 + $0x18] sm:$0xff] %v2552
  %2566 = vst [vmem:[%s1889 + $0x20] sm:$0xff] %v2553
  %2567 = vst [vmem:[%s1889 + $0x28] sm:$0xff] %v2554
  %2568 = vst [vmem:[%s1889 + $0x30] sm:$0xff] %v2555
  %2569 = vst [vmem:[%s1889 + $0x38] sm:$0xff] %v2556
  %2570 = vst [vmem:[%s1889 + $0x40] sm:$0xff] %v2557
  %2571 = vst [vmem:[%s1889 + $0x48] sm:$0xff] %v2558
  %2572 = vst [vmem:[%s1889 + $0x50] sm:$0xff] %v2559
  %2573 = vst [vmem:[%s1889 + $0x58] sm:$0xff] %v2560
  %2574 = vst [vmem:[%s1889 + $0x60] sm:$0xff] %v2561
  %s2575 = scalar_lea.vmem [#allocation2], 312
  %v2576 = vld [vmem:[%s2575] sm:$0xff]
  %v2577 = vld [vmem:[%s2575 + $0x8] sm:$0xff]
  %v2578 = vld [vmem:[%s2575 + $0x10] sm:$0xff]
  %v2579 = vld [vmem:[%s2575 + $0x18] sm:$0xff]
  %v2580 = vld [vmem:[%s2575 + $0x20] sm:$0xff]
  %v2581 = vld [vmem:[%s2575 + $0x28] sm:$0xff]
  %v2582 = vld [vmem:[%s2575 + $0x30] sm:$0xff]
  %v2583 = vld [vmem:[%s2575 + $0x38] sm:$0xff]
  %v2584 = vld [vmem:[%s2575 + $0x40] sm:$0xff]
  %v2585 = vld [vmem:[%s2575 + $0x48] sm:$0xff]
  %v2586 = vld [vmem:[%s2575 + $0x50] sm:$0xff]
  %v2587 = vld [vmem:[%s2575 + $0x58] sm:$0xff]
  %v2588 = vld [vmem:[%s2575 + $0x60] sm:$0xff]
  %s2589 = scalar_lea.vmem %s0, 1092
  %v2590 = vld [vmem:[%s2589] sm:$0xff]
  %v2591 = vld [vmem:[%s2589 + $0x8] sm:$0xff]
  %v2592 = vld [vmem:[%s2589 + $0x10] sm:$0xff]
  %v2593 = vld [vmem:[%s2589 + $0x18] sm:$0xf]
  %v2594 = vld [vmem:[%s2589 + $0x1c] sm:$0xff]
  %v2595 = vld [vmem:[%s2589 + $0x24] sm:$0xff]
  %v2596 = vld [vmem:[%s2589 + $0x2c] sm:$0xff]
  %v2597 = vld [vmem:[%s2589 + $0x34] sm:$0xf]
  %v2598 = vld [vmem:[%s2589 + $0x38] sm:$0xff]
  %v2599 = vld [vmem:[%s2589 + $0x40] sm:$0xff]
  %v2600 = vld [vmem:[%s2589 + $0x48] sm:$0xff]
  %v2601 = vld [vmem:[%s2589 + $0x50] sm:$0xf]
  %v2602 = vld [vmem:[%s2589 + $0x54] sm:$0xff]
  %v2603 = vld [vmem:[%s2589 + $0x5c] sm:$0xff]
  %v2604 = vld [vmem:[%s2589 + $0x64] sm:$0xff]
  %v2605 = vld [vmem:[%s2589 + $0x6c] sm:$0xf]
  %v2606 = vld [vmem:[%s2589 + $0x70] sm:$0xff]
  %v2607 = vld [vmem:[%s2589 + $0x78] sm:$0xff]
  %v2608 = vld [vmem:[%s2589 + $0x80] sm:$0xff]
  %v2609 = vld [vmem:[%s2589 + $0x88] sm:$0xf]
  %v2610 = vld [vmem:[%s2589 + $0x8c] sm:$0xff]
  %v2611 = vld [vmem:[%s2589 + $0x94] sm:$0xff]
  %v2612 = vld [vmem:[%s2589 + $0x9c] sm:$0xff]
  %v2613 = vld [vmem:[%s2589 + $0xa4] sm:$0xf]
  %v2614 = vld [vmem:[%s2589 + $0xa8] sm:$0xff]
  %v2615 = vld [vmem:[%s2589 + $0xb0] sm:$0xff]
  %v2616 = vld [vmem:[%s2589 + $0xb8] sm:$0xff]
  %v2617 = vld [vmem:[%s2589 + $0xc0] sm:$0xf]
  %v2618 = vld [vmem:[%s2589 + $0xc4] sm:$0xff]
  %v2619 = vld [vmem:[%s2589 + $0xcc] sm:$0xff]
  %v2620 = vld [vmem:[%s2589 + $0xd4] sm:$0xff]
  %v2621 = vld [vmem:[%s2589 + $0xdc] sm:$0xf]
  %v2622 = vld [vmem:[%s2589 + $0xe0] sm:$0xff]
  %v2623 = vld [vmem:[%s2589 + $0xe8] sm:$0xff]
  %v2624 = vld [vmem:[%s2589 + $0xf0] sm:$0xff]
  %v2625 = vld [vmem:[%s2589 + $0xf8] sm:$0xf]
  %v2626 = vld [vmem:[%s2589 + $0xfc] sm:$0xff]
  %v2627 = vld [vmem:[%s2589 + $0x104] sm:$0xff]
  %v2628 = vld [vmem:[%s2589 + $0x10c] sm:$0xff]
  %v2629 = vld [vmem:[%s2589 + $0x114] sm:$0xf]
  %v2630 = vld [vmem:[%s2589 + $0x118] sm:$0xff]
  %v2631 = vld [vmem:[%s2589 + $0x120] sm:$0xff]
  %v2632 = vld [vmem:[%s2589 + $0x128] sm:$0xff]
  %v2633 = vld [vmem:[%s2589 + $0x130] sm:$0xf]
  %v2634 = vld [vmem:[%s2589 + $0x134] sm:$0xff]
  %v2635 = vld [vmem:[%s2589 + $0x13c] sm:$0xff]
  %v2636 = vld [vmem:[%s2589 + $0x144] sm:$0xff]
  %v2637 = vld [vmem:[%s2589 + $0x14c] sm:$0xf]
  %v2638 = vld [vmem:[%s2589 + $0x150] sm:$0xff]
  %v2639 = vld [vmem:[%s2589 + $0x158] sm:$0xff]
  %v2640 = vld [vmem:[%s2589 + $0x160] sm:$0xff]
  %v2641 = vld [vmem:[%s2589 + $0x168] sm:$0xf]
  %v2694 = vunpack.c.l.b16 %v2590
  %v2695 = vunpack.c.h.b16 %v2590
  %v2696 = vunpack.c.l.b16 %v2591
  %v2697 = vunpack.c.h.b16 %v2591
  %v2698 = vunpack.c.l.b16 %v2592
  %v2699 = vunpack.c.h.b16 %v2592
  %v2700 = vunpack.c.l.b16 %v2593
  %v2701 = vunpack.c.l.b16 %v2594
  %v2702 = vunpack.c.h.b16 %v2594
  %v2703 = vunpack.c.l.b16 %v2595
  %v2704 = vunpack.c.h.b16 %v2595
  %v2705 = vunpack.c.l.b16 %v2596
  %v2706 = vunpack.c.h.b16 %v2596
  %v2707 = vunpack.c.l.b16 %v2597
  %v2708 = vunpack.c.l.b16 %v2598
  %v2709 = vunpack.c.h.b16 %v2598
  %v2710 = vunpack.c.l.b16 %v2599
  %v2711 = vunpack.c.h.b16 %v2599
  %v2712 = vunpack.c.l.b16 %v2600
  %v2713 = vunpack.c.h.b16 %v2600
  %v2714 = vunpack.c.l.b16 %v2601
  %v2715 = vunpack.c.l.b16 %v2602
  %v2716 = vunpack.c.h.b16 %v2602
  %v2717 = vunpack.c.l.b16 %v2603
  %v2718 = vunpack.c.h.b16 %v2603
  %v2719 = vunpack.c.l.b16 %v2604
  %v2720 = vunpack.c.h.b16 %v2604
  %v2721 = vunpack.c.l.b16 %v2605
  %v2722 = vunpack.c.l.b16 %v2606
  %v2723 = vunpack.c.h.b16 %v2606
  %v2724 = vunpack.c.l.b16 %v2607
  %v2725 = vunpack.c.h.b16 %v2607
  %v2726 = vunpack.c.l.b16 %v2608
  %v2727 = vunpack.c.h.b16 %v2608
  %v2728 = vunpack.c.l.b16 %v2609
  %v2729 = vunpack.c.l.b16 %v2610
  %v2730 = vunpack.c.h.b16 %v2610
  %v2731 = vunpack.c.l.b16 %v2611
  %v2732 = vunpack.c.h.b16 %v2611
  %v2733 = vunpack.c.l.b16 %v2612
  %v2734 = vunpack.c.h.b16 %v2612
  %v2735 = vunpack.c.l.b16 %v2613
  %v2736 = vunpack.c.l.b16 %v2614
  %v2737 = vunpack.c.h.b16 %v2614
  %v2738 = vunpack.c.l.b16 %v2615
  %v2739 = vunpack.c.h.b16 %v2615
  %v2740 = vunpack.c.l.b16 %v2616
  %v2741 = vunpack.c.h.b16 %v2616
  %v2742 = vunpack.c.l.b16 %v2617
  %v2743 = vunpack.c.l.b16 %v2618
  %v2744 = vunpack.c.h.b16 %v2618
  %v2745 = vunpack.c.l.b16 %v2619
  %v2746 = vunpack.c.h.b16 %v2619
  %v2747 = vunpack.c.l.b16 %v2620
  %v2748 = vunpack.c.h.b16 %v2620
  %v2749 = vunpack.c.l.b16 %v2621
  %v2750 = vunpack.c.l.b16 %v2622
  %v2751 = vunpack.c.h.b16 %v2622
  %v2752 = vunpack.c.l.b16 %v2623
  %v2753 = vunpack.c.h.b16 %v2623
  %v2754 = vunpack.c.l.b16 %v2624
  %v2755 = vunpack.c.h.b16 %v2624
  %v2756 = vunpack.c.l.b16 %v2625
  %v2757 = vunpack.c.l.b16 %v2626
  %v2758 = vunpack.c.h.b16 %v2626
  %v2759 = vunpack.c.l.b16 %v2627
  %v2760 = vunpack.c.h.b16 %v2627
  %v2761 = vunpack.c.l.b16 %v2628
  %v2762 = vunpack.c.h.b16 %v2628
  %v2763 = vunpack.c.l.b16 %v2629
  %v2764 = vunpack.c.l.b16 %v2630
  %v2765 = vunpack.c.h.b16 %v2630
  %v2766 = vunpack.c.l.b16 %v2631
  %v2767 = vunpack.c.h.b16 %v2631
  %v2768 = vunpack.c.l.b16 %v2632
  %v2769 = vunpack.c.h.b16 %v2632
  %v2770 = vunpack.c.l.b16 %v2633
  %v2771 = vunpack.c.l.b16 %v2634
  %v2772 = vunpack.c.h.b16 %v2634
  %v2773 = vunpack.c.l.b16 %v2635
  %v2774 = vunpack.c.h.b16 %v2635
  %v2775 = vunpack.c.l.b16 %v2636
  %v2776 = vunpack.c.h.b16 %v2636
  %v2777 = vunpack.c.l.b16 %v2637
  %v2778 = vunpack.c.l.b16 %v2638
  %v2779 = vunpack.c.h.b16 %v2638
  %v2780 = vunpack.c.l.b16 %v2639
  %v2781 = vunpack.c.h.b16 %v2639
  %v2782 = vunpack.c.l.b16 %v2640
  %v2783 = vunpack.c.h.b16 %v2640
  %v2784 = vunpack.c.l.b16 %v2641
  %v2785 = vpack.c.b16 %v2701, %v2694
  %v2786 = vpack.c.b16 %v2702, %v2695
  %v2787 = vpack.c.b16 %v2703, %v2696
  %v2788 = vpack.c.b16 %v2704, %v2697
  %v2789 = vpack.c.b16 %v2705, %v2698
  %v2790 = vpack.c.b16 %v2706, %v2699
  %v2791 = vpack.c.b16 %v2707, %v2700
  %v2792 = vpack.c.b16 %v2715, %v2708
  %v2793 = vpack.c.b16 %v2716, %v2709
  %v2794 = vpack.c.b16 %v2717, %v2710
  %v2795 = vpack.c.b16 %v2718, %v2711
  %v2796 = vpack.c.b16 %v2719, %v2712
  %v2797 = vpack.c.b16 %v2720, %v2713
  %v2798 = vpack.c.b16 %v2721, %v2714
  %v2799 = vpack.c.b16 %v2729, %v2722
  %v2800 = vpack.c.b16 %v2730, %v2723
  %v2801 = vpack.c.b16 %v2731, %v2724
  %v2802 = vpack.c.b16 %v2732, %v2725
  %v2803 = vpack.c.b16 %v2733, %v2726
  %v2804 = vpack.c.b16 %v2734, %v2727
  %v2805 = vpack.c.b16 %v2735, %v2728
  %v2806 = vpack.c.b16 %v2743, %v2736
  %v2807 = vpack.c.b16 %v2744, %v2737
  %v2808 = vpack.c.b16 %v2745, %v2738
  %v2809 = vpack.c.b16 %v2746, %v2739
  %v2810 = vpack.c.b16 %v2747, %v2740
  %v2811 = vpack.c.b16 %v2748, %v2741
  %v2812 = vpack.c.b16 %v2749, %v2742
  %v2813 = vpack.c.b16 %v2757, %v2750
  %v2814 = vpack.c.b16 %v2758, %v2751
  %v2815 = vpack.c.b16 %v2759, %v2752
  %v2816 = vpack.c.b16 %v2760, %v2753
  %v2817 = vpack.c.b16 %v2761, %v2754
  %v2818 = vpack.c.b16 %v2762, %v2755
  %v2819 = vpack.c.b16 %v2763, %v2756
  %v2820 = vpack.c.b16 %v2771, %v2764
  %v2821 = vpack.c.b16 %v2772, %v2765
  %v2822 = vpack.c.b16 %v2773, %v2766
  %v2823 = vpack.c.b16 %v2774, %v2767
  %v2824 = vpack.c.b16 %v2775, %v2768
  %v2825 = vpack.c.b16 %v2776, %v2769
  %v2826 = vpack.c.b16 %v2777, %v2770
  %v2827 = vpack.c.b16 %v2778, %v2778
  %v2828 = vpack.c.b16 %v2779, %v2779
  %v2829 = vpack.c.b16 %v2780, %v2780
  %v2830 = vpack.c.b16 %v2781, %v2781
  %v2831 = vpack.c.b16 %v2782, %v2782
  %v2832 = vpack.c.b16 %v2783, %v2783
  %v2833 = vpack.c.b16 %v2784, %v2784
  %2883 = vmatprep.subr.bf16.mxu0 0
  %2884 = vmatpush1.bf16.msra.mxu0 %v720
  %2885 = vmatprep.subr.bf16.mxu0 0
  %2886 = vmatpush1.bf16.msra.mxu0 %v719
  %2887 = vmatprep.subr.bf16.mxu0 0
  %2888 = vmatpush1.bf16.msra.mxu0 %v718
  %2889 = vmatprep.subr.bf16.mxu0 0
  %2890 = vmatpush1.bf16.msra.mxu0 %v717
  %2891 = vmatprep.subr.bf16.mxu0 0
  %2892 = vmatpush1.bf16.msra.mxu0 %v716
  %2893 = vmatprep.subr.bf16.mxu0 0
  %2894 = vmatpush1.bf16.msra.mxu0 %v715
  %2895 = vmatprep.subr.bf16.mxu0 0
  %2896 = vmatpush1.bf16.msra.mxu0 %v714
  %2897 = vmatprep.subr.bf16.mxu0 0
  %2898 = vmatpush1.bf16.msra.mxu0 %v713
  %2899 = vmatprep.subr.bf16.mxu0 0
  %2900 = vmatpush2.bf16.msra.mxu0 %v728
  %2901 = vmatprep.subr.bf16.mxu0 0
  %2902 = vmatpush2.bf16.msra.mxu0 %v727
  %2903 = vmatprep.subr.bf16.mxu0 0
  %2904 = vmatpush2.bf16.msra.mxu0 %v726
  %2905 = vmatprep.subr.bf16.mxu0 0
  %2906 = vmatpush2.bf16.msra.mxu0 %v725
  %2907 = vmatprep.subr.bf16.mxu0 0
  %2908 = vmatpush2.bf16.msra.mxu0 %v724
  %2909 = vmatprep.subr.bf16.mxu0 0
  %2910 = vmatpush2.bf16.msra.mxu0 %v723
  %2911 = vmatprep.subr.bf16.mxu0 0
  %2912 = vmatpush2.bf16.msra.mxu0 %v722
  %2913 = vmatprep.subr.bf16.mxu0 0
  %2914 = vmatpush2.bf16.msra.mxu0 %v721
  %2915 = vmatprep.mubr.bf16.mxu0 %v2786
  %2916 = vmatmul.mubr.bf16.gmra.mxu0 %v2785
  %v2917 = vpop.f32.mrf.mxu0
  %v2918 = vadd.f32 0.0, %v2917
  %v2919 = vpop.f32.mrf.mxu0
  %v2920 = vpop.f32.mrf.mxu0
  %v2921 = vadd.f32 0.0, %v2920
  %v2922 = vpop.f32.mrf.mxu0
  %2923 = vmatprep.mubr.bf16.mxu0 %v2793
  %2924 = vmatmul.mubr.bf16.gmra.mxu0 %v2792
  %v2925 = vpop.f32.mrf.mxu0
  %v2926 = vadd.f32 0.0, %v2925
  %v2927 = vpop.f32.mrf.mxu0
  %v2928 = vpop.f32.mrf.mxu0
  %v2929 = vadd.f32 0.0, %v2928
  %v2930 = vpop.f32.mrf.mxu0
  %2931 = vmatprep.mubr.bf16.mxu0 %v2800
  %2932 = vmatmul.mubr.bf16.gmra.mxu0 %v2799
  %v2933 = vpop.f32.mrf.mxu0
  %v2934 = vadd.f32 0.0, %v2933
  %v2935 = vpop.f32.mrf.mxu0
  %v2936 = vpop.f32.mrf.mxu0
  %v2937 = vadd.f32 0.0, %v2936
  %v2938 = vpop.f32.mrf.mxu0
  %2939 = vmatprep.mubr.bf16.mxu0 %v2807
  %2940 = vmatmul.mubr.bf16.gmra.mxu0 %v2806
  %v2941 = vpop.f32.mrf.mxu0
  %v2942 = vadd.f32 0.0, %v2941
  %v2943 = vpop.f32.mrf.mxu0
  %v2944 = vpop.f32.mrf.mxu0
  %v2945 = vadd.f32 0.0, %v2944
  %v2946 = vpop.f32.mrf.mxu0
  %2947 = vmatprep.mubr.bf16.mxu0 %v2814
  %2948 = vmatmul.mubr.bf16.gmra.mxu0 %v2813
  %v2949 = vpop.f32.mrf.mxu0
  %v2950 = vadd.f32 0.0, %v2949
  %v2951 = vpop.f32.mrf.mxu0
  %v2952 = vpop.f32.mrf.mxu0
  %v2953 = vadd.f32 0.0, %v2952
  %v2954 = vpop.f32.mrf.mxu0
  %2955 = vmatprep.mubr.bf16.mxu0 %v2821
  %2956 = vmatmul.mubr.bf16.gmra.mxu0 %v2820
  %v2957 = vpop.f32.mrf.mxu0
  %v2958 = vadd.f32 0.0, %v2957
  %v2959 = vpop.f32.mrf.mxu0
  %v2960 = vpop.f32.mrf.mxu0
  %v2961 = vadd.f32 0.0, %v2960
  %v2962 = vpop.f32.mrf.mxu0
  %2963 = vmatprep.mubr.bf16.mxu0 %v2828
  %2964 = vmatmul.mubr.bf16.gmra.mxu0 %v2827
  %v2965 = vpop.f32.mrf.mxu0
  %v2966 = vadd.f32 0.0, %v2965
  %v2967 = vpop.f32.mrf.mxu0
  %v2968 = vpop.f32.mrf.mxu0
  %v2969 = vpop.f32.mrf.mxu0
  %2970 = vdwg.mxu0
  %2971 = vmatprep.subr.bf16.mxu0 0
  %2972 = vmatpush1.bf16.msra.mxu0 %v736
  %2973 = vmatprep.subr.bf16.mxu0 0
  %2974 = vmatpush1.bf16.msra.mxu0 %v735
  %2975 = vmatprep.subr.bf16.mxu0 0
  %2976 = vmatpush1.bf16.msra.mxu0 %v734
  %2977 = vmatprep.subr.bf16.mxu0 0
  %2978 = vmatpush1.bf16.msra.mxu0 %v733
  %2979 = vmatprep.subr.bf16.mxu0 0
  %2980 = vmatpush1.bf16.msra.mxu0 %v732
  %2981 = vmatprep.subr.bf16.mxu0 0
  %2982 = vmatpush1.bf16.msra.mxu0 %v731
  %2983 = vmatprep.subr.bf16.mxu0 0
  %2984 = vmatpush1.bf16.msra.mxu0 %v730
  %2985 = vmatprep.subr.bf16.mxu0 0
  %2986 = vmatpush1.bf16.msra.mxu0 %v729
  %2987 = vmatprep.subr.bf16.mxu0 0
  %2988 = vmatpush2.bf16.msra.mxu0 %v744
  %2989 = vmatprep.subr.bf16.mxu0 0
  %2990 = vmatpush2.bf16.msra.mxu0 %v743
  %2991 = vmatprep.subr.bf16.mxu0 0
  %2992 = vmatpush2.bf16.msra.mxu0 %v742
  %2993 = vmatprep.subr.bf16.mxu0 0
  %2994 = vmatpush2.bf16.msra.mxu0 %v741
  %2995 = vmatprep.subr.bf16.mxu0 0
  %2996 = vmatpush2.bf16.msra.mxu0 %v740
  %2997 = vmatprep.subr.bf16.mxu0 0
  %2998 = vmatpush2.bf16.msra.mxu0 %v739
  %2999 = vmatprep.subr.bf16.mxu0 0
  %3000 = vmatpush2.bf16.msra.mxu0 %v738
  %3001 = vmatprep.subr.bf16.mxu0 0
  %3002 = vmatpush2.bf16.msra.mxu0 %v737
  %3003 = vmatprep.mubr.bf16.mxu0 %v2788
  %3004 = vmatmul.mubr.bf16.gmra.mxu0 %v2787
  %v3005 = vpop.f32.mrf.mxu0
  %v3006 = vadd.f32 %v2918, %v3005
  %v3007 = vpop.f32.mrf.mxu0
  %v3008 = vpop.f32.mrf.mxu0
  %v3009 = vadd.f32 %v2921, %v3008
  %v3010 = vpop.f32.mrf.mxu0
  %3011 = vmatprep.mubr.bf16.mxu0 %v2795
  %3012 = vmatmul.mubr.bf16.gmra.mxu0 %v2794
  %v3013 = vpop.f32.mrf.mxu0
  %v3014 = vadd.f32 %v2926, %v3013
  %v3015 = vpop.f32.mrf.mxu0
  %v3016 = vpop.f32.mrf.mxu0
  %v3017 = vadd.f32 %v2929, %v3016
  %v3018 = vpop.f32.mrf.mxu0
  %3019 = vmatprep.mubr.bf16.mxu0 %v2802
  %3020 = vmatmul.mubr.bf16.gmra.mxu0 %v2801
  %v3021 = vpop.f32.mrf.mxu0
  %v3022 = vadd.f32 %v2934, %v3021
  %v3023 = vpop.f32.mrf.mxu0
  %v3024 = vpop.f32.mrf.mxu0
  %v3025 = vadd.f32 %v2937, %v3024
  %v3026 = vpop.f32.mrf.mxu0
  %3027 = vmatprep.mubr.bf16.mxu0 %v2809
  %3028 = vmatmul.mubr.bf16.gmra.mxu0 %v2808
  %v3029 = vpop.f32.mrf.mxu0
  %v3030 = vadd.f32 %v2942, %v3029
  %v3031 = vpop.f32.mrf.mxu0
  %v3032 = vpop.f32.mrf.mxu0
  %v3033 = vadd.f32 %v2945, %v3032
  %v3034 = vpop.f32.mrf.mxu0
  %3035 = vmatprep.mubr.bf16.mxu0 %v2816
  %3036 = vmatmul.mubr.bf16.gmra.mxu0 %v2815
  %v3037 = vpop.f32.mrf.mxu0
  %v3038 = vadd.f32 %v2950, %v3037
  %v3039 = vpop.f32.mrf.mxu0
  %v3040 = vpop.f32.mrf.mxu0
  %v3041 = vadd.f32 %v2953, %v3040
  %v3042 = vpop.f32.mrf.mxu0
  %3043 = vmatprep.mubr.bf16.mxu0 %v2823
  %3044 = vmatmul.mubr.bf16.gmra.mxu0 %v2822
  %v3045 = vpop.f32.mrf.mxu0
  %v3046 = vadd.f32 %v2958, %v3045
  %v3047 = vpop.f32.mrf.mxu0
  %v3048 = vpop.f32.mrf.mxu0
  %v3049 = vadd.f32 %v2961, %v3048
  %v3050 = vpop.f32.mrf.mxu0
  %3051 = vmatprep.mubr.bf16.mxu0 %v2830
  %3052 = vmatmul.mubr.bf16.gmra.mxu0 %v2829
  %v3053 = vpop.f32.mrf.mxu0
  %v3054 = vadd.f32 %v2966, %v3053
  %v3055 = vpop.f32.mrf.mxu0
  %v3056 = vpop.f32.mrf.mxu0
  %v3057 = vpop.f32.mrf.mxu0
  %3058 = vdwg.mxu0
  %3059 = vmatprep.subr.bf16.mxu0 0
  %3060 = vmatpush1.bf16.msra.mxu0 %v752
  %3061 = vmatprep.subr.bf16.mxu0 0
  %3062 = vmatpush1.bf16.msra.mxu0 %v751
  %3063 = vmatprep.subr.bf16.mxu0 0
  %3064 = vmatpush1.bf16.msra.mxu0 %v750
  %3065 = vmatprep.subr.bf16.mxu0 0
  %3066 = vmatpush1.bf16.msra.mxu0 %v749
  %3067 = vmatprep.subr.bf16.mxu0 0
  %3068 = vmatpush1.bf16.msra.mxu0 %v748
  %3069 = vmatprep.subr.bf16.mxu0 0
  %3070 = vmatpush1.bf16.msra.mxu0 %v747
  %3071 = vmatprep.subr.bf16.mxu0 0
  %3072 = vmatpush1.bf16.msra.mxu0 %v746
  %3073 = vmatprep.subr.bf16.mxu0 0
  %3074 = vmatpush1.bf16.msra.mxu0 %v745
  %3075 = vmatprep.subr.bf16.mxu0 0
  %3076 = vmatpush2.bf16.msra.mxu0 %v760
  %3077 = vmatprep.subr.bf16.mxu0 0
  %3078 = vmatpush2.bf16.msra.mxu0 %v759
  %3079 = vmatprep.subr.bf16.mxu0 0
  %3080 = vmatpush2.bf16.msra.mxu0 %v758
  %3081 = vmatprep.subr.bf16.mxu0 0
  %3082 = vmatpush2.bf16.msra.mxu0 %v757
  %3083 = vmatprep.subr.bf16.mxu0 0
  %3084 = vmatpush2.bf16.msra.mxu0 %v756
  %3085 = vmatprep.subr.bf16.mxu0 0
  %3086 = vmatpush2.bf16.msra.mxu0 %v755
  %3087 = vmatprep.subr.bf16.mxu0 0
  %3088 = vmatpush2.bf16.msra.mxu0 %v754
  %3089 = vmatprep.subr.bf16.mxu0 0
  %3090 = vmatpush2.bf16.msra.mxu0 %v753
  %3091 = vmatprep.mubr.bf16.mxu0 %v2790
  %3092 = vmatmul.mubr.bf16.gmra.mxu0 %v2789
  %v3093 = vpop.f32.mrf.mxu0
  %v3094 = vadd.f32 %v3006, %v3093
  %v3095 = vpop.f32.mrf.mxu0
  %v3096 = vpop.f32.mrf.mxu0
  %v3097 = vadd.f32 %v3009, %v3096
  %v3098 = vpop.f32.mrf.mxu0
  %3099 = vmatprep.mubr.bf16.mxu0 %v2797
  %3100 = vmatmul.mubr.bf16.gmra.mxu0 %v2796
  %v3101 = vpop.f32.mrf.mxu0
  %v3102 = vadd.f32 %v3014, %v3101
  %v3103 = vpop.f32.mrf.mxu0
  %v3104 = vpop.f32.mrf.mxu0
  %v3105 = vadd.f32 %v3017, %v3104
  %v3106 = vpop.f32.mrf.mxu0
  %3107 = vmatprep.mubr.bf16.mxu0 %v2804
  %3108 = vmatmul.mubr.bf16.gmra.mxu0 %v2803
  %v3109 = vpop.f32.mrf.mxu0
  %v3110 = vadd.f32 %v3022, %v3109
  %v3111 = vpop.f32.mrf.mxu0
  %v3112 = vpop.f32.mrf.mxu0
  %v3113 = vadd.f32 %v3025, %v3112
  %v3114 = vpop.f32.mrf.mxu0
  %3115 = vmatprep.mubr.bf16.mxu0 %v2811
  %3116 = vmatmul.mubr.bf16.gmra.mxu0 %v2810
  %v3117 = vpop.f32.mrf.mxu0
  %v3118 = vadd.f32 %v3030, %v3117
  %v3119 = vpop.f32.mrf.mxu0
  %v3120 = vpop.f32.mrf.mxu0
  %v3121 = vadd.f32 %v3033, %v3120
  %v3122 = vpop.f32.mrf.mxu0
  %3123 = vmatprep.mubr.bf16.mxu0 %v2818
  %3124 = vmatmul.mubr.bf16.gmra.mxu0 %v2817
  %v3125 = vpop.f32.mrf.mxu0
  %v3126 = vadd.f32 %v3038, %v3125
  %v3127 = vpop.f32.mrf.mxu0
  %v3128 = vpop.f32.mrf.mxu0
  %v3129 = vadd.f32 %v3041, %v3128
  %v3130 = vpop.f32.mrf.mxu0
  %3131 = vmatprep.mubr.bf16.mxu0 %v2825
  %3132 = vmatmul.mubr.bf16.gmra.mxu0 %v2824
  %v3133 = vpop.f32.mrf.mxu0
  %v3134 = vadd.f32 %v3046, %v3133
  %v3135 = vpop.f32.mrf.mxu0
  %v3136 = vpop.f32.mrf.mxu0
  %v3137 = vadd.f32 %v3049, %v3136
  %v3138 = vpop.f32.mrf.mxu0
  %3139 = vmatprep.mubr.bf16.mxu0 %v2832
  %3140 = vmatmul.mubr.bf16.gmra.mxu0 %v2831
  %v3141 = vpop.f32.mrf.mxu0
  %v3142 = vadd.f32 %v3054, %v3141
  %v3143 = vpop.f32.mrf.mxu0
  %v3144 = vpop.f32.mrf.mxu0
  %v3145 = vpop.f32.mrf.mxu0
  %3146 = vdwg.mxu0
  %3147 = vmatprep.subr.bf16.mxu0 0
  %3148 = vmatpush1.bf16.msra.mxu0 %v768
  %3149 = vmatprep.subr.bf16.mxu0 0
  %3150 = vmatpush1.bf16.msra.mxu0 %v767
  %3151 = vmatprep.subr.bf16.mxu0 0
  %3152 = vmatpush1.bf16.msra.mxu0 %v766
  %3153 = vmatprep.subr.bf16.mxu0 0
  %3154 = vmatpush1.bf16.msra.mxu0 %v765
  %3155 = vmatprep.subr.bf16.mxu0 0
  %3156 = vmatpush1.bf16.msra.mxu0 %v764
  %3157 = vmatprep.subr.bf16.mxu0 0
  %3158 = vmatpush1.bf16.msra.mxu0 %v763
  %3159 = vmatprep.subr.bf16.mxu0 0
  %3160 = vmatpush1.bf16.msra.mxu0 %v762
  %3161 = vmatprep.subr.bf16.mxu0 0
  %3162 = vmatpush1.bf16.msra.mxu0 %v761
  %3163 = vmatprep.subr.bf16.mxu0 0
  %3164 = vmatpush2.bf16.msra.mxu0 0
  %3165 = vmatprep.subr.bf16.mxu0 0
  %3166 = vmatpush2.bf16.msra.mxu0 0
  %3167 = vmatprep.subr.bf16.mxu0 0
  %3168 = vmatpush2.bf16.msra.mxu0 0
  %3169 = vmatprep.subr.bf16.mxu0 0
  %3170 = vmatpush2.bf16.msra.mxu0 0
  %3171 = vmatprep.subr.bf16.mxu0 0
  %3172 = vmatpush2.bf16.msra.mxu0 0
  %3173 = vmatprep.subr.bf16.mxu0 0
  %3174 = vmatpush2.bf16.msra.mxu0 0
  %3175 = vmatprep.subr.bf16.mxu0 0
  %3176 = vmatpush2.bf16.msra.mxu0 0
  %3177 = vmatprep.subr.bf16.mxu0 0
  %3178 = vmatpush2.bf16.msra.mxu0 0
  %3179 = vmatprep.mubr.bf16.mxu0 0
  %3180 = vmatmul.mubr.bf16.gmra.mxu0 %v2791
  %v3181 = vpop.f32.mrf.mxu0
  %v3182 = vadd.f32 %v3094, %v3181
  %v3183 = vpop.f32.mrf.mxu0
  %v3184 = vpop.f32.mrf.mxu0
  %v3185 = vadd.f32 %v3097, %v3184
  %v3186 = vpop.f32.mrf.mxu0
  %3187 = vmatprep.mubr.bf16.mxu0 0
  %3188 = vmatmul.mubr.bf16.gmra.mxu0 %v2798
  %v3189 = vpop.f32.mrf.mxu0
  %v3190 = vadd.f32 %v3102, %v3189
  %v3191 = vpop.f32.mrf.mxu0
  %v3192 = vpop.f32.mrf.mxu0
  %v3193 = vadd.f32 %v3105, %v3192
  %v3194 = vpop.f32.mrf.mxu0
  %3195 = vmatprep.mubr.bf16.mxu0 0
  %3196 = vmatmul.mubr.bf16.gmra.mxu0 %v2805
  %v3197 = vpop.f32.mrf.mxu0
  %v3198 = vadd.f32 %v3110, %v3197
  %v3199 = vpop.f32.mrf.mxu0
  %v3200 = vpop.f32.mrf.mxu0
  %v3201 = vadd.f32 %v3113, %v3200
  %v3202 = vpop.f32.mrf.mxu0
  %3203 = vmatprep.mubr.bf16.mxu0 0
  %3204 = vmatmul.mubr.bf16.gmra.mxu0 %v2812
  %v3205 = vpop.f32.mrf.mxu0
  %v3206 = vadd.f32 %v3118, %v3205
  %v3207 = vpop.f32.mrf.mxu0
  %v3208 = vpop.f32.mrf.mxu0
  %v3209 = vadd.f32 %v3121, %v3208
  %v3210 = vpop.f32.mrf.mxu0
  %3211 = vmatprep.mubr.bf16.mxu0 0
  %3212 = vmatmul.mubr.bf16.gmra.mxu0 %v2819
  %v3213 = vpop.f32.mrf.mxu0
  %v3214 = vadd.f32 %v3126, %v3213
  %v3215 = vpop.f32.mrf.mxu0
  %v3216 = vpop.f32.mrf.mxu0
  %v3217 = vadd.f32 %v3129, %v3216
  %v3218 = vpop.f32.mrf.mxu0
  %3219 = vmatprep.mubr.bf16.mxu0 0
  %3220 = vmatmul.mubr.bf16.gmra.mxu0 %v2826
  %v3221 = vpop.f32.mrf.mxu0
  %v3222 = vadd.f32 %v3134, %v3221
  %v3223 = vpop.f32.mrf.mxu0
  %v3224 = vpop.f32.mrf.mxu0
  %v3225 = vadd.f32 %v3137, %v3224
  %v3226 = vpop.f32.mrf.mxu0
  %3227 = vmatprep.mubr.bf16.mxu0 0
  %3228 = vmatmul.mubr.bf16.gmra.mxu0 %v2833
  %v3229 = vpop.f32.mrf.mxu0
  %v3230 = vadd.f32 %v3142, %v3229
  %v3231 = vpop.f32.mrf.mxu0
  %v3232 = vpop.f32.mrf.mxu0
  %v3233 = vpop.f32.mrf.mxu0
  %3234 = vdwg.mxu0
  %v3235 = vadd.f32 %v2576, %v3182
  %v3236 = vadd.f32 %v2577, %v3185
  %v3237 = vadd.f32 %v2578, %v3190
  %v3238 = vadd.f32 %v2579, %v3193
  %v3239 = vadd.f32 %v2580, %v3198
  %v3240 = vadd.f32 %v2581, %v3201
  %v3241 = vadd.f32 %v2582, %v3206
  %v3242 = vadd.f32 %v2583, %v3209
  %v3243 = vadd.f32 %v2584, %v3214
  %v3244 = vadd.f32 %v2585, %v3217
  %v3245 = vadd.f32 %v2586, %v3222
  %v3246 = vadd.f32 %v2587, %v3225
  %v3247 = vadd.f32 %v2588, %v3230
  %3248 = vst [vmem:[%s2575] sm:$0xff] %v3235
  %3249 = vst [vmem:[%s2575 + $0x8] sm:$0xff] %v3236
  %3250 = vst [vmem:[%s2575 + $0x10] sm:$0xff] %v3237
  %3251 = vst [vmem:[%s2575 + $0x18] sm:$0xff] %v3238
  %3252 = vst [vmem:[%s2575 + $0x20] sm:$0xff] %v3239
  %3253 = vst [vmem:[%s2575 + $0x28] sm:$0xff] %v3240
  %3254 = vst [vmem:[%s2575 + $0x30] sm:$0xff] %v3241
  %3255 = vst [vmem:[%s2575 + $0x38] sm:$0xff] %v3242
  %3256 = vst [vmem:[%s2575 + $0x40] sm:$0xff] %v3243
  %3257 = vst [vmem:[%s2575 + $0x48] sm:$0xff] %v3244
  %3258 = vst [vmem:[%s2575 + $0x50] sm:$0xff] %v3245
  %3259 = vst [vmem:[%s2575 + $0x58] sm:$0xff] %v3246
  %3260 = vst [vmem:[%s2575 + $0x60] sm:$0xff] %v3247
  // Predicated region
  $region18: #{convnet_forward.5} parent=0 // pred_check
    %p3261 = pneg %p15
  $region19: #{convnet_forward.5} parent=0 // pred_check_branch
    %3263 = sbr.rel (%p3261) target = $region21
  $region20: #{convnet_forward.5} parent=0 // pred_region
    %v3264 = vld [vmem:[#allocation2] sm:$0xff]
    %v3265 = vld [vmem:[#allocation2 + $0x8] sm:$0xff]
    %v3266 = vld [vmem:[#allocation2 + $0x10] sm:$0xff]
    %v3267 = vld [vmem:[#allocation2 + $0x18] sm:$0xff]
    %v3268 = vld [vmem:[#allocation2 + $0x20] sm:$0xff]
    %v3269 = vld [vmem:[#allocation2 + $0x28] sm:$0xff]
    %v3270 = vld [vmem:[#allocation2 + $0x30] sm:$0xff]
    %v3271 = vld [vmem:[#allocation2 + $0x38] sm:$0xff]
    %v3272 = vld [vmem:[#allocation2 + $0x40] sm:$0xff]
    %v3273 = vld [vmem:[#allocation2 + $0x48] sm:$0xff]
    %v3274 = vld [vmem:[#allocation2 + $0x50] sm:$0xff]
    %v3275 = vld [vmem:[#allocation2 + $0x58] sm:$0xff]
    %v3276 = vld [vmem:[#allocation2 + $0x60] sm:$0xff]
    %v3277 = vld [vmem:[%s1203] sm:$0xff]
    %v3278 = vld [vmem:[%s1203 + $0x8] sm:$0xff]
    %v3279 = vld [vmem:[%s1203 + $0x10] sm:$0xff]
    %v3280 = vld [vmem:[%s1203 + $0x18] sm:$0xff]
    %v3281 = vld [vmem:[%s1203 + $0x20] sm:$0xff]
    %v3282 = vld [vmem:[%s1203 + $0x28] sm:$0xff]
    %v3283 = vld [vmem:[%s1203 + $0x30] sm:$0xff]
    %v3284 = vld [vmem:[%s1203 + $0x38] sm:$0xff]
    %v3285 = vld [vmem:[%s1203 + $0x40] sm:$0xff]
    %v3286 = vld [vmem:[%s1203 + $0x48] sm:$0xff]
    %v3287 = vld [vmem:[%s1203 + $0x50] sm:$0xff]
    %v3288 = vld [vmem:[%s1203 + $0x58] sm:$0xff]
    %v3289 = vld [vmem:[%s1203 + $0x60] sm:$0xff]
    %v3290 = vmax.f32 %v3264, %v3277
    %v3291 = vmax.f32 %v3265, %v3278
    %v3292 = vmax.f32 %v3266, %v3279
    %v3293 = vmax.f32 %v3267, %v3280
    %v3294 = vmax.f32 %v3268, %v3281
    %v3295 = vmax.f32 %v3269, %v3282
    %v3296 = vmax.f32 %v3270, %v3283
    %v3297 = vmax.f32 %v3271, %v3284
    %v3298 = vmax.f32 %v3272, %v3285
    %v3299 = vmax.f32 %v3273, %v3286
    %v3300 = vmax.f32 %v3274, %v3287
    %v3301 = vmax.f32 %v3275, %v3288
    %v3302 = vmax.f32 %v3276, %v3289
    %v3303 = vld [vmem:[%s1889] sm:$0xff]
    %v3304 = vld [vmem:[%s1889 + $0x8] sm:$0xff]
    %v3305 = vld [vmem:[%s1889 + $0x10] sm:$0xff]
    %v3306 = vld [vmem:[%s1889 + $0x18] sm:$0xff]
    %v3307 = vld [vmem:[%s1889 + $0x20] sm:$0xff]
    %v3308 = vld [vmem:[%s1889 + $0x28] sm:$0xff]
    %v3309 = vld [vmem:[%s1889 + $0x30] sm:$0xff]
    %v3310 = vld [vmem:[%s1889 + $0x38] sm:$0xff]
    %v3311 = vld [vmem:[%s1889 + $0x40] sm:$0xff]
    %v3312 = vld [vmem:[%s1889 + $0x48] sm:$0xff]
    %v3313 = vld [vmem:[%s1889 + $0x50] sm:$0xff]
    %v3314 = vld [vmem:[%s1889 + $0x58] sm:$0xff]
    %v3315 = vld [vmem:[%s1889 + $0x60] sm:$0xff]
    %v3316 = vmax.f32 %v3290, %v3303
    %v3317 = vmax.f32 %v3291, %v3304
    %v3318 = vmax.f32 %v3292, %v3305
    %v3319 = vmax.f32 %v3293, %v3306
    %v3320 = vmax.f32 %v3294, %v3307
    %v3321 = vmax.f32 %v3295, %v3308
    %v3322 = vmax.f32 %v3296, %v3309
    %v3323 = vmax.f32 %v3297, %v3310
    %v3324 = vmax.f32 %v3298, %v3311
    %v3325 = vmax.f32 %v3299, %v3312
    %v3326 = vmax.f32 %v3300, %v3313
    %v3327 = vmax.f32 %v3301, %v3314
    %v3328 = vmax.f32 %v3302, %v3315
    %v3329 = vld [vmem:[%s2575] sm:$0xff]
    %v3330 = vld [vmem:[%s2575 + $0x8] sm:$0xff]
    %v3331 = vld [vmem:[%s2575 + $0x10] sm:$0xff]
    %v3332 = vld [vmem:[%s2575 + $0x18] sm:$0xff]
    %v3333 = vld [vmem:[%s2575 + $0x20] sm:$0xff]
    %v3334 = vld [vmem:[%s2575 + $0x28] sm:$0xff]
    %v3335 = vld [vmem:[%s2575 + $0x30] sm:$0xff]
    %v3336 = vld [vmem:[%s2575 + $0x38] sm:$0xff]
    %v3337 = vld [vmem:[%s2575 + $0x40] sm:$0xff]
    %v3338 = vld [vmem:[%s2575 + $0x48] sm:$0xff]
    %v3339 = vld [vmem:[%s2575 + $0x50] sm:$0xff]
    %v3340 = vld [vmem:[%s2575 + $0x58] sm:$0xff]
    %v3341 = vld [vmem:[%s2575 + $0x60] sm:$0xff]
    %v3342 = vmax.f32 %v3316, %v3329
    %v3343 = vmax.f32 %v3317, %v3330
    %v3344 = vmax.f32 %v3318, %v3331
    %v3345 = vmax.f32 %v3319, %v3332
    %v3346 = vmax.f32 %v3320, %v3333
    %v3347 = vmax.f32 %v3321, %v3334
    %v3348 = vmax.f32 %v3322, %v3335
    %v3349 = vmax.f32 %v3323, %v3336
    %v3350 = vmax.f32 %v3324, %v3337
    %v3351 = vmax.f32 %v3325, %v3338
    %v3352 = vmax.f32 %v3326, %v3339
    %v3353 = vmax.f32 %v3327, %v3340
    %v3354 = vmax.f32 %v3328, %v3341
    %v3355 = vld [vmem:[%s2] sm:$0x1]
    %v3357 = vlaneseq
    %v3358 = vshrl.u32 %v3357, 7
    %v3359 = vsub.s32 0, %v3358
    %v3360 = vrot.slane %v3355, %v3359
    %v3362 = vadd.f32 %v3342, %v3360
    %v3363 = vadd.f32 %v3343, %v3360
    %v3364 = vadd.f32 %v3344, %v3360
    %v3365 = vadd.f32 %v3345, %v3360
    %v3366 = vadd.f32 %v3346, %v3360
    %v3367 = vadd.f32 %v3347, %v3360
    %v3368 = vadd.f32 %v3348, %v3360
    %v3369 = vadd.f32 %v3349, %v3360
    %v3370 = vadd.f32 %v3350, %v3360
    %v3371 = vadd.f32 %v3351, %v3360
    %v3372 = vadd.f32 %v3352, %v3360
    %v3373 = vadd.f32 %v3353, %v3360
    %v3374 = vadd.f32 %v3354, %v3360
    %v3375 = vmax.f32 %v3362, 0.0
    %v3376 = vmax.f32 %v3363, 0.0
    %v3377 = vmax.f32 %v3364, 0.0
    %v3378 = vmax.f32 %v3365, 0.0
    %v3379 = vmax.f32 %v3366, 0.0
    %v3380 = vmax.f32 %v3367, 0.0
    %v3381 = vmax.f32 %v3368, 0.0
    %v3382 = vmax.f32 %v3369, 0.0
    %v3383 = vmax.f32 %v3370, 0.0
    %v3384 = vmax.f32 %v3371, 0.0
    %v3385 = vmax.f32 %v3372, 0.0
    %v3386 = vmax.f32 %v3373, 0.0
    %v3387 = vmax.f32 %v3374, 0.0
    %3388 = vst [vmem:[%s3] sm:$0xff] %v3375
    %3389 = vst [vmem:[%s3 + $0x8] sm:$0xff] %v3376
    %3390 = vst [vmem:[%s3 + $0x10] sm:$0xff] %v3377
    %3391 = vst [vmem:[%s3 + $0x18] sm:$0xff] %v3378
    %3392 = vst [vmem:[%s3 + $0x20] sm:$0xff] %v3379
    %3393 = vst [vmem:[%s3 + $0x28] sm:$0xff] %v3380
    %3394 = vst [vmem:[%s3 + $0x30] sm:$0xff] %v3381
    %3395 = vst [vmem:[%s3 + $0x38] sm:$0xff] %v3382
    %3396 = vst [vmem:[%s3 + $0x40] sm:$0xff] %v3383
    %3397 = vst [vmem:[%s3 + $0x48] sm:$0xff] %v3384
    %3398 = vst [vmem:[%s3 + $0x50] sm:$0xff] %v3385
    %3399 = vst [vmem:[%s3 + $0x58] sm:$0xff] %v3386
    %3400 = vst [vmem:[%s3 + $0x60] sm:$0xff] %v3387
  $region21: #{convnet_forward.5} parent=0 // pred_fallthru
    _
  // Predicated region
  $region22: #{convnet_forward.5} parent=0 // pred_check
    _
  $region23: #{convnet_forward.5} parent=0 // pred_check_branch
    %3402 = sbr.rel (0) target = $region25
  $region24: #{convnet_forward.5} parent=0 // pred_region
    _
  $region25: #{convnet_forward.5} parent=0 // pred_fallthru
    _
  // Predicated region
  $region26: #{convnet_forward.5} parent=0 // pred_check
    _
  $region27: #{convnet_forward.5} parent=0 // pred_check_branch
    %3404 = sbr.rel (0) target = $region29
  $region28: #{convnet_forward.5} parent=0 // pred_region
    _
  $region29: #{convnet_forward.5} parent=0 // pred_fallthru
    _

// kernel: convnet_forward.6
$region0: #{convnet_forward.6}
  #allocation0 [shape = 'u32[]', space=smem, size = 0x4, offset = 0x4, fixed_abs, tag = 'smem constant byte address 0x4 - core index']
  #allocation1 [shape = 'u32[144,128]{1,0:T(1,128)}', space=vmem, size = 0x12000, scoped, tag = 'internal scratch']
  #allocation2 [shape = 'f32[1,8,256]{2,1,0:T(8,128)}', space=vmem, size = 0x2000, scoped, tag = 'scratch operand']
  %s0 = inlined_call_operand.vmem [shape: bf16[1,8,3584], index: 0, kind: input, shape index: {}]
  %s1 = inlined_call_operand.vmem [shape: bf16[3584,1024], index: 1, kind: input, shape index: {}]
  %s2 = inlined_call_operand.vmem [shape: f32[1,1024], index: 2, kind: input, shape index: {}]
  %s3 = inlined_call_operand.vmem [shape: f32[8,1024], index: 3, kind: output, shape index: {}]
  %s4 = sld [smem:[#allocation0]]
  $region91: #{convnet_forward.6} parent=0
    _
  %s6 = ssub.s32 1, %s4
  %s7 = scalar_select 0, %s6, %s4
  $region1: #{convnet_forward.6} parent=0
    #allocation3 [shape = 'u8[917504]{0}', space=vmem, size = 0xe0000, scoped, tag = 'input window, operand 1']
    loop: start=0, step=1, limit=18
    $region2: #{convnet_forward.6} parent=1 // loop_pre_header
      _
    $region3: #{convnet_forward.6} parent=1 // loop_header
      %s9 = sphi 0, %s13
      %p10 = scmp.ge.s32.totalorder %s9, 18
      %s16 = sphi 0, %s35
      %s17 = sphi 0, %s31
      %s18 = sphi 0, %s27
      %s19 = sphi 0, %s16
      %s20 = sphi 0, %s17
      %s21 = sphi 0, %s18
      %s22 = sphi 0, %s19
      %s23 = sphi 0, %s20
      %s24 = sphi 0, %s21
      %s40 = sphi 0, %s42
      %s43 = sphi 0, %s40
      %s44 = sphi 0, %s43
      %s60 = sphi 0, %s44
      %s68 = sphi 0, %s70
      %s71 = sphi 0, %s68
      %s72 = sphi 0, %s71
      %s88 = sphi 0, %s72
      %s94 = sphi 0, %s96
      %s97 = sphi 0, %s94
      %s98 = sphi 0, %s97
      %s114 = sphi 0, %s98
      %s122 = sphi 0, %s124
      %s125 = sphi 0, %s122
      %s126 = sphi 0, %s125
      %s142 = sphi 0, %s126
    $region4: #{convnet_forward.6} parent=1 // loop_header_branch
      %12 = sbr.rel (%p10) target = $region8
    $region5: #{convnet_forward.6} parent=1 // loop_body
      %s14 = ssub.s32 %s9, 1
      %s15 = ssub.s32 %s9, 2
      %s25 = sadd.s32 1, %s18
      %p26 = scmp.ge.s32.totalorder %s25, 4
      %s27 = scalar_select %p26, 0, %s25
      %s28 = sadd.s32 1, %s17
      %s29 = scalar_select %p26, %s28, %s17
      %p30 = scmp.ge.s32.totalorder %s29, 4
      %s31 = scalar_select %p30, 0, %s29
      %s32 = sadd.s32 1, %s16
      %s33 = scalar_select %p30, %s32, %s16
      %p34 = scmp.ge.s32.totalorder %s33, 1
      %s35 = scalar_select %p34, 0, %s33
      %s36 = ssub.s32 %s16, %s35
      %s37 = ssub.s32 %s18, %s27
      %s38 = sor.u32 %s36, %s37
      %p39 = scmp.eq.s32.totalorder %s38, 0
      %s41 = sadd.s32 %s40, 1
      %s42 = scalar_select %p39, %s40, %s41
      %p45 = pneg %p39
      %p46 = scmp.eq.s32.totalorder %s9, 15
      %p47 = por %p45, %p46
      %p48 = scmp.ne.s32.totalorder %s40, %s43
      %p49 = scmp.eq.s32.totalorder %s9, 0
      %p50 = por %p48, %p49
      %p51 = scmp.ne.s32.totalorder %s40, %s43
      %p52 = scmp.eq.s32.totalorder %s14, 15
      %p53 = por %p51, %p52
      %p54 = scmp.ne.s32.totalorder %s43, %s44
      %p55 = scmp.eq.s32.totalorder %s14, 0
      %p56 = por %p54, %p55
      %p57 = scmp.ne.s32.totalorder %s43, %s44
      %p58 = scmp.eq.s32.totalorder %s15, 15
      %p59 = por %p57, %p58
      %p61 = scmp.ne.s32.totalorder %s44, %s60
      %p62 = scmp.eq.s32.totalorder %s15, 0
      %p63 = por %p61, %p62
      %s64 = ssub.s32 %s18, %s27
      %s65 = ssub.s32 %s17, %s31
      %s66 = sor.u32 %s64, %s65
      %p67 = scmp.eq.s32.totalorder %s66, 0
      %s69 = sadd.s32 %s68, 1
      %s70 = scalar_select %p67, %s68, %s69
      %p73 = pneg %p67
      %p74 = scmp.eq.s32.totalorder %s9, 15
      %p75 = por %p73, %p74
      %p76 = scmp.ne.s32.totalorder %s68, %s71
      %p77 = scmp.eq.s32.totalorder %s9, 0
      %p78 = por %p76, %p77
      %p79 = scmp.ne.s32.totalorder %s68, %s71
      %p80 = scmp.eq.s32.totalorder %s14, 15
      %p81 = por %p79, %p80
      %p82 = scmp.ne.s32.totalorder %s71, %s72
      %p83 = scmp.eq.s32.totalorder %s14, 0
      %p84 = por %p82, %p83
      %p85 = scmp.ne.s32.totalorder %s71, %s72
      %p86 = scmp.eq.s32.totalorder %s15, 15
      %p87 = por %p85, %p86
      %p89 = scmp.ne.s32.totalorder %s72, %s88
      %p90 = scmp.eq.s32.totalorder %s15, 0
      %p91 = por %p89, %p90
      %s92 = ssub.s32 %s17, %s31
      %p93 = scmp.eq.s32.totalorder %s92, 0
      %s95 = sadd.s32 %s94, 1
      %s96 = scalar_select %p93, %s94, %s95
      %p99 = pneg %p93
      %p100 = scmp.eq.s32.totalorder %s9, 15
      %p101 = por %p99, %p100
      %p102 = scmp.ne.s32.totalorder %s94, %s97
      %p103 = scmp.eq.s32.totalorder %s9, 0
      %p104 = por %p102, %p103
      %p105 = scmp.ne.s32.totalorder %s94, %s97
      %p106 = scmp.eq.s32.totalorder %s14, 15
      %p107 = por %p105, %p106
      %p108 = scmp.ne.s32.totalorder %s97, %s98
      %p109 = scmp.eq.s32.totalorder %s14, 0
      %p110 = por %p108, %p109
      %p111 = scmp.ne.s32.totalorder %s97, %s98
      %p112 = scmp.eq.s32.totalorder %s15, 15
      %p113 = por %p111, %p112
      %p115 = scmp.ne.s32.totalorder %s98, %s114
      %p116 = scmp.eq.s32.totalorder %s15, 0
      %p117 = por %p115, %p116
      %s118 = ssub.s32 %s16, %s35
      %s119 = ssub.s32 %s17, %s31
      %s120 = sor.u32 %s118, %s119
      %p121 = scmp.eq.s32.totalorder %s120, 0
      %s123 = sadd.s32 %s122, 1
      %s124 = scalar_select %p121, %s122, %s123
      %p127 = pneg %p121
      %p128 = scmp.eq.s32.totalorder %s9, 15
      %p129 = por %p127, %p128
      %p130 = scmp.ne.s32.totalorder %s122, %s125
      %p131 = scmp.eq.s32.totalorder %s9, 0
      %p132 = por %p130, %p131
      %p133 = scmp.ne.s32.totalorder %s122, %s125
      %p134 = scmp.eq.s32.totalorder %s14, 15
      %p135 = por %p133, %p134
      %p136 = scmp.ne.s32.totalorder %s125, %s126
      %p137 = scmp.eq.s32.totalorder %s14, 0
      %p138 = por %p136, %p137
      %p139 = scmp.ne.s32.totalorder %s125, %s126
      %p140 = scmp.eq.s32.totalorder %s15, 15
      %p141 = por %p139, %p140
      %p143 = scmp.ne.s32.totalorder %s126, %s142
      %p144 = scmp.eq.s32.totalorder %s15, 0
      %p145 = por %p143, %p144
      %p146 = scmp.le.s32.totalorder 1, %s9
      %p147 = scmp.lt.s32.totalorder %s9, 17
      %p148 = pnand %p146, %p147
      %p149 = pneg %p148
      // Predicated region
      $region9: #{convnet_forward.6} parent=5 // pred_check
        _
      $region10: #{convnet_forward.6} parent=5 // pred_check_branch
        %151 = sbr.rel (%p148) target = $region12
      $region11: #{convnet_forward.6} parent=5 // pred_region
        %s152 = ssub.s32 %s9, 1
      $region12: #{convnet_forward.6} parent=5 // pred_fallthru
        _
      %p153 = scmp.lt.s32.totalorder %s9, 16
      // Predicated region
      $region13: #{convnet_forward.6} parent=5 // pred_check
        %p154 = pneg %p153
      $region14: #{convnet_forward.6} parent=5 // pred_check_branch
        %156 = sbr.rel (%p154) target = $region16
      $region15: #{convnet_forward.6} parent=5 // pred_region
        // Predicated region
        $region17: #{convnet_forward.6} parent=15 // pred_check
          %p157 = pneg %p50
        $region18: #{convnet_forward.6} parent=15 // pred_check_branch
          %159 = sbr.rel (%p157) target = $region20
        $region19: #{convnet_forward.6} parent=15 // pred_region
          %s160 = smul.u32 7, %s18
          %p161 = scmp.lt.s32.totalorder %s16, 0
          %s162 = scalar_select %p161, %s16, 0
          %p163 = scmp.lt.s32.totalorder %s160, 27
          %s164 = scalar_select %p163, %s160, 27
          %s165 = smul.addr %s162, 28
          %s166 = sadd.s32 %s164, %s165
          %s167 = smul.addr %s166, 4
          %s168 = scalar_lea.vmem %s0, %s167
          %s169 = smul.u32 7, %s18
        $region20: #{convnet_forward.6} parent=15 // pred_fallthru
          _
        // Predicated region
        $region21: #{convnet_forward.6} parent=15 // pred_check
          %p170 = pneg %p78
        $region22: #{convnet_forward.6} parent=15 // pred_check_branch
          %172 = sbr.rel (%p170) target = $region24
        $region23: #{convnet_forward.6} parent=15 // pred_region
          %s173 = sand.u32 %s68, 1
          %s174 = sand.u32 %s68, 1
          %s175 = smul.addr %s174, 896
          %s176 = scalar_lea.vmem [#allocation3], %s175
          %s177 = smul.u32 112, %s18
          %s178 = smul.u32 2, %s17
          %s179 = smul.addr %s177, 8
          %s180 = sadd.s32 %s178, %s179
          %s181 = smul.addr %s180, 4
          %s182 = scalar_lea.vmem %s1, %s181
          // Predicated region
          $region25: #{convnet_forward.6} parent=23 // pred_check
            _
          $region26: #{convnet_forward.6} parent=23 // pred_check_branch
            %184 = sbr.rel (0) target = $region28
          $region27: #{convnet_forward.6} parent=23 // pred_region
            // Predicated region
            $region29: #{convnet_forward.6} parent=27 // pred_check
              _
            $region30: #{convnet_forward.6} parent=27 // pred_check_branch
              %186 = sbr.rel (0) target = $region32
            $region31: #{convnet_forward.6} parent=27 // pred_region
              // Predicated region
              $region44: #{convnet_forward.6} parent=31 // pred_check
                _
              $region45: #{convnet_forward.6} parent=31 // pred_check_branch
                %424 = sbr.rel (0) target = $region47
              $region46: #{convnet_forward.6} parent=31 // pred_region
                loop: start=0, step=1, limit=1
                $region48: #{convnet_forward.6} parent=46 // loop_pre_header
                  _
                $region49: #{convnet_forward.6} parent=46 // loop_header
                  %s426 = sphi 0, %s430
                  %p427 = scmp.ge.s32.totalorder %s426, 1
                  %s431 = sphi %s182, %s182
                  %s432 = sphi %s176, %s176
                $region50: #{convnet_forward.6} parent=46 // loop_header_branch
                  %429 = sbr.rel (%p427) target = $region54
                $region51: #{convnet_forward.6} parent=46 // loop_body
                  %v433 = vld [vmem:[%s431] sm:$0xff]
                  %434 = vst [vmem:[%s432] sm:$0xff] %v433
                  %v435 = vld [vmem:[%s431 + $0x20] sm:$0xff]
                  %436 = vst [vmem:[%s432 + $0x8] sm:$0xff] %v435
                  %v437 = vld [vmem:[%s431 + $0x40] sm:$0xff]
                  %438 = vst [vmem:[%s432 + $0x10] sm:$0xff] %v437
                  %v439 = vld [vmem:[%s431 + $0x60] sm:$0xff]
                  %440 = vst [vmem:[%s432 + $0x18] sm:$0xff] %v439
                  %v441 = vld [vmem:[%s431 + $0x80] sm:$0xff]
                  %442 = vst [vmem:[%s432 + $0x20] sm:$0xff] %v441
                  %v443 = vld [vmem:[%s431 + $0xa0] sm:$0xff]
                  %444 = vst [vmem:[%s432 + $0x28] sm:$0xff] %v443
                  %v445 = vld [vmem:[%s431 + $0xc0] sm:$0xff]
                  %446 = vst [vmem:[%s432 + $0x30] sm:$0xff] %v445
                  %v447 = vld [vmem:[%s431 + $0xe0] sm:$0xff]
                  %448 = vst [vmem:[%s432 + $0x38] sm:$0xff] %v447
                  %v449 = vld [vmem:[%s431 + $0x100] sm:$0xff]
                  %450 = vst [vmem:[%s432 + $0x40] sm:$0xff] %v449
                  %v451 = vld [vmem:[%s431 + $0x120] sm:$0xff]
                  %452 = vst [vmem:[%s432 + $0x48] sm:$0xff] %v451
                  %v453 = vld [vmem:[%s431 + $0x140] sm:$0xff]
                  %454 = vst [vmem:[%s432 + $0x50] sm:$0xff] %v453
                  %v455 = vld [vmem:[%s431 + $0x160] sm:$0xff]
                  %456 = vst [vmem:[%s432 + $0x58] sm:$0xff] %v455
                  %v457 = vld [vmem:[%s431 + $0x180] sm:$0xff]
                  %458 = vst [vmem:[%s432 + $0x60] sm:$0xff] %v457
                  %v459 = vld [vmem:[%s431 + $0x1a0] sm:$0xff]
                  %460 = vst [vmem:[%s432 + $0x68] sm:$0xff] %v459
                  %v461 = vld [vmem:[%s431 + $0x1c0] sm:$0xff]
                  %462 = vst [vmem:[%s432 + $0x70] sm:$0xff] %v461
                  %v463 = vld [vmem:[%s431 + $0x1e0] sm:$0xff]
                  %464 = vst [vmem:[%s432 + $0x78] sm:$0xff] %v463
                  %v465 = vld [vmem:[%s431 + $0x200] sm:$0xff]
                  %466 = vst [vmem:[%s432 + $0x80] sm:$0xff] %v465
                  %v467 = vld [vmem:[%s431 + $0x220] sm:$0xff]
                  %468 = vst [vmem:[%s432 + $0x88] sm:$0xff] %v467
                  %v469 = vld [vmem:[%s431 + $0x240] sm:$0xff]
                  %470 = vst [vmem:[%s432 + $0x90] sm:$0xff] %v469
                  %v471 = vld [vmem:[%s431 + $0x260] sm:$0xff]
                  %472 = vst [vmem:[%s432 + $0x98] sm:$0xff] %v471
                  %v473 = vld [vmem:[%s431 + $0x280] sm:$0xff]
                  %474 = vst [vmem:[%s432 + $0xa0] sm:$0xff] %v473
                  %v475 = vld [vmem:[%s431 + $0x2a0] sm:$0xff]
                  %476 = vst [vmem:[%s432 + $0xa8] sm:$0xff] %v475
                  %v477 = vld [vmem:[%s431 + $0x2c0] sm:$0xff]
                  %478 = vst [vmem:[%s432 + $0xb0] sm:$0xff] %v477
                  %v479 = vld [vmem:[%s431 + $0x2e0] sm:$0xff]
                  %480 = vst [vmem:[%s432 + $0xb8] sm:$0xff] %v479
                  %v481 = vld [vmem:[%s431 + $0x300] sm:$0xff]
                  %482 = vst [vmem:[%s432 + $0xc0] sm:$0xff] %v481
                  %v483 = vld [vmem:[%s431 + $0x320] sm:$0xff]
                  %484 = vst [vmem:[%s432 + $0xc8] sm:$0xff] %v483
                  %v485 = vld [vmem:[%s431 + $0x340] sm:$0xff]
                  %486 = vst [vmem:[%s432 + $0xd0] sm:$0xff] %v485
                  %v487 = vld [vmem:[%s431 + $0x360] sm:$0xff]
                  %488 = vst [vmem:[%s432 + $0xd8] sm:$0xff] %v487
                  %v489 = vld [vmem:[%s431 + $0x380] sm:$0xff]
                  %490 = vst [vmem:[%s432 + $0xe0] sm:$0xff] %v489
                  %v491 = vld [vmem:[%s431 + $0x3a0] sm:$0xff]
                  %492 = vst [vmem:[%s432 + $0xe8] sm:$0xff] %v491
                  %v493 = vld [vmem:[%s431 + $0x3c0] sm:$0xff]
                  %494 = vst [vmem:[%s432 + $0xf0] sm:$0xff] %v493
                  %v495 = vld [vmem:[%s431 + $0x3e0] sm:$0xff]
                  %496 = vst [vmem:[%s432 + $0xf8] sm:$0xff] %v495
                  %v497 = vld [vmem:[%s431 + $0x400] sm:$0xff]
                  %498 = vst [vmem:[%s432 + $0x100] sm:$0xff] %v497
                  %v499 = vld [vmem:[%s431 + $0x420] sm:$0xff]
                  %500 = vst [vmem:[%s432 + $0x108] sm:$0xff] %v499
                  %v501 = vld [vmem:[%s431 + $0x440] sm:$0xff]
                  %502 = vst [vmem:[%s432 + $0x110] sm:$0xff] %v501
                  %v503 = vld [vmem:[%s431 + $0x460] sm:$0xff]
                  %504 = vst [vmem:[%s432 + $0x118] sm:$0xff] %v503
                  %v505 = vld [vmem:[%s431 + $0x480] sm:$0xff]
                  %506 = vst [vmem:[%s432 + $0x120] sm:$0xff] %v505
                  %v507 = vld [vmem:[%s431 + $0x4a0] sm:$0xff]
                  %508 = vst [vmem:[%s432 + $0x128] sm:$0xff] %v507
                  %v509 = vld [vmem:[%s431 + $0x4c0] sm:$0xff]
                  %510 = vst [vmem:[%s432 + $0x130] sm:$0xff] %v509
                  %v511 = vld [vmem:[%s431 + $0x4e0] sm:$0xff]
                  %512 = vst [vmem:[%s432 + $0x138] sm:$0xff] %v511
                  %v513 = vld [vmem:[%s431 + $0x500] sm:$0xff]
                  %514 = vst [vmem:[%s432 + $0x140] sm:$0xff] %v513
                  %v515 = vld [vmem:[%s431 + $0x520] sm:$0xff]
                  %516 = vst [vmem:[%s432 + $0x148] sm:$0xff] %v515
                  %v517 = vld [vmem:[%s431 + $0x540] sm:$0xff]
                  %518 = vst [vmem:[%s432 + $0x150] sm:$0xff] %v517
                  %v519 = vld [vmem:[%s431 + $0x560] sm:$0xff]
                  %520 = vst [vmem:[%s432 + $0x158] sm:$0xff] %v519
                  %v521 = vld [vmem:[%s431 + $0x580] sm:$0xff]
                  %522 = vst [vmem:[%s432 + $0x160] sm:$0xff] %v521
                  %v523 = vld [vmem:[%s431 + $0x5a0] sm:$0xff]
                  %524 = vst [vmem:[%s432 + $0x168] sm:$0xff] %v523
                  %v525 = vld [vmem:[%s431 + $0x5c0] sm:$0xff]
                  %526 = vst [vmem:[%s432 + $0x170] sm:$0xff] %v525
                  %v527 = vld [vmem:[%s431 + $0x5e0] sm:$0xff]
                  %528 = vst [vmem:[%s432 + $0x178] sm:$0xff] %v527
                  %v529 = vld [vmem:[%s431 + $0x600] sm:$0xff]
                  %530 = vst [vmem:[%s432 + $0x180] sm:$0xff] %v529
                  %v531 = vld [vmem:[%s431 + $0x620] sm:$0xff]
                  %532 = vst [vmem:[%s432 + $0x188] sm:$0xff] %v531
                  %v533 = vld [vmem:[%s431 + $0x640] sm:$0xff]
                  %534 = vst [vmem:[%s432 + $0x190] sm:$0xff] %v533
                  %v535 = vld [vmem:[%s431 + $0x660] sm:$0xff]
                  %536 = vst [vmem:[%s432 + $0x198] sm:$0xff] %v535
                  %v537 = vld [vmem:[%s431 + $0x680] sm:$0xff]
                  %538 = vst [vmem:[%s432 + $0x1a0] sm:$0xff] %v537
                  %v539 = vld [vmem:[%s431 + $0x6a0] sm:$0xff]
                  %540 = vst [vmem:[%s432 + $0x1a8] sm:$0xff] %v539
                  %v541 = vld [vmem:[%s431 + $0x6c0] sm:$0xff]
                  %542 = vst [vmem:[%s432 + $0x1b0] sm:$0xff] %v541
                  %v543 = vld [vmem:[%s431 + $0x6e0] sm:$0xff]
                  %544 = vst [vmem:[%s432 + $0x1b8] sm:$0xff] %v543
                  %v545 = vld [vmem:[%s431 + $0x700] sm:$0xff]
                  %546 = vst [vmem:[%s432 + $0x1c0] sm:$0xff] %v545
                  %v547 = vld [vmem:[%s431 + $0x720] sm:$0xff]
                  %548 = vst [vmem:[%s432 + $0x1c8] sm:$0xff] %v547
                  %v549 = vld [vmem:[%s431 + $0x740] sm:$0xff]
                  %550 = vst [vmem:[%s432 + $0x1d0] sm:$0xff] %v549
                  %v551 = vld [vmem:[%s431 + $0x760] sm:$0xff]
                  %552 = vst [vmem:[%s432 + $0x1d8] sm:$0xff] %v551
                  %v553 = vld [vmem:[%s431 + $0x780] sm:$0xff]
                  %554 = vst [vmem:[%s432 + $0x1e0] sm:$0xff] %v553
                  %v555 = vld [vmem:[%s431 + $0x7a0] sm:$0xff]
                  %556 = vst [vmem:[%s432 + $0x1e8] sm:$0xff] %v555
                  %v557 = vld [vmem:[%s431 + $0x7c0] sm:$0xff]
                  %558 = vst [vmem:[%s432 + $0x1f0] sm:$0xff] %v557
                  %v559 = vld [vmem:[%s431 + $0x7e0] sm:$0xff]
                  %560 = vst [vmem:[%s432 + $0x1f8] sm:$0xff] %v559
                  %v561 = vld [vmem:[%s431 + $0x800] sm:$0xff]
                  %562 = vst [vmem:[%s432 + $0x200] sm:$0xff] %v561
                  %v563 = vld [vmem:[%s431 + $0x820] sm:$0xff]
                  %564 = vst [vmem:[%s432 + $0x208] sm:$0xff] %v563
                  %v565 = vld [vmem:[%s431 + $0x840] sm:$0xff]
                  %566 = vst [vmem:[%s432 + $0x210] sm:$0xff] %v565
                  %v567 = vld [vmem:[%s431 + $0x860] sm:$0xff]
                  %568 = vst [vmem:[%s432 + $0x218] sm:$0xff] %v567
                  %v569 = vld [vmem:[%s431 + $0x880] sm:$0xff]
                  %570 = vst [vmem:[%s432 + $0x220] sm:$0xff] %v569
                  %v571 = vld [vmem:[%s431 + $0x8a0] sm:$0xff]
                  %572 = vst [vmem:[%s432 + $0x228] sm:$0xff] %v571
                  %v573 = vld [vmem:[%s431 + $0x8c0] sm:$0xff]
                  %574 = vst [vmem:[%s432 + $0x230] sm:$0xff] %v573
                  %v575 = vld [vmem:[%s431 + $0x8e0] sm:$0xff]
                  %576 = vst [vmem:[%s432 + $0x238] sm:$0xff] %v575
                  %v577 = vld [vmem:[%s431 + $0x900] sm:$0xff]
                  %578 = vst [vmem:[%s432 + $0x240] sm:$0xff] %v577
                  %v579 = vld [vmem:[%s431 + $0x920] sm:$0xff]
                  %580 = vst [vmem:[%s432 + $0x248] sm:$0xff] %v579
                  %v581 = vld [vmem:[%s431 + $0x940] sm:$0xff]
                  %582 = vst [vmem:[%s432 + $0x250] sm:$0xff] %v581
                  %v583 = vld [vmem:[%s431 + $0x960] sm:$0xff]
                  %584 = vst [vmem:[%s432 + $0x258] sm:$0xff] %v583
                  %v585 = vld [vmem:[%s431 + $0x980] sm:$0xff]
                  %586 = vst [vmem:[%s432 + $0x260] sm:$0xff] %v585
                  %v587 = vld [vmem:[%s431 + $0x9a0] sm:$0xff]
                  %588 = vst [vmem:[%s432 + $0x268] sm:$0xff] %v587
                  %v589 = vld [vmem:[%s431 + $0x9c0] sm:$0xff]
                  %590 = vst [vmem:[%s432 + $0x270] sm:$0xff] %v589
                  %v591 = vld [vmem:[%s431 + $0x9e0] sm:$0xff]
                  %592 = vst [vmem:[%s432 + $0x278] sm:$0xff] %v591
                  %v593 = vld [vmem:[%s431 + $0xa00] sm:$0xff]
                  %594 = vst [vmem:[%s432 + $0x280] sm:$0xff] %v593
                  %v595 = vld [vmem:[%s431 + $0xa20] sm:$0xff]
                  %596 = vst [vmem:[%s432 + $0x288] sm:$0xff] %v595
                  %v597 = vld [vmem:[%s431 + $0xa40] sm:$0xff]
                  %598 = vst [vmem:[%s432 + $0x290] sm:$0xff] %v597
                  %v599 = vld [vmem:[%s431 + $0xa60] sm:$0xff]
                  %600 = vst [vmem:[%s432 + $0x298] sm:$0xff] %v599
                  %v601 = vld [vmem:[%s431 + $0xa80] sm:$0xff]
                  %602 = vst [vmem:[%s432 + $0x2a0] sm:$0xff] %v601
                  %v603 = vld [vmem:[%s431 + $0xaa0] sm:$0xff]
                  %604 = vst [vmem:[%s432 + $0x2a8] sm:$0xff] %v603
                  %v605 = vld [vmem:[%s431 + $0xac0] sm:$0xff]
                  %606 = vst [vmem:[%s432 + $0x2b0] sm:$0xff] %v605
                  %v607 = vld [vmem:[%s431 + $0xae0] sm:$0xff]
                  %608 = vst [vmem:[%s432 + $0x2b8] sm:$0xff] %v607
                  %v609 = vld [vmem:[%s431 + $0xb00] sm:$0xff]
                  %610 = vst [vmem:[%s432 + $0x2c0] sm:$0xff] %v609
                  %v611 = vld [vmem:[%s431 + $0xb20] sm:$0xff]
                  %612 = vst [vmem:[%s432 + $0x2c8] sm:$0xff] %v611
                  %v613 = vld [vmem:[%s431 + $0xb40] sm:$0xff]
                  %614 = vst [vmem:[%s432 + $0x2d0] sm:$0xff] %v613
                  %v615 = vld [vmem:[%s431 + $0xb60] sm:$0xff]
                  %616 = vst [vmem:[%s432 + $0x2d8] sm:$0xff] %v615
                  %v617 = vld [vmem:[%s431 + $0xb80] sm:$0xff]
                  %618 = vst [vmem:[%s432 + $0x2e0] sm:$0xff] %v617
                  %v619 = vld [vmem:[%s431 + $0xba0] sm:$0xff]
                  %620 = vst [vmem:[%s432 + $0x2e8] sm:$0xff] %v619
                  %v621 = vld [vmem:[%s431 + $0xbc0] sm:$0xff]
                  %622 = vst [vmem:[%s432 + $0x2f0] sm:$0xff] %v621
                  %v623 = vld [vmem:[%s431 + $0xbe0] sm:$0xff]
                  %624 = vst [vmem:[%s432 + $0x2f8] sm:$0xff] %v623
                  %v625 = vld [vmem:[%s431 + $0xc00] sm:$0xff]
                  %626 = vst [vmem:[%s432 + $0x300] sm:$0xff] %v625
                  %v627 = vld [vmem:[%s431 + $0xc20] sm:$0xff]
                  %628 = vst [vmem:[%s432 + $0x308] sm:$0xff] %v627
                  %v629 = vld [vmem:[%s431 + $0xc40] sm:$0xff]
                  %630 = vst [vmem:[%s432 + $0x310] sm:$0xff] %v629
                  %v631 = vld [vmem:[%s431 + $0xc60] sm:$0xff]
                  %632 = vst [vmem:[%s432 + $0x318] sm:$0xff] %v631
                  %v633 = vld [vmem:[%s431 + $0xc80] sm:$0xff]
                  %634 = vst [vmem:[%s432 + $0x320] sm:$0xff] %v633
                  %v635 = vld [vmem:[%s431 + $0xca0] sm:$0xff]
                  %636 = vst [vmem:[%s432 + $0x328] sm:$0xff] %v635
                  %v637 = vld [vmem:[%s431 + $0xcc0] sm:$0xff]
                  %638 = vst [vmem:[%s432 + $0x330] sm:$0xff] %v637
                  %v639 = vld [vmem:[%s431 + $0xce0] sm:$0xff]
                  %640 = vst [vmem:[%s432 + $0x338] sm:$0xff] %v639
                  %v641 = vld [vmem:[%s431 + $0xd00] sm:$0xff]
                  %642 = vst [vmem:[%s432 + $0x340] sm:$0xff] %v641
                  %v643 = vld [vmem:[%s431 + $0xd20] sm:$0xff]
                  %644 = vst [vmem:[%s432 + $0x348] sm:$0xff] %v643
                  %v645 = vld [vmem:[%s431 + $0xd40] sm:$0xff]
                  %646 = vst [vmem:[%s432 + $0x350] sm:$0xff] %v645
                  %v647 = vld [vmem:[%s431 + $0xd60] sm:$0xff]
                  %648 = vst [vmem:[%s432 + $0x358] sm:$0xff] %v647
                  %v649 = vld [vmem:[%s431 + $0xd80] sm:$0xff]
                  %650 = vst [vmem:[%s432 + $0x360] sm:$0xff] %v649
                  %v651 = vld [vmem:[%s431 + $0xda0] sm:$0xff]
                  %652 = vst [vmem:[%s432 + $0x368] sm:$0xff] %v651
                  %v653 = vld [vmem:[%s431 + $0xdc0] sm:$0xff]
                  %654 = vst [vmem:[%s432 + $0x370] sm:$0xff] %v653
                  %v655 = vld [vmem:[%s431 + $0xde0] sm:$0xff]
                  %656 = vst [vmem:[%s432 + $0x378] sm:$0xff] %v655
                $region52: #{convnet_forward.6} parent=46 // loop_footer
                  %s430 = sadd.s32 1, %s426
                $region53: #{convnet_forward.6} parent=46 // loop_footer_branch
                  %425 = sbr.rel target = $region49
                $region54: #{convnet_forward.6} parent=46 // loop_exit
                  _
              $region47: #{convnet_forward.6} parent=31 // pred_fallthru
                _
              // Predicated region
              $region55: #{convnet_forward.6} parent=31 // pred_check
                _
              $region56: #{convnet_forward.6} parent=31 // pred_check_branch
                %658 = sbr.rel target = $region58
              $region57: #{convnet_forward.6} parent=31 // pred_region
                _
              $region58: #{convnet_forward.6} parent=31 // pred_fallthru
                _
            $region32: #{convnet_forward.6} parent=27 // pred_fallthru
              _
            // Predicated region
            $region33: #{convnet_forward.6} parent=27 // pred_check
              _
            $region34: #{convnet_forward.6} parent=27 // pred_check_branch
              %188 = sbr.rel target = $region36
            $region35: #{convnet_forward.6} parent=27 // pred_region
              %s190 = ssub.s32 256, 1
              loop: start=0, step=1, limit=1
              $region37: #{convnet_forward.6} parent=35 // loop_pre_header
                _
              $region38: #{convnet_forward.6} parent=35 // loop_header
                %s192 = sphi 0, %s196
                %p193 = scmp.ge.s32.totalorder %s192, 1
                %s197 = sphi %s182, %s182
                %s198 = sphi %s176, %s176
              $region39: #{convnet_forward.6} parent=35 // loop_header_branch
                %195 = sbr.rel (%p193) target = $region43
              $region40: #{convnet_forward.6} parent=35 // loop_body
                %v199 = vld [vmem:[%s197] sm:%s190]
                %200 = vst [vmem:[%s198] sm:%s190] %v199
                %v201 = vld [vmem:[%s197 + $0x20] sm:%s190]
                %202 = vst [vmem:[%s198 + $0x8] sm:%s190] %v201
                %v203 = vld [vmem:[%s197 + $0x40] sm:%s190]
                %204 = vst [vmem:[%s198 + $0x10] sm:%s190] %v203
                %v205 = vld [vmem:[%s197 + $0x60] sm:%s190]
                %206 = vst [vmem:[%s198 + $0x18] sm:%s190] %v205
                %v207 = vld [vmem:[%s197 + $0x80] sm:%s190]
                %208 = vst [vmem:[%s198 + $0x20] sm:%s190] %v207
                %v209 = vld [vmem:[%s197 + $0xa0] sm:%s190]
                %210 = vst [vmem:[%s198 + $0x28] sm:%s190] %v209
                %v211 = vld [vmem:[%s197 + $0xc0] sm:%s190]
                %212 = vst [vmem:[%s198 + $0x30] sm:%s190] %v211
                %v213 = vld [vmem:[%s197 + $0xe0] sm:%s190]
                %214 = vst [vmem:[%s198 + $0x38] sm:%s190] %v213
                %v215 = vld [vmem:[%s197 + $0x100] sm:%s190]
                %216 = vst [vmem:[%s198 + $0x40] sm:%s190] %v215
                %v217 = vld [vmem:[%s197 + $0x120] sm:%s190]
                %218 = vst [vmem:[%s198 + $0x48] sm:%s190] %v217
                %v219 = vld [vmem:[%s197 + $0x140] sm:%s190]
                %220 = vst [vmem:[%s198 + $0x50] sm:%s190] %v219
                %v221 = vld [vmem:[%s197 + $0x160] sm:%s190]
                %222 = vst [vmem:[%s198 + $0x58] sm:%s190] %v221
                %v223 = vld [vmem:[%s197 + $0x180] sm:%s190]
                %224 = vst [vmem:[%s198 + $0x60] sm:%s190] %v223
                %v225 = vld [vmem:[%s197 + $0x1a0] sm:%s190]
                %226 = vst [vmem:[%s198 + $0x68] sm:%s190] %v225
                %v227 = vld [vmem:[%s197 + $0x1c0] sm:%s190]
                %228 = vst [vmem:[%s198 + $0x70] sm:%s190] %v227
                %v229 = vld [vmem:[%s197 + $0x1e0] sm:%s190]
                %230 = vst [vmem:[%s198 + $0x78] sm:%s190] %v229
                %v231 = vld [vmem:[%s197 + $0x200] sm:%s190]
                %232 = vst [vmem:[%s198 + $0x80] sm:%s190] %v231
                %v233 = vld [vmem:[%s197 + $0x220] sm:%s190]
                %234 = vst [vmem:[%s198 + $0x88] sm:%s190] %v233
                %v235 = vld [vmem:[%s197 + $0x240] sm:%s190]
                %236 = vst [vmem:[%s198 + $0x90] sm:%s190] %v235
                %v237 = vld [vmem:[%s197 + $0x260] sm:%s190]
                %238 = vst [vmem:[%s198 + $0x98] sm:%s190] %v237
                %v239 = vld [vmem:[%s197 + $0x280] sm:%s190]
                %240 = vst [vmem:[%s198 + $0xa0] sm:%s190] %v239
                %v241 = vld [vmem:[%s197 + $0x2a0] sm:%s190]
                %242 = vst [vmem:[%s198 + $0xa8] sm:%s190] %v241
                %v243 = vld [vmem:[%s197 + $0x2c0] sm:%s190]
                %244 = vst [vmem:[%s198 + $0xb0] sm:%s190] %v243
                %v245 = vld [vmem:[%s197 + $0x2e0] sm:%s190]
                %246 = vst [vmem:[%s198 + $0xb8] sm:%s190] %v245
                %v247 = vld [vmem:[%s197 + $0x300] sm:%s190]
                %248 = vst [vmem:[%s198 + $0xc0] sm:%s190] %v247
                %v249 = vld [vmem:[%s197 + $0x320] sm:%s190]
                %250 = vst [vmem:[%s198 + $0xc8] sm:%s190] %v249
                %v251 = vld [vmem:[%s197 + $0x340] sm:%s190]
                %252 = vst [vmem:[%s198 + $0xd0] sm:%s190] %v251
                %v253 = vld [vmem:[%s197 + $0x360] sm:%s190]
                %254 = vst [vmem:[%s198 + $0xd8] sm:%s190] %v253
                %v255 = vld [vmem:[%s197 + $0x380] sm:%s190]
                %256 = vst [vmem:[%s198 + $0xe0] sm:%s190] %v255
                %v257 = vld [vmem:[%s197 + $0x3a0] sm:%s190]
                %258 = vst [vmem:[%s198 + $0xe8] sm:%s190] %v257
                %v259 = vld [vmem:[%s197 + $0x3c0] sm:%s190]
                %260 = vst [vmem:[%s198 + $0xf0] sm:%s190] %v259
                %v261 = vld [vmem:[%s197 + $0x3e0] sm:%s190]
                %262 = vst [vmem:[%s198 + $0xf8] sm:%s190] %v261
                %v263 = vld [vmem:[%s197 + $0x400] sm:%s190]
                %264 = vst [vmem:[%s198 + $0x100] sm:%s190] %v263
                %v265 = vld [vmem:[%s197 + $0x420] sm:%s190]
                %266 = vst [vmem:[%s198 + $0x108] sm:%s190] %v265
                %v267 = vld [vmem:[%s197 + $0x440] sm:%s190]
                %268 = vst [vmem:[%s198 + $0x110] sm:%s190] %v267
                %v269 = vld [vmem:[%s197 + $0x460] sm:%s190]
                %270 = vst [vmem:[%s198 + $0x118] sm:%s190] %v269
                %v271 = vld [vmem:[%s197 + $0x480] sm:%s190]
                %272 = vst [vmem:[%s198 + $0x120] sm:%s190] %v271
                %v273 = vld [vmem:[%s197 + $0x4a0] sm:%s190]
                %274 = vst [vmem:[%s198 + $0x128] sm:%s190] %v273
                %v275 = vld [vmem:[%s197 + $0x4c0] sm:%s190]
                %276 = vst [vmem:[%s198 + $0x130] sm:%s190] %v275
                %v277 = vld [vmem:[%s197 + $0x4e0] sm:%s190]
                %278 = vst [vmem:[%s198 + $0x138] sm:%s190] %v277
                %v279 = vld [vmem:[%s197 + $0x500] sm:%s190]
                %280 = vst [vmem:[%s198 + $0x140] sm:%s190] %v279
                %v281 = vld [vmem:[%s197 + $0x520] sm:%s190]
                %282 = vst [vmem:[%s198 + $0x148] sm:%s190] %v281
                %v283 = vld [vmem:[%s197 + $0x540] sm:%s190]
                %284 = vst [vmem:[%s198 + $0x150] sm:%s190] %v283
                %v285 = vld [vmem:[%s197 + $0x560] sm:%s190]
                %286 = vst [vmem:[%s198 + $0x158] sm:%s190] %v285
                %v287 = vld [vmem:[%s197 + $0x580] sm:%s190]
                %288 = vst [vmem:[%s198 + $0x160] sm:%s190] %v287
                %v289 = vld [vmem:[%s197 + $0x5a0] sm:%s190]
                %290 = vst [vmem:[%s198 + $0x168] sm:%s190] %v289
                %v291 = vld [vmem:[%s197 + $0x5c0] sm:%s190]
                %292 = vst [vmem:[%s198 + $0x170] sm:%s190] %v291
                %v293 = vld [vmem:[%s197 + $0x5e0] sm:%s190]
                %294 = vst [vmem:[%s198 + $0x178] sm:%s190] %v293
                %v295 = vld [vmem:[%s197 + $0x600] sm:%s190]
                %296 = vst [vmem:[%s198 + $0x180] sm:%s190] %v295
                %v297 = vld [vmem:[%s197 + $0x620] sm:%s190]
                %298 = vst [vmem:[%s198 + $0x188] sm:%s190] %v297
                %v299 = vld [vmem:[%s197 + $0x640] sm:%s190]
                %300 = vst [vmem:[%s198 + $0x190] sm:%s190] %v299
                %v301 = vld [vmem:[%s197 + $0x660] sm:%s190]
                %302 = vst [vmem:[%s198 + $0x198] sm:%s190] %v301
                %v303 = vld [vmem:[%s197 + $0x680] sm:%s190]
                %304 = vst [vmem:[%s198 + $0x1a0] sm:%s190] %v303
                %v305 = vld [vmem:[%s197 + $0x6a0] sm:%s190]
                %306 = vst [vmem:[%s198 + $0x1a8] sm:%s190] %v305
                %v307 = vld [vmem:[%s197 + $0x6c0] sm:%s190]
                %308 = vst [vmem:[%s198 + $0x1b0] sm:%s190] %v307
                %v309 = vld [vmem:[%s197 + $0x6e0] sm:%s190]
                %310 = vst [vmem:[%s198 + $0x1b8] sm:%s190] %v309
                %v311 = vld [vmem:[%s197 + $0x700] sm:%s190]
                %312 = vst [vmem:[%s198 + $0x1c0] sm:%s190] %v311
                %v313 = vld [vmem:[%s197 + $0x720] sm:%s190]
                %314 = vst [vmem:[%s198 + $0x1c8] sm:%s190] %v313
                %v315 = vld [vmem:[%s197 + $0x740] sm:%s190]
                %316 = vst [vmem:[%s198 + $0x1d0] sm:%s190] %v315
                %v317 = vld [vmem:[%s197 + $0x760] sm:%s190]
                %318 = vst [vmem:[%s198 + $0x1d8] sm:%s190] %v317
                %v319 = vld [vmem:[%s197 + $0x780] sm:%s190]
                %320 = vst [vmem:[%s198 + $0x1e0] sm:%s190] %v319
                %v321 = vld [vmem:[%s197 + $0x7a0] sm:%s190]
                %322 = vst [vmem:[%s198 + $0x1e8] sm:%s190] %v321
                %v323 = vld [vmem:[%s197 + $0x7c0] sm:%s190]
                %324 = vst [vmem:[%s198 + $0x1f0] sm:%s190] %v323
                %v325 = vld [vmem:[%s197 + $0x7e0] sm:%s190]
                %326 = vst [vmem:[%s198 + $0x1f8] sm:%s190] %v325
                %v327 = vld [vmem:[%s197 + $0x800] sm:%s190]
                %328 = vst [vmem:[%s198 + $0x200] sm:%s190] %v327
                %v329 = vld [vmem:[%s197 + $0x820] sm:%s190]
                %330 = vst [vmem:[%s198 + $0x208] sm:%s190] %v329
                %v331 = vld [vmem:[%s197 + $0x840] sm:%s190]
                %332 = vst [vmem:[%s198 + $0x210] sm:%s190] %v331
                %v333 = vld [vmem:[%s197 + $0x860] sm:%s190]
                %334 = vst [vmem:[%s198 + $0x218] sm:%s190] %v333
                %v335 = vld [vmem:[%s197 + $0x880] sm:%s190]
                %336 = vst [vmem:[%s198 + $0x220] sm:%s190] %v335
                %v337 = vld [vmem:[%s197 + $0x8a0] sm:%s190]
                %338 = vst [vmem:[%s198 + $0x228] sm:%s190] %v337
                %v339 = vld [vmem:[%s197 + $0x8c0] sm:%s190]
                %340 = vst [vmem:[%s198 + $0x230] sm:%s190] %v339
                %v341 = vld [vmem:[%s197 + $0x8e0] sm:%s190]
                %342 = vst [vmem:[%s198 + $0x238] sm:%s190] %v341
                %v343 = vld [vmem:[%s197 + $0x900] sm:%s190]
                %344 = vst [vmem:[%s198 + $0x240] sm:%s190] %v343
                %v345 = vld [vmem:[%s197 + $0x920] sm:%s190]
                %346 = vst [vmem:[%s198 + $0x248] sm:%s190] %v345
                %v347 = vld [vmem:[%s197 + $0x940] sm:%s190]
                %348 = vst [vmem:[%s198 + $0x250] sm:%s190] %v347
                %v349 = vld [vmem:[%s197 + $0x960] sm:%s190]
                %350 = vst [vmem:[%s198 + $0x258] sm:%s190] %v349
                %v351 = vld [vmem:[%s197 + $0x980] sm:%s190]
                %352 = vst [vmem:[%s198 + $0x260] sm:%s190] %v351
                %v353 = vld [vmem:[%s197 + $0x9a0] sm:%s190]
                %354 = vst [vmem:[%s198 + $0x268] sm:%s190] %v353
                %v355 = vld [vmem:[%s197 + $0x9c0] sm:%s190]
                %356 = vst [vmem:[%s198 + $0x270] sm:%s190] %v355
                %v357 = vld [vmem:[%s197 + $0x9e0] sm:%s190]
                %358 = vst [vmem:[%s198 + $0x278] sm:%s190] %v357
                %v359 = vld [vmem:[%s197 + $0xa00] sm:%s190]
                %360 = vst [vmem:[%s198 + $0x280] sm:%s190] %v359
                %v361 = vld [vmem:[%s197 + $0xa20] sm:%s190]
                %362 = vst [vmem:[%s198 + $0x288] sm:%s190] %v361
                %v363 = vld [vmem:[%s197 + $0xa40] sm:%s190]
                %364 = vst [vmem:[%s198 + $0x290] sm:%s190] %v363
                %v365 = vld [vmem:[%s197 + $0xa60] sm:%s190]
                %366 = vst [vmem:[%s198 + $0x298] sm:%s190] %v365
                %v367 = vld [vmem:[%s197 + $0xa80] sm:%s190]
                %368 = vst [vmem:[%s198 + $0x2a0] sm:%s190] %v367
                %v369 = vld [vmem:[%s197 + $0xaa0] sm:%s190]
                %370 = vst [vmem:[%s198 + $0x2a8] sm:%s190] %v369
                %v371 = vld [vmem:[%s197 + $0xac0] sm:%s190]
                %372 = vst [vmem:[%s198 + $0x2b0] sm:%s190] %v371
                %v373 = vld [vmem:[%s197 + $0xae0] sm:%s190]
                %374 = vst [vmem:[%s198 + $0x2b8] sm:%s190] %v373
                %v375 = vld [vmem:[%s197 + $0xb00] sm:%s190]
                %376 = vst [vmem:[%s198 + $0x2c0] sm:%s190] %v375
                %v377 = vld [vmem:[%s197 + $0xb20] sm:%s190]
                %378 = vst [vmem:[%s198 + $0x2c8] sm:%s190] %v377
                %v379 = vld [vmem:[%s197 + $0xb40] sm:%s190]
                %380 = vst [vmem:[%s198 + $0x2d0] sm:%s190] %v379
                %v381 = vld [vmem:[%s197 + $0xb60] sm:%s190]
                %382 = vst [vmem:[%s198 + $0x2d8] sm:%s190] %v381
                %v383 = vld [vmem:[%s197 + $0xb80] sm:%s190]
                %384 = vst [vmem:[%s198 + $0x2e0] sm:%s190] %v383
                %v385 = vld [vmem:[%s197 + $0xba0] sm:%s190]
                %386 = vst [vmem:[%s198 + $0x2e8] sm:%s190] %v385
                %v387 = vld [vmem:[%s197 + $0xbc0] sm:%s190]
                %388 = vst [vmem:[%s198 + $0x2f0] sm:%s190] %v387
                %v389 = vld [vmem:[%s197 + $0xbe0] sm:%s190]
                %390 = vst [vmem:[%s198 + $0x2f8] sm:%s190] %v389
                %v391 = vld [vmem:[%s197 + $0xc00] sm:%s190]
                %392 = vst [vmem:[%s198 + $0x300] sm:%s190] %v391
                %v393 = vld [vmem:[%s197 + $0xc20] sm:%s190]
                %394 = vst [vmem:[%s198 + $0x308] sm:%s190] %v393
                %v395 = vld [vmem:[%s197 + $0xc40] sm:%s190]
                %396 = vst [vmem:[%s198 + $0x310] sm:%s190] %v395
                %v397 = vld [vmem:[%s197 + $0xc60] sm:%s190]
                %398 = vst [vmem:[%s198 + $0x318] sm:%s190] %v397
                %v399 = vld [vmem:[%s197 + $0xc80] sm:%s190]
                %400 = vst [vmem:[%s198 + $0x320] sm:%s190] %v399
                %v401 = vld [vmem:[%s197 + $0xca0] sm:%s190]
                %402 = vst [vmem:[%s198 + $0x328] sm:%s190] %v401
                %v403 = vld [vmem:[%s197 + $0xcc0] sm:%s190]
                %404 = vst [vmem:[%s198 + $0x330] sm:%s190] %v403
                %v405 = vld [vmem:[%s197 + $0xce0] sm:%s190]
                %406 = vst [vmem:[%s198 + $0x338] sm:%s190] %v405
                %v407 = vld [vmem:[%s197 + $0xd00] sm:%s190]
                %408 = vst [vmem:[%s198 + $0x340] sm:%s190] %v407
                %v409 = vld [vmem:[%s197 + $0xd20] sm:%s190]
                %410 = vst [vmem:[%s198 + $0x348] sm:%s190] %v409
                %v411 = vld [vmem:[%s197 + $0xd40] sm:%s190]
                %412 = vst [vmem:[%s198 + $0x350] sm:%s190] %v411
                %v413 = vld [vmem:[%s197 + $0xd60] sm:%s190]
                %414 = vst [vmem:[%s198 + $0x358] sm:%s190] %v413
                %v415 = vld [vmem:[%s197 + $0xd80] sm:%s190]
                %416 = vst [vmem:[%s198 + $0x360] sm:%s190] %v415
                %v417 = vld [vmem:[%s197 + $0xda0] sm:%s190]
                %418 = vst [vmem:[%s198 + $0x368] sm:%s190] %v417
                %v419 = vld [vmem:[%s197 + $0xdc0] sm:%s190]
                %420 = vst [vmem:[%s198 + $0x370] sm:%s190] %v419
                %v421 = vld [vmem:[%s197 + $0xde0] sm:%s190]
                %422 = vst [vmem:[%s198 + $0x378] sm:%s190] %v421
              $region41: #{convnet_forward.6} parent=35 // loop_footer
                %s196 = sadd.s32 1, %s192
              $region42: #{convnet_forward.6} parent=35 // loop_footer_branch
                %191 = sbr.rel target = $region38
              $region43: #{convnet_forward.6} parent=35 // loop_exit
                _
            $region36: #{convnet_forward.6} parent=27 // pred_fallthru
              _
          $region28: #{convnet_forward.6} parent=23 // pred_fallthru
            _
          %659 = vnop
        $region24: #{convnet_forward.6} parent=15 // pred_fallthru
          _
        // Predicated region
        $region59: #{convnet_forward.6} parent=15 // pred_check
          %p660 = pneg %p104
        $region60: #{convnet_forward.6} parent=15 // pred_check_branch
          %662 = sbr.rel (%p660) target = $region62
        $region61: #{convnet_forward.6} parent=15 // pred_region
          %s663 = smul.u32 2, %s17
          %p664 = scmp.lt.s32.totalorder %s663, 7
          %s665 = scalar_select %p664, %s663, 7
          %s666 = scalar_lea.vmem %s2, %s665
          %s667 = smul.u32 2, %s17
        $region62: #{convnet_forward.6} parent=15 // pred_fallthru
          _
      $region16: #{convnet_forward.6} parent=5 // pred_fallthru
        _
      %p668 = scmp.le.s32.totalorder 1, %s9
      %p669 = scmp.lt.s32.totalorder %s9, 17
      %p670 = pnand %p668, %p669
      %p671 = pneg %p670
      // Predicated region
      $region63: #{convnet_forward.6} parent=5 // pred_check
        _
      $region64: #{convnet_forward.6} parent=5 // pred_check_branch
        %673 = sbr.rel (%p670) target = $region66
      $region65: #{convnet_forward.6} parent=5 // pred_region
        %s674 = ssub.s32 %s9, 1
        %s675 = sand.u32 %s71, 1
        %s676 = sand.u32 %s71, 1
        %s677 = smul.addr %s676, 896
        %s678 = scalar_lea.vmem [#allocation3], %s677
        // Predicated region
        $region67: #{convnet_forward.6} parent=65 // pred_check
          %p679 = pneg %p84
        $region68: #{convnet_forward.6} parent=65 // pred_check_branch
          %681 = sbr.rel (%p679) target = $region70
        $region69: #{convnet_forward.6} parent=65 // pred_region
          _
        $region70: #{convnet_forward.6} parent=65 // pred_fallthru
          _
        %s682 = smul.u32 7, %s21
        %p683 = scmp.lt.s32.totalorder %s19, 0
        %s684 = scalar_select %p683, %s19, 0
        %p685 = scmp.lt.s32.totalorder %s682, 27
        %s686 = scalar_select %p685, %s682, 27
        %s687 = smul.addr %s684, 28
        %s688 = sadd.s32 %s686, %s687
        %s689 = smul.addr %s688, 4
        %s690 = scalar_lea.vmem %s0, %s689
        %p691 = pneg %p56
        %p692 = pneg %p53
        %s693 = sand.u32 %s71, 1
        %s694 = sand.u32 %s71, 1
        %s695 = smul.addr %s694, 896
        %s696 = scalar_lea.vmem [#allocation3], %s695
        %p697 = pneg %p84
        %p698 = pneg %p81
        %s699 = smul.u32 2, %s20
        %p700 = scmp.lt.s32.totalorder %s699, 7
        %s701 = scalar_select %p700, %s699, 7
        %s702 = scalar_lea.vmem %s2, %s701
        %p703 = pneg %p110
        %p704 = pneg %p107
        %p705 = pneg %p138
        %p706 = pneg %p135
        %s707 = smul.u32 2, %s20
        %p708 = scmp.lt.s32.totalorder %s19, 0
        %s709 = scalar_select %p708, %s19, 0
        %p710 = scmp.lt.s32.totalorder %s707, 7
        %s711 = scalar_select %p710, %s707, 7
        %s712 = smul.addr %s709, 8
        %s713 = sadd.s32 %s711, %s712
        %s714 = smul.addr %s713, 8
        %s715 = scalar_lea.vmem %s3, %s714
        %s716 = smul.u32 7, %s21
        %p717 = scmp.lt.s32.totalorder %s19, 0
        %s718 = scalar_select %p717, %s19, 0
        %p719 = scmp.lt.s32.totalorder %s716, 27
        %s720 = scalar_select %p719, %s716, 27
        %s721 = smul.addr %s718, 28
        %s722 = sadd.s32 %s720, %s721
        %s723 = smul.addr %s722, 4
        %s724 = scalar_lea.vmem %s0, %s723
        %s725 = smul.u32 7, %s21
        %s726 = smul.u32 112, %s21
        %s727 = smul.u32 2, %s20
        %s728 = smul.u32 2, %s20
        %p729 = scmp.lt.s32.totalorder %s728, 7
        %s730 = scalar_select %p729, %s728, 7
        %s731 = scalar_lea.vmem %s2, %s730
        %s732 = smul.u32 2, %s20
        %s733 = smul.u32 2, %s20
        %p734 = scmp.lt.s32.totalorder %s19, 0
        %s735 = scalar_select %p734, %s19, 0
        %p736 = scmp.lt.s32.totalorder %s733, 7
        %s737 = scalar_select %p736, %s733, 7
        %s738 = smul.addr %s735, 8
        %s739 = sadd.s32 %s737, %s738
        %s740 = smul.addr %s739, 8
        %s741 = scalar_lea.vmem %s3, %s740
        %s742 = smul.u32 2, %s20
        %p744 = scmp.eq.s32.totalorder %s21, 0
        // Predicated region
        $region71: #{convnet_forward.6} parent=65 // pred_check
          %p745 = pneg %p744
        $region72: #{convnet_forward.6} parent=65 // pred_check_branch
          %747 = sbr.rel (%p745) target = $region74
        $region73: #{convnet_forward.6} parent=65 // pred_region
          %748 = vst [vmem:[#allocation2] sm:$0xff] 0.0
          %749 = vst [vmem:[#allocation2 + $0x8] sm:$0xff] 0.0
        $region74: #{convnet_forward.6} parent=65 // pred_fallthru
          _
        %v750 = vld [vmem:[%s678] sm:$0xff]
        %v751 = vld [vmem:[%s678 + $0x8] sm:$0xff]
        %v752 = vld [vmem:[%s678 + $0x10] sm:$0xff]
        %v753 = vld [vmem:[%s678 + $0x18] sm:$0xff]
        %v754 = vld [vmem:[%s678 + $0x20] sm:$0xff]
        %v755 = vld [vmem:[%s678 + $0x28] sm:$0xff]
        %v756 = vld [vmem:[%s678 + $0x30] sm:$0xff]
        %v757 = vld [vmem:[%s678 + $0x38] sm:$0xff]
        %v758 = vld [vmem:[%s678 + $0x40] sm:$0xff]
        %v759 = vld [vmem:[%s678 + $0x48] sm:$0xff]
        %v760 = vld [vmem:[%s678 + $0x50] sm:$0xff]
        %v761 = vld [vmem:[%s678 + $0x58] sm:$0xff]
        %v762 = vld [vmem:[%s678 + $0x60] sm:$0xff]
        %v763 = vld [vmem:[%s678 + $0x68] sm:$0xff]
        %v764 = vld [vmem:[%s678 + $0x70] sm:$0xff]
        %v765 = vld [vmem:[%s678 + $0x78] sm:$0xff]
        %v766 = vld [vmem:[%s678 + $0x80] sm:$0xff]
        %v767 = vld [vmem:[%s678 + $0x88] sm:$0xff]
        %v768 = vld [vmem:[%s678 + $0x90] sm:$0xff]
        %v769 = vld [vmem:[%s678 + $0x98] sm:$0xff]
        %v770 = vld [vmem:[%s678 + $0xa0] sm:$0xff]
        %v771 = vld [vmem:[%s678 + $0xa8] sm:$0xff]
        %v772 = vld [vmem:[%s678 + $0xb0] sm:$0xff]
        %v773 = vld [vmem:[%s678 + $0xb8] sm:$0xff]
        %v774 = vld [vmem:[%s678 + $0xc0] sm:$0xff]
        %v775 = vld [vmem:[%s678 + $0xc8] sm:$0xff]
        %v776 = vld [vmem:[%s678 + $0xd0] sm:$0xff]
        %v777 = vld [vmem:[%s678 + $0xd8] sm:$0xff]
        %v778 = vld [vmem:[%s678 + $0xe0] sm:$0xff]
        %v779 = vld [vmem:[%s678 + $0xe8] sm:$0xff]
        %v780 = vld [vmem:[%s678 + $0xf0] sm:$0xff]
        %v781 = vld [vmem:[%s678 + $0xf8] sm:$0xff]
        %v782 = vld [vmem:[%s678 + $0x100] sm:$0xff]
        %v783 = vld [vmem:[%s678 + $0x108] sm:$0xff]
        %v784 = vld [vmem:[%s678 + $0x110] sm:$0xff]
        %v785 = vld [vmem:[%s678 + $0x118] sm:$0xff]
        %v786 = vld [vmem:[%s678 + $0x120] sm:$0xff]
        %v787 = vld [vmem:[%s678 + $0x128] sm:$0xff]
        %v788 = vld [vmem:[%s678 + $0x130] sm:$0xff]
        %v789 = vld [vmem:[%s678 + $0x138] sm:$0xff]
        %v790 = vld [vmem:[%s678 + $0x140] sm:$0xff]
        %v791 = vld [vmem:[%s678 + $0x148] sm:$0xff]
        %v792 = vld [vmem:[%s678 + $0x150] sm:$0xff]
        %v793 = vld [vmem:[%s678 + $0x158] sm:$0xff]
        %v794 = vld [vmem:[%s678 + $0x160] sm:$0xff]
        %v795 = vld [vmem:[%s678 + $0x168] sm:$0xff]
        %v796 = vld [vmem:[%s678 + $0x170] sm:$0xff]
        %v797 = vld [vmem:[%s678 + $0x178] sm:$0xff]
        %v798 = vld [vmem:[%s678 + $0x180] sm:$0xff]
        %v799 = vld [vmem:[%s678 + $0x188] sm:$0xff]
        %v800 = vld [vmem:[%s678 + $0x190] sm:$0xff]
        %v801 = vld [vmem:[%s678 + $0x198] sm:$0xff]
        %v802 = vld [vmem:[%s678 + $0x1a0] sm:$0xff]
        %v803 = vld [vmem:[%s678 + $0x1a8] sm:$0xff]
        %v804 = vld [vmem:[%s678 + $0x1b0] sm:$0xff]
        %v805 = vld [vmem:[%s678 + $0x1b8] sm:$0xff]
        %v806 = vld [vmem:[%s678 + $0x1c0] sm:$0xff]
        %v807 = vld [vmem:[%s678 + $0x1c8] sm:$0xff]
        %v808 = vld [vmem:[%s678 + $0x1d0] sm:$0xff]
        %v809 = vld [vmem:[%s678 + $0x1d8] sm:$0xff]
        %v810 = vld [vmem:[%s678 + $0x1e0] sm:$0xff]
        %v811 = vld [vmem:[%s678 + $0x1e8] sm:$0xff]
        %v812 = vld [vmem:[%s678 + $0x1f0] sm:$0xff]
        %v813 = vld [vmem:[%s678 + $0x1f8] sm:$0xff]
        %v814 = vld [vmem:[%s678 + $0x200] sm:$0xff]
        %v815 = vld [vmem:[%s678 + $0x208] sm:$0xff]
        %v816 = vld [vmem:[%s678 + $0x210] sm:$0xff]
        %v817 = vld [vmem:[%s678 + $0x218] sm:$0xff]
        %v818 = vld [vmem:[%s678 + $0x220] sm:$0xff]
        %v819 = vld [vmem:[%s678 + $0x228] sm:$0xff]
        %v820 = vld [vmem:[%s678 + $0x230] sm:$0xff]
        %v821 = vld [vmem:[%s678 + $0x238] sm:$0xff]
        %v822 = vld [vmem:[%s678 + $0x240] sm:$0xff]
        %v823 = vld [vmem:[%s678 + $0x248] sm:$0xff]
        %v824 = vld [vmem:[%s678 + $0x250] sm:$0xff]
        %v825 = vld [vmem:[%s678 + $0x258] sm:$0xff]
        %v826 = vld [vmem:[%s678 + $0x260] sm:$0xff]
        %v827 = vld [vmem:[%s678 + $0x268] sm:$0xff]
        %v828 = vld [vmem:[%s678 + $0x270] sm:$0xff]
        %v829 = vld [vmem:[%s678 + $0x278] sm:$0xff]
        %v830 = vld [vmem:[%s678 + $0x280] sm:$0xff]
        %v831 = vld [vmem:[%s678 + $0x288] sm:$0xff]
        %v832 = vld [vmem:[%s678 + $0x290] sm:$0xff]
        %v833 = vld [vmem:[%s678 + $0x298] sm:$0xff]
        %v834 = vld [vmem:[%s678 + $0x2a0] sm:$0xff]
        %v835 = vld [vmem:[%s678 + $0x2a8] sm:$0xff]
        %v836 = vld [vmem:[%s678 + $0x2b0] sm:$0xff]
        %v837 = vld [vmem:[%s678 + $0x2b8] sm:$0xff]
        %v838 = vld [vmem:[%s678 + $0x2c0] sm:$0xff]
        %v839 = vld [vmem:[%s678 + $0x2c8] sm:$0xff]
        %v840 = vld [vmem:[%s678 + $0x2d0] sm:$0xff]
        %v841 = vld [vmem:[%s678 + $0x2d8] sm:$0xff]
        %v842 = vld [vmem:[%s678 + $0x2e0] sm:$0xff]
        %v843 = vld [vmem:[%s678 + $0x2e8] sm:$0xff]
        %v844 = vld [vmem:[%s678 + $0x2f0] sm:$0xff]
        %v845 = vld [vmem:[%s678 + $0x2f8] sm:$0xff]
        %v846 = vld [vmem:[%s678 + $0x300] sm:$0xff]
        %v847 = vld [vmem:[%s678 + $0x308] sm:$0xff]
        %v848 = vld [vmem:[%s678 + $0x310] sm:$0xff]
        %v849 = vld [vmem:[%s678 + $0x318] sm:$0xff]
        %v850 = vld [vmem:[%s678 + $0x320] sm:$0xff]
        %v851 = vld [vmem:[%s678 + $0x328] sm:$0xff]
        %v852 = vld [vmem:[%s678 + $0x330] sm:$0xff]
        %v853 = vld [vmem:[%s678 + $0x338] sm:$0xff]
        %v854 = vld [vmem:[%s678 + $0x340] sm:$0xff]
        %v855 = vld [vmem:[%s678 + $0x348] sm:$0xff]
        %v856 = vld [vmem:[%s678 + $0x350] sm:$0xff]
        %v857 = vld [vmem:[%s678 + $0x358] sm:$0xff]
        %v858 = vld [vmem:[%s678 + $0x360] sm:$0xff]
        %v859 = vld [vmem:[%s678 + $0x368] sm:$0xff]
        %v860 = vld [vmem:[%s678 + $0x370] sm:$0xff]
        %v861 = vld [vmem:[%s678 + $0x378] sm:$0xff]
        %v862 = vld [vmem:[#allocation2] sm:$0xff]
        %v863 = vld [vmem:[#allocation2 + $0x8] sm:$0xff]
        %v864 = vld [vmem:[%s724] sm:$0xff]
        %v865 = vld [vmem:[%s724 + $0x8] sm:$0xff]
        %v866 = vld [vmem:[%s724 + $0x10] sm:$0xff]
        %v867 = vld [vmem:[%s724 + $0x18] sm:$0xf]
        %v872 = vunpack.c.l.b16 %v864
        %v873 = vunpack.c.h.b16 %v864
        %v874 = vunpack.c.l.b16 %v865
        %v875 = vunpack.c.h.b16 %v865
        %v876 = vunpack.c.l.b16 %v866
        %v877 = vunpack.c.h.b16 %v866
        %v878 = vunpack.c.l.b16 %v867
        %v879 = vpack.c.b16 %v872, %v872
        %v880 = vpack.c.b16 %v873, %v873
        %v881 = vpack.c.b16 %v874, %v874
        %v882 = vpack.c.b16 %v875, %v875
        %v883 = vpack.c.b16 %v876, %v876
        %v884 = vpack.c.b16 %v877, %v877
        %v885 = vpack.c.b16 %v878, %v878
        %v1005 = vunpack.c.l.b16 %v750
        %v1006 = vunpack.c.h.b16 %v750
        %v1007 = vunpack.c.l.b16 %v751
        %v1008 = vunpack.c.h.b16 %v751
        %v1009 = vunpack.c.l.b16 %v752
        %v1010 = vunpack.c.h.b16 %v752
        %v1011 = vunpack.c.l.b16 %v753
        %v1012 = vunpack.c.h.b16 %v753
        %v1013 = vunpack.c.l.b16 %v754
        %v1014 = vunpack.c.h.b16 %v754
        %v1015 = vunpack.c.l.b16 %v755
        %v1016 = vunpack.c.h.b16 %v755
        %v1017 = vunpack.c.l.b16 %v756
        %v1018 = vunpack.c.h.b16 %v756
        %v1019 = vunpack.c.l.b16 %v757
        %v1020 = vunpack.c.h.b16 %v757
        %v1021 = vunpack.c.l.b16 %v758
        %v1022 = vunpack.c.h.b16 %v758
        %v1023 = vunpack.c.l.b16 %v759
        %v1024 = vunpack.c.h.b16 %v759
        %v1025 = vunpack.c.l.b16 %v760
        %v1026 = vunpack.c.h.b16 %v760
        %v1027 = vunpack.c.l.b16 %v761
        %v1028 = vunpack.c.h.b16 %v761
        %v1029 = vunpack.c.l.b16 %v762
        %v1030 = vunpack.c.h.b16 %v762
        %v1031 = vunpack.c.l.b16 %v763
        %v1032 = vunpack.c.h.b16 %v763
        %v1033 = vunpack.c.l.b16 %v764
        %v1034 = vunpack.c.h.b16 %v764
        %v1035 = vunpack.c.l.b16 %v765
        %v1036 = vunpack.c.h.b16 %v765
        %v1037 = vunpack.c.l.b16 %v766
        %v1038 = vunpack.c.h.b16 %v766
        %v1039 = vunpack.c.l.b16 %v767
        %v1040 = vunpack.c.h.b16 %v767
        %v1041 = vunpack.c.l.b16 %v768
        %v1042 = vunpack.c.h.b16 %v768
        %v1043 = vunpack.c.l.b16 %v769
        %v1044 = vunpack.c.h.b16 %v769
        %v1045 = vunpack.c.l.b16 %v770
        %v1046 = vunpack.c.h.b16 %v770
        %v1047 = vunpack.c.l.b16 %v771
        %v1048 = vunpack.c.h.b16 %v771
        %v1049 = vunpack.c.l.b16 %v772
        %v1050 = vunpack.c.h.b16 %v772
        %v1051 = vunpack.c.l.b16 %v773
        %v1052 = vunpack.c.h.b16 %v773
        %v1053 = vunpack.c.l.b16 %v774
        %v1054 = vunpack.c.h.b16 %v774
        %v1055 = vunpack.c.l.b16 %v775
        %v1056 = vunpack.c.h.b16 %v775
        %v1057 = vunpack.c.l.b16 %v776
        %v1058 = vunpack.c.h.b16 %v776
        %v1059 = vunpack.c.l.b16 %v777
        %v1060 = vunpack.c.h.b16 %v777
        %v1061 = vunpack.c.l.b16 %v778
        %v1062 = vunpack.c.h.b16 %v778
        %v1063 = vunpack.c.l.b16 %v779
        %v1064 = vunpack.c.h.b16 %v779
        %v1065 = vunpack.c.l.b16 %v780
        %v1066 = vunpack.c.h.b16 %v780
        %v1067 = vunpack.c.l.b16 %v781
        %v1068 = vunpack.c.h.b16 %v781
        %v1069 = vunpack.c.l.b16 %v782
        %v1070 = vunpack.c.h.b16 %v782
        %v1071 = vunpack.c.l.b16 %v783
        %v1072 = vunpack.c.h.b16 %v783
        %v1073 = vunpack.c.l.b16 %v784
        %v1074 = vunpack.c.h.b16 %v784
        %v1075 = vunpack.c.l.b16 %v785
        %v1076 = vunpack.c.h.b16 %v785
        %v1077 = vunpack.c.l.b16 %v786
        %v1078 = vunpack.c.h.b16 %v786
        %v1079 = vunpack.c.l.b16 %v787
        %v1080 = vunpack.c.h.b16 %v787
        %v1081 = vunpack.c.l.b16 %v788
        %v1082 = vunpack.c.h.b16 %v788
        %v1083 = vunpack.c.l.b16 %v789
        %v1084 = vunpack.c.h.b16 %v789
        %v1085 = vunpack.c.l.b16 %v790
        %v1086 = vunpack.c.h.b16 %v790
        %v1087 = vunpack.c.l.b16 %v791
        %v1088 = vunpack.c.h.b16 %v791
        %v1089 = vunpack.c.l.b16 %v792
        %v1090 = vunpack.c.h.b16 %v792
        %v1091 = vunpack.c.l.b16 %v793
        %v1092 = vunpack.c.h.b16 %v793
        %v1093 = vunpack.c.l.b16 %v794
        %v1094 = vunpack.c.h.b16 %v794
        %v1095 = vunpack.c.l.b16 %v795
        %v1096 = vunpack.c.h.b16 %v795
        %v1097 = vunpack.c.l.b16 %v796
        %v1098 = vunpack.c.h.b16 %v796
        %v1099 = vunpack.c.l.b16 %v797
        %v1100 = vunpack.c.h.b16 %v797
        %v1101 = vunpack.c.l.b16 %v798
        %v1102 = vunpack.c.h.b16 %v798
        %v1103 = vunpack.c.l.b16 %v799
        %v1104 = vunpack.c.h.b16 %v799
        %v1105 = vunpack.c.l.b16 %v800
        %v1106 = vunpack.c.h.b16 %v800
        %v1107 = vunpack.c.l.b16 %v801
        %v1108 = vunpack.c.h.b16 %v801
        %v1109 = vunpack.c.l.b16 %v802
        %v1110 = vunpack.c.h.b16 %v802
        %v1111 = vunpack.c.l.b16 %v803
        %v1112 = vunpack.c.h.b16 %v803
        %v1113 = vunpack.c.l.b16 %v804
        %v1114 = vunpack.c.h.b16 %v804
        %v1115 = vunpack.c.l.b16 %v805
        %v1116 = vunpack.c.h.b16 %v805
        %v1117 = vunpack.c.l.b16 %v806
        %v1118 = vunpack.c.h.b16 %v806
        %v1119 = vunpack.c.l.b16 %v807
        %v1120 = vunpack.c.h.b16 %v807
        %v1121 = vunpack.c.l.b16 %v808
        %v1122 = vunpack.c.h.b16 %v808
        %v1123 = vunpack.c.l.b16 %v809
        %v1124 = vunpack.c.h.b16 %v809
        %v1125 = vunpack.c.l.b16 %v810
        %v1126 = vunpack.c.h.b16 %v810
        %v1127 = vunpack.c.l.b16 %v811
        %v1128 = vunpack.c.h.b16 %v811
        %v1129 = vunpack.c.l.b16 %v812
        %v1130 = vunpack.c.h.b16 %v812
        %v1131 = vunpack.c.l.b16 %v813
        %v1132 = vunpack.c.h.b16 %v813
        %v1133 = vunpack.c.l.b16 %v814
        %v1134 = vunpack.c.h.b16 %v814
        %v1135 = vunpack.c.l.b16 %v815
        %v1136 = vunpack.c.h.b16 %v815
        %v1137 = vunpack.c.l.b16 %v816
        %v1138 = vunpack.c.h.b16 %v816
        %v1139 = vunpack.c.l.b16 %v817
        %v1140 = vunpack.c.h.b16 %v817
        %v1141 = vunpack.c.l.b16 %v818
        %v1142 = vunpack.c.h.b16 %v818
        %v1143 = vunpack.c.l.b16 %v819
        %v1144 = vunpack.c.h.b16 %v819
        %v1145 = vunpack.c.l.b16 %v820
        %v1146 = vunpack.c.h.b16 %v820
        %v1147 = vunpack.c.l.b16 %v821
        %v1148 = vunpack.c.h.b16 %v821
        %v1149 = vunpack.c.l.b16 %v822
        %v1150 = vunpack.c.h.b16 %v822
        %v1151 = vunpack.c.l.b16 %v823
        %v1152 = vunpack.c.h.b16 %v823
        %v1153 = vunpack.c.l.b16 %v824
        %v1154 = vunpack.c.h.b16 %v824
        %v1155 = vunpack.c.l.b16 %v825
        %v1156 = vunpack.c.h.b16 %v825
        %v1157 = vunpack.c.l.b16 %v826
        %v1158 = vunpack.c.h.b16 %v826
        %v1159 = vunpack.c.l.b16 %v827
        %v1160 = vunpack.c.h.b16 %v827
        %v1161 = vunpack.c.l.b16 %v828
        %v1162 = vunpack.c.h.b16 %v828
        %v1163 = vunpack.c.l.b16 %v829
        %v1164 = vunpack.c.h.b16 %v829
        %v1165 = vunpack.c.l.b16 %v830
        %v1166 = vunpack.c.h.b16 %v830
        %v1167 = vunpack.c.l.b16 %v831
        %v1168 = vunpack.c.h.b16 %v831
        %v1169 = vunpack.c.l.b16 %v832
        %v1170 = vunpack.c.h.b16 %v832
        %v1171 = vunpack.c.l.b16 %v833
        %v1172 = vunpack.c.h.b16 %v833
        %v1173 = vunpack.c.l.b16 %v834
        %v1174 = vunpack.c.h.b16 %v834
        %v1175 = vunpack.c.l.b16 %v835
        %v1176 = vunpack.c.h.b16 %v835
        %v1177 = vunpack.c.l.b16 %v836
        %v1178 = vunpack.c.h.b16 %v836
        %v1179 = vunpack.c.l.b16 %v837
        %v1180 = vunpack.c.h.b16 %v837
        %v1181 = vunpack.c.l.b16 %v838
        %v1182 = vunpack.c.h.b16 %v838
        %v1183 = vunpack.c.l.b16 %v839
        %v1184 = vunpack.c.h.b16 %v839
        %v1185 = vunpack.c.l.b16 %v840
        %v1186 = vunpack.c.h.b16 %v840
        %v1187 = vunpack.c.l.b16 %v841
        %v1188 = vunpack.c.h.b16 %v841
        %v1189 = vunpack.c.l.b16 %v842
        %v1190 = vunpack.c.h.b16 %v842
        %v1191 = vunpack.c.l.b16 %v843
        %v1192 = vunpack.c.h.b16 %v843
        %v1193 = vunpack.c.l.b16 %v844
        %v1194 = vunpack.c.h.b16 %v844
        %v1195 = vunpack.c.l.b16 %v845
        %v1196 = vunpack.c.h.b16 %v845
        %v1197 = vunpack.c.l.b16 %v846
        %v1198 = vunpack.c.h.b16 %v846
        %v1199 = vunpack.c.l.b16 %v847
        %v1200 = vunpack.c.h.b16 %v847
        %v1201 = vunpack.c.l.b16 %v848
        %v1202 = vunpack.c.h.b16 %v848
        %v1203 = vunpack.c.l.b16 %v849
        %v1204 = vunpack.c.h.b16 %v849
        %v1205 = vunpack.c.l.b16 %v850
        %v1206 = vunpack.c.h.b16 %v850
        %v1207 = vunpack.c.l.b16 %v851
        %v1208 = vunpack.c.h.b16 %v851
        %v1209 = vunpack.c.l.b16 %v852
        %v1210 = vunpack.c.h.b16 %v852
        %v1211 = vunpack.c.l.b16 %v853
        %v1212 = vunpack.c.h.b16 %v853
        %v1213 = vunpack.c.l.b16 %v854
        %v1214 = vunpack.c.h.b16 %v854
        %v1215 = vunpack.c.l.b16 %v855
        %v1216 = vunpack.c.h.b16 %v855
        %v1217 = vunpack.c.l.b16 %v856
        %v1218 = vunpack.c.h.b16 %v856
        %v1219 = vunpack.c.l.b16 %v857
        %v1220 = vunpack.c.h.b16 %v857
        %v1221 = vunpack.c.l.b16 %v858
        %v1222 = vunpack.c.h.b16 %v858
        %v1223 = vunpack.c.l.b16 %v859
        %v1224 = vunpack.c.h.b16 %v859
        %v1225 = vunpack.c.l.b16 %v860
        %v1226 = vunpack.c.h.b16 %v860
        %v1227 = vunpack.c.l.b16 %v861
        %v1228 = vunpack.c.h.b16 %v861
        %v1229 = vpack.c.b16 %v1007, %v1005
        %v1230 = vpack.c.b16 %v1008, %v1006
        %v1231 = vpack.c.b16 %v1011, %v1009
        %v1232 = vpack.c.b16 %v1012, %v1010
        %v1233 = vpack.c.b16 %v1015, %v1013
        %v1234 = vpack.c.b16 %v1016, %v1014
        %v1235 = vpack.c.b16 %v1019, %v1017
        %v1236 = vpack.c.b16 %v1020, %v1018
        %v1237 = vpack.c.b16 %v1023, %v1021
        %v1238 = vpack.c.b16 %v1024, %v1022
        %v1239 = vpack.c.b16 %v1027, %v1025
        %v1240 = vpack.c.b16 %v1028, %v1026
        %v1241 = vpack.c.b16 %v1031, %v1029
        %v1242 = vpack.c.b16 %v1032, %v1030
        %v1243 = vpack.c.b16 %v1035, %v1033
        %v1244 = vpack.c.b16 %v1036, %v1034
        %v1245 = vpack.c.b16 %v1039, %v1037
        %v1246 = vpack.c.b16 %v1040, %v1038
        %v1247 = vpack.c.b16 %v1043, %v1041
        %v1248 = vpack.c.b16 %v1044, %v1042
        %v1249 = vpack.c.b16 %v1047, %v1045
        %v1250 = vpack.c.b16 %v1048, %v1046
        %v1251 = vpack.c.b16 %v1051, %v1049
        %v1252 = vpack.c.b16 %v1052, %v1050
        %v1253 = vpack.c.b16 %v1055, %v1053
        %v1254 = vpack.c.b16 %v1056, %v1054
        %v1255 = vpack.c.b16 %v1059, %v1057
        %v1256 = vpack.c.b16 %v1060, %v1058
        %v1257 = vpack.c.b16 %v1063, %v1061
        %v1258 = vpack.c.b16 %v1064, %v1062
        %v1259 = vpack.c.b16 %v1067, %v1065
        %v1260 = vpack.c.b16 %v1068, %v1066
        %v1261 = vpack.c.b16 %v1071, %v1069
        %v1262 = vpack.c.b16 %v1072, %v1070
        %v1263 = vpack.c.b16 %v1075, %v1073
        %v1264 = vpack.c.b16 %v1076, %v1074
        %v1265 = vpack.c.b16 %v1079, %v1077
        %v1266 = vpack.c.b16 %v1080, %v1078
        %v1267 = vpack.c.b16 %v1083, %v1081
        %v1268 = vpack.c.b16 %v1084, %v1082
        %v1269 = vpack.c.b16 %v1087, %v1085
        %v1270 = vpack.c.b16 %v1088, %v1086
        %v1271 = vpack.c.b16 %v1091, %v1089
        %v1272 = vpack.c.b16 %v1092, %v1090
        %v1273 = vpack.c.b16 %v1095, %v1093
        %v1274 = vpack.c.b16 %v1096, %v1094
        %v1275 = vpack.c.b16 %v1099, %v1097
        %v1276 = vpack.c.b16 %v1100, %v1098
        %v1277 = vpack.c.b16 %v1103, %v1101
        %v1278 = vpack.c.b16 %v1104, %v1102
        %v1279 = vpack.c.b16 %v1107, %v1105
        %v1280 = vpack.c.b16 %v1108, %v1106
        %v1281 = vpack.c.b16 %v1111, %v1109
        %v1282 = vpack.c.b16 %v1112, %v1110
        %v1283 = vpack.c.b16 %v1115, %v1113
        %v1284 = vpack.c.b16 %v1116, %v1114
        %v1285 = vpack.c.b16 %v1119, %v1117
        %v1286 = vpack.c.b16 %v1120, %v1118
        %v1287 = vpack.c.b16 %v1123, %v1121
        %v1288 = vpack.c.b16 %v1124, %v1122
        %v1289 = vpack.c.b16 %v1127, %v1125
        %v1290 = vpack.c.b16 %v1128, %v1126
        %v1291 = vpack.c.b16 %v1131, %v1129
        %v1292 = vpack.c.b16 %v1132, %v1130
        %v1293 = vpack.c.b16 %v1135, %v1133
        %v1294 = vpack.c.b16 %v1136, %v1134
        %v1295 = vpack.c.b16 %v1139, %v1137
        %v1296 = vpack.c.b16 %v1140, %v1138
        %v1297 = vpack.c.b16 %v1143, %v1141
        %v1298 = vpack.c.b16 %v1144, %v1142
        %v1299 = vpack.c.b16 %v1147, %v1145
        %v1300 = vpack.c.b16 %v1148, %v1146
        %v1301 = vpack.c.b16 %v1151, %v1149
        %v1302 = vpack.c.b16 %v1152, %v1150
        %v1303 = vpack.c.b16 %v1155, %v1153
        %v1304 = vpack.c.b16 %v1156, %v1154
        %v1305 = vpack.c.b16 %v1159, %v1157
        %v1306 = vpack.c.b16 %v1160, %v1158
        %v1307 = vpack.c.b16 %v1163, %v1161
        %v1308 = vpack.c.b16 %v1164, %v1162
        %v1309 = vpack.c.b16 %v1167, %v1165
        %v1310 = vpack.c.b16 %v1168, %v1166
        %v1311 = vpack.c.b16 %v1171, %v1169
        %v1312 = vpack.c.b16 %v1172, %v1170
        %v1313 = vpack.c.b16 %v1175, %v1173
        %v1314 = vpack.c.b16 %v1176, %v1174
        %v1315 = vpack.c.b16 %v1179, %v1177
        %v1316 = vpack.c.b16 %v1180, %v1178
        %v1317 = vpack.c.b16 %v1183, %v1181
        %v1318 = vpack.c.b16 %v1184, %v1182
        %v1319 = vpack.c.b16 %v1187, %v1185
        %v1320 = vpack.c.b16 %v1188, %v1186
        %v1321 = vpack.c.b16 %v1191, %v1189
        %v1322 = vpack.c.b16 %v1192, %v1190
        %v1323 = vpack.c.b16 %v1195, %v1193
        %v1324 = vpack.c.b16 %v1196, %v1194
        %v1325 = vpack.c.b16 %v1199, %v1197
        %v1326 = vpack.c.b16 %v1200, %v1198
        %v1327 = vpack.c.b16 %v1203, %v1201
        %v1328 = vpack.c.b16 %v1204, %v1202
        %v1329 = vpack.c.b16 %v1207, %v1205
        %v1330 = vpack.c.b16 %v1208, %v1206
        %v1331 = vpack.c.b16 %v1211, %v1209
        %v1332 = vpack.c.b16 %v1212, %v1210
        %v1333 = vpack.c.b16 %v1215, %v1213
        %v1334 = vpack.c.b16 %v1216, %v1214
        %v1335 = vpack.c.b16 %v1219, %v1217
        %v1336 = vpack.c.b16 %v1220, %v1218
        %v1337 = vpack.c.b16 %v1223, %v1221
        %v1338 = vpack.c.b16 %v1224, %v1222
        %v1339 = vpack.c.b16 %v1227, %v1225
        %v1340 = vpack.c.b16 %v1228, %v1226
        %1453 = vmatprep.subr.bf16.mxu0 %v1244
        %1454 = vmatpush1.bf16.msra.mxu0 %v1243
        %1455 = vmatprep.subr.bf16.mxu0 %v1242
        %1456 = vmatpush1.bf16.msra.mxu0 %v1241
        %1457 = vmatprep.subr.bf16.mxu0 %v1240
        %1458 = vmatpush1.bf16.msra.mxu0 %v1239
        %1459 = vmatprep.subr.bf16.mxu0 %v1238
        %1460 = vmatpush1.bf16.msra.mxu0 %v1237
        %1461 = vmatprep.subr.bf16.mxu0 %v1236
        %1462 = vmatpush1.bf16.msra.mxu0 %v1235
        %1463 = vmatprep.subr.bf16.mxu0 %v1234
        %1464 = vmatpush1.bf16.msra.mxu0 %v1233
        %1465 = vmatprep.subr.bf16.mxu0 %v1232
        %1466 = vmatpush1.bf16.msra.mxu0 %v1231
        %1467 = vmatprep.subr.bf16.mxu0 %v1230
        %1468 = vmatpush1.bf16.msra.mxu0 %v1229
        %1469 = vmatprep.subr.bf16.mxu0 %v1260
        %1470 = vmatpush2.bf16.msra.mxu0 %v1259
        %1471 = vmatprep.subr.bf16.mxu0 %v1258
        %1472 = vmatpush2.bf16.msra.mxu0 %v1257
        %1473 = vmatprep.subr.bf16.mxu0 %v1256
        %1474 = vmatpush2.bf16.msra.mxu0 %v1255
        %1475 = vmatprep.subr.bf16.mxu0 %v1254
        %1476 = vmatpush2.bf16.msra.mxu0 %v1253
        %1477 = vmatprep.subr.bf16.mxu0 %v1252
        %1478 = vmatpush2.bf16.msra.mxu0 %v1251
        %1479 = vmatprep.subr.bf16.mxu0 %v1250
        %1480 = vmatpush2.bf16.msra.mxu0 %v1249
        %1481 = vmatprep.subr.bf16.mxu0 %v1248
        %1482 = vmatpush2.bf16.msra.mxu0 %v1247
        %1483 = vmatprep.subr.bf16.mxu0 %v1246
        %1484 = vmatpush2.bf16.msra.mxu0 %v1245
        %1485 = vmatprep.mubr.bf16.mxu0 %v880
        %1486 = vmatmul.mubr.bf16.gmra.mxu0 %v879
        %v1487 = vpop.f32.mrf.mxu0
        %v1488 = vadd.f32 0.0, %v1487
        %v1489 = vpop.f32.mrf.mxu0
        %v1490 = vadd.f32 0.0, %v1489
        %v1491 = vpop.f32.mrf.mxu0
        %v1492 = vpop.f32.mrf.mxu0
        %1493 = vdwg.mxu0
        %1494 = vmatprep.subr.bf16.mxu0 %v1276
        %1495 = vmatpush1.bf16.msra.mxu0 %v1275
        %1496 = vmatprep.subr.bf16.mxu0 %v1274
        %1497 = vmatpush1.bf16.msra.mxu0 %v1273
        %1498 = vmatprep.subr.bf16.mxu0 %v1272
        %1499 = vmatpush1.bf16.msra.mxu0 %v1271
        %1500 = vmatprep.subr.bf16.mxu0 %v1270
        %1501 = vmatpush1.bf16.msra.mxu0 %v1269
        %1502 = vmatprep.subr.bf16.mxu0 %v1268
        %1503 = vmatpush1.bf16.msra.mxu0 %v1267
        %1504 = vmatprep.subr.bf16.mxu0 %v1266
        %1505 = vmatpush1.bf16.msra.mxu0 %v1265
        %1506 = vmatprep.subr.bf16.mxu0 %v1264
        %1507 = vmatpush1.bf16.msra.mxu0 %v1263
        %1508 = vmatprep.subr.bf16.mxu0 %v1262
        %1509 = vmatpush1.bf16.msra.mxu0 %v1261
        %1510 = vmatprep.subr.bf16.mxu0 %v1292
        %1511 = vmatpush2.bf16.msra.mxu0 %v1291
        %1512 = vmatprep.subr.bf16.mxu0 %v1290
        %1513 = vmatpush2.bf16.msra.mxu0 %v1289
        %1514 = vmatprep.subr.bf16.mxu0 %v1288
        %1515 = vmatpush2.bf16.msra.mxu0 %v1287
        %1516 = vmatprep.subr.bf16.mxu0 %v1286
        %1517 = vmatpush2.bf16.msra.mxu0 %v1285
        %1518 = vmatprep.subr.bf16.mxu0 %v1284
        %1519 = vmatpush2.bf16.msra.mxu0 %v1283
        %1520 = vmatprep.subr.bf16.mxu0 %v1282
        %1521 = vmatpush2.bf16.msra.mxu0 %v1281
        %1522 = vmatprep.subr.bf16.mxu0 %v1280
        %1523 = vmatpush2.bf16.msra.mxu0 %v1279
        %1524 = vmatprep.subr.bf16.mxu0 %v1278
        %1525 = vmatpush2.bf16.msra.mxu0 %v1277
        %1526 = vmatprep.mubr.bf16.mxu0 %v882
        %1527 = vmatmul.mubr.bf16.gmra.mxu0 %v881
        %v1528 = vpop.f32.mrf.mxu0
        %v1529 = vadd.f32 %v1488, %v1528
        %v1530 = vpop.f32.mrf.mxu0
        %v1531 = vadd.f32 %v1490, %v1530
        %v1532 = vpop.f32.mrf.mxu0
        %v1533 = vpop.f32.mrf.mxu0
        %1534 = vdwg.mxu0
        %1535 = vmatprep.subr.bf16.mxu0 %v1308
        %1536 = vmatpush1.bf16.msra.mxu0 %v1307
        %1537 = vmatprep.subr.bf16.mxu0 %v1306
        %1538 = vmatpush1.bf16.msra.mxu0 %v1305
        %1539 = vmatprep.subr.bf16.mxu0 %v1304
        %1540 = vmatpush1.bf16.msra.mxu0 %v1303
        %1541 = vmatprep.subr.bf16.mxu0 %v1302
        %1542 = vmatpush1.bf16.msra.mxu0 %v1301
        %1543 = vmatprep.subr.bf16.mxu0 %v1300
        %1544 = vmatpush1.bf16.msra.mxu0 %v1299
        %1545 = vmatprep.subr.bf16.mxu0 %v1298
        %1546 = vmatpush1.bf16.msra.mxu0 %v1297
        %1547 = vmatprep.subr.bf16.mxu0 %v1296
        %1548 = vmatpush1.bf16.msra.mxu0 %v1295
        %1549 = vmatprep.subr.bf16.mxu0 %v1294
        %1550 = vmatpush1.bf16.msra.mxu0 %v1293
        %1551 = vmatprep.subr.bf16.mxu0 %v1324
        %1552 = vmatpush2.bf16.msra.mxu0 %v1323
        %1553 = vmatprep.subr.bf16.mxu0 %v1322
        %1554 = vmatpush2.bf16.msra.mxu0 %v1321
        %1555 = vmatprep.subr.bf16.mxu0 %v1320
        %1556 = vmatpush2.bf16.msra.mxu0 %v1319
        %1557 = vmatprep.subr.bf16.mxu0 %v1318
        %1558 = vmatpush2.bf16.msra.mxu0 %v1317
        %1559 = vmatprep.subr.bf16.mxu0 %v1316
        %1560 = vmatpush2.bf16.msra.mxu0 %v1315
        %1561 = vmatprep.subr.bf16.mxu0 %v1314
        %1562 = vmatpush2.bf16.msra.mxu0 %v1313
        %1563 = vmatprep.subr.bf16.mxu0 %v1312
        %1564 = vmatpush2.bf16.msra.mxu0 %v1311
        %1565 = vmatprep.subr.bf16.mxu0 %v1310
        %1566 = vmatpush2.bf16.msra.mxu0 %v1309
        %1567 = vmatprep.mubr.bf16.mxu0 %v884
        %1568 = vmatmul.mubr.bf16.gmra.mxu0 %v883
        %v1569 = vpop.f32.mrf.mxu0
        %v1570 = vadd.f32 %v1529, %v1569
        %v1571 = vpop.f32.mrf.mxu0
        %v1572 = vadd.f32 %v1531, %v1571
        %v1573 = vpop.f32.mrf.mxu0
        %v1574 = vpop.f32.mrf.mxu0
        %1575 = vdwg.mxu0
        %1576 = vmatprep.subr.bf16.mxu0 %v1340
        %1577 = vmatpush1.bf16.msra.mxu0 %v1339
        %1578 = vmatprep.subr.bf16.mxu0 %v1338
        %1579 = vmatpush1.bf16.msra.mxu0 %v1337
        %1580 = vmatprep.subr.bf16.mxu0 %v1336
        %1581 = vmatpush1.bf16.msra.mxu0 %v1335
        %1582 = vmatprep.subr.bf16.mxu0 %v1334
        %1583 = vmatpush1.bf16.msra.mxu0 %v1333
        %1584 = vmatprep.subr.bf16.mxu0 %v1332
        %1585 = vmatpush1.bf16.msra.mxu0 %v1331
        %1586 = vmatprep.subr.bf16.mxu0 %v1330
        %1587 = vmatpush1.bf16.msra.mxu0 %v1329
        %1588 = vmatprep.subr.bf16.mxu0 %v1328
        %1589 = vmatpush1.bf16.msra.mxu0 %v1327
        %1590 = vmatprep.subr.bf16.mxu0 %v1326
        %1591 = vmatpush1.bf16.msra.mxu0 %v1325
        %1592 = vmatprep.subr.bf16.mxu0 0
        %1593 = vmatpush2.bf16.msra.mxu0 0
        %1594 = vmatprep.subr.bf16.mxu0 0
        %1595 = vmatpush2.bf16.msra.mxu0 0
        %1596 = vmatprep.subr.bf16.mxu0 0
        %1597 = vmatpush2.bf16.msra.mxu0 0
        %1598 = vmatprep.subr.bf16.mxu0 0
        %1599 = vmatpush2.bf16.msra.mxu0 0
        %1600 = vmatprep.subr.bf16.mxu0 0
        %1601 = vmatpush2.bf16.msra.mxu0 0
        %1602 = vmatprep.subr.bf16.mxu0 0
        %1603 = vmatpush2.bf16.msra.mxu0 0
        %1604 = vmatprep.subr.bf16.mxu0 0
        %1605 = vmatpush2.bf16.msra.mxu0 0
        %1606 = vmatprep.subr.bf16.mxu0 0
        %1607 = vmatpush2.bf16.msra.mxu0 0
        %1608 = vmatprep.mubr.bf16.mxu0 0
        %1609 = vmatmul.mubr.bf16.gmra.mxu0 %v885
        %v1610 = vpop.f32.mrf.mxu0
        %v1611 = vadd.f32 %v1570, %v1610
        %v1612 = vpop.f32.mrf.mxu0
        %v1613 = vadd.f32 %v1572, %v1612
        %v1614 = vpop.f32.mrf.mxu0
        %v1615 = vpop.f32.mrf.mxu0
        %1616 = vdwg.mxu0
        %v1617 = vadd.f32 %v862, %v1611
        %v1618 = vadd.f32 %v863, %v1613
        %1619 = vst [vmem:[#allocation2] sm:$0xff] %v1617
        %1620 = vst [vmem:[#allocation2 + $0x8] sm:$0xff] %v1618
        %p1621 = scmp.eq.s32.totalorder %s21, 3
        // Predicated region
        $region75: #{convnet_forward.6} parent=65 // pred_check
          %p1622 = pneg %p1621
        $region76: #{convnet_forward.6} parent=65 // pred_check_branch
          %1624 = sbr.rel (%p1622) target = $region78
        $region77: #{convnet_forward.6} parent=65 // pred_region
          %v1625 = vld [vmem:[#allocation2] sm:$0xff]
          %v1626 = vld [vmem:[#allocation2 + $0x8] sm:$0xff]
          %v1627 = vld [vmem:[%s731] sm:$0x3]
          %v1629 = vlaneseq
          %v1630 = vshrl.u32 %v1629, 7
          %v1631 = vsub.s32 0, %v1630
          %v1632 = vrot.slane %v1627, %v1631
          %v1633 = vlaneseq
          %v1634 = vshrl.u32 %v1633, 7
          %v1635 = vsub.s32 1, %v1634
          %v1636 = vrot.slane %v1627, %v1635
          %v1639 = vadd.f32 %v1625, %v1632
          %v1640 = vadd.f32 %v1626, %v1636
          %1641 = vst [vmem:[%s741] sm:$0xff] %v1639
          %1642 = vst [vmem:[%s741 + $0x8] sm:$0xff] %v1640
        $region78: #{convnet_forward.6} parent=65 // pred_fallthru
          _
        %s1643 = smul.u32 2, %s20
        %p1644 = scmp.lt.s32.totalorder %s19, 0
        %s1645 = scalar_select %p1644, %s19, 0
        %p1646 = scmp.lt.s32.totalorder %s1643, 7
        %s1647 = scalar_select %p1646, %s1643, 7
        %s1648 = smul.addr %s1645, 8
        %s1649 = sadd.s32 %s1647, %s1648
        %s1650 = smul.addr %s1649, 8
        %s1651 = scalar_lea.vmem %s3, %s1650
        // Predicated region
        $region79: #{convnet_forward.6} parent=65 // pred_check
          %p1652 = pneg %p135
        $region80: #{convnet_forward.6} parent=65 // pred_check_branch
          %1654 = sbr.rel (%p1652) target = $region82
        $region81: #{convnet_forward.6} parent=65 // pred_region
          %s1655 = smul.u32 2, %s20
        $region82: #{convnet_forward.6} parent=65 // pred_fallthru
          _
      $region66: #{convnet_forward.6} parent=5 // pred_fallthru
        _
      %p1656 = scmp.le.s32.totalorder 2, %s9
      // Predicated region
      $region83: #{convnet_forward.6} parent=5 // pred_check
        %p1657 = pneg %p1656
      $region84: #{convnet_forward.6} parent=5 // pred_check_branch
        %1659 = sbr.rel (%p1657) target = $region86
      $region85: #{convnet_forward.6} parent=5 // pred_region
        %s1660 = ssub.s32 %s9, 2
        // Predicated region
        $region87: #{convnet_forward.6} parent=85 // pred_check
          %p1661 = pneg %p141
        $region88: #{convnet_forward.6} parent=85 // pred_check_branch
          %1663 = sbr.rel (%p1661) target = $region90
        $region89: #{convnet_forward.6} parent=85 // pred_region
          %s1664 = smul.u32 2, %s23
          %p1665 = scmp.lt.s32.totalorder %s22, 0
          %s1666 = scalar_select %p1665, %s22, 0
          %p1667 = scmp.lt.s32.totalorder %s1664, 7
          %s1668 = scalar_select %p1667, %s1664, 7
          %s1669 = smul.addr %s1666, 8
          %s1670 = sadd.s32 %s1668, %s1669
          %s1671 = smul.addr %s1670, 8
          %s1672 = scalar_lea.vmem %s3, %s1671
        $region90: #{convnet_forward.6} parent=85 // pred_fallthru
          _
      $region86: #{convnet_forward.6} parent=5 // pred_fallthru
        _
    $region6: #{convnet_forward.6} parent=1 // loop_footer
      %s13 = sadd.s32 1, %s9
    $region7: #{convnet_forward.6} parent=1 // loop_footer_branch
      %8 = sbr.rel target = $region3
    $region8: #{convnet_forward.6} parent=1 // loop_exit
      _

// kernel: convnet_forward.7
$region0: #{convnet_forward.7}
  #allocation0 [shape = 'u32[]', space=smem, size = 0x4, offset = 0x4, fixed_abs, tag = 'smem constant byte address 0x4 - core index']
  #allocation1 [shape = 'u32[144,128]{1,0:T(1,128)}', space=vmem, size = 0x12000, scoped, tag = 'internal scratch']
  #allocation2 [shape = 'f32[1,8,128]{2,1,0:T(8,128)}', space=vmem, size = 0x1000, scoped, tag = 'scratch operand']
  %s0 = inlined_call_operand.vmem [shape: bf16[1,8,1024], index: 0, kind: input, shape index: {}]
  %s1 = inlined_call_operand.vmem [shape: bf16[1024,128], index: 1, kind: input, shape index: {}]
  %s2 = inlined_call_operand.vmem [shape: f32[1,128], index: 2, kind: input, shape index: {}]
  %s3 = inlined_call_operand.vmem [shape: f32[8,128], index: 3, kind: output, shape index: {}]
  %s4 = sld [smem:[#allocation0]]
  $region30: #{convnet_forward.7} parent=0
    _
  %s6 = ssub.s32 1, %s4
  %s7 = scalar_select 0, %s6, %s4
  // Predicated region
  $region2: #{convnet_forward.7} parent=0 // pred_check
    _
  $region3: #{convnet_forward.7} parent=0 // pred_check_branch
    %9 = sbr.rel (0) target = $region5
  $region4: #{convnet_forward.7} parent=0 // pred_region
    _
  $region5: #{convnet_forward.7} parent=0 // pred_fallthru
    _
  // Predicated region
  $region6: #{convnet_forward.7} parent=0 // pred_check
    _
  $region7: #{convnet_forward.7} parent=0 // pred_check_branch
    %11 = sbr.rel (0) target = $region9
  $region8: #{convnet_forward.7} parent=0 // pred_region
    _
  $region9: #{convnet_forward.7} parent=0 // pred_fallthru
    _
  // Predicated region
  $region10: #{convnet_forward.7} parent=0 // pred_check
    _
  $region11: #{convnet_forward.7} parent=0 // pred_check_branch
    %13 = sbr.rel (0) target = $region13
  $region12: #{convnet_forward.7} parent=0 // pred_region
    _
  $region13: #{convnet_forward.7} parent=0 // pred_fallthru
    _
  %p15 = scmp.eq.s32.totalorder 0, 0
  // Predicated region
  $region14: #{convnet_forward.7} parent=0 // pred_check
    %p16 = pneg %p15
  $region15: #{convnet_forward.7} parent=0 // pred_check_branch
    %18 = sbr.rel (%p16) target = $region17
  $region16: #{convnet_forward.7} parent=0 // pred_region
    %19 = vst [vmem:[#allocation2] sm:$0xff] 0.0
  $region17: #{convnet_forward.7} parent=0 // pred_fallthru
    _
  %v20 = vld [vmem:[%s1] sm:$0xf]
  %v21 = vld [vmem:[%s1 + $0x4] sm:$0xf]
  %v22 = vld [vmem:[%s1 + $0x8] sm:$0xf]
  %v23 = vld [vmem:[%s1 + $0xc] sm:$0xf]
  %v24 = vld [vmem:[%s1 + $0x10] sm:$0xf]
  %v25 = vld [vmem:[%s1 + $0x14] sm:$0xf]
  %v26 = vld [vmem:[%s1 + $0x18] sm:$0xf]
  %v27 = vld [vmem:[%s1 + $0x1c] sm:$0xf]
  %v28 = vld [vmem:[%s1 + $0x20] sm:$0xf]
  %v29 = vld [vmem:[%s1 + $0x24] sm:$0xf]
  %v30 = vld [vmem:[%s1 + $0x28] sm:$0xf]
  %v31 = vld [vmem:[%s1 + $0x2c] sm:$0xf]
  %v32 = vld [vmem:[%s1 + $0x30] sm:$0xf]
  %v33 = vld [vmem:[%s1 + $0x34] sm:$0xf]
  %v34 = vld [vmem:[%s1 + $0x38] sm:$0xf]
  %v35 = vld [vmem:[%s1 + $0x3c] sm:$0xf]
  %v36 = vld [vmem:[%s1 + $0x40] sm:$0xf]
  %v37 = vld [vmem:[%s1 + $0x44] sm:$0xf]
  %v38 = vld [vmem:[%s1 + $0x48] sm:$0xf]
  %v39 = vld [vmem:[%s1 + $0x4c] sm:$0xf]
  %v40 = vld [vmem:[%s1 + $0x50] sm:$0xf]
  %v41 = vld [vmem:[%s1 + $0x54] sm:$0xf]
  %v42 = vld [vmem:[%s1 + $0x58] sm:$0xf]
  %v43 = vld [vmem:[%s1 + $0x5c] sm:$0xf]
  %v44 = vld [vmem:[%s1 + $0x60] sm:$0xf]
  %v45 = vld [vmem:[%s1 + $0x64] sm:$0xf]
  %v46 = vld [vmem:[%s1 + $0x68] sm:$0xf]
  %v47 = vld [vmem:[%s1 + $0x6c] sm:$0xf]
  %v48 = vld [vmem:[%s1 + $0x70] sm:$0xf]
  %v49 = vld [vmem:[%s1 + $0x74] sm:$0xf]
  %v50 = vld [vmem:[%s1 + $0x78] sm:$0xf]
  %v51 = vld [vmem:[%s1 + $0x7c] sm:$0xf]
  %v52 = vld [vmem:[%s1 + $0x80] sm:$0xf]
  %v53 = vld [vmem:[%s1 + $0x84] sm:$0xf]
  %v54 = vld [vmem:[%s1 + $0x88] sm:$0xf]
  %v55 = vld [vmem:[%s1 + $0x8c] sm:$0xf]
  %v56 = vld [vmem:[%s1 + $0x90] sm:$0xf]
  %v57 = vld [vmem:[%s1 + $0x94] sm:$0xf]
  %v58 = vld [vmem:[%s1 + $0x98] sm:$0xf]
  %v59 = vld [vmem:[%s1 + $0x9c] sm:$0xf]
  %v60 = vld [vmem:[%s1 + $0xa0] sm:$0xf]
  %v61 = vld [vmem:[%s1 + $0xa4] sm:$0xf]
  %v62 = vld [vmem:[%s1 + $0xa8] sm:$0xf]
  %v63 = vld [vmem:[%s1 + $0xac] sm:$0xf]
  %v64 = vld [vmem:[%s1 + $0xb0] sm:$0xf]
  %v65 = vld [vmem:[%s1 + $0xb4] sm:$0xf]
  %v66 = vld [vmem:[%s1 + $0xb8] sm:$0xf]
  %v67 = vld [vmem:[%s1 + $0xbc] sm:$0xf]
  %v68 = vld [vmem:[%s1 + $0xc0] sm:$0xf]
  %v69 = vld [vmem:[%s1 + $0xc4] sm:$0xf]
  %v70 = vld [vmem:[%s1 + $0xc8] sm:$0xf]
  %v71 = vld [vmem:[%s1 + $0xcc] sm:$0xf]
  %v72 = vld [vmem:[%s1 + $0xd0] sm:$0xf]
  %v73 = vld [vmem:[%s1 + $0xd4] sm:$0xf]
  %v74 = vld [vmem:[%s1 + $0xd8] sm:$0xf]
  %v75 = vld [vmem:[%s1 + $0xdc] sm:$0xf]
  %v76 = vld [vmem:[%s1 + $0xe0] sm:$0xf]
  %v77 = vld [vmem:[%s1 + $0xe4] sm:$0xf]
  %v78 = vld [vmem:[%s1 + $0xe8] sm:$0xf]
  %v79 = vld [vmem:[%s1 + $0xec] sm:$0xf]
  %v80 = vld [vmem:[%s1 + $0xf0] sm:$0xf]
  %v81 = vld [vmem:[%s1 + $0xf4] sm:$0xf]
  %v82 = vld [vmem:[%s1 + $0xf8] sm:$0xf]
  %v83 = vld [vmem:[%s1 + $0xfc] sm:$0xf]
  %v84 = vld [vmem:[%s1 + $0x100] sm:$0xf]
  %v85 = vld [vmem:[%s1 + $0x104] sm:$0xf]
  %v86 = vld [vmem:[%s1 + $0x108] sm:$0xf]
  %v87 = vld [vmem:[%s1 + $0x10c] sm:$0xf]
  %v88 = vld [vmem:[%s1 + $0x110] sm:$0xf]
  %v89 = vld [vmem:[%s1 + $0x114] sm:$0xf]
  %v90 = vld [vmem:[%s1 + $0x118] sm:$0xf]
  %v91 = vld [vmem:[%s1 + $0x11c] sm:$0xf]
  %v92 = vld [vmem:[%s1 + $0x120] sm:$0xf]
  %v93 = vld [vmem:[%s1 + $0x124] sm:$0xf]
  %v94 = vld [vmem:[%s1 + $0x128] sm:$0xf]
  %v95 = vld [vmem:[%s1 + $0x12c] sm:$0xf]
  %v96 = vld [vmem:[%s1 + $0x130] sm:$0xf]
  %v97 = vld [vmem:[%s1 + $0x134] sm:$0xf]
  %v98 = vld [vmem:[%s1 + $0x138] sm:$0xf]
  %v99 = vld [vmem:[%s1 + $0x13c] sm:$0xf]
  %v100 = vld [vmem:[%s1 + $0x140] sm:$0xf]
  %v101 = vld [vmem:[%s1 + $0x144] sm:$0xf]
  %v102 = vld [vmem:[%s1 + $0x148] sm:$0xf]
  %v103 = vld [vmem:[%s1 + $0x14c] sm:$0xf]
  %v104 = vld [vmem:[%s1 + $0x150] sm:$0xf]
  %v105 = vld [vmem:[%s1 + $0x154] sm:$0xf]
  %v106 = vld [vmem:[%s1 + $0x158] sm:$0xf]
  %v107 = vld [vmem:[%s1 + $0x15c] sm:$0xf]
  %v108 = vld [vmem:[%s1 + $0x160] sm:$0xf]
  %v109 = vld [vmem:[%s1 + $0x164] sm:$0xf]
  %v110 = vld [vmem:[%s1 + $0x168] sm:$0xf]
  %v111 = vld [vmem:[%s1 + $0x16c] sm:$0xf]
  %v112 = vld [vmem:[%s1 + $0x170] sm:$0xf]
  %v113 = vld [vmem:[%s1 + $0x174] sm:$0xf]
  %v114 = vld [vmem:[%s1 + $0x178] sm:$0xf]
  %v115 = vld [vmem:[%s1 + $0x17c] sm:$0xf]
  %v116 = vld [vmem:[%s1 + $0x180] sm:$0xf]
  %v117 = vld [vmem:[%s1 + $0x184] sm:$0xf]
  %v118 = vld [vmem:[%s1 + $0x188] sm:$0xf]
  %v119 = vld [vmem:[%s1 + $0x18c] sm:$0xf]
  %v120 = vld [vmem:[%s1 + $0x190] sm:$0xf]
  %v121 = vld [vmem:[%s1 + $0x194] sm:$0xf]
  %v122 = vld [vmem:[%s1 + $0x198] sm:$0xf]
  %v123 = vld [vmem:[%s1 + $0x19c] sm:$0xf]
  %v124 = vld [vmem:[%s1 + $0x1a0] sm:$0xf]
  %v125 = vld [vmem:[%s1 + $0x1a4] sm:$0xf]
  %v126 = vld [vmem:[%s1 + $0x1a8] sm:$0xf]
  %v127 = vld [vmem:[%s1 + $0x1ac] sm:$0xf]
  %v128 = vld [vmem:[%s1 + $0x1b0] sm:$0xf]
  %v129 = vld [vmem:[%s1 + $0x1b4] sm:$0xf]
  %v130 = vld [vmem:[%s1 + $0x1b8] sm:$0xf]
  %v131 = vld [vmem:[%s1 + $0x1bc] sm:$0xf]
  %v132 = vld [vmem:[%s1 + $0x1c0] sm:$0xf]
  %v133 = vld [vmem:[%s1 + $0x1c4] sm:$0xf]
  %v134 = vld [vmem:[%s1 + $0x1c8] sm:$0xf]
  %v135 = vld [vmem:[%s1 + $0x1cc] sm:$0xf]
  %v136 = vld [vmem:[%s1 + $0x1d0] sm:$0xf]
  %v137 = vld [vmem:[%s1 + $0x1d4] sm:$0xf]
  %v138 = vld [vmem:[%s1 + $0x1d8] sm:$0xf]
  %v139 = vld [vmem:[%s1 + $0x1dc] sm:$0xf]
  %v140 = vld [vmem:[%s1 + $0x1e0] sm:$0xf]
  %v141 = vld [vmem:[%s1 + $0x1e4] sm:$0xf]
  %v142 = vld [vmem:[%s1 + $0x1e8] sm:$0xf]
  %v143 = vld [vmem:[%s1 + $0x1ec] sm:$0xf]
  %v144 = vld [vmem:[%s1 + $0x1f0] sm:$0xf]
  %v145 = vld [vmem:[%s1 + $0x1f4] sm:$0xf]
  %v146 = vld [vmem:[%s1 + $0x1f8] sm:$0xf]
  %v147 = vld [vmem:[%s1 + $0x1fc] sm:$0xf]
  %v148 = vld [vmem:[#allocation2] sm:$0xff]
  %v149 = vld [vmem:[%s0] sm:$0xff]
  %v150 = vld [vmem:[%s0 + $0x8] sm:$0xff]
  %v151 = vld [vmem:[%s0 + $0x10] sm:$0xff]
  %v152 = vld [vmem:[%s0 + $0x18] sm:$0xff]
  %v157 = vunpack.c.l.b16 %v149
  %v158 = vunpack.c.h.b16 %v149
  %v159 = vunpack.c.l.b16 %v150
  %v160 = vunpack.c.h.b16 %v150
  %v161 = vunpack.c.l.b16 %v151
  %v162 = vunpack.c.h.b16 %v151
  %v163 = vunpack.c.l.b16 %v152
  %v164 = vunpack.c.h.b16 %v152
  %v165 = vpack.c.b16 %v157, %v157
  %v166 = vpack.c.b16 %v158, %v158
  %v167 = vpack.c.b16 %v159, %v159
  %v168 = vpack.c.b16 %v160, %v160
  %v169 = vpack.c.b16 %v161, %v161
  %v170 = vpack.c.b16 %v162, %v162
  %v171 = vpack.c.b16 %v163, %v163
  %v172 = vpack.c.b16 %v164, %v164
  %v309 = vunpack.c.l.b16 %v20
  %v310 = vunpack.c.l.b16 %v21
  %v311 = vunpack.c.l.b16 %v22
  %v312 = vunpack.c.l.b16 %v23
  %v313 = vunpack.c.l.b16 %v24
  %v314 = vunpack.c.l.b16 %v25
  %v315 = vunpack.c.l.b16 %v26
  %v316 = vunpack.c.l.b16 %v27
  %v317 = vunpack.c.l.b16 %v28
  %v318 = vunpack.c.l.b16 %v29
  %v319 = vunpack.c.l.b16 %v30
  %v320 = vunpack.c.l.b16 %v31
  %v321 = vunpack.c.l.b16 %v32
  %v322 = vunpack.c.l.b16 %v33
  %v323 = vunpack.c.l.b16 %v34
  %v324 = vunpack.c.l.b16 %v35
  %v325 = vunpack.c.l.b16 %v36
  %v326 = vunpack.c.l.b16 %v37
  %v327 = vunpack.c.l.b16 %v38
  %v328 = vunpack.c.l.b16 %v39
  %v329 = vunpack.c.l.b16 %v40
  %v330 = vunpack.c.l.b16 %v41
  %v331 = vunpack.c.l.b16 %v42
  %v332 = vunpack.c.l.b16 %v43
  %v333 = vunpack.c.l.b16 %v44
  %v334 = vunpack.c.l.b16 %v45
  %v335 = vunpack.c.l.b16 %v46
  %v336 = vunpack.c.l.b16 %v47
  %v337 = vunpack.c.l.b16 %v48
  %v338 = vunpack.c.l.b16 %v49
  %v339 = vunpack.c.l.b16 %v50
  %v340 = vunpack.c.l.b16 %v51
  %v341 = vunpack.c.l.b16 %v52
  %v342 = vunpack.c.l.b16 %v53
  %v343 = vunpack.c.l.b16 %v54
  %v344 = vunpack.c.l.b16 %v55
  %v345 = vunpack.c.l.b16 %v56
  %v346 = vunpack.c.l.b16 %v57
  %v347 = vunpack.c.l.b16 %v58
  %v348 = vunpack.c.l.b16 %v59
  %v349 = vunpack.c.l.b16 %v60
  %v350 = vunpack.c.l.b16 %v61
  %v351 = vunpack.c.l.b16 %v62
  %v352 = vunpack.c.l.b16 %v63
  %v353 = vunpack.c.l.b16 %v64
  %v354 = vunpack.c.l.b16 %v65
  %v355 = vunpack.c.l.b16 %v66
  %v356 = vunpack.c.l.b16 %v67
  %v357 = vunpack.c.l.b16 %v68
  %v358 = vunpack.c.l.b16 %v69
  %v359 = vunpack.c.l.b16 %v70
  %v360 = vunpack.c.l.b16 %v71
  %v361 = vunpack.c.l.b16 %v72
  %v362 = vunpack.c.l.b16 %v73
  %v363 = vunpack.c.l.b16 %v74
  %v364 = vunpack.c.l.b16 %v75
  %v365 = vunpack.c.l.b16 %v76
  %v366 = vunpack.c.l.b16 %v77
  %v367 = vunpack.c.l.b16 %v78
  %v368 = vunpack.c.l.b16 %v79
  %v369 = vunpack.c.l.b16 %v80
  %v370 = vunpack.c.l.b16 %v81
  %v371 = vunpack.c.l.b16 %v82
  %v372 = vunpack.c.l.b16 %v83
  %v373 = vunpack.c.l.b16 %v84
  %v374 = vunpack.c.l.b16 %v85
  %v375 = vunpack.c.l.b16 %v86
  %v376 = vunpack.c.l.b16 %v87
  %v377 = vunpack.c.l.b16 %v88
  %v378 = vunpack.c.l.b16 %v89
  %v379 = vunpack.c.l.b16 %v90
  %v380 = vunpack.c.l.b16 %v91
  %v381 = vunpack.c.l.b16 %v92
  %v382 = vunpack.c.l.b16 %v93
  %v383 = vunpack.c.l.b16 %v94
  %v384 = vunpack.c.l.b16 %v95
  %v385 = vunpack.c.l.b16 %v96
  %v386 = vunpack.c.l.b16 %v97
  %v387 = vunpack.c.l.b16 %v98
  %v388 = vunpack.c.l.b16 %v99
  %v389 = vunpack.c.l.b16 %v100
  %v390 = vunpack.c.l.b16 %v101
  %v391 = vunpack.c.l.b16 %v102
  %v392 = vunpack.c.l.b16 %v103
  %v393 = vunpack.c.l.b16 %v104
  %v394 = vunpack.c.l.b16 %v105
  %v395 = vunpack.c.l.b16 %v106
  %v396 = vunpack.c.l.b16 %v107
  %v397 = vunpack.c.l.b16 %v108
  %v398 = vunpack.c.l.b16 %v109
  %v399 = vunpack.c.l.b16 %v110
  %v400 = vunpack.c.l.b16 %v111
  %v401 = vunpack.c.l.b16 %v112
  %v402 = vunpack.c.l.b16 %v113
  %v403 = vunpack.c.l.b16 %v114
  %v404 = vunpack.c.l.b16 %v115
  %v405 = vunpack.c.l.b16 %v116
  %v406 = vunpack.c.l.b16 %v117
  %v407 = vunpack.c.l.b16 %v118
  %v408 = vunpack.c.l.b16 %v119
  %v409 = vunpack.c.l.b16 %v120
  %v410 = vunpack.c.l.b16 %v121
  %v411 = vunpack.c.l.b16 %v122
  %v412 = vunpack.c.l.b16 %v123
  %v413 = vunpack.c.l.b16 %v124
  %v414 = vunpack.c.l.b16 %v125
  %v415 = vunpack.c.l.b16 %v126
  %v416 = vunpack.c.l.b16 %v127
  %v417 = vunpack.c.l.b16 %v128
  %v418 = vunpack.c.l.b16 %v129
  %v419 = vunpack.c.l.b16 %v130
  %v420 = vunpack.c.l.b16 %v131
  %v421 = vunpack.c.l.b16 %v132
  %v422 = vunpack.c.l.b16 %v133
  %v423 = vunpack.c.l.b16 %v134
  %v424 = vunpack.c.l.b16 %v135
  %v425 = vunpack.c.l.b16 %v136
  %v426 = vunpack.c.l.b16 %v137
  %v427 = vunpack.c.l.b16 %v138
  %v428 = vunpack.c.l.b16 %v139
  %v429 = vunpack.c.l.b16 %v140
  %v430 = vunpack.c.l.b16 %v141
  %v431 = vunpack.c.l.b16 %v142
  %v432 = vunpack.c.l.b16 %v143
  %v433 = vunpack.c.l.b16 %v144
  %v434 = vunpack.c.l.b16 %v145
  %v435 = vunpack.c.l.b16 %v146
  %v436 = vunpack.c.l.b16 %v147
  %v437 = vpack.c.b16 %v310, %v309
  %v438 = vpack.c.b16 %v312, %v311
  %v439 = vpack.c.b16 %v314, %v313
  %v440 = vpack.c.b16 %v316, %v315
  %v441 = vpack.c.b16 %v318, %v317
  %v442 = vpack.c.b16 %v320, %v319
  %v443 = vpack.c.b16 %v322, %v321
  %v444 = vpack.c.b16 %v324, %v323
  %v445 = vpack.c.b16 %v326, %v325
  %v446 = vpack.c.b16 %v328, %v327
  %v447 = vpack.c.b16 %v330, %v329
  %v448 = vpack.c.b16 %v332, %v331
  %v449 = vpack.c.b16 %v334, %v333
  %v450 = vpack.c.b16 %v336, %v335
  %v451 = vpack.c.b16 %v338, %v337
  %v452 = vpack.c.b16 %v340, %v339
  %v453 = vpack.c.b16 %v342, %v341
  %v454 = vpack.c.b16 %v344, %v343
  %v455 = vpack.c.b16 %v346, %v345
  %v456 = vpack.c.b16 %v348, %v347
  %v457 = vpack.c.b16 %v350, %v349
  %v458 = vpack.c.b16 %v352, %v351
  %v459 = vpack.c.b16 %v354, %v353
  %v460 = vpack.c.b16 %v356, %v355
  %v461 = vpack.c.b16 %v358, %v357
  %v462 = vpack.c.b16 %v360, %v359
  %v463 = vpack.c.b16 %v362, %v361
  %v464 = vpack.c.b16 %v364, %v363
  %v465 = vpack.c.b16 %v366, %v365
  %v466 = vpack.c.b16 %v368, %v367
  %v467 = vpack.c.b16 %v370, %v369
  %v468 = vpack.c.b16 %v372, %v371
  %v469 = vpack.c.b16 %v374, %v373
  %v470 = vpack.c.b16 %v376, %v375
  %v471 = vpack.c.b16 %v378, %v377
  %v472 = vpack.c.b16 %v380, %v379
  %v473 = vpack.c.b16 %v382, %v381
  %v474 = vpack.c.b16 %v384, %v383
  %v475 = vpack.c.b16 %v386, %v385
  %v476 = vpack.c.b16 %v388, %v387
  %v477 = vpack.c.b16 %v390, %v389
  %v478 = vpack.c.b16 %v392, %v391
  %v479 = vpack.c.b16 %v394, %v393
  %v480 = vpack.c.b16 %v396, %v395
  %v481 = vpack.c.b16 %v398, %v397
  %v482 = vpack.c.b16 %v400, %v399
  %v483 = vpack.c.b16 %v402, %v401
  %v484 = vpack.c.b16 %v404, %v403
  %v485 = vpack.c.b16 %v406, %v405
  %v486 = vpack.c.b16 %v408, %v407
  %v487 = vpack.c.b16 %v410, %v409
  %v488 = vpack.c.b16 %v412, %v411
  %v489 = vpack.c.b16 %v414, %v413
  %v490 = vpack.c.b16 %v416, %v415
  %v491 = vpack.c.b16 %v418, %v417
  %v492 = vpack.c.b16 %v420, %v419
  %v493 = vpack.c.b16 %v422, %v421
  %v494 = vpack.c.b16 %v424, %v423
  %v495 = vpack.c.b16 %v426, %v425
  %v496 = vpack.c.b16 %v428, %v427
  %v497 = vpack.c.b16 %v430, %v429
  %v498 = vpack.c.b16 %v432, %v431
  %v499 = vpack.c.b16 %v434, %v433
  %v500 = vpack.c.b16 %v436, %v435
  %565 = vmatprep.subr.bf16.mxu0 0
  %566 = vmatpush1.bf16.msra.mxu0 %v444
  %567 = vmatprep.subr.bf16.mxu0 0
  %568 = vmatpush1.bf16.msra.mxu0 %v443
  %569 = vmatprep.subr.bf16.mxu0 0
  %570 = vmatpush1.bf16.msra.mxu0 %v442
  %571 = vmatprep.subr.bf16.mxu0 0
  %572 = vmatpush1.bf16.msra.mxu0 %v441
  %573 = vmatprep.subr.bf16.mxu0 0
  %574 = vmatpush1.bf16.msra.mxu0 %v440
  %575 = vmatprep.subr.bf16.mxu0 0
  %576 = vmatpush1.bf16.msra.mxu0 %v439
  %577 = vmatprep.subr.bf16.mxu0 0
  %578 = vmatpush1.bf16.msra.mxu0 %v438
  %579 = vmatprep.subr.bf16.mxu0 0
  %580 = vmatpush1.bf16.msra.mxu0 %v437
  %581 = vmatprep.subr.bf16.mxu0 0
  %582 = vmatpush2.bf16.msra.mxu0 %v452
  %583 = vmatprep.subr.bf16.mxu0 0
  %584 = vmatpush2.bf16.msra.mxu0 %v451
  %585 = vmatprep.subr.bf16.mxu0 0
  %586 = vmatpush2.bf16.msra.mxu0 %v450
  %587 = vmatprep.subr.bf16.mxu0 0
  %588 = vmatpush2.bf16.msra.mxu0 %v449
  %589 = vmatprep.subr.bf16.mxu0 0
  %590 = vmatpush2.bf16.msra.mxu0 %v448
  %591 = vmatprep.subr.bf16.mxu0 0
  %592 = vmatpush2.bf16.msra.mxu0 %v447
  %593 = vmatprep.subr.bf16.mxu0 0
  %594 = vmatpush2.bf16.msra.mxu0 %v446
  %595 = vmatprep.subr.bf16.mxu0 0
  %596 = vmatpush2.bf16.msra.mxu0 %v445
  %597 = vmatprep.mubr.bf16.mxu0 %v166
  %598 = vmatmul.mubr.bf16.gmra.mxu0 %v165
  %v599 = vpop.f32.mrf.mxu0
  %v600 = vadd.f32 0.0, %v599
  %v601 = vpop.f32.mrf.mxu0
  %v602 = vpop.f32.mrf.mxu0
  %v603 = vpop.f32.mrf.mxu0
  %604 = vdwg.mxu0
  %605 = vmatprep.subr.bf16.mxu0 0
  %606 = vmatpush1.bf16.msra.mxu0 %v460
  %607 = vmatprep.subr.bf16.mxu0 0
  %608 = vmatpush1.bf16.msra.mxu0 %v459
  %609 = vmatprep.subr.bf16.mxu0 0
  %610 = vmatpush1.bf16.msra.mxu0 %v458
  %611 = vmatprep.subr.bf16.mxu0 0
  %612 = vmatpush1.bf16.msra.mxu0 %v457
  %613 = vmatprep.subr.bf16.mxu0 0
  %614 = vmatpush1.bf16.msra.mxu0 %v456
  %615 = vmatprep.subr.bf16.mxu0 0
  %616 = vmatpush1.bf16.msra.mxu0 %v455
  %617 = vmatprep.subr.bf16.mxu0 0
  %618 = vmatpush1.bf16.msra.mxu0 %v454
  %619 = vmatprep.subr.bf16.mxu0 0
  %620 = vmatpush1.bf16.msra.mxu0 %v453
  %621 = vmatprep.subr.bf16.mxu0 0
  %622 = vmatpush2.bf16.msra.mxu0 %v468
  %623 = vmatprep.subr.bf16.mxu0 0
  %624 = vmatpush2.bf16.msra.mxu0 %v467
  %625 = vmatprep.subr.bf16.mxu0 0
  %626 = vmatpush2.bf16.msra.mxu0 %v466
  %627 = vmatprep.subr.bf16.mxu0 0
  %628 = vmatpush2.bf16.msra.mxu0 %v465
  %629 = vmatprep.subr.bf16.mxu0 0
  %630 = vmatpush2.bf16.msra.mxu0 %v464
  %631 = vmatprep.subr.bf16.mxu0 0
  %632 = vmatpush2.bf16.msra.mxu0 %v463
  %633 = vmatprep.subr.bf16.mxu0 0
  %634 = vmatpush2.bf16.msra.mxu0 %v462
  %635 = vmatprep.subr.bf16.mxu0 0
  %636 = vmatpush2.bf16.msra.mxu0 %v461
  %637 = vmatprep.mubr.bf16.mxu0 %v168
  %638 = vmatmul.mubr.bf16.gmra.mxu0 %v167
  %v639 = vpop.f32.mrf.mxu0
  %v640 = vadd.f32 %v600, %v639
  %v641 = vpop.f32.mrf.mxu0
  %v642 = vpop.f32.mrf.mxu0
  %v643 = vpop.f32.mrf.mxu0
  %644 = vdwg.mxu0
  %645 = vmatprep.subr.bf16.mxu0 0
  %646 = vmatpush1.bf16.msra.mxu0 %v476
  %647 = vmatprep.subr.bf16.mxu0 0
  %648 = vmatpush1.bf16.msra.mxu0 %v475
  %649 = vmatprep.subr.bf16.mxu0 0
  %650 = vmatpush1.bf16.msra.mxu0 %v474
  %651 = vmatprep.subr.bf16.mxu0 0
  %652 = vmatpush1.bf16.msra.mxu0 %v473
  %653 = vmatprep.subr.bf16.mxu0 0
  %654 = vmatpush1.bf16.msra.mxu0 %v472
  %655 = vmatprep.subr.bf16.mxu0 0
  %656 = vmatpush1.bf16.msra.mxu0 %v471
  %657 = vmatprep.subr.bf16.mxu0 0
  %658 = vmatpush1.bf16.msra.mxu0 %v470
  %659 = vmatprep.subr.bf16.mxu0 0
  %660 = vmatpush1.bf16.msra.mxu0 %v469
  %661 = vmatprep.subr.bf16.mxu0 0
  %662 = vmatpush2.bf16.msra.mxu0 %v484
  %663 = vmatprep.subr.bf16.mxu0 0
  %664 = vmatpush2.bf16.msra.mxu0 %v483
  %665 = vmatprep.subr.bf16.mxu0 0
  %666 = vmatpush2.bf16.msra.mxu0 %v482
  %667 = vmatprep.subr.bf16.mxu0 0
  %668 = vmatpush2.bf16.msra.mxu0 %v481
  %669 = vmatprep.subr.bf16.mxu0 0
  %670 = vmatpush2.bf16.msra.mxu0 %v480
  %671 = vmatprep.subr.bf16.mxu0 0
  %672 = vmatpush2.bf16.msra.mxu0 %v479
  %673 = vmatprep.subr.bf16.mxu0 0
  %674 = vmatpush2.bf16.msra.mxu0 %v478
  %675 = vmatprep.subr.bf16.mxu0 0
  %676 = vmatpush2.bf16.msra.mxu0 %v477
  %677 = vmatprep.mubr.bf16.mxu0 %v170
  %678 = vmatmul.mubr.bf16.gmra.mxu0 %v169
  %v679 = vpop.f32.mrf.mxu0
  %v680 = vadd.f32 %v640, %v679
  %v681 = vpop.f32.mrf.mxu0
  %v682 = vpop.f32.mrf.mxu0
  %v683 = vpop.f32.mrf.mxu0
  %684 = vdwg.mxu0
  %685 = vmatprep.subr.bf16.mxu0 0
  %686 = vmatpush1.bf16.msra.mxu0 %v492
  %687 = vmatprep.subr.bf16.mxu0 0
  %688 = vmatpush1.bf16.msra.mxu0 %v491
  %689 = vmatprep.subr.bf16.mxu0 0
  %690 = vmatpush1.bf16.msra.mxu0 %v490
  %691 = vmatprep.subr.bf16.mxu0 0
  %692 = vmatpush1.bf16.msra.mxu0 %v489
  %693 = vmatprep.subr.bf16.mxu0 0
  %694 = vmatpush1.bf16.msra.mxu0 %v488
  %695 = vmatprep.subr.bf16.mxu0 0
  %696 = vmatpush1.bf16.msra.mxu0 %v487
  %697 = vmatprep.subr.bf16.mxu0 0
  %698 = vmatpush1.bf16.msra.mxu0 %v486
  %699 = vmatprep.subr.bf16.mxu0 0
  %700 = vmatpush1.bf16.msra.mxu0 %v485
  %701 = vmatprep.subr.bf16.mxu0 0
  %702 = vmatpush2.bf16.msra.mxu0 %v500
  %703 = vmatprep.subr.bf16.mxu0 0
  %704 = vmatpush2.bf16.msra.mxu0 %v499
  %705 = vmatprep.subr.bf16.mxu0 0
  %706 = vmatpush2.bf16.msra.mxu0 %v498
  %707 = vmatprep.subr.bf16.mxu0 0
  %708 = vmatpush2.bf16.msra.mxu0 %v497
  %709 = vmatprep.subr.bf16.mxu0 0
  %710 = vmatpush2.bf16.msra.mxu0 %v496
  %711 = vmatprep.subr.bf16.mxu0 0
  %712 = vmatpush2.bf16.msra.mxu0 %v495
  %713 = vmatprep.subr.bf16.mxu0 0
  %714 = vmatpush2.bf16.msra.mxu0 %v494
  %715 = vmatprep.subr.bf16.mxu0 0
  %716 = vmatpush2.bf16.msra.mxu0 %v493
  %717 = vmatprep.mubr.bf16.mxu0 %v172
  %718 = vmatmul.mubr.bf16.gmra.mxu0 %v171
  %v719 = vpop.f32.mrf.mxu0
  %v720 = vadd.f32 %v680, %v719
  %v721 = vpop.f32.mrf.mxu0
  %v722 = vpop.f32.mrf.mxu0
  %v723 = vpop.f32.mrf.mxu0
  %724 = vdwg.mxu0
  %v725 = vadd.f32 %v148, %v720
  %726 = vst [vmem:[#allocation2] sm:$0xff] %v725
  // Predicated region
  $region18: #{convnet_forward.7} parent=0 // pred_check
    %p727 = pneg %p15
  $region19: #{convnet_forward.7} parent=0 // pred_check_branch
    %729 = sbr.rel (%p727) target = $region21
  $region20: #{convnet_forward.7} parent=0 // pred_region
    %v730 = vld [vmem:[#allocation2] sm:$0xff]
    %v731 = vld [vmem:[%s2] sm:$0x1]
    %v733 = vlaneseq
    %v734 = vshrl.u32 %v733, 7
    %v735 = vsub.s32 0, %v734
    %v736 = vrot.slane %v731, %v735
    %v738 = vadd.f32 %v730, %v736
    %739 = vst [vmem:[%s3] sm:$0xff] %v738
  $region21: #{convnet_forward.7} parent=0 // pred_fallthru
    _
  // Predicated region
  $region22: #{convnet_forward.7} parent=0 // pred_check
    _
  $region23: #{convnet_forward.7} parent=0 // pred_check_branch
    %741 = sbr.rel (0) target = $region25
  $region24: #{convnet_forward.7} parent=0 // pred_region
    _
  $region25: #{convnet_forward.7} parent=0 // pred_fallthru
    _
  // Predicated region
  $region26: #{convnet_forward.7} parent=0 // pred_check
    _
  $region27: #{convnet_forward.7} parent=0 // pred_check_branch
    %743 = sbr.rel (0) target = $region29
  $region28: #{convnet_forward.7} parent=0 // pred_region
    _
  $region29: #{convnet_forward.7} parent=0 // pred_fallthru
    _

</llo_original>
